<compile_context>
chip_gen: v7x
topology: tpu7x:2x2x1
jax: 0.10.0
libtpu: 0.0.40
codegen_flags: <defaults>
</compile_context>

<pallas_src>
import jax
import jax.numpy as jnp
from jax.experimental import pallas as pl
from jax.experimental.pallas import tpu as pltpu

# ---------------------------------------------------------------------------
# Config (small shapes consistent with the module)
# ---------------------------------------------------------------------------
VOCAB = 50
EMB_DIM = 32
HIDDEN = 32          # hidden_dim -> BiLSTM output width = 2*HIDDEN
LINEAR = 64          # linear_size
SEQ = 8
BATCH = 2
PAD_ID = 1
BN_EPS = 1e-5

VMEM_SPEC = pl.BlockSpec(memory_space=pltpu.MemorySpace.VMEM)


# ---------------------------------------------------------------------------
# LSTM helpers (traced inside the kernel, fully unrolled)
# ---------------------------------------------------------------------------
def _lstm_cell(pre, h, c, whh, H):
    """One LSTM cell step.  pre: (N, 4H) = x-projection + bias (precomputed)."""
    g = pre + jnp.dot(h, whh, preferred_element_type=jnp.float32)
    sg = jax.nn.sigmoid(g)                       # full-width EUP pass, slice after
    i_g = sg[:, 0 * H:1 * H]
    f_g = sg[:, 1 * H:2 * H]
    o_g = sg[:, 3 * H:4 * H]
    g_g = jnp.tanh(g[:, 2 * H:3 * H])
    c_new = f_g * c + i_g * g_g
    h_new = o_g * jnp.tanh(c_new)
    return h_new, c_new


def _bilstm_unrolled(gates, whh_f, whh_b, H):
    """gates: list of S arrays (N, 8H) laid out [fwd i,f,g,o | bwd i,f,g,o],
    with the input projection and biases already applied.  Returns a list of
    S arrays (N, 2H) = [h_fwd_t | h_bwd_t] (torch bidirectional output)."""
    S = len(gates)
    N = gates[0].shape[0]
    G = 4 * H
    zeros = jnp.zeros((N, H), jnp.float32)
    h_f, c_f, h_b, c_b = zeros, zeros, zeros, zeros
    outs_f = [None] * S
    outs_b = [None] * S
    for t in range(S):                            # static unroll, fwd/bwd interleaved
        h_f, c_f = _lstm_cell(gates[t][:, :G], h_f, c_f, whh_f, H)
        outs_f[t] = h_f
        tb = S - 1 - t
        h_b, c_b = _lstm_cell(gates[tb][:, G:], h_b, c_b, whh_b, H)
        outs_b[tb] = h_b
    return [jnp.concatenate([outs_f[t], outs_b[t]], axis=-1) for t in range(S)]


# ---------------------------------------------------------------------------
# The fused ESIM kernel
# ---------------------------------------------------------------------------
def _esim_kernel(ids_col_ref, ids_bf_ref, emb_ref,
                 wih1_ref, whh1f_ref, whh1b_ref, bg1_ref,
                 wih2_ref, whh2f_ref, whh2b_ref, bg2_ref,
                 s1_ref, t1_ref, w1_ref, b1_ref,
                 s2_ref, t2_ref, w2_ref, b2_ref,
                 s3_ref, t3_ref, w3_ref, b3_ref,
                 out_ref):
    BB, S = ids_bf_ref.shape          # BB = 2*B (x1 sentences then x2 sentences)
    B = BB // 2
    V, E = emb_ref.shape
    H = whh1f_ref.shape[0]

    # ---- padding mask -> additive bias (0 / -inf), batch-first (BB, S) ----
    neg_inf = jnp.float32(-jnp.inf)
    mask_bf = jnp.where(ids_bf_ref[...] == PAD_ID, neg_inf, jnp.float32(0.0))

    # ---- embedding as one-hot matmul (rows in seq-major order t*BB + b) ----
    onehot = (ids_col_ref[...] ==
              jax.lax.broadcasted_iota(jnp.int32, (S * BB, V), 1)).astype(jnp.float32)
    x_emb = jnp.dot(onehot, emb_ref[...], preferred_element_type=jnp.float32)  # (S*BB, E)

    # ---- BiLSTM 1: hoisted input projection, both directions fused (8H=256) ----
    xg1 = (jnp.dot(x_emb, wih1_ref[...], preferred_element_type=jnp.float32)
           + bg1_ref[...])                                             # (S*BB, 8H)
    gates1 = [xg1[t * BB:(t + 1) * BB] for t in range(S)]
    h_rows = _bilstm_unrolled(gates1, whh1f_ref[...], whh1b_ref[...], H)   # S x (BB, 2H)

    # per-sentence seq-major matrices (S, 2H)
    o_seq = [jnp.concatenate([h_rows[t][b:b + 1] for t in range(S)], axis=0)
             for b in range(BB)]

    # ---- soft attention align + [a, align, a-align, a*align] (lane-dense 256) ----
    cat_seq = [None] * BB
    for b in range(B):                             # B=2, static unroll
        o1b = o_seq[b]                   # (S, 2H)   sentence b of x1
        o2b = o_seq[B + b]               # (S, 2H)   sentence b of x2
        m1b = mask_bf[b:b + 1]           # (1, S)
        m2b = mask_bf[B + b:B + b + 1]   # (1, S)
        attn12 = jax.lax.dot_general(o1b, o2b, (((1,), (1,)), ((), ())),
                                     preferred_element_type=jnp.float32)   # (S1, S2)
        attn21 = jax.lax.dot_general(o2b, o1b, (((1,), (1,)), ((), ())),
                                     preferred_element_type=jnp.float32)   # (S2, S1)
        w1b = jax.nn.softmax(attn12 + m2b, axis=-1)
        a1 = jnp.dot(w1b, o2b, preferred_element_type=jnp.float32)         # (S1, 2H)
        w2b = jax.nn.softmax(attn21 + m1b, axis=-1)
        a2 = jnp.dot(w2b, o1b, preferred_element_type=jnp.float32)         # (S2, 2H)
        cat_seq[b] = jnp.concatenate([o1b, a1, o1b - a1, o1b * a1], axis=-1)     # (S, 8H)
        cat_seq[B + b] = jnp.concatenate([o2b, a2, o2b - a2, o2b * a2], axis=-1)

    # ---- BiLSTM 2: hoisted input projection over all sentences at once ----
    cat_all = jnp.concatenate(cat_seq, axis=0)                         # (BB*S, 8H), row b*S+t
    xg2 = (jnp.dot(cat_all, wih2_ref[...], preferred_element_type=jnp.float32)
           + bg2_ref[...])                                             # (BB*S, 8H)
    gates2 = [jnp.concatenate([xg2[b * S + t:b * S + t + 1] for b in range(BB)], axis=0)
              for t in range(S)]                                       # S x (BB, 8H)
    c_rows = _bilstm_unrolled(gates2, whh2f_ref[...], whh2b_ref[...], H)   # S x (BB, 2H)

    # ---- avg + max pooling over the full sequence (pads included, as in torch) ----
    mean_c = c_rows[0]
    max_c = c_rows[0]
    for t in range(1, S):
        mean_c = mean_c + c_rows[t]
        max_c = jnp.maximum(max_c, c_rows[t])
    mean_c = mean_c * jnp.float32(1.0 / S)
    feat = jnp.concatenate([mean_c[:B], max_c[:B], mean_c[B:], max_c[B:]],
                           axis=-1)                                    # (B, 8H=256)

    # ---- fc head: BN -> Linear -> ELU -> BN -> Linear -> ELU -> BN -> Linear ----
    def elu(x):
        return jnp.where(x > 0, x, jnp.exp(jnp.minimum(x, 0.0)) - 1.0)

    h = feat * s1_ref[...] + t1_ref[...]
    h = elu(jnp.dot(h, w1_ref[...], preferred_element_type=jnp.float32) + b1_ref[...])
    h = h * s2_ref[...] + t2_ref[...]
    h = elu(jnp.dot(h, w2_ref[...], preferred_element_type=jnp.float32) + b2_ref[...])
    h = h * s3_ref[...] + t3_ref[...]
    out_ref[...] = (jnp.dot(h, w3_ref[...], preferred_element_type=jnp.float32)
                    + b3_ref[...])


# ---------------------------------------------------------------------------
# Wrapper: one pallas_call for the entire forward pass
# ---------------------------------------------------------------------------
def esim_forward(params, x1, x2):
    """x1, x2: (S, B) int32 token ids (seq-major, like nn.LSTM default)."""
    S, B = x1.shape
    ids_sm = jnp.concatenate([x1, x2], axis=1)        # (S, 2B): x1 cols then x2 cols
    ids_col = ids_sm.reshape(S * 2 * B, 1)            # seq-major flat ids (t*2B + b)
    ids_bf = ids_sm.T                                 # (2B, S) batch-first

    l1, l2, fc = params["lstm1"], params["lstm2"], params["fc"]
    return pl.pallas_call(
        _esim_kernel,
        out_shape=jax.ShapeDtypeStruct((B, 2), jnp.float32),
        in_specs=[VMEM_SPEC] * 23,
        out_specs=VMEM_SPEC,
    )(ids_col, ids_bf, params["embedding"],
      l1["wih"], l1["whh_f"], l1["whh_b"], l1["b"],
      l2["wih"], l2["whh_f"], l2["whh_b"], l2["b"],
      fc["s1"], fc["t1"], fc["w1"], fc["b1"],
      fc["s2"], fc["t2"], fc["w2"], fc["b2"],
      fc["s3"], fc["t3"], fc["w3"], fc["b3"])


# ---------------------------------------------------------------------------
# Deterministic parameter initialization
# ---------------------------------------------------------------------------
def _rnd(key, shape, scale=0.1):
    return scale * jax.random.normal(key, shape, jnp.float32)


def init_lstm_params(key, input_dim, hidden_dim):
    ks = jax.random.split(key, 8)
    G = 4 * hidden_dim
    wih_f = _rnd(ks[0], (input_dim, G))
    wih_b = _rnd(ks[1], (input_dim, G))
    b_f = _rnd(ks[2], (1, G)) + _rnd(ks[3], (1, G))    # b_ih + b_hh (fwd)
    b_b = _rnd(ks[4], (1, G)) + _rnd(ks[5], (1, G))    # b_ih + b_hh (bwd)
    return {
        "wih": jnp.concatenate([wih_f, wih_b], axis=1),   # (input_dim, 8H) fwd|bwd
        "b": jnp.concatenate([b_f, b_b], axis=1),         # (1, 8H)
        "whh_f": _rnd(ks[6], (hidden_dim, G)),
        "whh_b": _rnd(ks[7], (hidden_dim, G)),
    }


def init_bn_affine(key, dim):
    k1, k2, k3, k4 = jax.random.split(key, 4)
    gamma = 1.0 + _rnd(k1, (1, dim))
    beta = _rnd(k2, (1, dim))
    mean = _rnd(k3, (1, dim))
    var = 1.0 + 0.1 * jax.random.uniform(k4, (1, dim), jnp.float32)
    scale = gamma / jnp.sqrt(var + BN_EPS)
    shift = beta - mean * scale
    return scale, shift


def init_params(key):
    keys = jax.random.split(key, 10)
    fc = {}
    fc["s1"], fc["t1"] = init_bn_affine(keys[3], 8 * HIDDEN)
    fc["w1"] = _rnd(keys[4], (8 * HIDDEN, LINEAR))
    fc["b1"] = _rnd(keys[9], (1, LINEAR))
    fc["s2"], fc["t2"] = init_bn_affine(keys[5], LINEAR)
    fc["w2"] = _rnd(keys[6], (LINEAR, LINEAR))
    fc["b2"] = _rnd(keys[6], (1, LINEAR))
    fc["s3"], fc["t3"] = init_bn_affine(keys[7], LINEAR)
    fc["w3"] = _rnd(keys[8], (LINEAR, 2))
    fc["b3"] = _rnd(keys[8], (1, 2))
    return {
        "embedding": _rnd(keys[0], (VOCAB, EMB_DIM), scale=1.0),
        "lstm1": init_lstm_params(keys[1], EMB_DIM, HIDDEN),
        "lstm2": init_lstm_params(keys[2], 8 * HIDDEN, HIDDEN),
        "fc": fc,
    }


# ---------------------------------------------------------------------------
if __name__ == "__main__":
    key = jax.random.PRNGKey(0)
    kp, kx1, kx2 = jax.random.split(key, 3)

    params = init_params(kp)

    x1 = jax.random.randint(kx1, (SEQ, BATCH), 2, VOCAB, dtype=jnp.int32)
    x2 = jax.random.randint(kx2, (SEQ, BATCH), 2, VOCAB, dtype=jnp.int32)
    # trailing padding tokens (id == 1) to exercise the attention masking
    x1 = x1.at[-1, :].set(PAD_ID)
    x2 = x2.at[-2:, :].set(PAD_ID)

    out = jax.jit(esim_forward)(params, x1, x2)
    out = jax.block_until_ready(out)

    assert out.shape == (BATCH, 2), out.shape
    assert bool(jnp.all(jnp.isfinite(out)))
    print("KERNEL_OK")
</pallas_src>

<mosaic_0001>
module attributes {stable_mosaic.version = 11 : i64} {
  func.func @_esim_kernel(%arg0: memref<32x1xi32, #tpu.memory_space<vmem>>, %arg1: memref<4x8xi32, #tpu.memory_space<vmem>>, %arg2: memref<50x32xf32, #tpu.memory_space<vmem>>, %arg3: memref<32x256xf32, #tpu.memory_space<vmem>>, %arg4: memref<32x128xf32, #tpu.memory_space<vmem>>, %arg5: memref<32x128xf32, #tpu.memory_space<vmem>>, %arg6: memref<1x256xf32, #tpu.memory_space<vmem>>, %arg7: memref<256x256xf32, #tpu.memory_space<vmem>>, %arg8: memref<32x128xf32, #tpu.memory_space<vmem>>, %arg9: memref<32x128xf32, #tpu.memory_space<vmem>>, %arg10: memref<1x256xf32, #tpu.memory_space<vmem>>, %arg11: memref<1x256xf32, #tpu.memory_space<vmem>>, %arg12: memref<1x256xf32, #tpu.memory_space<vmem>>, %arg13: memref<256x64xf32, #tpu.memory_space<vmem>>, %arg14: memref<1x64xf32, #tpu.memory_space<vmem>>, %arg15: memref<1x64xf32, #tpu.memory_space<vmem>>, %arg16: memref<1x64xf32, #tpu.memory_space<vmem>>, %arg17: memref<64x64xf32, #tpu.memory_space<vmem>>, %arg18: memref<1x64xf32, #tpu.memory_space<vmem>>, %arg19: memref<1x64xf32, #tpu.memory_space<vmem>>, %arg20: memref<1x64xf32, #tpu.memory_space<vmem>>, %arg21: memref<64x2xf32, #tpu.memory_space<vmem>>, %arg22: memref<1x2xf32, #tpu.memory_space<vmem>>, %arg23: memref<2x2xf32, #tpu.memory_space<vmem>>) attributes {dimension_semantics = [], scalar_prefetch = 0 : i64, scratch_operands = 0 : i64, tpu.core_type = #tpu.core_type<tc>} {
    %c0 = arith.constant 0 : index
    %c0_0 = arith.constant 0 : index
    %0 = vector.load %arg1[%c0, %c0_0] : memref<4x8xi32, #tpu.memory_space<vmem>>, vector<4x8xi32>
    %c1_i32 = arith.constant 1 : i32
    %1 = vector.broadcast %c1_i32 : i32 to vector<4x8xi32>
    %2 = arith.cmpi eq, %0, %1 : vector<4x8xi32>
    %cst = arith.constant 0xFF800000 : f32
    %cst_1 = arith.constant 0.000000e+00 : f32
    %3 = vector.broadcast %cst : f32 to vector<4x8xf32>
    %4 = vector.broadcast %cst_1 : f32 to vector<4x8xf32>
    %5 = arith.select %2, %3, %4 : vector<4x8xi1>, vector<4x8xf32>
    %c0_2 = arith.constant 0 : index
    %c0_3 = arith.constant 0 : index
    %6 = vector.load %arg0[%c0_2, %c0_3] : memref<32x1xi32, #tpu.memory_space<vmem>>, vector<32x1xi32>
    %7 = tpu.iota {dimensions = array<i32: 1>} : vector<32x50xi32>
    %8 = vector.broadcast %6 : vector<32x1xi32> to vector<32x50xi32>
    %9 = arith.cmpi eq, %8, %7 : vector<32x50xi32>
    %10 = arith.extui %9 : vector<32x50xi1> to vector<32x50xi32>
    %11 = arith.sitofp %10 : vector<32x50xi32> to vector<32x50xf32>
    %c0_4 = arith.constant 0 : index
    %c0_5 = arith.constant 0 : index
    %12 = vector.load %arg2[%c0_4, %c0_5] : memref<50x32xf32, #tpu.memory_space<vmem>>, vector<50x32xf32>
    %cst_6 = arith.constant dense<0.000000e+00> : vector<32x32xf32>
    %13 = tpu.matmul %11, %12, %cst_6 {dimension_numbers = #tpu.dot_dimension_numbers<[1], [0], [0], [1], [0, 0, 1, 1], [], []>} : vector<32x50xf32>, vector<50x32xf32>, vector<32x32xf32> -> vector<32x32xf32>
    %c0_7 = arith.constant 0 : index
    %c0_8 = arith.constant 0 : index
    %14 = vector.load %arg3[%c0_7, %c0_8] : memref<32x256xf32, #tpu.memory_space<vmem>>, vector<32x256xf32>
    %cst_9 = arith.constant dense<0.000000e+00> : vector<32x256xf32>
    %15 = tpu.matmul %13, %14, %cst_9 {dimension_numbers = #tpu.dot_dimension_numbers<[1], [0], [0], [1], [0, 0, 1, 1], [], []>} : vector<32x32xf32>, vector<32x256xf32>, vector<32x256xf32> -> vector<32x256xf32>
    %c0_10 = arith.constant 0 : index
    %c0_11 = arith.constant 0 : index
    %16 = vector.load %arg6[%c0_10, %c0_11] : memref<1x256xf32, #tpu.memory_space<vmem>>, vector<1x256xf32>
    %17 = vector.broadcast %16 : vector<1x256xf32> to vector<32x256xf32>
    %18 = arith.addf %15, %17 : vector<32x256xf32>
    %19 = vector.extract_strided_slice %18 {offsets = [0, 0], sizes = [4, 256], strides = [1, 1]} : vector<32x256xf32> to vector<4x256xf32>
    %20 = vector.extract_strided_slice %18 {offsets = [4, 0], sizes = [4, 256], strides = [1, 1]} : vector<32x256xf32> to vector<4x256xf32>
    %21 = vector.extract_strided_slice %18 {offsets = [8, 0], sizes = [4, 256], strides = [1, 1]} : vector<32x256xf32> to vector<4x256xf32>
    %22 = vector.extract_strided_slice %18 {offsets = [12, 0], sizes = [4, 256], strides = [1, 1]} : vector<32x256xf32> to vector<4x256xf32>
    %23 = vector.extract_strided_slice %18 {offsets = [16, 0], sizes = [4, 256], strides = [1, 1]} : vector<32x256xf32> to vector<4x256xf32>
    %24 = vector.extract_strided_slice %18 {offsets = [20, 0], sizes = [4, 256], strides = [1, 1]} : vector<32x256xf32> to vector<4x256xf32>
    %25 = vector.extract_strided_slice %18 {offsets = [24, 0], sizes = [4, 256], strides = [1, 1]} : vector<32x256xf32> to vector<4x256xf32>
    %26 = vector.extract_strided_slice %18 {offsets = [28, 0], sizes = [4, 256], strides = [1, 1]} : vector<32x256xf32> to vector<4x256xf32>
    %c0_12 = arith.constant 0 : index
    %c0_13 = arith.constant 0 : index
    %27 = vector.load %arg4[%c0_12, %c0_13] : memref<32x128xf32, #tpu.memory_space<vmem>>, vector<32x128xf32>
    %c0_14 = arith.constant 0 : index
    %c0_15 = arith.constant 0 : index
    %28 = vector.load %arg5[%c0_14, %c0_15] : memref<32x128xf32, #tpu.memory_space<vmem>>, vector<32x128xf32>
    %cst_16 = arith.constant 0.000000e+00 : f32
    %29 = vector.broadcast %cst_16 : f32 to vector<4x32xf32>
    %30 = vector.extract_strided_slice %19 {offsets = [0, 0], sizes = [4, 128], strides = [1, 1]} : vector<4x256xf32> to vector<4x128xf32>
    %cst_17 = arith.constant dense<0.000000e+00> : vector<4x128xf32>
    %31 = tpu.matmul %29, %27, %cst_17 {dimension_numbers = #tpu.dot_dimension_numbers<[1], [0], [0], [1], [0, 0, 1, 1], [], []>} : vector<4x32xf32>, vector<32x128xf32>, vector<4x128xf32> -> vector<4x128xf32>
    %32 = arith.addf %30, %31 : vector<4x128xf32>
    %33 = arith.negf %32 : vector<4x128xf32>
    %34 = math.exp %33 : vector<4x128xf32>
    %cst_18 = arith.constant 1.000000e+00 : f32
    %35 = vector.broadcast %cst_18 : f32 to vector<4x128xf32>
    %36 = arith.addf %35, %34 : vector<4x128xf32>
    %37 = arith.divf %35, %36 : vector<4x128xf32>
    %38 = vector.extract_strided_slice %37 {offsets = [0, 0], sizes = [4, 32], strides = [1, 1]} : vector<4x128xf32> to vector<4x32xf32>
    %39 = vector.extract_strided_slice %37 {offsets = [0, 32], sizes = [4, 32], strides = [1, 1]} : vector<4x128xf32> to vector<4x32xf32>
    %40 = vector.extract_strided_slice %37 {offsets = [0, 96], sizes = [4, 32], strides = [1, 1]} : vector<4x128xf32> to vector<4x32xf32>
    %41 = vector.extract_strided_slice %32 {offsets = [0, 64], sizes = [4, 32], strides = [1, 1]} : vector<4x128xf32> to vector<4x32xf32>
    %42 = math.tanh %41 : vector<4x32xf32>
    %43 = arith.mulf %39, %29 : vector<4x32xf32>
    %44 = arith.mulf %38, %42 : vector<4x32xf32>
    %45 = arith.addf %43, %44 : vector<4x32xf32>
    %46 = math.tanh %45 : vector<4x32xf32>
    %47 = arith.mulf %40, %46 : vector<4x32xf32>
    %48 = vector.extract_strided_slice %26 {offsets = [0, 128], sizes = [4, 128], strides = [1, 1]} : vector<4x256xf32> to vector<4x128xf32>
    %cst_19 = arith.constant dense<0.000000e+00> : vector<4x128xf32>
    %49 = tpu.matmul %29, %28, %cst_19 {dimension_numbers = #tpu.dot_dimension_numbers<[1], [0], [0], [1], [0, 0, 1, 1], [], []>} : vector<4x32xf32>, vector<32x128xf32>, vector<4x128xf32> -> vector<4x128xf32>
    %50 = arith.addf %48, %49 : vector<4x128xf32>
    %51 = arith.negf %50 : vector<4x128xf32>
    %52 = math.exp %51 : vector<4x128xf32>
    %cst_20 = arith.constant 1.000000e+00 : f32
    %53 = vector.broadcast %cst_20 : f32 to vector<4x128xf32>
    %54 = arith.addf %53, %52 : vector<4x128xf32>
    %55 = arith.divf %53, %54 : vector<4x128xf32>
    %56 = vector.extract_strided_slice %55 {offsets = [0, 0], sizes = [4, 32], strides = [1, 1]} : vector<4x128xf32> to vector<4x32xf32>
    %57 = vector.extract_strided_slice %55 {offsets = [0, 32], sizes = [4, 32], strides = [1, 1]} : vector<4x128xf32> to vector<4x32xf32>
    %58 = vector.extract_strided_slice %55 {offsets = [0, 96], sizes = [4, 32], strides = [1, 1]} : vector<4x128xf32> to vector<4x32xf32>
    %59 = vector.extract_strided_slice %50 {offsets = [0, 64], sizes = [4, 32], strides = [1, 1]} : vector<4x128xf32> to vector<4x32xf32>
    %60 = math.tanh %59 : vector<4x32xf32>
    %61 = arith.mulf %57, %29 : vector<4x32xf32>
    %62 = arith.mulf %56, %60 : vector<4x32xf32>
    %63 = arith.addf %61, %62 : vector<4x32xf32>
    %64 = math.tanh %63 : vector<4x32xf32>
    %65 = arith.mulf %58, %64 : vector<4x32xf32>
    %66 = vector.extract_strided_slice %20 {offsets = [0, 0], sizes = [4, 128], strides = [1, 1]} : vector<4x256xf32> to vector<4x128xf32>
    %cst_21 = arith.constant dense<0.000000e+00> : vector<4x128xf32>
    %67 = tpu.matmul %47, %27, %cst_21 {dimension_numbers = #tpu.dot_dimension_numbers<[1], [0], [0], [1], [0, 0, 1, 1], [], []>} : vector<4x32xf32>, vector<32x128xf32>, vector<4x128xf32> -> vector<4x128xf32>
    %68 = arith.addf %66, %67 : vector<4x128xf32>
    %69 = arith.negf %68 : vector<4x128xf32>
    %70 = math.exp %69 : vector<4x128xf32>
    %cst_22 = arith.constant 1.000000e+00 : f32
    %71 = vector.broadcast %cst_22 : f32 to vector<4x128xf32>
    %72 = arith.addf %71, %70 : vector<4x128xf32>
    %73 = arith.divf %71, %72 : vector<4x128xf32>
    %74 = vector.extract_strided_slice %73 {offsets = [0, 0], sizes = [4, 32], strides = [1, 1]} : vector<4x128xf32> to vector<4x32xf32>
    %75 = vector.extract_strided_slice %73 {offsets = [0, 32], sizes = [4, 32], strides = [1, 1]} : vector<4x128xf32> to vector<4x32xf32>
    %76 = vector.extract_strided_slice %73 {offsets = [0, 96], sizes = [4, 32], strides = [1, 1]} : vector<4x128xf32> to vector<4x32xf32>
    %77 = vector.extract_strided_slice %68 {offsets = [0, 64], sizes = [4, 32], strides = [1, 1]} : vector<4x128xf32> to vector<4x32xf32>
    %78 = math.tanh %77 : vector<4x32xf32>
    %79 = arith.mulf %75, %45 : vector<4x32xf32>
    %80 = arith.mulf %74, %78 : vector<4x32xf32>
    %81 = arith.addf %79, %80 : vector<4x32xf32>
    %82 = math.tanh %81 : vector<4x32xf32>
    %83 = arith.mulf %76, %82 : vector<4x32xf32>
    %84 = vector.extract_strided_slice %25 {offsets = [0, 128], sizes = [4, 128], strides = [1, 1]} : vector<4x256xf32> to vector<4x128xf32>
    %cst_23 = arith.constant dense<0.000000e+00> : vector<4x128xf32>
    %85 = tpu.matmul %65, %28, %cst_23 {dimension_numbers = #tpu.dot_dimension_numbers<[1], [0], [0], [1], [0, 0, 1, 1], [], []>} : vector<4x32xf32>, vector<32x128xf32>, vector<4x128xf32> -> vector<4x128xf32>
    %86 = arith.addf %84, %85 : vector<4x128xf32>
    %87 = arith.negf %86 : vector<4x128xf32>
    %88 = math.exp %87 : vector<4x128xf32>
    %cst_24 = arith.constant 1.000000e+00 : f32
    %89 = vector.broadcast %cst_24 : f32 to vector<4x128xf32>
    %90 = arith.addf %89, %88 : vector<4x128xf32>
    %91 = arith.divf %89, %90 : vector<4x128xf32>
    %92 = vector.extract_strided_slice %91 {offsets = [0, 0], sizes = [4, 32], strides = [1, 1]} : vector<4x128xf32> to vector<4x32xf32>
    %93 = vector.extract_strided_slice %91 {offsets = [0, 32], sizes = [4, 32], strides = [1, 1]} : vector<4x128xf32> to vector<4x32xf32>
    %94 = vector.extract_strided_slice %91 {offsets = [0, 96], sizes = [4, 32], strides = [1, 1]} : vector<4x128xf32> to vector<4x32xf32>
    %95 = vector.extract_strided_slice %86 {offsets = [0, 64], sizes = [4, 32], strides = [1, 1]} : vector<4x128xf32> to vector<4x32xf32>
    %96 = math.tanh %95 : vector<4x32xf32>
    %97 = arith.mulf %93, %63 : vector<4x32xf32>
    %98 = arith.mulf %92, %96 : vector<4x32xf32>
    %99 = arith.addf %97, %98 : vector<4x32xf32>
    %100 = math.tanh %99 : vector<4x32xf32>
    %101 = arith.mulf %94, %100 : vector<4x32xf32>
    %102 = vector.extract_strided_slice %21 {offsets = [0, 0], sizes = [4, 128], strides = [1, 1]} : vector<4x256xf32> to vector<4x128xf32>
    %cst_25 = arith.constant dense<0.000000e+00> : vector<4x128xf32>
    %103 = tpu.matmul %83, %27, %cst_25 {dimension_numbers = #tpu.dot_dimension_numbers<[1], [0], [0], [1], [0, 0, 1, 1], [], []>} : vector<4x32xf32>, vector<32x128xf32>, vector<4x128xf32> -> vector<4x128xf32>
    %104 = arith.addf %102, %103 : vector<4x128xf32>
    %105 = arith.negf %104 : vector<4x128xf32>
    %106 = math.exp %105 : vector<4x128xf32>
    %cst_26 = arith.constant 1.000000e+00 : f32
    %107 = vector.broadcast %cst_26 : f32 to vector<4x128xf32>
    %108 = arith.addf %107, %106 : vector<4x128xf32>
    %109 = arith.divf %107, %108 : vector<4x128xf32>
    %110 = vector.extract_strided_slice %109 {offsets = [0, 0], sizes = [4, 32], strides = [1, 1]} : vector<4x128xf32> to vector<4x32xf32>
    %111 = vector.extract_strided_slice %109 {offsets = [0, 32], sizes = [4, 32], strides = [1, 1]} : vector<4x128xf32> to vector<4x32xf32>
    %112 = vector.extract_strided_slice %109 {offsets = [0, 96], sizes = [4, 32], strides = [1, 1]} : vector<4x128xf32> to vector<4x32xf32>
    %113 = vector.extract_strided_slice %104 {offsets = [0, 64], sizes = [4, 32], strides = [1, 1]} : vector<4x128xf32> to vector<4x32xf32>
    %114 = math.tanh %113 : vector<4x32xf32>
    %115 = arith.mulf %111, %81 : vector<4x32xf32>
    %116 = arith.mulf %110, %114 : vector<4x32xf32>
    %117 = arith.addf %115, %116 : vector<4x32xf32>
    %118 = math.tanh %117 : vector<4x32xf32>
    %119 = arith.mulf %112, %118 : vector<4x32xf32>
    %120 = vector.extract_strided_slice %24 {offsets = [0, 128], sizes = [4, 128], strides = [1, 1]} : vector<4x256xf32> to vector<4x128xf32>
    %cst_27 = arith.constant dense<0.000000e+00> : vector<4x128xf32>
    %121 = tpu.matmul %101, %28, %cst_27 {dimension_numbers = #tpu.dot_dimension_numbers<[1], [0], [0], [1], [0, 0, 1, 1], [], []>} : vector<4x32xf32>, vector<32x128xf32>, vector<4x128xf32> -> vector<4x128xf32>
    %122 = arith.addf %120, %121 : vector<4x128xf32>
    %123 = arith.negf %122 : vector<4x128xf32>
    %124 = math.exp %123 : vector<4x128xf32>
    %cst_28 = arith.constant 1.000000e+00 : f32
    %125 = vector.broadcast %cst_28 : f32 to vector<4x128xf32>
    %126 = arith.addf %125, %124 : vector<4x128xf32>
    %127 = arith.divf %125, %126 : vector<4x128xf32>
    %128 = vector.extract_strided_slice %127 {offsets = [0, 0], sizes = [4, 32], strides = [1, 1]} : vector<4x128xf32> to vector<4x32xf32>
    %129 = vector.extract_strided_slice %127 {offsets = [0, 32], sizes = [4, 32], strides = [1, 1]} : vector<4x128xf32> to vector<4x32xf32>
    %130 = vector.extract_strided_slice %127 {offsets = [0, 96], sizes = [4, 32], strides = [1, 1]} : vector<4x128xf32> to vector<4x32xf32>
    %131 = vector.extract_strided_slice %122 {offsets = [0, 64], sizes = [4, 32], strides = [1, 1]} : vector<4x128xf32> to vector<4x32xf32>
    %132 = math.tanh %131 : vector<4x32xf32>
    %133 = arith.mulf %129, %99 : vector<4x32xf32>
    %134 = arith.mulf %128, %132 : vector<4x32xf32>
    %135 = arith.addf %133, %134 : vector<4x32xf32>
    %136 = math.tanh %135 : vector<4x32xf32>
    %137 = arith.mulf %130, %136 : vector<4x32xf32>
    %138 = vector.extract_strided_slice %22 {offsets = [0, 0], sizes = [4, 128], strides = [1, 1]} : vector<4x256xf32> to vector<4x128xf32>
    %cst_29 = arith.constant dense<0.000000e+00> : vector<4x128xf32>
    %139 = tpu.matmul %119, %27, %cst_29 {dimension_numbers = #tpu.dot_dimension_numbers<[1], [0], [0], [1], [0, 0, 1, 1], [], []>} : vector<4x32xf32>, vector<32x128xf32>, vector<4x128xf32> -> vector<4x128xf32>
    %140 = arith.addf %138, %139 : vector<4x128xf32>
    %141 = arith.negf %140 : vector<4x128xf32>
    %142 = math.exp %141 : vector<4x128xf32>
    %cst_30 = arith.constant 1.000000e+00 : f32
    %143 = vector.broadcast %cst_30 : f32 to vector<4x128xf32>
    %144 = arith.addf %143, %142 : vector<4x128xf32>
    %145 = arith.divf %143, %144 : vector<4x128xf32>
    %146 = vector.extract_strided_slice %145 {offsets = [0, 0], sizes = [4, 32], strides = [1, 1]} : vector<4x128xf32> to vector<4x32xf32>
    %147 = vector.extract_strided_slice %145 {offsets = [0, 32], sizes = [4, 32], strides = [1, 1]} : vector<4x128xf32> to vector<4x32xf32>
    %148 = vector.extract_strided_slice %145 {offsets = [0, 96], sizes = [4, 32], strides = [1, 1]} : vector<4x128xf32> to vector<4x32xf32>
    %149 = vector.extract_strided_slice %140 {offsets = [0, 64], sizes = [4, 32], strides = [1, 1]} : vector<4x128xf32> to vector<4x32xf32>
    %150 = math.tanh %149 : vector<4x32xf32>
    %151 = arith.mulf %147, %117 : vector<4x32xf32>
    %152 = arith.mulf %146, %150 : vector<4x32xf32>
    %153 = arith.addf %151, %152 : vector<4x32xf32>
    %154 = math.tanh %153 : vector<4x32xf32>
    %155 = arith.mulf %148, %154 : vector<4x32xf32>
    %156 = vector.extract_strided_slice %23 {offsets = [0, 128], sizes = [4, 128], strides = [1, 1]} : vector<4x256xf32> to vector<4x128xf32>
    %cst_31 = arith.constant dense<0.000000e+00> : vector<4x128xf32>
    %157 = tpu.matmul %137, %28, %cst_31 {dimension_numbers = #tpu.dot_dimension_numbers<[1], [0], [0], [1], [0, 0, 1, 1], [], []>} : vector<4x32xf32>, vector<32x128xf32>, vector<4x128xf32> -> vector<4x128xf32>
    %158 = arith.addf %156, %157 : vector<4x128xf32>
    %159 = arith.negf %158 : vector<4x128xf32>
    %160 = math.exp %159 : vector<4x128xf32>
    %cst_32 = arith.constant 1.000000e+00 : f32
    %161 = vector.broadcast %cst_32 : f32 to vector<4x128xf32>
    %162 = arith.addf %161, %160 : vector<4x128xf32>
    %163 = arith.divf %161, %162 : vector<4x128xf32>
    %164 = vector.extract_strided_slice %163 {offsets = [0, 0], sizes = [4, 32], strides = [1, 1]} : vector<4x128xf32> to vector<4x32xf32>
    %165 = vector.extract_strided_slice %163 {offsets = [0, 32], sizes = [4, 32], strides = [1, 1]} : vector<4x128xf32> to vector<4x32xf32>
    %166 = vector.extract_strided_slice %163 {offsets = [0, 96], sizes = [4, 32], strides = [1, 1]} : vector<4x128xf32> to vector<4x32xf32>
    %167 = vector.extract_strided_slice %158 {offsets = [0, 64], sizes = [4, 32], strides = [1, 1]} : vector<4x128xf32> to vector<4x32xf32>
    %168 = math.tanh %167 : vector<4x32xf32>
    %169 = arith.mulf %165, %135 : vector<4x32xf32>
    %170 = arith.mulf %164, %168 : vector<4x32xf32>
    %171 = arith.addf %169, %170 : vector<4x32xf32>
    %172 = math.tanh %171 : vector<4x32xf32>
    %173 = arith.mulf %166, %172 : vector<4x32xf32>
    %174 = vector.extract_strided_slice %23 {offsets = [0, 0], sizes = [4, 128], strides = [1, 1]} : vector<4x256xf32> to vector<4x128xf32>
    %cst_33 = arith.constant dense<0.000000e+00> : vector<4x128xf32>
    %175 = tpu.matmul %155, %27, %cst_33 {dimension_numbers = #tpu.dot_dimension_numbers<[1], [0], [0], [1], [0, 0, 1, 1], [], []>} : vector<4x32xf32>, vector<32x128xf32>, vector<4x128xf32> -> vector<4x128xf32>
    %176 = arith.addf %174, %175 : vector<4x128xf32>
    %177 = arith.negf %176 : vector<4x128xf32>
    %178 = math.exp %177 : vector<4x128xf32>
    %cst_34 = arith.constant 1.000000e+00 : f32
    %179 = vector.broadcast %cst_34 : f32 to vector<4x128xf32>
    %180 = arith.addf %179, %178 : vector<4x128xf32>
    %181 = arith.divf %179, %180 : vector<4x128xf32>
    %182 = vector.extract_strided_slice %181 {offsets = [0, 0], sizes = [4, 32], strides = [1, 1]} : vector<4x128xf32> to vector<4x32xf32>
    %183 = vector.extract_strided_slice %181 {offsets = [0, 32], sizes = [4, 32], strides = [1, 1]} : vector<4x128xf32> to vector<4x32xf32>
    %184 = vector.extract_strided_slice %181 {offsets = [0, 96], sizes = [4, 32], strides = [1, 1]} : vector<4x128xf32> to vector<4x32xf32>
    %185 = vector.extract_strided_slice %176 {offsets = [0, 64], sizes = [4, 32], strides = [1, 1]} : vector<4x128xf32> to vector<4x32xf32>
    %186 = math.tanh %185 : vector<4x32xf32>
    %187 = arith.mulf %183, %153 : vector<4x32xf32>
    %188 = arith.mulf %182, %186 : vector<4x32xf32>
    %189 = arith.addf %187, %188 : vector<4x32xf32>
    %190 = math.tanh %189 : vector<4x32xf32>
    %191 = arith.mulf %184, %190 : vector<4x32xf32>
    %192 = vector.extract_strided_slice %22 {offsets = [0, 128], sizes = [4, 128], strides = [1, 1]} : vector<4x256xf32> to vector<4x128xf32>
    %cst_35 = arith.constant dense<0.000000e+00> : vector<4x128xf32>
    %193 = tpu.matmul %173, %28, %cst_35 {dimension_numbers = #tpu.dot_dimension_numbers<[1], [0], [0], [1], [0, 0, 1, 1], [], []>} : vector<4x32xf32>, vector<32x128xf32>, vector<4x128xf32> -> vector<4x128xf32>
    %194 = arith.addf %192, %193 : vector<4x128xf32>
    %195 = arith.negf %194 : vector<4x128xf32>
    %196 = math.exp %195 : vector<4x128xf32>
    %cst_36 = arith.constant 1.000000e+00 : f32
    %197 = vector.broadcast %cst_36 : f32 to vector<4x128xf32>
    %198 = arith.addf %197, %196 : vector<4x128xf32>
    %199 = arith.divf %197, %198 : vector<4x128xf32>
    %200 = vector.extract_strided_slice %199 {offsets = [0, 0], sizes = [4, 32], strides = [1, 1]} : vector<4x128xf32> to vector<4x32xf32>
    %201 = vector.extract_strided_slice %199 {offsets = [0, 32], sizes = [4, 32], strides = [1, 1]} : vector<4x128xf32> to vector<4x32xf32>
    %202 = vector.extract_strided_slice %199 {offsets = [0, 96], sizes = [4, 32], strides = [1, 1]} : vector<4x128xf32> to vector<4x32xf32>
    %203 = vector.extract_strided_slice %194 {offsets = [0, 64], sizes = [4, 32], strides = [1, 1]} : vector<4x128xf32> to vector<4x32xf32>
    %204 = math.tanh %203 : vector<4x32xf32>
    %205 = arith.mulf %201, %171 : vector<4x32xf32>
    %206 = arith.mulf %200, %204 : vector<4x32xf32>
    %207 = arith.addf %205, %206 : vector<4x32xf32>
    %208 = math.tanh %207 : vector<4x32xf32>
    %209 = arith.mulf %202, %208 : vector<4x32xf32>
    %210 = vector.extract_strided_slice %24 {offsets = [0, 0], sizes = [4, 128], strides = [1, 1]} : vector<4x256xf32> to vector<4x128xf32>
    %cst_37 = arith.constant dense<0.000000e+00> : vector<4x128xf32>
    %211 = tpu.matmul %191, %27, %cst_37 {dimension_numbers = #tpu.dot_dimension_numbers<[1], [0], [0], [1], [0, 0, 1, 1], [], []>} : vector<4x32xf32>, vector<32x128xf32>, vector<4x128xf32> -> vector<4x128xf32>
    %212 = arith.addf %210, %211 : vector<4x128xf32>
    %213 = arith.negf %212 : vector<4x128xf32>
    %214 = math.exp %213 : vector<4x128xf32>
    %cst_38 = arith.constant 1.000000e+00 : f32
    %215 = vector.broadcast %cst_38 : f32 to vector<4x128xf32>
    %216 = arith.addf %215, %214 : vector<4x128xf32>
    %217 = arith.divf %215, %216 : vector<4x128xf32>
    %218 = vector.extract_strided_slice %217 {offsets = [0, 0], sizes = [4, 32], strides = [1, 1]} : vector<4x128xf32> to vector<4x32xf32>
    %219 = vector.extract_strided_slice %217 {offsets = [0, 32], sizes = [4, 32], strides = [1, 1]} : vector<4x128xf32> to vector<4x32xf32>
    %220 = vector.extract_strided_slice %217 {offsets = [0, 96], sizes = [4, 32], strides = [1, 1]} : vector<4x128xf32> to vector<4x32xf32>
    %221 = vector.extract_strided_slice %212 {offsets = [0, 64], sizes = [4, 32], strides = [1, 1]} : vector<4x128xf32> to vector<4x32xf32>
    %222 = math.tanh %221 : vector<4x32xf32>
    %223 = arith.mulf %219, %189 : vector<4x32xf32>
    %224 = arith.mulf %218, %222 : vector<4x32xf32>
    %225 = arith.addf %223, %224 : vector<4x32xf32>
    %226 = math.tanh %225 : vector<4x32xf32>
    %227 = arith.mulf %220, %226 : vector<4x32xf32>
    %228 = vector.extract_strided_slice %21 {offsets = [0, 128], sizes = [4, 128], strides = [1, 1]} : vector<4x256xf32> to vector<4x128xf32>
    %cst_39 = arith.constant dense<0.000000e+00> : vector<4x128xf32>
    %229 = tpu.matmul %209, %28, %cst_39 {dimension_numbers = #tpu.dot_dimension_numbers<[1], [0], [0], [1], [0, 0, 1, 1], [], []>} : vector<4x32xf32>, vector<32x128xf32>, vector<4x128xf32> -> vector<4x128xf32>
    %230 = arith.addf %228, %229 : vector<4x128xf32>
    %231 = arith.negf %230 : vector<4x128xf32>
    %232 = math.exp %231 : vector<4x128xf32>
    %cst_40 = arith.constant 1.000000e+00 : f32
    %233 = vector.broadcast %cst_40 : f32 to vector<4x128xf32>
    %234 = arith.addf %233, %232 : vector<4x128xf32>
    %235 = arith.divf %233, %234 : vector<4x128xf32>
    %236 = vector.extract_strided_slice %235 {offsets = [0, 0], sizes = [4, 32], strides = [1, 1]} : vector<4x128xf32> to vector<4x32xf32>
    %237 = vector.extract_strided_slice %235 {offsets = [0, 32], sizes = [4, 32], strides = [1, 1]} : vector<4x128xf32> to vector<4x32xf32>
    %238 = vector.extract_strided_slice %235 {offsets = [0, 96], sizes = [4, 32], strides = [1, 1]} : vector<4x128xf32> to vector<4x32xf32>
    %239 = vector.extract_strided_slice %230 {offsets = [0, 64], sizes = [4, 32], strides = [1, 1]} : vector<4x128xf32> to vector<4x32xf32>
    %240 = math.tanh %239 : vector<4x32xf32>
    %241 = arith.mulf %237, %207 : vector<4x32xf32>
    %242 = arith.mulf %236, %240 : vector<4x32xf32>
    %243 = arith.addf %241, %242 : vector<4x32xf32>
    %244 = math.tanh %243 : vector<4x32xf32>
    %245 = arith.mulf %238, %244 : vector<4x32xf32>
    %246 = vector.extract_strided_slice %25 {offsets = [0, 0], sizes = [4, 128], strides = [1, 1]} : vector<4x256xf32> to vector<4x128xf32>
    %cst_41 = arith.constant dense<0.000000e+00> : vector<4x128xf32>
    %247 = tpu.matmul %227, %27, %cst_41 {dimension_numbers = #tpu.dot_dimension_numbers<[1], [0], [0], [1], [0, 0, 1, 1], [], []>} : vector<4x32xf32>, vector<32x128xf32>, vector<4x128xf32> -> vector<4x128xf32>
    %248 = arith.addf %246, %247 : vector<4x128xf32>
    %249 = arith.negf %248 : vector<4x128xf32>
    %250 = math.exp %249 : vector<4x128xf32>
    %cst_42 = arith.constant 1.000000e+00 : f32
    %251 = vector.broadcast %cst_42 : f32 to vector<4x128xf32>
    %252 = arith.addf %251, %250 : vector<4x128xf32>
    %253 = arith.divf %251, %252 : vector<4x128xf32>
    %254 = vector.extract_strided_slice %253 {offsets = [0, 0], sizes = [4, 32], strides = [1, 1]} : vector<4x128xf32> to vector<4x32xf32>
    %255 = vector.extract_strided_slice %253 {offsets = [0, 32], sizes = [4, 32], strides = [1, 1]} : vector<4x128xf32> to vector<4x32xf32>
    %256 = vector.extract_strided_slice %253 {offsets = [0, 96], sizes = [4, 32], strides = [1, 1]} : vector<4x128xf32> to vector<4x32xf32>
    %257 = vector.extract_strided_slice %248 {offsets = [0, 64], sizes = [4, 32], strides = [1, 1]} : vector<4x128xf32> to vector<4x32xf32>
    %258 = math.tanh %257 : vector<4x32xf32>
    %259 = arith.mulf %255, %225 : vector<4x32xf32>
    %260 = arith.mulf %254, %258 : vector<4x32xf32>
    %261 = arith.addf %259, %260 : vector<4x32xf32>
    %262 = math.tanh %261 : vector<4x32xf32>
    %263 = arith.mulf %256, %262 : vector<4x32xf32>
    %264 = vector.extract_strided_slice %20 {offsets = [0, 128], sizes = [4, 128], strides = [1, 1]} : vector<4x256xf32> to vector<4x128xf32>
    %cst_43 = arith.constant dense<0.000000e+00> : vector<4x128xf32>
    %265 = tpu.matmul %245, %28, %cst_43 {dimension_numbers = #tpu.dot_dimension_numbers<[1], [0], [0], [1], [0, 0, 1, 1], [], []>} : vector<4x32xf32>, vector<32x128xf32>, vector<4x128xf32> -> vector<4x128xf32>
    %266 = arith.addf %264, %265 : vector<4x128xf32>
    %267 = arith.negf %266 : vector<4x128xf32>
    %268 = math.exp %267 : vector<4x128xf32>
    %cst_44 = arith.constant 1.000000e+00 : f32
    %269 = vector.broadcast %cst_44 : f32 to vector<4x128xf32>
    %270 = arith.addf %269, %268 : vector<4x128xf32>
    %271 = arith.divf %269, %270 : vector<4x128xf32>
    %272 = vector.extract_strided_slice %271 {offsets = [0, 0], sizes = [4, 32], strides = [1, 1]} : vector<4x128xf32> to vector<4x32xf32>
    %273 = vector.extract_strided_slice %271 {offsets = [0, 32], sizes = [4, 32], strides = [1, 1]} : vector<4x128xf32> to vector<4x32xf32>
    %274 = vector.extract_strided_slice %271 {offsets = [0, 96], sizes = [4, 32], strides = [1, 1]} : vector<4x128xf32> to vector<4x32xf32>
    %275 = vector.extract_strided_slice %266 {offsets = [0, 64], sizes = [4, 32], strides = [1, 1]} : vector<4x128xf32> to vector<4x32xf32>
    %276 = math.tanh %275 : vector<4x32xf32>
    %277 = arith.mulf %273, %243 : vector<4x32xf32>
    %278 = arith.mulf %272, %276 : vector<4x32xf32>
    %279 = arith.addf %277, %278 : vector<4x32xf32>
    %280 = math.tanh %279 : vector<4x32xf32>
    %281 = arith.mulf %274, %280 : vector<4x32xf32>
    %282 = vector.extract_strided_slice %26 {offsets = [0, 0], sizes = [4, 128], strides = [1, 1]} : vector<4x256xf32> to vector<4x128xf32>
    %cst_45 = arith.constant dense<0.000000e+00> : vector<4x128xf32>
    %283 = tpu.matmul %263, %27, %cst_45 {dimension_numbers = #tpu.dot_dimension_numbers<[1], [0], [0], [1], [0, 0, 1, 1], [], []>} : vector<4x32xf32>, vector<32x128xf32>, vector<4x128xf32> -> vector<4x128xf32>
    %284 = arith.addf %282, %283 : vector<4x128xf32>
    %285 = arith.negf %284 : vector<4x128xf32>
    %286 = math.exp %285 : vector<4x128xf32>
    %cst_46 = arith.constant 1.000000e+00 : f32
    %287 = vector.broadcast %cst_46 : f32 to vector<4x128xf32>
    %288 = arith.addf %287, %286 : vector<4x128xf32>
    %289 = arith.divf %287, %288 : vector<4x128xf32>
    %290 = vector.extract_strided_slice %289 {offsets = [0, 0], sizes = [4, 32], strides = [1, 1]} : vector<4x128xf32> to vector<4x32xf32>
    %291 = vector.extract_strided_slice %289 {offsets = [0, 32], sizes = [4, 32], strides = [1, 1]} : vector<4x128xf32> to vector<4x32xf32>
    %292 = vector.extract_strided_slice %289 {offsets = [0, 96], sizes = [4, 32], strides = [1, 1]} : vector<4x128xf32> to vector<4x32xf32>
    %293 = vector.extract_strided_slice %284 {offsets = [0, 64], sizes = [4, 32], strides = [1, 1]} : vector<4x128xf32> to vector<4x32xf32>
    %294 = math.tanh %293 : vector<4x32xf32>
    %295 = arith.mulf %291, %261 : vector<4x32xf32>
    %296 = arith.mulf %290, %294 : vector<4x32xf32>
    %297 = arith.addf %295, %296 : vector<4x32xf32>
    %298 = math.tanh %297 : vector<4x32xf32>
    %299 = arith.mulf %292, %298 : vector<4x32xf32>
    %300 = vector.extract_strided_slice %19 {offsets = [0, 128], sizes = [4, 128], strides = [1, 1]} : vector<4x256xf32> to vector<4x128xf32>
    %cst_47 = arith.constant dense<0.000000e+00> : vector<4x128xf32>
    %301 = tpu.matmul %281, %28, %cst_47 {dimension_numbers = #tpu.dot_dimension_numbers<[1], [0], [0], [1], [0, 0, 1, 1], [], []>} : vector<4x32xf32>, vector<32x128xf32>, vector<4x128xf32> -> vector<4x128xf32>
    %302 = arith.addf %300, %301 : vector<4x128xf32>
    %303 = arith.negf %302 : vector<4x128xf32>
    %304 = math.exp %303 : vector<4x128xf32>
    %cst_48 = arith.constant 1.000000e+00 : f32
    %305 = vector.broadcast %cst_48 : f32 to vector<4x128xf32>
    %306 = arith.addf %305, %304 : vector<4x128xf32>
    %307 = arith.divf %305, %306 : vector<4x128xf32>
    %308 = vector.extract_strided_slice %307 {offsets = [0, 0], sizes = [4, 32], strides = [1, 1]} : vector<4x128xf32> to vector<4x32xf32>
    %309 = vector.extract_strided_slice %307 {offsets = [0, 32], sizes = [4, 32], strides = [1, 1]} : vector<4x128xf32> to vector<4x32xf32>
    %310 = vector.extract_strided_slice %307 {offsets = [0, 96], sizes = [4, 32], strides = [1, 1]} : vector<4x128xf32> to vector<4x32xf32>
    %311 = vector.extract_strided_slice %302 {offsets = [0, 64], sizes = [4, 32], strides = [1, 1]} : vector<4x128xf32> to vector<4x32xf32>
    %312 = math.tanh %311 : vector<4x32xf32>
    %313 = arith.mulf %309, %279 : vector<4x32xf32>
    %314 = arith.mulf %308, %312 : vector<4x32xf32>
    %315 = arith.addf %313, %314 : vector<4x32xf32>
    %316 = math.tanh %315 : vector<4x32xf32>
    %317 = arith.mulf %310, %316 : vector<4x32xf32>
    %318 = tpu.concatenate %47, %317 in 1 : vector<4x32xf32>, vector<4x32xf32> -> vector<4x64xf32>
    %319 = tpu.concatenate %83, %281 in 1 : vector<4x32xf32>, vector<4x32xf32> -> vector<4x64xf32>
    %320 = tpu.concatenate %119, %245 in 1 : vector<4x32xf32>, vector<4x32xf32> -> vector<4x64xf32>
    %321 = tpu.concatenate %155, %209 in 1 : vector<4x32xf32>, vector<4x32xf32> -> vector<4x64xf32>
    %322 = tpu.concatenate %191, %173 in 1 : vector<4x32xf32>, vector<4x32xf32> -> vector<4x64xf32>
    %323 = tpu.concatenate %227, %137 in 1 : vector<4x32xf32>, vector<4x32xf32> -> vector<4x64xf32>
    %324 = tpu.concatenate %263, %101 in 1 : vector<4x32xf32>, vector<4x32xf32> -> vector<4x64xf32>
    %325 = tpu.concatenate %299, %65 in 1 : vector<4x32xf32>, vector<4x32xf32> -> vector<4x64xf32>
    %326 = vector.extract_strided_slice %318 {offsets = [0, 0], sizes = [1, 64], strides = [1, 1]} : vector<4x64xf32> to vector<1x64xf32>
    %327 = vector.extract_strided_slice %319 {offsets = [0, 0], sizes = [1, 64], strides = [1, 1]} : vector<4x64xf32> to vector<1x64xf32>
    %328 = vector.extract_strided_slice %320 {offsets = [0, 0], sizes = [1, 64], strides = [1, 1]} : vector<4x64xf32> to vector<1x64xf32>
    %329 = vector.extract_strided_slice %321 {offsets = [0, 0], sizes = [1, 64], strides = [1, 1]} : vector<4x64xf32> to vector<1x64xf32>
    %330 = vector.extract_strided_slice %322 {offsets = [0, 0], sizes = [1, 64], strides = [1, 1]} : vector<4x64xf32> to vector<1x64xf32>
    %331 = vector.extract_strided_slice %323 {offsets = [0, 0], sizes = [1, 64], strides = [1, 1]} : vector<4x64xf32> to vector<1x64xf32>
    %332 = vector.extract_strided_slice %324 {offsets = [0, 0], sizes = [1, 64], strides = [1, 1]} : vector<4x64xf32> to vector<1x64xf32>
    %333 = vector.extract_strided_slice %325 {offsets = [0, 0], sizes = [1, 64], strides = [1, 1]} : vector<4x64xf32> to vector<1x64xf32>
    %334 = tpu.concatenate %326, %327, %328, %329, %330, %331, %332, %333 in 0 : vector<1x64xf32>, vector<1x64xf32>, vector<1x64xf32>, vector<1x64xf32>, vector<1x64xf32>, vector<1x64xf32>, vector<1x64xf32>, vector<1x64xf32> -> vector<8x64xf32>
    %335 = vector.extract_strided_slice %318 {offsets = [1, 0], sizes = [1, 64], strides = [1, 1]} : vector<4x64xf32> to vector<1x64xf32>
    %336 = vector.extract_strided_slice %319 {offsets = [1, 0], sizes = [1, 64], strides = [1, 1]} : vector<4x64xf32> to vector<1x64xf32>
    %337 = vector.extract_strided_slice %320 {offsets = [1, 0], sizes = [1, 64], strides = [1, 1]} : vector<4x64xf32> to vector<1x64xf32>
    %338 = vector.extract_strided_slice %321 {offsets = [1, 0], sizes = [1, 64], strides = [1, 1]} : vector<4x64xf32> to vector<1x64xf32>
    %339 = vector.extract_strided_slice %322 {offsets = [1, 0], sizes = [1, 64], strides = [1, 1]} : vector<4x64xf32> to vector<1x64xf32>
    %340 = vector.extract_strided_slice %323 {offsets = [1, 0], sizes = [1, 64], strides = [1, 1]} : vector<4x64xf32> to vector<1x64xf32>
    %341 = vector.extract_strided_slice %324 {offsets = [1, 0], sizes = [1, 64], strides = [1, 1]} : vector<4x64xf32> to vector<1x64xf32>
    %342 = vector.extract_strided_slice %325 {offsets = [1, 0], sizes = [1, 64], strides = [1, 1]} : vector<4x64xf32> to vector<1x64xf32>
    %343 = tpu.concatenate %335, %336, %337, %338, %339, %340, %341, %342 in 0 : vector<1x64xf32>, vector<1x64xf32>, vector<1x64xf32>, vector<1x64xf32>, vector<1x64xf32>, vector<1x64xf32>, vector<1x64xf32>, vector<1x64xf32> -> vector<8x64xf32>
    %344 = vector.extract_strided_slice %318 {offsets = [2, 0], sizes = [1, 64], strides = [1, 1]} : vector<4x64xf32> to vector<1x64xf32>
    %345 = vector.extract_strided_slice %319 {offsets = [2, 0], sizes = [1, 64], strides = [1, 1]} : vector<4x64xf32> to vector<1x64xf32>
    %346 = vector.extract_strided_slice %320 {offsets = [2, 0], sizes = [1, 64], strides = [1, 1]} : vector<4x64xf32> to vector<1x64xf32>
    %347 = vector.extract_strided_slice %321 {offsets = [2, 0], sizes = [1, 64], strides = [1, 1]} : vector<4x64xf32> to vector<1x64xf32>
    %348 = vector.extract_strided_slice %322 {offsets = [2, 0], sizes = [1, 64], strides = [1, 1]} : vector<4x64xf32> to vector<1x64xf32>
    %349 = vector.extract_strided_slice %323 {offsets = [2, 0], sizes = [1, 64], strides = [1, 1]} : vector<4x64xf32> to vector<1x64xf32>
    %350 = vector.extract_strided_slice %324 {offsets = [2, 0], sizes = [1, 64], strides = [1, 1]} : vector<4x64xf32> to vector<1x64xf32>
    %351 = vector.extract_strided_slice %325 {offsets = [2, 0], sizes = [1, 64], strides = [1, 1]} : vector<4x64xf32> to vector<1x64xf32>
    %352 = tpu.concatenate %344, %345, %346, %347, %348, %349, %350, %351 in 0 : vector<1x64xf32>, vector<1x64xf32>, vector<1x64xf32>, vector<1x64xf32>, vector<1x64xf32>, vector<1x64xf32>, vector<1x64xf32>, vector<1x64xf32> -> vector<8x64xf32>
    %353 = vector.extract_strided_slice %318 {offsets = [3, 0], sizes = [1, 64], strides = [1, 1]} : vector<4x64xf32> to vector<1x64xf32>
    %354 = vector.extract_strided_slice %319 {offsets = [3, 0], sizes = [1, 64], strides = [1, 1]} : vector<4x64xf32> to vector<1x64xf32>
    %355 = vector.extract_strided_slice %320 {offsets = [3, 0], sizes = [1, 64], strides = [1, 1]} : vector<4x64xf32> to vector<1x64xf32>
    %356 = vector.extract_strided_slice %321 {offsets = [3, 0], sizes = [1, 64], strides = [1, 1]} : vector<4x64xf32> to vector<1x64xf32>
    %357 = vector.extract_strided_slice %322 {offsets = [3, 0], sizes = [1, 64], strides = [1, 1]} : vector<4x64xf32> to vector<1x64xf32>
    %358 = vector.extract_strided_slice %323 {offsets = [3, 0], sizes = [1, 64], strides = [1, 1]} : vector<4x64xf32> to vector<1x64xf32>
    %359 = vector.extract_strided_slice %324 {offsets = [3, 0], sizes = [1, 64], strides = [1, 1]} : vector<4x64xf32> to vector<1x64xf32>
    %360 = vector.extract_strided_slice %325 {offsets = [3, 0], sizes = [1, 64], strides = [1, 1]} : vector<4x64xf32> to vector<1x64xf32>
    %361 = tpu.concatenate %353, %354, %355, %356, %357, %358, %359, %360 in 0 : vector<1x64xf32>, vector<1x64xf32>, vector<1x64xf32>, vector<1x64xf32>, vector<1x64xf32>, vector<1x64xf32>, vector<1x64xf32>, vector<1x64xf32> -> vector<8x64xf32>
    %362 = vector.extract_strided_slice %5 {offsets = [0, 0], sizes = [1, 8], strides = [1, 1]} : vector<4x8xf32> to vector<1x8xf32>
    %363 = vector.extract_strided_slice %5 {offsets = [2, 0], sizes = [1, 8], strides = [1, 1]} : vector<4x8xf32> to vector<1x8xf32>
    %cst_49 = arith.constant dense<0.000000e+00> : vector<8x8xf32>
    %364 = tpu.matmul %334, %352, %cst_49 {dimension_numbers = #tpu.dot_dimension_numbers<[1], [1], [0], [0], [0, 0, 1, 0], [], []>} : vector<8x64xf32>, vector<8x64xf32>, vector<8x8xf32> -> vector<8x8xf32>
    %cst_50 = arith.constant dense<0.000000e+00> : vector<8x8xf32>
    %365 = tpu.matmul %352, %334, %cst_50 {dimension_numbers = #tpu.dot_dimension_numbers<[1], [1], [0], [0], [0, 0, 1, 0], [], []>} : vector<8x64xf32>, vector<8x64xf32>, vector<8x8xf32> -> vector<8x8xf32>
    %366 = vector.broadcast %363 : vector<1x8xf32> to vector<8x8xf32>
    %367 = arith.addf %364, %366 : vector<8x8xf32>
    %cst_51 = arith.constant dense<0xFF800000> : vector<8xf32>
    %368 = vector.multi_reduction <maximumf>, %367, %cst_51 [1] : vector<8x8xf32> to vector<8xf32>
    %cst_52 = arith.constant 0xFF800000 : f32
    %369 = vector.broadcast %cst_52 : f32 to vector<8xf32>
    %370 = arith.maximumf %369, %368 : vector<8xf32>
    %371 = vector.shape_cast %370 : vector<8xf32> to vector<8x1xf32>
    %372 = vector.broadcast %371 : vector<8x1xf32> to vector<8x8xf32>
    %373 = arith.subf %367, %372 : vector<8x8xf32>
    %374 = math.exp %373 : vector<8x8xf32>
    %cst_53 = arith.constant dense<0.000000e+00> : vector<8xf32>
    %375 = vector.multi_reduction <add>, %374, %cst_53 [1] : vector<8x8xf32> to vector<8xf32>
    %376 = vector.shape_cast %375 : vector<8xf32> to vector<8x1xf32>
    %377 = vector.broadcast %376 : vector<8x1xf32> to vector<8x8xf32>
    %378 = arith.divf %374, %377 : vector<8x8xf32>
    %cst_54 = arith.constant dense<0.000000e+00> : vector<8x64xf32>
    %379 = tpu.matmul %378, %352, %cst_54 {dimension_numbers = #tpu.dot_dimension_numbers<[1], [0], [0], [1], [0, 0, 1, 1], [], []>} : vector<8x8xf32>, vector<8x64xf32>, vector<8x64xf32> -> vector<8x64xf32>
    %380 = vector.broadcast %362 : vector<1x8xf32> to vector<8x8xf32>
    %381 = arith.addf %365, %380 : vector<8x8xf32>
    %cst_55 = arith.constant dense<0xFF800000> : vector<8xf32>
    %382 = vector.multi_reduction <maximumf>, %381, %cst_55 [1] : vector<8x8xf32> to vector<8xf32>
    %cst_56 = arith.constant 0xFF800000 : f32
    %383 = vector.broadcast %cst_56 : f32 to vector<8xf32>
    %384 = arith.maximumf %383, %382 : vector<8xf32>
    %385 = vector.shape_cast %384 : vector<8xf32> to vector<8x1xf32>
    %386 = vector.broadcast %385 : vector<8x1xf32> to vector<8x8xf32>
    %387 = arith.subf %381, %386 : vector<8x8xf32>
    %388 = math.exp %387 : vector<8x8xf32>
    %cst_57 = arith.constant dense<0.000000e+00> : vector<8xf32>
    %389 = vector.multi_reduction <add>, %388, %cst_57 [1] : vector<8x8xf32> to vector<8xf32>
    %390 = vector.shape_cast %389 : vector<8xf32> to vector<8x1xf32>
    %391 = vector.broadcast %390 : vector<8x1xf32> to vector<8x8xf32>
    %392 = arith.divf %388, %391 : vector<8x8xf32>
    %cst_58 = arith.constant dense<0.000000e+00> : vector<8x64xf32>
    %393 = tpu.matmul %392, %334, %cst_58 {dimension_numbers = #tpu.dot_dimension_numbers<[1], [0], [0], [1], [0, 0, 1, 1], [], []>} : vector<8x8xf32>, vector<8x64xf32>, vector<8x64xf32> -> vector<8x64xf32>
    %394 = arith.subf %334, %379 : vector<8x64xf32>
    %395 = arith.mulf %334, %379 : vector<8x64xf32>
    %396 = tpu.concatenate %334, %379, %394, %395 in 1 : vector<8x64xf32>, vector<8x64xf32>, vector<8x64xf32>, vector<8x64xf32> -> vector<8x256xf32>
    %397 = arith.subf %352, %393 : vector<8x64xf32>
    %398 = arith.mulf %352, %393 : vector<8x64xf32>
    %399 = tpu.concatenate %352, %393, %397, %398 in 1 : vector<8x64xf32>, vector<8x64xf32>, vector<8x64xf32>, vector<8x64xf32> -> vector<8x256xf32>
    %400 = vector.extract_strided_slice %5 {offsets = [1, 0], sizes = [1, 8], strides = [1, 1]} : vector<4x8xf32> to vector<1x8xf32>
    %401 = vector.extract_strided_slice %5 {offsets = [3, 0], sizes = [1, 8], strides = [1, 1]} : vector<4x8xf32> to vector<1x8xf32>
    %cst_59 = arith.constant dense<0.000000e+00> : vector<8x8xf32>
    %402 = tpu.matmul %343, %361, %cst_59 {dimension_numbers = #tpu.dot_dimension_numbers<[1], [1], [0], [0], [0, 0, 1, 0], [], []>} : vector<8x64xf32>, vector<8x64xf32>, vector<8x8xf32> -> vector<8x8xf32>
    %cst_60 = arith.constant dense<0.000000e+00> : vector<8x8xf32>
    %403 = tpu.matmul %361, %343, %cst_60 {dimension_numbers = #tpu.dot_dimension_numbers<[1], [1], [0], [0], [0, 0, 1, 0], [], []>} : vector<8x64xf32>, vector<8x64xf32>, vector<8x8xf32> -> vector<8x8xf32>
    %404 = vector.broadcast %401 : vector<1x8xf32> to vector<8x8xf32>
    %405 = arith.addf %402, %404 : vector<8x8xf32>
    %cst_61 = arith.constant dense<0xFF800000> : vector<8xf32>
    %406 = vector.multi_reduction <maximumf>, %405, %cst_61 [1] : vector<8x8xf32> to vector<8xf32>
    %cst_62 = arith.constant 0xFF800000 : f32
    %407 = vector.broadcast %cst_62 : f32 to vector<8xf32>
    %408 = arith.maximumf %407, %406 : vector<8xf32>
    %409 = vector.shape_cast %408 : vector<8xf32> to vector<8x1xf32>
    %410 = vector.broadcast %409 : vector<8x1xf32> to vector<8x8xf32>
    %411 = arith.subf %405, %410 : vector<8x8xf32>
    %412 = math.exp %411 : vector<8x8xf32>
    %cst_63 = arith.constant dense<0.000000e+00> : vector<8xf32>
    %413 = vector.multi_reduction <add>, %412, %cst_63 [1] : vector<8x8xf32> to vector<8xf32>
    %414 = vector.shape_cast %413 : vector<8xf32> to vector<8x1xf32>
    %415 = vector.broadcast %414 : vector<8x1xf32> to vector<8x8xf32>
    %416 = arith.divf %412, %415 : vector<8x8xf32>
    %cst_64 = arith.constant dense<0.000000e+00> : vector<8x64xf32>
    %417 = tpu.matmul %416, %361, %cst_64 {dimension_numbers = #tpu.dot_dimension_numbers<[1], [0], [0], [1], [0, 0, 1, 1], [], []>} : vector<8x8xf32>, vector<8x64xf32>, vector<8x64xf32> -> vector<8x64xf32>
    %418 = vector.broadcast %400 : vector<1x8xf32> to vector<8x8xf32>
    %419 = arith.addf %403, %418 : vector<8x8xf32>
    %cst_65 = arith.constant dense<0xFF800000> : vector<8xf32>
    %420 = vector.multi_reduction <maximumf>, %419, %cst_65 [1] : vector<8x8xf32> to vector<8xf32>
    %cst_66 = arith.constant 0xFF800000 : f32
    %421 = vector.broadcast %cst_66 : f32 to vector<8xf32>
    %422 = arith.maximumf %421, %420 : vector<8xf32>
    %423 = vector.shape_cast %422 : vector<8xf32> to vector<8x1xf32>
    %424 = vector.broadcast %423 : vector<8x1xf32> to vector<8x8xf32>
    %425 = arith.subf %419, %424 : vector<8x8xf32>
    %426 = math.exp %425 : vector<8x8xf32>
    %cst_67 = arith.constant dense<0.000000e+00> : vector<8xf32>
    %427 = vector.multi_reduction <add>, %426, %cst_67 [1] : vector<8x8xf32> to vector<8xf32>
    %428 = vector.shape_cast %427 : vector<8xf32> to vector<8x1xf32>
    %429 = vector.broadcast %428 : vector<8x1xf32> to vector<8x8xf32>
    %430 = arith.divf %426, %429 : vector<8x8xf32>
    %cst_68 = arith.constant dense<0.000000e+00> : vector<8x64xf32>
    %431 = tpu.matmul %430, %343, %cst_68 {dimension_numbers = #tpu.dot_dimension_numbers<[1], [0], [0], [1], [0, 0, 1, 1], [], []>} : vector<8x8xf32>, vector<8x64xf32>, vector<8x64xf32> -> vector<8x64xf32>
    %432 = arith.subf %343, %417 : vector<8x64xf32>
    %433 = arith.mulf %343, %417 : vector<8x64xf32>
    %434 = tpu.concatenate %343, %417, %432, %433 in 1 : vector<8x64xf32>, vector<8x64xf32>, vector<8x64xf32>, vector<8x64xf32> -> vector<8x256xf32>
    %435 = arith.subf %361, %431 : vector<8x64xf32>
    %436 = arith.mulf %361, %431 : vector<8x64xf32>
    %437 = tpu.concatenate %361, %431, %435, %436 in 1 : vector<8x64xf32>, vector<8x64xf32>, vector<8x64xf32>, vector<8x64xf32> -> vector<8x256xf32>
    %438 = tpu.concatenate %396, %434, %399, %437 in 0 : vector<8x256xf32>, vector<8x256xf32>, vector<8x256xf32>, vector<8x256xf32> -> vector<32x256xf32>
    %c0_69 = arith.constant 0 : index
    %c0_70 = arith.constant 0 : index
    %439 = vector.load %arg7[%c0_69, %c0_70] : memref<256x256xf32, #tpu.memory_space<vmem>>, vector<256x256xf32>
    %cst_71 = arith.constant dense<0.000000e+00> : vector<32x256xf32>
    %440 = tpu.matmul %438, %439, %cst_71 {dimension_numbers = #tpu.dot_dimension_numbers<[1], [0], [0], [1], [0, 0, 1, 1], [], []>} : vector<32x256xf32>, vector<256x256xf32>, vector<32x256xf32> -> vector<32x256xf32>
    %c0_72 = arith.constant 0 : index
    %c0_73 = arith.constant 0 : index
    %441 = vector.load %arg10[%c0_72, %c0_73] : memref<1x256xf32, #tpu.memory_space<vmem>>, vector<1x256xf32>
    %442 = vector.broadcast %441 : vector<1x256xf32> to vector<32x256xf32>
    %443 = arith.addf %440, %442 : vector<32x256xf32>
    %444 = vector.extract_strided_slice %443 {offsets = [0, 0], sizes = [1, 256], strides = [1, 1]} : vector<32x256xf32> to vector<1x256xf32>
    %445 = vector.extract_strided_slice %443 {offsets = [8, 0], sizes = [1, 256], strides = [1, 1]} : vector<32x256xf32> to vector<1x256xf32>
    %446 = vector.extract_strided_slice %443 {offsets = [16, 0], sizes = [1, 256], strides = [1, 1]} : vector<32x256xf32> to vector<1x256xf32>
    %447 = vector.extract_strided_slice %443 {offsets = [24, 0], sizes = [1, 256], strides = [1, 1]} : vector<32x256xf32> to vector<1x256xf32>
    %448 = tpu.concatenate %444, %445, %446, %447 in 0 : vector<1x256xf32>, vector<1x256xf32>, vector<1x256xf32>, vector<1x256xf32> -> vector<4x256xf32>
    %449 = vector.extract_strided_slice %443 {offsets = [1, 0], sizes = [1, 256], strides = [1, 1]} : vector<32x256xf32> to vector<1x256xf32>
    %450 = vector.extract_strided_slice %443 {offsets = [9, 0], sizes = [1, 256], strides = [1, 1]} : vector<32x256xf32> to vector<1x256xf32>
    %451 = vector.extract_strided_slice %443 {offsets = [17, 0], sizes = [1, 256], strides = [1, 1]} : vector<32x256xf32> to vector<1x256xf32>
    %452 = vector.extract_strided_slice %443 {offsets = [25, 0], sizes = [1, 256], strides = [1, 1]} : vector<32x256xf32> to vector<1x256xf32>
    %453 = tpu.concatenate %449, %450, %451, %452 in 0 : vector<1x256xf32>, vector<1x256xf32>, vector<1x256xf32>, vector<1x256xf32> -> vector<4x256xf32>
    %454 = vector.extract_strided_slice %443 {offsets = [2, 0], sizes = [1, 256], strides = [1, 1]} : vector<32x256xf32> to vector<1x256xf32>
    %455 = vector.extract_strided_slice %443 {offsets = [10, 0], sizes = [1, 256], strides = [1, 1]} : vector<32x256xf32> to vector<1x256xf32>
    %456 = vector.extract_strided_slice %443 {offsets = [18, 0], sizes = [1, 256], strides = [1, 1]} : vector<32x256xf32> to vector<1x256xf32>
    %457 = vector.extract_strided_slice %443 {offsets = [26, 0], sizes = [1, 256], strides = [1, 1]} : vector<32x256xf32> to vector<1x256xf32>
    %458 = tpu.concatenate %454, %455, %456, %457 in 0 : vector<1x256xf32>, vector<1x256xf32>, vector<1x256xf32>, vector<1x256xf32> -> vector<4x256xf32>
    %459 = vector.extract_strided_slice %443 {offsets = [3, 0], sizes = [1, 256], strides = [1, 1]} : vector<32x256xf32> to vector<1x256xf32>
    %460 = vector.extract_strided_slice %443 {offsets = [11, 0], sizes = [1, 256], strides = [1, 1]} : vector<32x256xf32> to vector<1x256xf32>
    %461 = vector.extract_strided_slice %443 {offsets = [19, 0], sizes = [1, 256], strides = [1, 1]} : vector<32x256xf32> to vector<1x256xf32>
    %462 = vector.extract_strided_slice %443 {offsets = [27, 0], sizes = [1, 256], strides = [1, 1]} : vector<32x256xf32> to vector<1x256xf32>
    %463 = tpu.concatenate %459, %460, %461, %462 in 0 : vector<1x256xf32>, vector<1x256xf32>, vector<1x256xf32>, vector<1x256xf32> -> vector<4x256xf32>
    %464 = vector.extract_strided_slice %443 {offsets = [4, 0], sizes = [1, 256], strides = [1, 1]} : vector<32x256xf32> to vector<1x256xf32>
    %465 = vector.extract_strided_slice %443 {offsets = [12, 0], sizes = [1, 256], strides = [1, 1]} : vector<32x256xf32> to vector<1x256xf32>
    %466 = vector.extract_strided_slice %443 {offsets = [20, 0], sizes = [1, 256], strides = [1, 1]} : vector<32x256xf32> to vector<1x256xf32>
    %467 = vector.extract_strided_slice %443 {offsets = [28, 0], sizes = [1, 256], strides = [1, 1]} : vector<32x256xf32> to vector<1x256xf32>
    %468 = tpu.concatenate %464, %465, %466, %467 in 0 : vector<1x256xf32>, vector<1x256xf32>, vector<1x256xf32>, vector<1x256xf32> -> vector<4x256xf32>
    %469 = vector.extract_strided_slice %443 {offsets = [5, 0], sizes = [1, 256], strides = [1, 1]} : vector<32x256xf32> to vector<1x256xf32>
    %470 = vector.extract_strided_slice %443 {offsets = [13, 0], sizes = [1, 256], strides = [1, 1]} : vector<32x256xf32> to vector<1x256xf32>
    %471 = vector.extract_strided_slice %443 {offsets = [21, 0], sizes = [1, 256], strides = [1, 1]} : vector<32x256xf32> to vector<1x256xf32>
    %472 = vector.extract_strided_slice %443 {offsets = [29, 0], sizes = [1, 256], strides = [1, 1]} : vector<32x256xf32> to vector<1x256xf32>
    %473 = tpu.concatenate %469, %470, %471, %472 in 0 : vector<1x256xf32>, vector<1x256xf32>, vector<1x256xf32>, vector<1x256xf32> -> vector<4x256xf32>
    %474 = vector.extract_strided_slice %443 {offsets = [6, 0], sizes = [1, 256], strides = [1, 1]} : vector<32x256xf32> to vector<1x256xf32>
    %475 = vector.extract_strided_slice %443 {offsets = [14, 0], sizes = [1, 256], strides = [1, 1]} : vector<32x256xf32> to vector<1x256xf32>
    %476 = vector.extract_strided_slice %443 {offsets = [22, 0], sizes = [1, 256], strides = [1, 1]} : vector<32x256xf32> to vector<1x256xf32>
    %477 = vector.extract_strided_slice %443 {offsets = [30, 0], sizes = [1, 256], strides = [1, 1]} : vector<32x256xf32> to vector<1x256xf32>
    %478 = tpu.concatenate %474, %475, %476, %477 in 0 : vector<1x256xf32>, vector<1x256xf32>, vector<1x256xf32>, vector<1x256xf32> -> vector<4x256xf32>
    %479 = vector.extract_strided_slice %443 {offsets = [7, 0], sizes = [1, 256], strides = [1, 1]} : vector<32x256xf32> to vector<1x256xf32>
    %480 = vector.extract_strided_slice %443 {offsets = [15, 0], sizes = [1, 256], strides = [1, 1]} : vector<32x256xf32> to vector<1x256xf32>
    %481 = vector.extract_strided_slice %443 {offsets = [23, 0], sizes = [1, 256], strides = [1, 1]} : vector<32x256xf32> to vector<1x256xf32>
    %482 = vector.extract_strided_slice %443 {offsets = [31, 0], sizes = [1, 256], strides = [1, 1]} : vector<32x256xf32> to vector<1x256xf32>
    %483 = tpu.concatenate %479, %480, %481, %482 in 0 : vector<1x256xf32>, vector<1x256xf32>, vector<1x256xf32>, vector<1x256xf32> -> vector<4x256xf32>
    %c0_74 = arith.constant 0 : index
    %c0_75 = arith.constant 0 : index
    %484 = vector.load %arg8[%c0_74, %c0_75] : memref<32x128xf32, #tpu.memory_space<vmem>>, vector<32x128xf32>
    %c0_76 = arith.constant 0 : index
    %c0_77 = arith.constant 0 : index
    %485 = vector.load %arg9[%c0_76, %c0_77] : memref<32x128xf32, #tpu.memory_space<vmem>>, vector<32x128xf32>
    %cst_78 = arith.constant 0.000000e+00 : f32
    %486 = vector.broadcast %cst_78 : f32 to vector<4x32xf32>
    %487 = vector.extract_strided_slice %448 {offsets = [0, 0], sizes = [4, 128], strides = [1, 1]} : vector<4x256xf32> to vector<4x128xf32>
    %cst_79 = arith.constant dense<0.000000e+00> : vector<4x128xf32>
    %488 = tpu.matmul %486, %484, %cst_79 {dimension_numbers = #tpu.dot_dimension_numbers<[1], [0], [0], [1], [0, 0, 1, 1], [], []>} : vector<4x32xf32>, vector<32x128xf32>, vector<4x128xf32> -> vector<4x128xf32>
    %489 = arith.addf %487, %488 : vector<4x128xf32>
    %490 = arith.negf %489 : vector<4x128xf32>
    %491 = math.exp %490 : vector<4x128xf32>
    %cst_80 = arith.constant 1.000000e+00 : f32
    %492 = vector.broadcast %cst_80 : f32 to vector<4x128xf32>
    %493 = arith.addf %492, %491 : vector<4x128xf32>
    %494 = arith.divf %492, %493 : vector<4x128xf32>
    %495 = vector.extract_strided_slice %494 {offsets = [0, 0], sizes = [4, 32], strides = [1, 1]} : vector<4x128xf32> to vector<4x32xf32>
    %496 = vector.extract_strided_slice %494 {offsets = [0, 32], sizes = [4, 32], strides = [1, 1]} : vector<4x128xf32> to vector<4x32xf32>
    %497 = vector.extract_strided_slice %494 {offsets = [0, 96], sizes = [4, 32], strides = [1, 1]} : vector<4x128xf32> to vector<4x32xf32>
    %498 = vector.extract_strided_slice %489 {offsets = [0, 64], sizes = [4, 32], strides = [1, 1]} : vector<4x128xf32> to vector<4x32xf32>
    %499 = math.tanh %498 : vector<4x32xf32>
    %500 = arith.mulf %496, %486 : vector<4x32xf32>
    %501 = arith.mulf %495, %499 : vector<4x32xf32>
    %502 = arith.addf %500, %501 : vector<4x32xf32>
    %503 = math.tanh %502 : vector<4x32xf32>
    %504 = arith.mulf %497, %503 : vector<4x32xf32>
    %505 = vector.extract_strided_slice %483 {offsets = [0, 128], sizes = [4, 128], strides = [1, 1]} : vector<4x256xf32> to vector<4x128xf32>
    %cst_81 = arith.constant dense<0.000000e+00> : vector<4x128xf32>
    %506 = tpu.matmul %486, %485, %cst_81 {dimension_numbers = #tpu.dot_dimension_numbers<[1], [0], [0], [1], [0, 0, 1, 1], [], []>} : vector<4x32xf32>, vector<32x128xf32>, vector<4x128xf32> -> vector<4x128xf32>
    %507 = arith.addf %505, %506 : vector<4x128xf32>
    %508 = arith.negf %507 : vector<4x128xf32>
    %509 = math.exp %508 : vector<4x128xf32>
    %cst_82 = arith.constant 1.000000e+00 : f32
    %510 = vector.broadcast %cst_82 : f32 to vector<4x128xf32>
    %511 = arith.addf %510, %509 : vector<4x128xf32>
    %512 = arith.divf %510, %511 : vector<4x128xf32>
    %513 = vector.extract_strided_slice %512 {offsets = [0, 0], sizes = [4, 32], strides = [1, 1]} : vector<4x128xf32> to vector<4x32xf32>
    %514 = vector.extract_strided_slice %512 {offsets = [0, 32], sizes = [4, 32], strides = [1, 1]} : vector<4x128xf32> to vector<4x32xf32>
    %515 = vector.extract_strided_slice %512 {offsets = [0, 96], sizes = [4, 32], strides = [1, 1]} : vector<4x128xf32> to vector<4x32xf32>
    %516 = vector.extract_strided_slice %507 {offsets = [0, 64], sizes = [4, 32], strides = [1, 1]} : vector<4x128xf32> to vector<4x32xf32>
    %517 = math.tanh %516 : vector<4x32xf32>
    %518 = arith.mulf %514, %486 : vector<4x32xf32>
    %519 = arith.mulf %513, %517 : vector<4x32xf32>
    %520 = arith.addf %518, %519 : vector<4x32xf32>
    %521 = math.tanh %520 : vector<4x32xf32>
    %522 = arith.mulf %515, %521 : vector<4x32xf32>
    %523 = vector.extract_strided_slice %453 {offsets = [0, 0], sizes = [4, 128], strides = [1, 1]} : vector<4x256xf32> to vector<4x128xf32>
    %cst_83 = arith.constant dense<0.000000e+00> : vector<4x128xf32>
    %524 = tpu.matmul %504, %484, %cst_83 {dimension_numbers = #tpu.dot_dimension_numbers<[1], [0], [0], [1], [0, 0, 1, 1], [], []>} : vector<4x32xf32>, vector<32x128xf32>, vector<4x128xf32> -> vector<4x128xf32>
    %525 = arith.addf %523, %524 : vector<4x128xf32>
    %526 = arith.negf %525 : vector<4x128xf32>
    %527 = math.exp %526 : vector<4x128xf32>
    %cst_84 = arith.constant 1.000000e+00 : f32
    %528 = vector.broadcast %cst_84 : f32 to vector<4x128xf32>
    %529 = arith.addf %528, %527 : vector<4x128xf32>
    %530 = arith.divf %528, %529 : vector<4x128xf32>
    %531 = vector.extract_strided_slice %530 {offsets = [0, 0], sizes = [4, 32], strides = [1, 1]} : vector<4x128xf32> to vector<4x32xf32>
    %532 = vector.extract_strided_slice %530 {offsets = [0, 32], sizes = [4, 32], strides = [1, 1]} : vector<4x128xf32> to vector<4x32xf32>
    %533 = vector.extract_strided_slice %530 {offsets = [0, 96], sizes = [4, 32], strides = [1, 1]} : vector<4x128xf32> to vector<4x32xf32>
    %534 = vector.extract_strided_slice %525 {offsets = [0, 64], sizes = [4, 32], strides = [1, 1]} : vector<4x128xf32> to vector<4x32xf32>
    %535 = math.tanh %534 : vector<4x32xf32>
    %536 = arith.mulf %532, %502 : vector<4x32xf32>
    %537 = arith.mulf %531, %535 : vector<4x32xf32>
    %538 = arith.addf %536, %537 : vector<4x32xf32>
    %539 = math.tanh %538 : vector<4x32xf32>
    %540 = arith.mulf %533, %539 : vector<4x32xf32>
    %541 = vector.extract_strided_slice %478 {offsets = [0, 128], sizes = [4, 128], strides = [1, 1]} : vector<4x256xf32> to vector<4x128xf32>
    %cst_85 = arith.constant dense<0.000000e+00> : vector<4x128xf32>
    %542 = tpu.matmul %522, %485, %cst_85 {dimension_numbers = #tpu.dot_dimension_numbers<[1], [0], [0], [1], [0, 0, 1, 1], [], []>} : vector<4x32xf32>, vector<32x128xf32>, vector<4x128xf32> -> vector<4x128xf32>
    %543 = arith.addf %541, %542 : vector<4x128xf32>
    %544 = arith.negf %543 : vector<4x128xf32>
    %545 = math.exp %544 : vector<4x128xf32>
    %cst_86 = arith.constant 1.000000e+00 : f32
    %546 = vector.broadcast %cst_86 : f32 to vector<4x128xf32>
    %547 = arith.addf %546, %545 : vector<4x128xf32>
    %548 = arith.divf %546, %547 : vector<4x128xf32>
    %549 = vector.extract_strided_slice %548 {offsets = [0, 0], sizes = [4, 32], strides = [1, 1]} : vector<4x128xf32> to vector<4x32xf32>
    %550 = vector.extract_strided_slice %548 {offsets = [0, 32], sizes = [4, 32], strides = [1, 1]} : vector<4x128xf32> to vector<4x32xf32>
    %551 = vector.extract_strided_slice %548 {offsets = [0, 96], sizes = [4, 32], strides = [1, 1]} : vector<4x128xf32> to vector<4x32xf32>
    %552 = vector.extract_strided_slice %543 {offsets = [0, 64], sizes = [4, 32], strides = [1, 1]} : vector<4x128xf32> to vector<4x32xf32>
    %553 = math.tanh %552 : vector<4x32xf32>
    %554 = arith.mulf %550, %520 : vector<4x32xf32>
    %555 = arith.mulf %549, %553 : vector<4x32xf32>
    %556 = arith.addf %554, %555 : vector<4x32xf32>
    %557 = math.tanh %556 : vector<4x32xf32>
    %558 = arith.mulf %551, %557 : vector<4x32xf32>
    %559 = vector.extract_strided_slice %458 {offsets = [0, 0], sizes = [4, 128], strides = [1, 1]} : vector<4x256xf32> to vector<4x128xf32>
    %cst_87 = arith.constant dense<0.000000e+00> : vector<4x128xf32>
    %560 = tpu.matmul %540, %484, %cst_87 {dimension_numbers = #tpu.dot_dimension_numbers<[1], [0], [0], [1], [0, 0, 1, 1], [], []>} : vector<4x32xf32>, vector<32x128xf32>, vector<4x128xf32> -> vector<4x128xf32>
    %561 = arith.addf %559, %560 : vector<4x128xf32>
    %562 = arith.negf %561 : vector<4x128xf32>
    %563 = math.exp %562 : vector<4x128xf32>
    %cst_88 = arith.constant 1.000000e+00 : f32
    %564 = vector.broadcast %cst_88 : f32 to vector<4x128xf32>
    %565 = arith.addf %564, %563 : vector<4x128xf32>
    %566 = arith.divf %564, %565 : vector<4x128xf32>
    %567 = vector.extract_strided_slice %566 {offsets = [0, 0], sizes = [4, 32], strides = [1, 1]} : vector<4x128xf32> to vector<4x32xf32>
    %568 = vector.extract_strided_slice %566 {offsets = [0, 32], sizes = [4, 32], strides = [1, 1]} : vector<4x128xf32> to vector<4x32xf32>
    %569 = vector.extract_strided_slice %566 {offsets = [0, 96], sizes = [4, 32], strides = [1, 1]} : vector<4x128xf32> to vector<4x32xf32>
    %570 = vector.extract_strided_slice %561 {offsets = [0, 64], sizes = [4, 32], strides = [1, 1]} : vector<4x128xf32> to vector<4x32xf32>
    %571 = math.tanh %570 : vector<4x32xf32>
    %572 = arith.mulf %568, %538 : vector<4x32xf32>
    %573 = arith.mulf %567, %571 : vector<4x32xf32>
    %574 = arith.addf %572, %573 : vector<4x32xf32>
    %575 = math.tanh %574 : vector<4x32xf32>
    %576 = arith.mulf %569, %575 : vector<4x32xf32>
    %577 = vector.extract_strided_slice %473 {offsets = [0, 128], sizes = [4, 128], strides = [1, 1]} : vector<4x256xf32> to vector<4x128xf32>
    %cst_89 = arith.constant dense<0.000000e+00> : vector<4x128xf32>
    %578 = tpu.matmul %558, %485, %cst_89 {dimension_numbers = #tpu.dot_dimension_numbers<[1], [0], [0], [1], [0, 0, 1, 1], [], []>} : vector<4x32xf32>, vector<32x128xf32>, vector<4x128xf32> -> vector<4x128xf32>
    %579 = arith.addf %577, %578 : vector<4x128xf32>
    %580 = arith.negf %579 : vector<4x128xf32>
    %581 = math.exp %580 : vector<4x128xf32>
    %cst_90 = arith.constant 1.000000e+00 : f32
    %582 = vector.broadcast %cst_90 : f32 to vector<4x128xf32>
    %583 = arith.addf %582, %581 : vector<4x128xf32>
    %584 = arith.divf %582, %583 : vector<4x128xf32>
    %585 = vector.extract_strided_slice %584 {offsets = [0, 0], sizes = [4, 32], strides = [1, 1]} : vector<4x128xf32> to vector<4x32xf32>
    %586 = vector.extract_strided_slice %584 {offsets = [0, 32], sizes = [4, 32], strides = [1, 1]} : vector<4x128xf32> to vector<4x32xf32>
    %587 = vector.extract_strided_slice %584 {offsets = [0, 96], sizes = [4, 32], strides = [1, 1]} : vector<4x128xf32> to vector<4x32xf32>
    %588 = vector.extract_strided_slice %579 {offsets = [0, 64], sizes = [4, 32], strides = [1, 1]} : vector<4x128xf32> to vector<4x32xf32>
    %589 = math.tanh %588 : vector<4x32xf32>
    %590 = arith.mulf %586, %556 : vector<4x32xf32>
    %591 = arith.mulf %585, %589 : vector<4x32xf32>
    %592 = arith.addf %590, %591 : vector<4x32xf32>
    %593 = math.tanh %592 : vector<4x32xf32>
    %594 = arith.mulf %587, %593 : vector<4x32xf32>
    %595 = vector.extract_strided_slice %463 {offsets = [0, 0], sizes = [4, 128], strides = [1, 1]} : vector<4x256xf32> to vector<4x128xf32>
    %cst_91 = arith.constant dense<0.000000e+00> : vector<4x128xf32>
    %596 = tpu.matmul %576, %484, %cst_91 {dimension_numbers = #tpu.dot_dimension_numbers<[1], [0], [0], [1], [0, 0, 1, 1], [], []>} : vector<4x32xf32>, vector<32x128xf32>, vector<4x128xf32> -> vector<4x128xf32>
    %597 = arith.addf %595, %596 : vector<4x128xf32>
    %598 = arith.negf %597 : vector<4x128xf32>
    %599 = math.exp %598 : vector<4x128xf32>
    %cst_92 = arith.constant 1.000000e+00 : f32
    %600 = vector.broadcast %cst_92 : f32 to vector<4x128xf32>
    %601 = arith.addf %600, %599 : vector<4x128xf32>
    %602 = arith.divf %600, %601 : vector<4x128xf32>
    %603 = vector.extract_strided_slice %602 {offsets = [0, 0], sizes = [4, 32], strides = [1, 1]} : vector<4x128xf32> to vector<4x32xf32>
    %604 = vector.extract_strided_slice %602 {offsets = [0, 32], sizes = [4, 32], strides = [1, 1]} : vector<4x128xf32> to vector<4x32xf32>
    %605 = vector.extract_strided_slice %602 {offsets = [0, 96], sizes = [4, 32], strides = [1, 1]} : vector<4x128xf32> to vector<4x32xf32>
    %606 = vector.extract_strided_slice %597 {offsets = [0, 64], sizes = [4, 32], strides = [1, 1]} : vector<4x128xf32> to vector<4x32xf32>
    %607 = math.tanh %606 : vector<4x32xf32>
    %608 = arith.mulf %604, %574 : vector<4x32xf32>
    %609 = arith.mulf %603, %607 : vector<4x32xf32>
    %610 = arith.addf %608, %609 : vector<4x32xf32>
    %611 = math.tanh %610 : vector<4x32xf32>
    %612 = arith.mulf %605, %611 : vector<4x32xf32>
    %613 = vector.extract_strided_slice %468 {offsets = [0, 128], sizes = [4, 128], strides = [1, 1]} : vector<4x256xf32> to vector<4x128xf32>
    %cst_93 = arith.constant dense<0.000000e+00> : vector<4x128xf32>
    %614 = tpu.matmul %594, %485, %cst_93 {dimension_numbers = #tpu.dot_dimension_numbers<[1], [0], [0], [1], [0, 0, 1, 1], [], []>} : vector<4x32xf32>, vector<32x128xf32>, vector<4x128xf32> -> vector<4x128xf32>
    %615 = arith.addf %613, %614 : vector<4x128xf32>
    %616 = arith.negf %615 : vector<4x128xf32>
    %617 = math.exp %616 : vector<4x128xf32>
    %cst_94 = arith.constant 1.000000e+00 : f32
    %618 = vector.broadcast %cst_94 : f32 to vector<4x128xf32>
    %619 = arith.addf %618, %617 : vector<4x128xf32>
    %620 = arith.divf %618, %619 : vector<4x128xf32>
    %621 = vector.extract_strided_slice %620 {offsets = [0, 0], sizes = [4, 32], strides = [1, 1]} : vector<4x128xf32> to vector<4x32xf32>
    %622 = vector.extract_strided_slice %620 {offsets = [0, 32], sizes = [4, 32], strides = [1, 1]} : vector<4x128xf32> to vector<4x32xf32>
    %623 = vector.extract_strided_slice %620 {offsets = [0, 96], sizes = [4, 32], strides = [1, 1]} : vector<4x128xf32> to vector<4x32xf32>
    %624 = vector.extract_strided_slice %615 {offsets = [0, 64], sizes = [4, 32], strides = [1, 1]} : vector<4x128xf32> to vector<4x32xf32>
    %625 = math.tanh %624 : vector<4x32xf32>
    %626 = arith.mulf %622, %592 : vector<4x32xf32>
    %627 = arith.mulf %621, %625 : vector<4x32xf32>
    %628 = arith.addf %626, %627 : vector<4x32xf32>
    %629 = math.tanh %628 : vector<4x32xf32>
    %630 = arith.mulf %623, %629 : vector<4x32xf32>
    %631 = vector.extract_strided_slice %468 {offsets = [0, 0], sizes = [4, 128], strides = [1, 1]} : vector<4x256xf32> to vector<4x128xf32>
    %cst_95 = arith.constant dense<0.000000e+00> : vector<4x128xf32>
    %632 = tpu.matmul %612, %484, %cst_95 {dimension_numbers = #tpu.dot_dimension_numbers<[1], [0], [0], [1], [0, 0, 1, 1], [], []>} : vector<4x32xf32>, vector<32x128xf32>, vector<4x128xf32> -> vector<4x128xf32>
    %633 = arith.addf %631, %632 : vector<4x128xf32>
    %634 = arith.negf %633 : vector<4x128xf32>
    %635 = math.exp %634 : vector<4x128xf32>
    %cst_96 = arith.constant 1.000000e+00 : f32
    %636 = vector.broadcast %cst_96 : f32 to vector<4x128xf32>
    %637 = arith.addf %636, %635 : vector<4x128xf32>
    %638 = arith.divf %636, %637 : vector<4x128xf32>
    %639 = vector.extract_strided_slice %638 {offsets = [0, 0], sizes = [4, 32], strides = [1, 1]} : vector<4x128xf32> to vector<4x32xf32>
    %640 = vector.extract_strided_slice %638 {offsets = [0, 32], sizes = [4, 32], strides = [1, 1]} : vector<4x128xf32> to vector<4x32xf32>
    %641 = vector.extract_strided_slice %638 {offsets = [0, 96], sizes = [4, 32], strides = [1, 1]} : vector<4x128xf32> to vector<4x32xf32>
    %642 = vector.extract_strided_slice %633 {offsets = [0, 64], sizes = [4, 32], strides = [1, 1]} : vector<4x128xf32> to vector<4x32xf32>
    %643 = math.tanh %642 : vector<4x32xf32>
    %644 = arith.mulf %640, %610 : vector<4x32xf32>
    %645 = arith.mulf %639, %643 : vector<4x32xf32>
    %646 = arith.addf %644, %645 : vector<4x32xf32>
    %647 = math.tanh %646 : vector<4x32xf32>
    %648 = arith.mulf %641, %647 : vector<4x32xf32>
    %649 = vector.extract_strided_slice %463 {offsets = [0, 128], sizes = [4, 128], strides = [1, 1]} : vector<4x256xf32> to vector<4x128xf32>
    %cst_97 = arith.constant dense<0.000000e+00> : vector<4x128xf32>
    %650 = tpu.matmul %630, %485, %cst_97 {dimension_numbers = #tpu.dot_dimension_numbers<[1], [0], [0], [1], [0, 0, 1, 1], [], []>} : vector<4x32xf32>, vector<32x128xf32>, vector<4x128xf32> -> vector<4x128xf32>
    %651 = arith.addf %649, %650 : vector<4x128xf32>
    %652 = arith.negf %651 : vector<4x128xf32>
    %653 = math.exp %652 : vector<4x128xf32>
    %cst_98 = arith.constant 1.000000e+00 : f32
    %654 = vector.broadcast %cst_98 : f32 to vector<4x128xf32>
    %655 = arith.addf %654, %653 : vector<4x128xf32>
    %656 = arith.divf %654, %655 : vector<4x128xf32>
    %657 = vector.extract_strided_slice %656 {offsets = [0, 0], sizes = [4, 32], strides = [1, 1]} : vector<4x128xf32> to vector<4x32xf32>
    %658 = vector.extract_strided_slice %656 {offsets = [0, 32], sizes = [4, 32], strides = [1, 1]} : vector<4x128xf32> to vector<4x32xf32>
    %659 = vector.extract_strided_slice %656 {offsets = [0, 96], sizes = [4, 32], strides = [1, 1]} : vector<4x128xf32> to vector<4x32xf32>
    %660 = vector.extract_strided_slice %651 {offsets = [0, 64], sizes = [4, 32], strides = [1, 1]} : vector<4x128xf32> to vector<4x32xf32>
    %661 = math.tanh %660 : vector<4x32xf32>
    %662 = arith.mulf %658, %628 : vector<4x32xf32>
    %663 = arith.mulf %657, %661 : vector<4x32xf32>
    %664 = arith.addf %662, %663 : vector<4x32xf32>
    %665 = math.tanh %664 : vector<4x32xf32>
    %666 = arith.mulf %659, %665 : vector<4x32xf32>
    %667 = vector.extract_strided_slice %473 {offsets = [0, 0], sizes = [4, 128], strides = [1, 1]} : vector<4x256xf32> to vector<4x128xf32>
    %cst_99 = arith.constant dense<0.000000e+00> : vector<4x128xf32>
    %668 = tpu.matmul %648, %484, %cst_99 {dimension_numbers = #tpu.dot_dimension_numbers<[1], [0], [0], [1], [0, 0, 1, 1], [], []>} : vector<4x32xf32>, vector<32x128xf32>, vector<4x128xf32> -> vector<4x128xf32>
    %669 = arith.addf %667, %668 : vector<4x128xf32>
    %670 = arith.negf %669 : vector<4x128xf32>
    %671 = math.exp %670 : vector<4x128xf32>
    %cst_100 = arith.constant 1.000000e+00 : f32
    %672 = vector.broadcast %cst_100 : f32 to vector<4x128xf32>
    %673 = arith.addf %672, %671 : vector<4x128xf32>
    %674 = arith.divf %672, %673 : vector<4x128xf32>
    %675 = vector.extract_strided_slice %674 {offsets = [0, 0], sizes = [4, 32], strides = [1, 1]} : vector<4x128xf32> to vector<4x32xf32>
    %676 = vector.extract_strided_slice %674 {offsets = [0, 32], sizes = [4, 32], strides = [1, 1]} : vector<4x128xf32> to vector<4x32xf32>
    %677 = vector.extract_strided_slice %674 {offsets = [0, 96], sizes = [4, 32], strides = [1, 1]} : vector<4x128xf32> to vector<4x32xf32>
    %678 = vector.extract_strided_slice %669 {offsets = [0, 64], sizes = [4, 32], strides = [1, 1]} : vector<4x128xf32> to vector<4x32xf32>
    %679 = math.tanh %678 : vector<4x32xf32>
    %680 = arith.mulf %676, %646 : vector<4x32xf32>
    %681 = arith.mulf %675, %679 : vector<4x32xf32>
    %682 = arith.addf %680, %681 : vector<4x32xf32>
    %683 = math.tanh %682 : vector<4x32xf32>
    %684 = arith.mulf %677, %683 : vector<4x32xf32>
    %685 = vector.extract_strided_slice %458 {offsets = [0, 128], sizes = [4, 128], strides = [1, 1]} : vector<4x256xf32> to vector<4x128xf32>
    %cst_101 = arith.constant dense<0.000000e+00> : vector<4x128xf32>
    %686 = tpu.matmul %666, %485, %cst_101 {dimension_numbers = #tpu.dot_dimension_numbers<[1], [0], [0], [1], [0, 0, 1, 1], [], []>} : vector<4x32xf32>, vector<32x128xf32>, vector<4x128xf32> -> vector<4x128xf32>
    %687 = arith.addf %685, %686 : vector<4x128xf32>
    %688 = arith.negf %687 : vector<4x128xf32>
    %689 = math.exp %688 : vector<4x128xf32>
    %cst_102 = arith.constant 1.000000e+00 : f32
    %690 = vector.broadcast %cst_102 : f32 to vector<4x128xf32>
    %691 = arith.addf %690, %689 : vector<4x128xf32>
    %692 = arith.divf %690, %691 : vector<4x128xf32>
    %693 = vector.extract_strided_slice %692 {offsets = [0, 0], sizes = [4, 32], strides = [1, 1]} : vector<4x128xf32> to vector<4x32xf32>
    %694 = vector.extract_strided_slice %692 {offsets = [0, 32], sizes = [4, 32], strides = [1, 1]} : vector<4x128xf32> to vector<4x32xf32>
    %695 = vector.extract_strided_slice %692 {offsets = [0, 96], sizes = [4, 32], strides = [1, 1]} : vector<4x128xf32> to vector<4x32xf32>
    %696 = vector.extract_strided_slice %687 {offsets = [0, 64], sizes = [4, 32], strides = [1, 1]} : vector<4x128xf32> to vector<4x32xf32>
    %697 = math.tanh %696 : vector<4x32xf32>
    %698 = arith.mulf %694, %664 : vector<4x32xf32>
    %699 = arith.mulf %693, %697 : vector<4x32xf32>
    %700 = arith.addf %698, %699 : vector<4x32xf32>
    %701 = math.tanh %700 : vector<4x32xf32>
    %702 = arith.mulf %695, %701 : vector<4x32xf32>
    %703 = vector.extract_strided_slice %478 {offsets = [0, 0], sizes = [4, 128], strides = [1, 1]} : vector<4x256xf32> to vector<4x128xf32>
    %cst_103 = arith.constant dense<0.000000e+00> : vector<4x128xf32>
    %704 = tpu.matmul %684, %484, %cst_103 {dimension_numbers = #tpu.dot_dimension_numbers<[1], [0], [0], [1], [0, 0, 1, 1], [], []>} : vector<4x32xf32>, vector<32x128xf32>, vector<4x128xf32> -> vector<4x128xf32>
    %705 = arith.addf %703, %704 : vector<4x128xf32>
    %706 = arith.negf %705 : vector<4x128xf32>
    %707 = math.exp %706 : vector<4x128xf32>
    %cst_104 = arith.constant 1.000000e+00 : f32
    %708 = vector.broadcast %cst_104 : f32 to vector<4x128xf32>
    %709 = arith.addf %708, %707 : vector<4x128xf32>
    %710 = arith.divf %708, %709 : vector<4x128xf32>
    %711 = vector.extract_strided_slice %710 {offsets = [0, 0], sizes = [4, 32], strides = [1, 1]} : vector<4x128xf32> to vector<4x32xf32>
    %712 = vector.extract_strided_slice %710 {offsets = [0, 32], sizes = [4, 32], strides = [1, 1]} : vector<4x128xf32> to vector<4x32xf32>
    %713 = vector.extract_strided_slice %710 {offsets = [0, 96], sizes = [4, 32], strides = [1, 1]} : vector<4x128xf32> to vector<4x32xf32>
    %714 = vector.extract_strided_slice %705 {offsets = [0, 64], sizes = [4, 32], strides = [1, 1]} : vector<4x128xf32> to vector<4x32xf32>
    %715 = math.tanh %714 : vector<4x32xf32>
    %716 = arith.mulf %712, %682 : vector<4x32xf32>
    %717 = arith.mulf %711, %715 : vector<4x32xf32>
    %718 = arith.addf %716, %717 : vector<4x32xf32>
    %719 = math.tanh %718 : vector<4x32xf32>
    %720 = arith.mulf %713, %719 : vector<4x32xf32>
    %721 = vector.extract_strided_slice %453 {offsets = [0, 128], sizes = [4, 128], strides = [1, 1]} : vector<4x256xf32> to vector<4x128xf32>
    %cst_105 = arith.constant dense<0.000000e+00> : vector<4x128xf32>
    %722 = tpu.matmul %702, %485, %cst_105 {dimension_numbers = #tpu.dot_dimension_numbers<[1], [0], [0], [1], [0, 0, 1, 1], [], []>} : vector<4x32xf32>, vector<32x128xf32>, vector<4x128xf32> -> vector<4x128xf32>
    %723 = arith.addf %721, %722 : vector<4x128xf32>
    %724 = arith.negf %723 : vector<4x128xf32>
    %725 = math.exp %724 : vector<4x128xf32>
    %cst_106 = arith.constant 1.000000e+00 : f32
    %726 = vector.broadcast %cst_106 : f32 to vector<4x128xf32>
    %727 = arith.addf %726, %725 : vector<4x128xf32>
    %728 = arith.divf %726, %727 : vector<4x128xf32>
    %729 = vector.extract_strided_slice %728 {offsets = [0, 0], sizes = [4, 32], strides = [1, 1]} : vector<4x128xf32> to vector<4x32xf32>
    %730 = vector.extract_strided_slice %728 {offsets = [0, 32], sizes = [4, 32], strides = [1, 1]} : vector<4x128xf32> to vector<4x32xf32>
    %731 = vector.extract_strided_slice %728 {offsets = [0, 96], sizes = [4, 32], strides = [1, 1]} : vector<4x128xf32> to vector<4x32xf32>
    %732 = vector.extract_strided_slice %723 {offsets = [0, 64], sizes = [4, 32], strides = [1, 1]} : vector<4x128xf32> to vector<4x32xf32>
    %733 = math.tanh %732 : vector<4x32xf32>
    %734 = arith.mulf %730, %700 : vector<4x32xf32>
    %735 = arith.mulf %729, %733 : vector<4x32xf32>
    %736 = arith.addf %734, %735 : vector<4x32xf32>
    %737 = math.tanh %736 : vector<4x32xf32>
    %738 = arith.mulf %731, %737 : vector<4x32xf32>
    %739 = vector.extract_strided_slice %483 {offsets = [0, 0], sizes = [4, 128], strides = [1, 1]} : vector<4x256xf32> to vector<4x128xf32>
    %cst_107 = arith.constant dense<0.000000e+00> : vector<4x128xf32>
    %740 = tpu.matmul %720, %484, %cst_107 {dimension_numbers = #tpu.dot_dimension_numbers<[1], [0], [0], [1], [0, 0, 1, 1], [], []>} : vector<4x32xf32>, vector<32x128xf32>, vector<4x128xf32> -> vector<4x128xf32>
    %741 = arith.addf %739, %740 : vector<4x128xf32>
    %742 = arith.negf %741 : vector<4x128xf32>
    %743 = math.exp %742 : vector<4x128xf32>
    %cst_108 = arith.constant 1.000000e+00 : f32
    %744 = vector.broadcast %cst_108 : f32 to vector<4x128xf32>
    %745 = arith.addf %744, %743 : vector<4x128xf32>
    %746 = arith.divf %744, %745 : vector<4x128xf32>
    %747 = vector.extract_strided_slice %746 {offsets = [0, 0], sizes = [4, 32], strides = [1, 1]} : vector<4x128xf32> to vector<4x32xf32>
    %748 = vector.extract_strided_slice %746 {offsets = [0, 32], sizes = [4, 32], strides = [1, 1]} : vector<4x128xf32> to vector<4x32xf32>
    %749 = vector.extract_strided_slice %746 {offsets = [0, 96], sizes = [4, 32], strides = [1, 1]} : vector<4x128xf32> to vector<4x32xf32>
    %750 = vector.extract_strided_slice %741 {offsets = [0, 64], sizes = [4, 32], strides = [1, 1]} : vector<4x128xf32> to vector<4x32xf32>
    %751 = math.tanh %750 : vector<4x32xf32>
    %752 = arith.mulf %748, %718 : vector<4x32xf32>
    %753 = arith.mulf %747, %751 : vector<4x32xf32>
    %754 = arith.addf %752, %753 : vector<4x32xf32>
    %755 = math.tanh %754 : vector<4x32xf32>
    %756 = arith.mulf %749, %755 : vector<4x32xf32>
    %757 = vector.extract_strided_slice %448 {offsets = [0, 128], sizes = [4, 128], strides = [1, 1]} : vector<4x256xf32> to vector<4x128xf32>
    %cst_109 = arith.constant dense<0.000000e+00> : vector<4x128xf32>
    %758 = tpu.matmul %738, %485, %cst_109 {dimension_numbers = #tpu.dot_dimension_numbers<[1], [0], [0], [1], [0, 0, 1, 1], [], []>} : vector<4x32xf32>, vector<32x128xf32>, vector<4x128xf32> -> vector<4x128xf32>
    %759 = arith.addf %757, %758 : vector<4x128xf32>
    %760 = arith.negf %759 : vector<4x128xf32>
    %761 = math.exp %760 : vector<4x128xf32>
    %cst_110 = arith.constant 1.000000e+00 : f32
    %762 = vector.broadcast %cst_110 : f32 to vector<4x128xf32>
    %763 = arith.addf %762, %761 : vector<4x128xf32>
    %764 = arith.divf %762, %763 : vector<4x128xf32>
    %765 = vector.extract_strided_slice %764 {offsets = [0, 0], sizes = [4, 32], strides = [1, 1]} : vector<4x128xf32> to vector<4x32xf32>
    %766 = vector.extract_strided_slice %764 {offsets = [0, 32], sizes = [4, 32], strides = [1, 1]} : vector<4x128xf32> to vector<4x32xf32>
    %767 = vector.extract_strided_slice %764 {offsets = [0, 96], sizes = [4, 32], strides = [1, 1]} : vector<4x128xf32> to vector<4x32xf32>
    %768 = vector.extract_strided_slice %759 {offsets = [0, 64], sizes = [4, 32], strides = [1, 1]} : vector<4x128xf32> to vector<4x32xf32>
    %769 = math.tanh %768 : vector<4x32xf32>
    %770 = arith.mulf %766, %736 : vector<4x32xf32>
    %771 = arith.mulf %765, %769 : vector<4x32xf32>
    %772 = arith.addf %770, %771 : vector<4x32xf32>
    %773 = math.tanh %772 : vector<4x32xf32>
    %774 = arith.mulf %767, %773 : vector<4x32xf32>
    %775 = tpu.concatenate %504, %774 in 1 : vector<4x32xf32>, vector<4x32xf32> -> vector<4x64xf32>
    %776 = tpu.concatenate %540, %738 in 1 : vector<4x32xf32>, vector<4x32xf32> -> vector<4x64xf32>
    %777 = tpu.concatenate %576, %702 in 1 : vector<4x32xf32>, vector<4x32xf32> -> vector<4x64xf32>
    %778 = tpu.concatenate %612, %666 in 1 : vector<4x32xf32>, vector<4x32xf32> -> vector<4x64xf32>
    %779 = tpu.concatenate %648, %630 in 1 : vector<4x32xf32>, vector<4x32xf32> -> vector<4x64xf32>
    %780 = tpu.concatenate %684, %594 in 1 : vector<4x32xf32>, vector<4x32xf32> -> vector<4x64xf32>
    %781 = tpu.concatenate %720, %558 in 1 : vector<4x32xf32>, vector<4x32xf32> -> vector<4x64xf32>
    %782 = tpu.concatenate %756, %522 in 1 : vector<4x32xf32>, vector<4x32xf32> -> vector<4x64xf32>
    %783 = arith.addf %775, %776 : vector<4x64xf32>
    %784 = arith.maximumf %775, %776 : vector<4x64xf32>
    %785 = arith.addf %783, %777 : vector<4x64xf32>
    %786 = arith.maximumf %784, %777 : vector<4x64xf32>
    %787 = arith.addf %785, %778 : vector<4x64xf32>
    %788 = arith.maximumf %786, %778 : vector<4x64xf32>
    %789 = arith.addf %787, %779 : vector<4x64xf32>
    %790 = arith.maximumf %788, %779 : vector<4x64xf32>
    %791 = arith.addf %789, %780 : vector<4x64xf32>
    %792 = arith.maximumf %790, %780 : vector<4x64xf32>
    %793 = arith.addf %791, %781 : vector<4x64xf32>
    %794 = arith.maximumf %792, %781 : vector<4x64xf32>
    %795 = arith.addf %793, %782 : vector<4x64xf32>
    %796 = arith.maximumf %794, %782 : vector<4x64xf32>
    %cst_111 = arith.constant 1.250000e-01 : f32
    %797 = vector.broadcast %cst_111 : f32 to vector<4x64xf32>
    %798 = arith.mulf %795, %797 : vector<4x64xf32>
    %799 = vector.extract_strided_slice %798 {offsets = [0, 0], sizes = [2, 64], strides = [1, 1]} : vector<4x64xf32> to vector<2x64xf32>
    %800 = vector.extract_strided_slice %796 {offsets = [0, 0], sizes = [2, 64], strides = [1, 1]} : vector<4x64xf32> to vector<2x64xf32>
    %801 = vector.extract_strided_slice %798 {offsets = [2, 0], sizes = [2, 64], strides = [1, 1]} : vector<4x64xf32> to vector<2x64xf32>
    %802 = vector.extract_strided_slice %796 {offsets = [2, 0], sizes = [2, 64], strides = [1, 1]} : vector<4x64xf32> to vector<2x64xf32>
    %803 = tpu.concatenate %799, %800, %801, %802 in 1 : vector<2x64xf32>, vector<2x64xf32>, vector<2x64xf32>, vector<2x64xf32> -> vector<2x256xf32>
    %c0_112 = arith.constant 0 : index
    %c0_113 = arith.constant 0 : index
    %804 = vector.load %arg11[%c0_112, %c0_113] : memref<1x256xf32, #tpu.memory_space<vmem>>, vector<1x256xf32>
    %805 = vector.broadcast %804 : vector<1x256xf32> to vector<2x256xf32>
    %806 = arith.mulf %803, %805 : vector<2x256xf32>
    %c0_114 = arith.constant 0 : index
    %c0_115 = arith.constant 0 : index
    %807 = vector.load %arg12[%c0_114, %c0_115] : memref<1x256xf32, #tpu.memory_space<vmem>>, vector<1x256xf32>
    %808 = vector.broadcast %807 : vector<1x256xf32> to vector<2x256xf32>
    %809 = arith.addf %806, %808 : vector<2x256xf32>
    %c0_116 = arith.constant 0 : index
    %c0_117 = arith.constant 0 : index
    %810 = vector.load %arg13[%c0_116, %c0_117] : memref<256x64xf32, #tpu.memory_space<vmem>>, vector<256x64xf32>
    %cst_118 = arith.constant dense<0.000000e+00> : vector<2x64xf32>
    %811 = tpu.matmul %809, %810, %cst_118 {dimension_numbers = #tpu.dot_dimension_numbers<[1], [0], [0], [1], [0, 0, 1, 1], [], []>} : vector<2x256xf32>, vector<256x64xf32>, vector<2x64xf32> -> vector<2x64xf32>
    %c0_119 = arith.constant 0 : index
    %c0_120 = arith.constant 0 : index
    %812 = vector.load %arg14[%c0_119, %c0_120] : memref<1x64xf32, #tpu.memory_space<vmem>>, vector<1x64xf32>
    %813 = vector.broadcast %812 : vector<1x64xf32> to vector<2x64xf32>
    %814 = arith.addf %811, %813 : vector<2x64xf32>
    %cst_121 = arith.constant 0.000000e+00 : f32
    %815 = vector.broadcast %cst_121 : f32 to vector<2x64xf32>
    %816 = arith.cmpf ogt, %814, %815 : vector<2x64xf32>
    %cst_122 = arith.constant 0.000000e+00 : f32
    %817 = vector.broadcast %cst_122 : f32 to vector<2x64xf32>
    %818 = arith.minimumf %814, %817 : vector<2x64xf32>
    %819 = math.exp %818 : vector<2x64xf32>
    %cst_123 = arith.constant 1.000000e+00 : f32
    %820 = vector.broadcast %cst_123 : f32 to vector<2x64xf32>
    %821 = arith.subf %819, %820 : vector<2x64xf32>
    %822 = arith.select %816, %814, %821 : vector<2x64xi1>, vector<2x64xf32>
    %c0_124 = arith.constant 0 : index
    %c0_125 = arith.constant 0 : index
    %823 = vector.load %arg15[%c0_124, %c0_125] : memref<1x64xf32, #tpu.memory_space<vmem>>, vector<1x64xf32>
    %824 = vector.broadcast %823 : vector<1x64xf32> to vector<2x64xf32>
    %825 = arith.mulf %822, %824 : vector<2x64xf32>
    %c0_126 = arith.constant 0 : index
    %c0_127 = arith.constant 0 : index
    %826 = vector.load %arg16[%c0_126, %c0_127] : memref<1x64xf32, #tpu.memory_space<vmem>>, vector<1x64xf32>
    %827 = vector.broadcast %826 : vector<1x64xf32> to vector<2x64xf32>
    %828 = arith.addf %825, %827 : vector<2x64xf32>
    %c0_128 = arith.constant 0 : index
    %c0_129 = arith.constant 0 : index
    %829 = vector.load %arg17[%c0_128, %c0_129] : memref<64x64xf32, #tpu.memory_space<vmem>>, vector<64x64xf32>
    %cst_130 = arith.constant dense<0.000000e+00> : vector<2x64xf32>
    %830 = tpu.matmul %828, %829, %cst_130 {dimension_numbers = #tpu.dot_dimension_numbers<[1], [0], [0], [1], [0, 0, 1, 1], [], []>} : vector<2x64xf32>, vector<64x64xf32>, vector<2x64xf32> -> vector<2x64xf32>
    %c0_131 = arith.constant 0 : index
    %c0_132 = arith.constant 0 : index
    %831 = vector.load %arg18[%c0_131, %c0_132] : memref<1x64xf32, #tpu.memory_space<vmem>>, vector<1x64xf32>
    %832 = vector.broadcast %831 : vector<1x64xf32> to vector<2x64xf32>
    %833 = arith.addf %830, %832 : vector<2x64xf32>
    %cst_133 = arith.constant 0.000000e+00 : f32
    %834 = vector.broadcast %cst_133 : f32 to vector<2x64xf32>
    %835 = arith.cmpf ogt, %833, %834 : vector<2x64xf32>
    %cst_134 = arith.constant 0.000000e+00 : f32
    %836 = vector.broadcast %cst_134 : f32 to vector<2x64xf32>
    %837 = arith.minimumf %833, %836 : vector<2x64xf32>
    %838 = math.exp %837 : vector<2x64xf32>
    %cst_135 = arith.constant 1.000000e+00 : f32
    %839 = vector.broadcast %cst_135 : f32 to vector<2x64xf32>
    %840 = arith.subf %838, %839 : vector<2x64xf32>
    %841 = arith.select %835, %833, %840 : vector<2x64xi1>, vector<2x64xf32>
    %c0_136 = arith.constant 0 : index
    %c0_137 = arith.constant 0 : index
    %842 = vector.load %arg19[%c0_136, %c0_137] : memref<1x64xf32, #tpu.memory_space<vmem>>, vector<1x64xf32>
    %843 = vector.broadcast %842 : vector<1x64xf32> to vector<2x64xf32>
    %844 = arith.mulf %841, %843 : vector<2x64xf32>
    %c0_138 = arith.constant 0 : index
    %c0_139 = arith.constant 0 : index
    %845 = vector.load %arg20[%c0_138, %c0_139] : memref<1x64xf32, #tpu.memory_space<vmem>>, vector<1x64xf32>
    %846 = vector.broadcast %845 : vector<1x64xf32> to vector<2x64xf32>
    %847 = arith.addf %844, %846 : vector<2x64xf32>
    %c0_140 = arith.constant 0 : index
    %c0_141 = arith.constant 0 : index
    %848 = vector.load %arg21[%c0_140, %c0_141] : memref<64x2xf32, #tpu.memory_space<vmem>>, vector<64x2xf32>
    %cst_142 = arith.constant dense<0.000000e+00> : vector<2x2xf32>
    %849 = tpu.matmul %847, %848, %cst_142 {dimension_numbers = #tpu.dot_dimension_numbers<[1], [0], [0], [1], [0, 0, 1, 1], [], []>} : vector<2x64xf32>, vector<64x2xf32>, vector<2x2xf32> -> vector<2x2xf32>
    %c0_143 = arith.constant 0 : index
    %c0_144 = arith.constant 0 : index
    %850 = vector.load %arg22[%c0_143, %c0_144] : memref<1x2xf32, #tpu.memory_space<vmem>>, vector<1x2xf32>
    %851 = vector.broadcast %850 : vector<1x2xf32> to vector<2x2xf32>
    %852 = arith.addf %849, %851 : vector<2x2xf32>
    %c0_145 = arith.constant 0 : index
    %c0_146 = arith.constant 0 : index
    %853 = vector.load %arg23[%c0_145, %c0_146] : memref<2x2xf32, #tpu.memory_space<vmem>>, vector<2x2xf32>
    tpu.vector_store %arg23[%c0_145, %c0_146], %852 {strides = array<i32>} : memref<2x2xf32, #tpu.memory_space<vmem>>, vector<2x2xf32>,
    return
  }
}

</mosaic_0001>

<llo_original>
// kernel: esim_forward.1
$region0: #{esim_forward.1}
  #allocation0 [shape = 'u32[]', space=smem, size = 0x4, offset = 0x4, fixed_abs, tag = 'smem constant byte address 0x4 - core index']
  #allocation1 [shape = 'u32[144,128]{1,0:T(1,128)}', space=vmem, size = 0x12000, scoped, tag = 'internal scratch']
  %s0 = inlined_call_operand.vmem [shape: s32[32,1], index: 0, kind: input, shape index: {}]
  %s1 = inlined_call_operand.vmem [shape: s32[4,8], index: 1, kind: input, shape index: {}]
  %s2 = inlined_call_operand.vmem [shape: f32[50,32], index: 2, kind: input, shape index: {}]
  %s3 = inlined_call_operand.vmem [shape: f32[32,256], index: 3, kind: input, shape index: {}]
  %s4 = inlined_call_operand.vmem [shape: f32[32,128], index: 4, kind: input, shape index: {}]
  %s5 = inlined_call_operand.hbm [shape: f32[32,128], index: 5, kind: input, shape index: {}]
  %s6 = inlined_call_operand.vmem [shape: f32[1,256], index: 6, kind: input, shape index: {}]
  %s7 = inlined_call_operand.vmem [shape: f32[256,256], index: 7, kind: input, shape index: {}]
  %s8 = inlined_call_operand.hbm [shape: f32[32,128], index: 8, kind: input, shape index: {}]
  %s9 = inlined_call_operand.hbm [shape: f32[32,128], index: 9, kind: input, shape index: {}]
  %s10 = inlined_call_operand.vmem [shape: f32[1,256], index: 10, kind: input, shape index: {}]
  %s11 = inlined_call_operand.vmem [shape: f32[1,256], index: 11, kind: input, shape index: {}]
  %s12 = inlined_call_operand.vmem [shape: f32[1,256], index: 12, kind: input, shape index: {}]
  %s13 = inlined_call_operand.vmem [shape: f32[256,64], index: 13, kind: input, shape index: {}]
  %s14 = inlined_call_operand.vmem [shape: f32[1,64], index: 14, kind: input, shape index: {}]
  %s15 = inlined_call_operand.vmem [shape: f32[1,64], index: 15, kind: input, shape index: {}]
  %s16 = inlined_call_operand.vmem [shape: f32[1,64], index: 16, kind: input, shape index: {}]
  %s17 = inlined_call_operand.vmem [shape: f32[64,64], index: 17, kind: input, shape index: {}]
  %s18 = inlined_call_operand.vmem [shape: f32[1,64], index: 18, kind: input, shape index: {}]
  %s19 = inlined_call_operand.vmem [shape: f32[1,64], index: 19, kind: input, shape index: {}]
  %s20 = inlined_call_operand.hbm [shape: f32[1,64], index: 20, kind: input, shape index: {}]
  %s21 = inlined_call_operand.vmem [shape: f32[64,2], index: 21, kind: input, shape index: {}]
  %s22 = inlined_call_operand.hbm [shape: f32[1,2], index: 22, kind: input, shape index: {}]
  %s23 = inlined_call_operand.hbm [shape: f32[2,2], index: 23, kind: output, shape index: {}]
  %s24 = sld [smem:[#allocation0]]
  $region122: #{esim_forward.1} parent=0
    _
  %s26 = ssub.s32 1, %s24
  %s27 = scalar_select 0, %s26, %s24
  $region1: #{esim_forward.1} parent=0
    #allocation2 [shape = 'u8[16384]{0}', space=vmem, size = 0x4000, scoped, tag = 'input window, operand 5, single buffered']
    #allocation3 [shape = 's32[1]{0}', space=sflag, size = 0x4, scoped, tag = 'scoped memory for esim_forward.1']
    #allocation4 [shape = 's32[1]{0}', space=sflag, size = 0x4, scoped, tag = 'scoped memory for esim_forward.1']
    #allocation5 [shape = 'u8[16384]{0}', space=vmem, size = 0x4000, scoped, tag = 'input window, operand 8, single buffered']
    #allocation6 [shape = 's32[1]{0}', space=sflag, size = 0x4, scoped, tag = 'scoped memory for esim_forward.1']
    #allocation7 [shape = 'u8[16384]{0}', space=vmem, size = 0x4000, scoped, tag = 'input window, operand 9, single buffered']
    #allocation8 [shape = 'u8[512]{0}', space=vmem, size = 0x400, scoped, tag = 'input window, operand 20, single buffered']
    #allocation9 [shape = 's32[1]{0}', space=sflag, size = 0x4, scoped, tag = 'scoped memory for esim_forward.1']
    #allocation10 [shape = 'u8[512]{0}', space=vmem, size = 0x400, scoped, tag = 'input window, operand 22, single buffered']
    #allocation11 [shape = 'u8[1024]{0}', space=vmem, size = 0x400, scoped, tag = 'output window, operand 0, single buffered']
    %28 = vsyncpa [#allocation3], 0
    %29 = vsyncpa [#allocation6], 0
    %30 = vsyncpa [#allocation9], 0
    %31 = vsyncpa [#allocation4], 0
    // Predicated region
    $region2: #{esim_forward.1} parent=1 // pred_check
      _
    $region3: #{esim_forward.1} parent=1 // pred_check_branch
      %33 = sbr.rel (0) target = $region5
    $region4: #{esim_forward.1} parent=1 // pred_region
      _
    $region5: #{esim_forward.1} parent=1 // pred_fallthru
      _
    // Predicated region
    $region6: #{esim_forward.1} parent=1 // pred_check
      _
    $region7: #{esim_forward.1} parent=1 // pred_check_branch
      %35 = sbr.rel (0) target = $region9
    $region8: #{esim_forward.1} parent=1 // pred_region
      _
    $region9: #{esim_forward.1} parent=1 // pred_fallthru
      _
    // Predicated region
    $region10: #{esim_forward.1} parent=1 // pred_check
      _
    $region11: #{esim_forward.1} parent=1 // pred_check_branch
      %37 = sbr.rel (0) target = $region13
    $region12: #{esim_forward.1} parent=1 // pred_region
      _
    $region13: #{esim_forward.1} parent=1 // pred_fallthru
      _
    // Predicated region
    $region14: #{esim_forward.1} parent=1 // pred_check
      _
    $region15: #{esim_forward.1} parent=1 // pred_check_branch
      %39 = sbr.rel (0) target = $region17
    $region16: #{esim_forward.1} parent=1 // pred_region
      _
    $region17: #{esim_forward.1} parent=1 // pred_fallthru
      _
    // Predicated region
    $region18: #{esim_forward.1} parent=1 // pred_check
      _
    $region19: #{esim_forward.1} parent=1 // pred_check_branch
      %41 = sbr.rel (0) target = $region21
    $region20: #{esim_forward.1} parent=1 // pred_region
      _
    $region21: #{esim_forward.1} parent=1 // pred_fallthru
      _
    // Predicated region
    $region22: #{esim_forward.1} parent=1 // pred_check
      _
    $region23: #{esim_forward.1} parent=1 // pred_check_branch
      %43 = sbr.rel (0) target = $region25
    $region24: #{esim_forward.1} parent=1 // pred_region
      %s45 = ssub.s32 512, 512
      %46 = vsyncadd [#allocation3], %s45
      %s47 = sshll.u32 [#allocation2], 4
      %s48 = int_to_ptr.vmem [resolvable:$true] %s47
      %53 = dma.hbm_to_vmem [thread:$0]  %s5, 512, %s48, [#allocation3], 128, 128, 8
    $region25: #{esim_forward.1} parent=1 // pred_fallthru
      _
    // Predicated region
    $region26: #{esim_forward.1} parent=1 // pred_check
      _
    $region27: #{esim_forward.1} parent=1 // pred_check_branch
      %55 = sbr.rel (0) target = $region29
    $region28: #{esim_forward.1} parent=1 // pred_region
      _
    $region29: #{esim_forward.1} parent=1 // pred_fallthru
      _
    // Predicated region
    $region30: #{esim_forward.1} parent=1 // pred_check
      _
    $region31: #{esim_forward.1} parent=1 // pred_check_branch
      %57 = sbr.rel (0) target = $region33
    $region32: #{esim_forward.1} parent=1 // pred_region
      _
    $region33: #{esim_forward.1} parent=1 // pred_fallthru
      _
    // Predicated region
    $region34: #{esim_forward.1} parent=1 // pred_check
      _
    $region35: #{esim_forward.1} parent=1 // pred_check_branch
      %59 = sbr.rel (0) target = $region37
    $region36: #{esim_forward.1} parent=1 // pred_region
      %s61 = ssub.s32 512, 512
      %62 = vsyncadd [#allocation6], %s61
      %s63 = sshll.u32 [#allocation5], 4
      %s64 = int_to_ptr.vmem [resolvable:$true] %s63
      %69 = dma.hbm_to_vmem [thread:$0]  %s8, 512, %s64, [#allocation6], 128, 128, 8
    $region37: #{esim_forward.1} parent=1 // pred_fallthru
      _
    // Predicated region
    $region38: #{esim_forward.1} parent=1 // pred_check
      _
    $region39: #{esim_forward.1} parent=1 // pred_check_branch
      %71 = sbr.rel (0) target = $region41
    $region40: #{esim_forward.1} parent=1 // pred_region
      %s73 = ssub.s32 512, 512
      %74 = vsyncadd [#allocation6], %s73
      %s75 = sshll.u32 [#allocation7], 4
      %s76 = int_to_ptr.vmem [resolvable:$true] %s75
      %81 = dma.hbm_to_vmem [thread:$0]  %s9, 512, %s76, [#allocation6], 128, 128, 8
    $region41: #{esim_forward.1} parent=1 // pred_fallthru
      _
    // Predicated region
    $region42: #{esim_forward.1} parent=1 // pred_check
      _
    $region43: #{esim_forward.1} parent=1 // pred_check_branch
      %83 = sbr.rel (0) target = $region45
    $region44: #{esim_forward.1} parent=1 // pred_region
      _
    $region45: #{esim_forward.1} parent=1 // pred_fallthru
      _
    // Predicated region
    $region46: #{esim_forward.1} parent=1 // pred_check
      _
    $region47: #{esim_forward.1} parent=1 // pred_check_branch
      %85 = sbr.rel (0) target = $region49
    $region48: #{esim_forward.1} parent=1 // pred_region
      _
    $region49: #{esim_forward.1} parent=1 // pred_fallthru
      _
    // Predicated region
    $region50: #{esim_forward.1} parent=1 // pred_check
      _
    $region51: #{esim_forward.1} parent=1 // pred_check_branch
      %87 = sbr.rel (0) target = $region53
    $region52: #{esim_forward.1} parent=1 // pred_region
      _
    $region53: #{esim_forward.1} parent=1 // pred_fallthru
      _
    // Predicated region
    $region54: #{esim_forward.1} parent=1 // pred_check
      _
    $region55: #{esim_forward.1} parent=1 // pred_check_branch
      %89 = sbr.rel (0) target = $region57
    $region56: #{esim_forward.1} parent=1 // pred_region
      _
    $region57: #{esim_forward.1} parent=1 // pred_fallthru
      _
    // Predicated region
    $region58: #{esim_forward.1} parent=1 // pred_check
      _
    $region59: #{esim_forward.1} parent=1 // pred_check_branch
      %91 = sbr.rel (0) target = $region61
    $region60: #{esim_forward.1} parent=1 // pred_region
      _
    $region61: #{esim_forward.1} parent=1 // pred_fallthru
      _
    // Predicated region
    $region62: #{esim_forward.1} parent=1 // pred_check
      _
    $region63: #{esim_forward.1} parent=1 // pred_check_branch
      %93 = sbr.rel (0) target = $region65
    $region64: #{esim_forward.1} parent=1 // pred_region
      _
    $region65: #{esim_forward.1} parent=1 // pred_fallthru
      _
    // Predicated region
    $region66: #{esim_forward.1} parent=1 // pred_check
      _
    $region67: #{esim_forward.1} parent=1 // pred_check_branch
      %95 = sbr.rel (0) target = $region69
    $region68: #{esim_forward.1} parent=1 // pred_region
      _
    $region69: #{esim_forward.1} parent=1 // pred_fallthru
      _
    // Predicated region
    $region70: #{esim_forward.1} parent=1 // pred_check
      _
    $region71: #{esim_forward.1} parent=1 // pred_check_branch
      %97 = sbr.rel (0) target = $region73
    $region72: #{esim_forward.1} parent=1 // pred_region
      _
    $region73: #{esim_forward.1} parent=1 // pred_fallthru
      _
    // Predicated region
    $region74: #{esim_forward.1} parent=1 // pred_check
      _
    $region75: #{esim_forward.1} parent=1 // pred_check_branch
      %99 = sbr.rel (0) target = $region77
    $region76: #{esim_forward.1} parent=1 // pred_region
      _
    $region77: #{esim_forward.1} parent=1 // pred_fallthru
      _
    // Predicated region
    $region78: #{esim_forward.1} parent=1 // pred_check
      _
    $region79: #{esim_forward.1} parent=1 // pred_check_branch
      %101 = sbr.rel (0) target = $region81
    $region80: #{esim_forward.1} parent=1 // pred_region
      _
    $region81: #{esim_forward.1} parent=1 // pred_fallthru
      _
    // Predicated region
    $region82: #{esim_forward.1} parent=1 // pred_check
      _
    $region83: #{esim_forward.1} parent=1 // pred_check_branch
      %103 = sbr.rel (0) target = $region85
    $region84: #{esim_forward.1} parent=1 // pred_region
      %s105 = ssub.s32 16, 16
      %106 = vsyncadd [#allocation9], %s105
      %s108 = sshll.u32 [#allocation8], 4
      %s109 = int_to_ptr.vmem [resolvable:$true] %s108
      %111 = dma.hbm_to_vmem [thread:$0]  %s20, 16, %s109, [#allocation9]
    $region85: #{esim_forward.1} parent=1 // pred_fallthru
      _
    // Predicated region
    $region86: #{esim_forward.1} parent=1 // pred_check
      _
    $region87: #{esim_forward.1} parent=1 // pred_check_branch
      %113 = sbr.rel (0) target = $region89
    $region88: #{esim_forward.1} parent=1 // pred_region
      _
    $region89: #{esim_forward.1} parent=1 // pred_fallthru
      _
    // Predicated region
    $region90: #{esim_forward.1} parent=1 // pred_check
      _
    $region91: #{esim_forward.1} parent=1 // pred_check_branch
      %115 = sbr.rel (0) target = $region93
    $region92: #{esim_forward.1} parent=1 // pred_region
      %s117 = ssub.s32 16, 16
      %118 = vsyncadd [#allocation9], %s117
      %s120 = sshll.u32 [#allocation10], 4
      %s121 = int_to_ptr.vmem [resolvable:$true] %s120
      %123 = dma.hbm_to_vmem [thread:$0]  %s22, 16, %s121, [#allocation9]
    $region93: #{esim_forward.1} parent=1 // pred_fallthru
      _
    // Predicated region
    $region94: #{esim_forward.1} parent=1 // pred_check
      _
    $region95: #{esim_forward.1} parent=1 // pred_check_branch
      %125 = sbr.rel (0) target = $region97
    $region96: #{esim_forward.1} parent=1 // pred_region
      %126 = dma.done [#allocation3], 512
    $region97: #{esim_forward.1} parent=1 // pred_fallthru
      _
    // Predicated region
    $region98: #{esim_forward.1} parent=1 // pred_check
      _
    $region99: #{esim_forward.1} parent=1 // pred_check_branch
      %128 = sbr.rel (0) target = $region101
    $region100: #{esim_forward.1} parent=1 // pred_region
      %129 = dma.done [#allocation6], 512
    $region101: #{esim_forward.1} parent=1 // pred_fallthru
      _
    // Predicated region
    $region102: #{esim_forward.1} parent=1 // pred_check
      _
    $region103: #{esim_forward.1} parent=1 // pred_check_branch
      %131 = sbr.rel (0) target = $region105
    $region104: #{esim_forward.1} parent=1 // pred_region
      %132 = dma.done [#allocation6], 512
    $region105: #{esim_forward.1} parent=1 // pred_fallthru
      _
    // Predicated region
    $region106: #{esim_forward.1} parent=1 // pred_check
      _
    $region107: #{esim_forward.1} parent=1 // pred_check_branch
      %134 = sbr.rel (0) target = $region109
    $region108: #{esim_forward.1} parent=1 // pred_region
      %135 = dma.done [#allocation9], 16
    $region109: #{esim_forward.1} parent=1 // pred_fallthru
      _
    // Predicated region
    $region110: #{esim_forward.1} parent=1 // pred_check
      _
    $region111: #{esim_forward.1} parent=1 // pred_check_branch
      %137 = sbr.rel (0) target = $region113
    $region112: #{esim_forward.1} parent=1 // pred_region
      %138 = dma.done [#allocation9], 16
    $region113: #{esim_forward.1} parent=1 // pred_fallthru
      _
    %v139 = vld [vmem:[%s1] sm:$0xf]
    %vm140 = vcmp.eq.s32.totalorder %v139, 1
    %v141 = vsel %vm140, -inf, 0.0
    %v142 = vld [vmem:[%s0] sm:$0xff]
    %v143 = vld [vmem:[%s0 + $0x8] sm:$0xff]
    %v144 = vld [vmem:[%s0 + $0x10] sm:$0xff]
    %v145 = vld [vmem:[%s0 + $0x18] sm:$0xff]
    %v146 = vlaneseq
    %v147 = vand.u32 %v146, 127
    %148 = vset.pattern.permute.xlu0 0
    %149 = vperm.xlu0 %148, %v142
    %v150 = vpop.permute.xlu0 %149
    %151 = vset.pattern.permute.xlu0 0
    %152 = vperm.xlu0 %151, %v143
    %v153 = vpop.permute.xlu0 %152
    %154 = vset.pattern.permute.xlu0 0
    %155 = vperm.xlu0 %154, %v144
    %v156 = vpop.permute.xlu0 %155
    %157 = vset.pattern.permute.xlu0 0
    %158 = vperm.xlu0 %157, %v145
    %v159 = vpop.permute.xlu0 %158
    %vm160 = vcmp.eq.s32.totalorder %v150, %v147
    %vm161 = vcmp.eq.s32.totalorder %v153, %v147
    %vm162 = vcmp.eq.s32.totalorder %v156, %v147
    %vm163 = vcmp.eq.s32.totalorder %v159, %v147
    %v164 = vsel %vm160, 1, 0
    %v165 = vsel %vm161, 1, 0
    %v166 = vsel %vm162, 1, 0
    %v167 = vsel %vm163, 1, 0
    %v168 = vcvt.s32.f32 %v164
    %v169 = vcvt.s32.f32 %v165
    %v170 = vcvt.s32.f32 %v166
    %v171 = vcvt.s32.f32 %v167
    %v172 = vld [vmem:[%s2] sm:$0xff]
    %v173 = vld [vmem:[%s2 + $0x8] sm:$0xff]
    %v174 = vld [vmem:[%s2 + $0x10] sm:$0xff]
    %v175 = vld [vmem:[%s2 + $0x18] sm:$0xff]
    %v176 = vld [vmem:[%s2 + $0x20] sm:$0xff]
    %v177 = vld [vmem:[%s2 + $0x28] sm:$0xff]
    %v178 = vld [vmem:[%s2 + $0x30] sm:$0x3]
    %vm179 = vcmask 408576
    %v181 = vsel %vm179, %v168, 0
    %v184 = vsel %vm179, %v169, 0
    %v187 = vsel %vm179, %v170, 0
    %v190 = vsel %vm179, %v171, 0
    %vm192 = vcmask 1041408
    %v194 = vsel %vm192, %v178, 0
    %196 = vmatprep.subr.mxu0 0.0
    %197 = vmatpush1.msra.mxu0 %v172
    %198 = vmatprep.subr.mxu0 0.0
    %199 = vmatpush1.msra.mxu0 %v173
    %200 = vmatprep.subr.mxu0 0.0
    %201 = vmatpush1.msra.mxu0 %v174
    %202 = vmatprep.subr.mxu0 0.0
    %203 = vmatpush1.msra.mxu0 %v175
    %204 = vmatprep.subr.mxu0 0.0
    %205 = vmatpush1.msra.mxu0 %v176
    %206 = vmatprep.subr.mxu0 0.0
    %207 = vmatpush1.msra.mxu0 %v177
    %208 = vmatprep.subr.mxu0 0.0
    %209 = vmatpush1.msra.mxu0 %v194
    %210 = vmatprep.subr.mxu0 0.0
    %211 = vmatpush1.msra.mxu0 0.0
    %212 = vmatprep.subr.mxu0 0.0
    %213 = vmatpush1.msra.mxu0 0.0
    %214 = vmatprep.subr.mxu0 0.0
    %215 = vmatpush1.msra.mxu0 0.0
    %216 = vmatprep.subr.mxu0 0.0
    %217 = vmatpush1.msra.mxu0 0.0
    %218 = vmatprep.subr.mxu0 0.0
    %219 = vmatpush1.msra.mxu0 0.0
    %220 = vmatprep.subr.mxu0 0.0
    %221 = vmatpush1.msra.mxu0 0.0
    %222 = vmatprep.subr.mxu0 0.0
    %223 = vmatpush1.msra.mxu0 0.0
    %224 = vmatprep.subr.mxu0 0.0
    %225 = vmatpush1.msra.mxu0 0.0
    %226 = vmatprep.subr.mxu0 0.0
    %227 = vmatpush1.msra.mxu0 0.0
    %228 = vmatprep.subr.mxu0 0.0
    %229 = vmatpush1.msra.mxu0 0.0
    %230 = vmatprep.subr.mxu0 0.0
    %231 = vmatpush1.msra.mxu0 0.0
    %232 = vmatprep.subr.mxu0 0.0
    %233 = vmatpush1.msra.mxu0 0.0
    %234 = vmatprep.subr.mxu0 0.0
    %235 = vmatpush1.msra.mxu0 0.0
    %236 = vmatprep.subr.mxu0 0.0
    %237 = vmatpush1.msra.mxu0 0.0
    %238 = vmatprep.subr.mxu0 0.0
    %239 = vmatpush1.msra.mxu0 0.0
    %240 = vmatprep.subr.mxu0 0.0
    %241 = vmatpush1.msra.mxu0 0.0
    %242 = vmatprep.subr.mxu0 0.0
    %243 = vmatpush1.msra.mxu0 0.0
    %244 = vmatprep.subr.mxu0 0.0
    %245 = vmatpush1.msra.mxu0 0.0
    %246 = vmatprep.subr.mxu0 0.0
    %247 = vmatpush1.msra.mxu0 0.0
    %248 = vmatprep.subr.mxu0 0.0
    %249 = vmatpush1.msra.mxu0 0.0
    %250 = vmatprep.subr.mxu0 0.0
    %251 = vmatpush1.msra.mxu0 0.0
    %252 = vmatprep.subr.mxu0 0.0
    %253 = vmatpush1.msra.mxu0 0.0
    %254 = vmatprep.subr.mxu0 0.0
    %255 = vmatpush1.msra.mxu0 0.0
    %256 = vmatprep.subr.mxu0 0.0
    %257 = vmatpush1.msra.mxu0 0.0
    %258 = vmatprep.subr.mxu0 0.0
    %259 = vmatpush1.msra.mxu0 0.0
    %260 = vmatprep.mubr.f32.mxu0 0.0
    %261 = vmatmul.mubr.f32.gmra.mrb[0].mxu0 %v181
    %v262 = vpop.f32.mrb[0].mxu0
    %v263 = vadd.f32 0.0, %v262
    %v264 = vpop.f32.mrb[0].mxu0
    %265 = vmatprep.mubr.f32.mxu0 0.0
    %266 = vmatmul.mubr.f32.gmra.mrb[0].mxu0 %v184
    %v267 = vpop.f32.mrb[0].mxu0
    %v268 = vadd.f32 0.0, %v267
    %v269 = vpop.f32.mrb[0].mxu0
    %270 = vmatprep.mubr.f32.mxu0 0.0
    %271 = vmatmul.mubr.f32.gmra.mrb[0].mxu0 %v187
    %v272 = vpop.f32.mrb[0].mxu0
    %v273 = vadd.f32 0.0, %v272
    %v274 = vpop.f32.mrb[0].mxu0
    %275 = vmatprep.mubr.f32.mxu0 0.0
    %276 = vmatmul.mubr.f32.gmra.mrb[0].mxu0 %v190
    %v277 = vpop.f32.mrb[0].mxu0
    %v278 = vadd.f32 0.0, %v277
    %v279 = vpop.f32.mrb[0].mxu0
    %280 = vdwg.mxu0
    %v281 = vld [vmem:[%s3] sm:$0xff]
    %v282 = vld [vmem:[%s3 + $0x8] sm:$0xff]
    %v283 = vld [vmem:[%s3 + $0x10] sm:$0xff]
    %v284 = vld [vmem:[%s3 + $0x18] sm:$0xff]
    %v285 = vld [vmem:[%s3 + $0x20] sm:$0xff]
    %v286 = vld [vmem:[%s3 + $0x28] sm:$0xff]
    %v287 = vld [vmem:[%s3 + $0x30] sm:$0xff]
    %v288 = vld [vmem:[%s3 + $0x38] sm:$0xff]
    %v289 = vld [vmem:[%s6] sm:$0x3]
    %v291 = vlaneseq
    %v292 = vshrl.u32 %v291, 7
    %v293 = vsub.s32 0, %v292
    %v294 = vrot.slane %v289, %v293
    %v295 = vlaneseq
    %v296 = vshrl.u32 %v295, 7
    %v297 = vsub.s32 1, %v296
    %v298 = vrot.slane %v289, %v297
    %vm301 = vcmask 261120
    %v303 = vsel %vm301, %v263, 0
    %v306 = vsel %vm301, %v268, 0
    %v309 = vsel %vm301, %v273, 0
    %v312 = vsel %vm301, %v278, 0
    %314 = vmatprep.subr.mxu0 %v282
    %315 = vmatpush1.msra.mxu0 %v281
    %316 = vmatprep.subr.mxu0 %v284
    %317 = vmatpush1.msra.mxu0 %v283
    %318 = vmatprep.subr.mxu0 %v286
    %319 = vmatpush1.msra.mxu0 %v285
    %320 = vmatprep.subr.mxu0 %v288
    %321 = vmatpush1.msra.mxu0 %v287
    %322 = vmatprep.subr.mxu0 0.0
    %323 = vmatpush1.msra.mxu0 0.0
    %324 = vmatprep.subr.mxu0 0.0
    %325 = vmatpush1.msra.mxu0 0.0
    %326 = vmatprep.subr.mxu0 0.0
    %327 = vmatpush1.msra.mxu0 0.0
    %328 = vmatprep.subr.mxu0 0.0
    %329 = vmatpush1.msra.mxu0 0.0
    %330 = vmatprep.subr.mxu0 0.0
    %331 = vmatpush1.msra.mxu0 0.0
    %332 = vmatprep.subr.mxu0 0.0
    %333 = vmatpush1.msra.mxu0 0.0
    %334 = vmatprep.subr.mxu0 0.0
    %335 = vmatpush1.msra.mxu0 0.0
    %336 = vmatprep.subr.mxu0 0.0
    %337 = vmatpush1.msra.mxu0 0.0
    %338 = vmatprep.subr.mxu0 0.0
    %339 = vmatpush1.msra.mxu0 0.0
    %340 = vmatprep.subr.mxu0 0.0
    %341 = vmatpush1.msra.mxu0 0.0
    %342 = vmatprep.subr.mxu0 0.0
    %343 = vmatpush1.msra.mxu0 0.0
    %344 = vmatprep.subr.mxu0 0.0
    %345 = vmatpush1.msra.mxu0 0.0
    %346 = vmatprep.subr.mxu0 0.0
    %347 = vmatpush1.msra.mxu0 0.0
    %348 = vmatprep.subr.mxu0 0.0
    %349 = vmatpush1.msra.mxu0 0.0
    %350 = vmatprep.subr.mxu0 0.0
    %351 = vmatpush1.msra.mxu0 0.0
    %352 = vmatprep.subr.mxu0 0.0
    %353 = vmatpush1.msra.mxu0 0.0
    %354 = vmatprep.subr.mxu0 0.0
    %355 = vmatpush1.msra.mxu0 0.0
    %356 = vmatprep.subr.mxu0 0.0
    %357 = vmatpush1.msra.mxu0 0.0
    %358 = vmatprep.subr.mxu0 0.0
    %359 = vmatpush1.msra.mxu0 0.0
    %360 = vmatprep.subr.mxu0 0.0
    %361 = vmatpush1.msra.mxu0 0.0
    %362 = vmatprep.subr.mxu0 0.0
    %363 = vmatpush1.msra.mxu0 0.0
    %364 = vmatprep.subr.mxu0 0.0
    %365 = vmatpush1.msra.mxu0 0.0
    %366 = vmatprep.subr.mxu0 0.0
    %367 = vmatpush1.msra.mxu0 0.0
    %368 = vmatprep.subr.mxu0 0.0
    %369 = vmatpush1.msra.mxu0 0.0
    %370 = vmatprep.subr.mxu0 0.0
    %371 = vmatpush1.msra.mxu0 0.0
    %372 = vmatprep.subr.mxu0 0.0
    %373 = vmatpush1.msra.mxu0 0.0
    %374 = vmatprep.subr.mxu0 0.0
    %375 = vmatpush1.msra.mxu0 0.0
    %376 = vmatprep.subr.mxu0 0.0
    %377 = vmatpush1.msra.mxu0 0.0
    %378 = vmatprep.mubr.f32.mxu0 0.0
    %379 = vmatmul.mubr.f32.gmra.mrb[0].mxu0 %v303
    %v380 = vpop.f32.mrb[0].mxu0
    %v381 = vadd.f32 %v294, %v380
    %v382 = vpop.f32.mrb[0].mxu0
    %v383 = vadd.f32 %v298, %v382
    %384 = vmatprep.mubr.f32.mxu0 0.0
    %385 = vmatmul.mubr.f32.gmra.mrb[0].mxu0 %v306
    %v386 = vpop.f32.mrb[0].mxu0
    %v387 = vadd.f32 %v294, %v386
    %v388 = vpop.f32.mrb[0].mxu0
    %v389 = vadd.f32 %v298, %v388
    %390 = vmatprep.mubr.f32.mxu0 0.0
    %391 = vmatmul.mubr.f32.gmra.mrb[0].mxu0 %v309
    %v392 = vpop.f32.mrb[0].mxu0
    %v393 = vadd.f32 %v294, %v392
    %v394 = vpop.f32.mrb[0].mxu0
    %v395 = vadd.f32 %v298, %v394
    %396 = vmatprep.mubr.f32.mxu0 0.0
    %397 = vmatmul.mubr.f32.gmra.mrb[0].mxu0 %v312
    %v398 = vpop.f32.mrb[0].mxu0
    %v399 = vadd.f32 %v294, %v398
    %v400 = vpop.f32.mrb[0].mxu0
    %v401 = vadd.f32 %v298, %v400
    %402 = vdwg.mxu0
    %v403 = vld [vmem:[%s4] sm:$0xff]
    %v404 = vld [vmem:[%s4 + $0x8] sm:$0xff]
    %v405 = vld [vmem:[%s4 + $0x10] sm:$0xff]
    %v406 = vld [vmem:[%s4 + $0x18] sm:$0xff]
    %v407 = vld [vmem:[#allocation2] sm:$0xff]
    %v408 = vld [vmem:[#allocation2 + $0x8] sm:$0xff]
    %v409 = vld [vmem:[#allocation2 + $0x10] sm:$0xff]
    %v410 = vld [vmem:[#allocation2 + $0x18] sm:$0xff]
    %v412 = vsel %vm301, 0.0, 0
    %414 = vmatprep.subr.mxu0 0.0
    %415 = vmatpush1.msra.mxu0 %v403
    %416 = vmatprep.subr.mxu0 0.0
    %417 = vmatpush1.msra.mxu0 %v404
    %418 = vmatprep.subr.mxu0 0.0
    %419 = vmatpush1.msra.mxu0 %v405
    %420 = vmatprep.subr.mxu0 0.0
    %421 = vmatpush1.msra.mxu0 %v406
    %422 = vmatprep.subr.mxu0 0.0
    %423 = vmatpush1.msra.mxu0 0.0
    %424 = vmatprep.subr.mxu0 0.0
    %425 = vmatpush1.msra.mxu0 0.0
    %426 = vmatprep.subr.mxu0 0.0
    %427 = vmatpush1.msra.mxu0 0.0
    %428 = vmatprep.subr.mxu0 0.0
    %429 = vmatpush1.msra.mxu0 0.0
    %430 = vmatprep.subr.mxu0 0.0
    %431 = vmatpush1.msra.mxu0 0.0
    %432 = vmatprep.subr.mxu0 0.0
    %433 = vmatpush1.msra.mxu0 0.0
    %434 = vmatprep.subr.mxu0 0.0
    %435 = vmatpush1.msra.mxu0 0.0
    %436 = vmatprep.subr.mxu0 0.0
    %437 = vmatpush1.msra.mxu0 0.0
    %438 = vmatprep.subr.mxu0 0.0
    %439 = vmatpush1.msra.mxu0 0.0
    %440 = vmatprep.subr.mxu0 0.0
    %441 = vmatpush1.msra.mxu0 0.0
    %442 = vmatprep.subr.mxu0 0.0
    %443 = vmatpush1.msra.mxu0 0.0
    %444 = vmatprep.subr.mxu0 0.0
    %445 = vmatpush1.msra.mxu0 0.0
    %446 = vmatprep.subr.mxu0 0.0
    %447 = vmatpush1.msra.mxu0 0.0
    %448 = vmatprep.subr.mxu0 0.0
    %449 = vmatpush1.msra.mxu0 0.0
    %450 = vmatprep.subr.mxu0 0.0
    %451 = vmatpush1.msra.mxu0 0.0
    %452 = vmatprep.subr.mxu0 0.0
    %453 = vmatpush1.msra.mxu0 0.0
    %454 = vmatprep.subr.mxu0 0.0
    %455 = vmatpush1.msra.mxu0 0.0
    %456 = vmatprep.subr.mxu0 0.0
    %457 = vmatpush1.msra.mxu0 0.0
    %458 = vmatprep.subr.mxu0 0.0
    %459 = vmatpush1.msra.mxu0 0.0
    %460 = vmatprep.subr.mxu0 0.0
    %461 = vmatpush1.msra.mxu0 0.0
    %462 = vmatprep.subr.mxu0 0.0
    %463 = vmatpush1.msra.mxu0 0.0
    %464 = vmatprep.subr.mxu0 0.0
    %465 = vmatpush1.msra.mxu0 0.0
    %466 = vmatprep.subr.mxu0 0.0
    %467 = vmatpush1.msra.mxu0 0.0
    %468 = vmatprep.subr.mxu0 0.0
    %469 = vmatpush1.msra.mxu0 0.0
    %470 = vmatprep.subr.mxu0 0.0
    %471 = vmatpush1.msra.mxu0 0.0
    %472 = vmatprep.subr.mxu0 0.0
    %473 = vmatpush1.msra.mxu0 0.0
    %474 = vmatprep.subr.mxu0 0.0
    %475 = vmatpush1.msra.mxu0 0.0
    %476 = vmatprep.subr.mxu0 0.0
    %477 = vmatpush1.msra.mxu0 0.0
    %478 = vmatprep.mubr.f32.mxu0 0.0
    %479 = vmatmul.mubr.f32.gmra.mrb[0].mxu0 %v412
    %v480 = vpop.f32.mrb[0].mxu0
    %v481 = vadd.f32 0.0, %v480
    %v482 = vpop.f32.mrb[0].mxu0
    %483 = vdwg.mxu0
    %v484 = vadd.f32 %v381, %v481
    %v485 = vxor.u32 %v484, 2147483648
    %v486 = vmul.f32 %v485, 1.442695
    %v487 = vpow.pop %v486
    %v488 = vadd.f32 %v487, 1.0
    %v489 = vrcp.pop %v488
    %v490 = vmul.f32 1.0, %v489
    %v491 = vtanh.pop %v484
    %v492 = vmul.f32 %v490, 0.0
    %494 = vrot.lane.b32.xlu0 %v491, 64
    %v495 = vpop.permute.xlu0 %494
    %v497 = vmul.f32 %v490, %v495
    %499 = vrot.lane.b32.xlu0 %v497, 32
    %v500 = vpop.permute.xlu0 %499
    %v502 = vadd.f32 %v492, %v500
    %v503 = vtanh.pop %v502
    %505 = vrot.lane.b32.xlu0 %v503, 64
    %v506 = vpop.permute.xlu0 %505
    %v508 = vmul.f32 %v490, %v506
    %509 = vmatprep.subr.mxu0 0.0
    %510 = vmatpush1.msra.mxu0 %v407
    %511 = vmatprep.subr.mxu0 0.0
    %512 = vmatpush1.msra.mxu0 %v408
    %513 = vmatprep.subr.mxu0 0.0
    %514 = vmatpush1.msra.mxu0 %v409
    %515 = vmatprep.subr.mxu0 0.0
    %516 = vmatpush1.msra.mxu0 %v410
    %517 = vmatprep.subr.mxu0 0.0
    %518 = vmatpush1.msra.mxu0 0.0
    %519 = vmatprep.subr.mxu0 0.0
    %520 = vmatpush1.msra.mxu0 0.0
    %521 = vmatprep.subr.mxu0 0.0
    %522 = vmatpush1.msra.mxu0 0.0
    %523 = vmatprep.subr.mxu0 0.0
    %524 = vmatpush1.msra.mxu0 0.0
    %525 = vmatprep.subr.mxu0 0.0
    %526 = vmatpush1.msra.mxu0 0.0
    %527 = vmatprep.subr.mxu0 0.0
    %528 = vmatpush1.msra.mxu0 0.0
    %529 = vmatprep.subr.mxu0 0.0
    %530 = vmatpush1.msra.mxu0 0.0
    %531 = vmatprep.subr.mxu0 0.0
    %532 = vmatpush1.msra.mxu0 0.0
    %533 = vmatprep.subr.mxu0 0.0
    %534 = vmatpush1.msra.mxu0 0.0
    %535 = vmatprep.subr.mxu0 0.0
    %536 = vmatpush1.msra.mxu0 0.0
    %537 = vmatprep.subr.mxu0 0.0
    %538 = vmatpush1.msra.mxu0 0.0
    %539 = vmatprep.subr.mxu0 0.0
    %540 = vmatpush1.msra.mxu0 0.0
    %541 = vmatprep.subr.mxu0 0.0
    %542 = vmatpush1.msra.mxu0 0.0
    %543 = vmatprep.subr.mxu0 0.0
    %544 = vmatpush1.msra.mxu0 0.0
    %545 = vmatprep.subr.mxu0 0.0
    %546 = vmatpush1.msra.mxu0 0.0
    %547 = vmatprep.subr.mxu0 0.0
    %548 = vmatpush1.msra.mxu0 0.0
    %549 = vmatprep.subr.mxu0 0.0
    %550 = vmatpush1.msra.mxu0 0.0
    %551 = vmatprep.subr.mxu0 0.0
    %552 = vmatpush1.msra.mxu0 0.0
    %553 = vmatprep.subr.mxu0 0.0
    %554 = vmatpush1.msra.mxu0 0.0
    %555 = vmatprep.subr.mxu0 0.0
    %556 = vmatpush1.msra.mxu0 0.0
    %557 = vmatprep.subr.mxu0 0.0
    %558 = vmatpush1.msra.mxu0 0.0
    %559 = vmatprep.subr.mxu0 0.0
    %560 = vmatpush1.msra.mxu0 0.0
    %561 = vmatprep.subr.mxu0 0.0
    %562 = vmatpush1.msra.mxu0 0.0
    %563 = vmatprep.subr.mxu0 0.0
    %564 = vmatpush1.msra.mxu0 0.0
    %565 = vmatprep.subr.mxu0 0.0
    %566 = vmatpush1.msra.mxu0 0.0
    %567 = vmatprep.subr.mxu0 0.0
    %568 = vmatpush1.msra.mxu0 0.0
    %569 = vmatprep.subr.mxu0 0.0
    %570 = vmatpush1.msra.mxu0 0.0
    %571 = vmatprep.subr.mxu0 0.0
    %572 = vmatpush1.msra.mxu0 0.0
    %573 = vmatprep.mubr.f32.mxu0 0.0
    %574 = vmatmul.mubr.f32.gmra.mrb[0].mxu0 %v412
    %v575 = vpop.f32.mrb[0].mxu0
    %v576 = vadd.f32 0.0, %v575
    %v577 = vpop.f32.mrb[0].mxu0
    %578 = vdwg.mxu0
    %v580 = vrot.slane %v576, 4
    %v582 = vadd.f32 %v401, %v580
    %v583 = vxor.u32 %v582, 2147483648
    %v584 = vmul.f32 %v583, 1.442695
    %v585 = vpow.pop %v584
    %v586 = vadd.f32 %v585, 1.0
    %v587 = vrcp.pop %v586
    %v588 = vmul.f32 1.0, %v587
    %v589 = vtanh.pop %v582
    %v590 = vmul.f32 %v588, 0.0
    %592 = vrot.lane.b32.xlu0 %v589, 64
    %v593 = vpop.permute.xlu0 %592
    %v595 = vmul.f32 %v588, %v593
    %597 = vrot.lane.b32.xlu0 %v595, 32
    %v598 = vpop.permute.xlu0 %597
    %v600 = vadd.f32 %v590, %v598
    %v601 = vtanh.pop %v600
    %603 = vrot.lane.b32.xlu0 %v601, 64
    %v604 = vpop.permute.xlu0 %603
    %v606 = vmul.f32 %v588, %v604
    %608 = vrot.lane.b32.xlu0 %v508, 32
    %v609 = vpop.permute.xlu0 %608
    %v610 = vsel %vm301, %v609, 0
    %612 = vmatprep.subr.mxu0 0.0
    %613 = vmatpush1.msra.mxu0 %v403
    %614 = vmatprep.subr.mxu0 0.0
    %615 = vmatpush1.msra.mxu0 %v404
    %616 = vmatprep.subr.mxu0 0.0
    %617 = vmatpush1.msra.mxu0 %v405
    %618 = vmatprep.subr.mxu0 0.0
    %619 = vmatpush1.msra.mxu0 %v406
    %620 = vmatprep.subr.mxu0 0.0
    %621 = vmatpush1.msra.mxu0 0.0
    %622 = vmatprep.subr.mxu0 0.0
    %623 = vmatpush1.msra.mxu0 0.0
    %624 = vmatprep.subr.mxu0 0.0
    %625 = vmatpush1.msra.mxu0 0.0
    %626 = vmatprep.subr.mxu0 0.0
    %627 = vmatpush1.msra.mxu0 0.0
    %628 = vmatprep.subr.mxu0 0.0
    %629 = vmatpush1.msra.mxu0 0.0
    %630 = vmatprep.subr.mxu0 0.0
    %631 = vmatpush1.msra.mxu0 0.0
    %632 = vmatprep.subr.mxu0 0.0
    %633 = vmatpush1.msra.mxu0 0.0
    %634 = vmatprep.subr.mxu0 0.0
    %635 = vmatpush1.msra.mxu0 0.0
    %636 = vmatprep.subr.mxu0 0.0
    %637 = vmatpush1.msra.mxu0 0.0
    %638 = vmatprep.subr.mxu0 0.0
    %639 = vmatpush1.msra.mxu0 0.0
    %640 = vmatprep.subr.mxu0 0.0
    %641 = vmatpush1.msra.mxu0 0.0
    %642 = vmatprep.subr.mxu0 0.0
    %643 = vmatpush1.msra.mxu0 0.0
    %644 = vmatprep.subr.mxu0 0.0
    %645 = vmatpush1.msra.mxu0 0.0
    %646 = vmatprep.subr.mxu0 0.0
    %647 = vmatpush1.msra.mxu0 0.0
    %648 = vmatprep.subr.mxu0 0.0
    %649 = vmatpush1.msra.mxu0 0.0
    %650 = vmatprep.subr.mxu0 0.0
    %651 = vmatpush1.msra.mxu0 0.0
    %652 = vmatprep.subr.mxu0 0.0
    %653 = vmatpush1.msra.mxu0 0.0
    %654 = vmatprep.subr.mxu0 0.0
    %655 = vmatpush1.msra.mxu0 0.0
    %656 = vmatprep.subr.mxu0 0.0
    %657 = vmatpush1.msra.mxu0 0.0
    %658 = vmatprep.subr.mxu0 0.0
    %659 = vmatpush1.msra.mxu0 0.0
    %660 = vmatprep.subr.mxu0 0.0
    %661 = vmatpush1.msra.mxu0 0.0
    %662 = vmatprep.subr.mxu0 0.0
    %663 = vmatpush1.msra.mxu0 0.0
    %664 = vmatprep.subr.mxu0 0.0
    %665 = vmatpush1.msra.mxu0 0.0
    %666 = vmatprep.subr.mxu0 0.0
    %667 = vmatpush1.msra.mxu0 0.0
    %668 = vmatprep.subr.mxu0 0.0
    %669 = vmatpush1.msra.mxu0 0.0
    %670 = vmatprep.subr.mxu0 0.0
    %671 = vmatpush1.msra.mxu0 0.0
    %672 = vmatprep.subr.mxu0 0.0
    %673 = vmatpush1.msra.mxu0 0.0
    %674 = vmatprep.subr.mxu0 0.0
    %675 = vmatpush1.msra.mxu0 0.0
    %676 = vmatprep.mubr.f32.mxu0 0.0
    %677 = vmatmul.mubr.f32.gmra.mrb[0].mxu0 %v610
    %v678 = vpop.f32.mrb[0].mxu0
    %v679 = vadd.f32 0.0, %v678
    %v680 = vpop.f32.mrb[0].mxu0
    %681 = vdwg.mxu0
    %v683 = vrot.slane %v679, 4
    %v685 = vadd.f32 %v381, %v683
    %v686 = vxor.u32 %v685, 2147483648
    %v687 = vmul.f32 %v686, 1.442695
    %v688 = vpow.pop %v687
    %v689 = vadd.f32 %v688, 1.0
    %v690 = vrcp.pop %v689
    %v691 = vmul.f32 1.0, %v690
    %v692 = vtanh.pop %v685
    %v694 = vrot.slane %v502, 4
    %v696 = vmul.f32 %v691, %v694
    %698 = vrot.lane.b32.xlu0 %v692, 64
    %v699 = vpop.permute.xlu0 %698
    %v701 = vmul.f32 %v691, %v699
    %703 = vrot.lane.b32.xlu0 %v701, 32
    %v704 = vpop.permute.xlu0 %703
    %v706 = vadd.f32 %v696, %v704
    %v707 = vtanh.pop %v706
    %709 = vrot.lane.b32.xlu0 %v707, 64
    %v710 = vpop.permute.xlu0 %709
    %v712 = vmul.f32 %v691, %v710
    %v714 = vrot.slane %v606, 4
    %715 = vrot.lane.b32.xlu0 %v714, 32
    %v716 = vpop.permute.xlu0 %715
    %v717 = vsel %vm301, %v716, 0
    %719 = vmatprep.subr.mxu0 0.0
    %720 = vmatpush1.msra.mxu0 %v407
    %721 = vmatprep.subr.mxu0 0.0
    %722 = vmatpush1.msra.mxu0 %v408
    %723 = vmatprep.subr.mxu0 0.0
    %724 = vmatpush1.msra.mxu0 %v409
    %725 = vmatprep.subr.mxu0 0.0
    %726 = vmatpush1.msra.mxu0 %v410
    %727 = vmatprep.subr.mxu0 0.0
    %728 = vmatpush1.msra.mxu0 0.0
    %729 = vmatprep.subr.mxu0 0.0
    %730 = vmatpush1.msra.mxu0 0.0
    %731 = vmatprep.subr.mxu0 0.0
    %732 = vmatpush1.msra.mxu0 0.0
    %733 = vmatprep.subr.mxu0 0.0
    %734 = vmatpush1.msra.mxu0 0.0
    %735 = vmatprep.subr.mxu0 0.0
    %736 = vmatpush1.msra.mxu0 0.0
    %737 = vmatprep.subr.mxu0 0.0
    %738 = vmatpush1.msra.mxu0 0.0
    %739 = vmatprep.subr.mxu0 0.0
    %740 = vmatpush1.msra.mxu0 0.0
    %741 = vmatprep.subr.mxu0 0.0
    %742 = vmatpush1.msra.mxu0 0.0
    %743 = vmatprep.subr.mxu0 0.0
    %744 = vmatpush1.msra.mxu0 0.0
    %745 = vmatprep.subr.mxu0 0.0
    %746 = vmatpush1.msra.mxu0 0.0
    %747 = vmatprep.subr.mxu0 0.0
    %748 = vmatpush1.msra.mxu0 0.0
    %749 = vmatprep.subr.mxu0 0.0
    %750 = vmatpush1.msra.mxu0 0.0
    %751 = vmatprep.subr.mxu0 0.0
    %752 = vmatpush1.msra.mxu0 0.0
    %753 = vmatprep.subr.mxu0 0.0
    %754 = vmatpush1.msra.mxu0 0.0
    %755 = vmatprep.subr.mxu0 0.0
    %756 = vmatpush1.msra.mxu0 0.0
    %757 = vmatprep.subr.mxu0 0.0
    %758 = vmatpush1.msra.mxu0 0.0
    %759 = vmatprep.subr.mxu0 0.0
    %760 = vmatpush1.msra.mxu0 0.0
    %761 = vmatprep.subr.mxu0 0.0
    %762 = vmatpush1.msra.mxu0 0.0
    %763 = vmatprep.subr.mxu0 0.0
    %764 = vmatpush1.msra.mxu0 0.0
    %765 = vmatprep.subr.mxu0 0.0
    %766 = vmatpush1.msra.mxu0 0.0
    %767 = vmatprep.subr.mxu0 0.0
    %768 = vmatpush1.msra.mxu0 0.0
    %769 = vmatprep.subr.mxu0 0.0
    %770 = vmatpush1.msra.mxu0 0.0
    %771 = vmatprep.subr.mxu0 0.0
    %772 = vmatpush1.msra.mxu0 0.0
    %773 = vmatprep.subr.mxu0 0.0
    %774 = vmatpush1.msra.mxu0 0.0
    %775 = vmatprep.subr.mxu0 0.0
    %776 = vmatpush1.msra.mxu0 0.0
    %777 = vmatprep.subr.mxu0 0.0
    %778 = vmatpush1.msra.mxu0 0.0
    %779 = vmatprep.subr.mxu0 0.0
    %780 = vmatpush1.msra.mxu0 0.0
    %781 = vmatprep.subr.mxu0 0.0
    %782 = vmatpush1.msra.mxu0 0.0
    %783 = vmatprep.mubr.f32.mxu0 0.0
    %784 = vmatmul.mubr.f32.gmra.mrb[0].mxu0 %v717
    %v785 = vpop.f32.mrb[0].mxu0
    %v786 = vadd.f32 0.0, %v785
    %v787 = vpop.f32.mrb[0].mxu0
    %788 = vdwg.mxu0
    %v789 = vadd.f32 %v401, %v786
    %v790 = vxor.u32 %v789, 2147483648
    %v791 = vmul.f32 %v790, 1.442695
    %v792 = vpow.pop %v791
    %v793 = vadd.f32 %v792, 1.0
    %v794 = vrcp.pop %v793
    %v795 = vmul.f32 1.0, %v794
    %v796 = vtanh.pop %v789
    %v798 = vrot.slane %v600, 4
    %v800 = vmul.f32 %v795, %v798
    %802 = vrot.lane.b32.xlu0 %v796, 64
    %v803 = vpop.permute.xlu0 %802
    %v805 = vmul.f32 %v795, %v803
    %807 = vrot.lane.b32.xlu0 %v805, 32
    %v808 = vpop.permute.xlu0 %807
    %v810 = vadd.f32 %v800, %v808
    %v811 = vtanh.pop %v810
    %813 = vrot.lane.b32.xlu0 %v811, 64
    %v814 = vpop.permute.xlu0 %813
    %v816 = vmul.f32 %v795, %v814
    %v818 = vrot.slane %v712, 4
    %819 = vrot.lane.b32.xlu0 %v818, 32
    %v820 = vpop.permute.xlu0 %819
    %v821 = vsel %vm301, %v820, 0
    %823 = vmatprep.subr.mxu0 0.0
    %824 = vmatpush1.msra.mxu0 %v403
    %825 = vmatprep.subr.mxu0 0.0
    %826 = vmatpush1.msra.mxu0 %v404
    %827 = vmatprep.subr.mxu0 0.0
    %828 = vmatpush1.msra.mxu0 %v405
    %829 = vmatprep.subr.mxu0 0.0
    %830 = vmatpush1.msra.mxu0 %v406
    %831 = vmatprep.subr.mxu0 0.0
    %832 = vmatpush1.msra.mxu0 0.0
    %833 = vmatprep.subr.mxu0 0.0
    %834 = vmatpush1.msra.mxu0 0.0
    %835 = vmatprep.subr.mxu0 0.0
    %836 = vmatpush1.msra.mxu0 0.0
    %837 = vmatprep.subr.mxu0 0.0
    %838 = vmatpush1.msra.mxu0 0.0
    %839 = vmatprep.subr.mxu0 0.0
    %840 = vmatpush1.msra.mxu0 0.0
    %841 = vmatprep.subr.mxu0 0.0
    %842 = vmatpush1.msra.mxu0 0.0
    %843 = vmatprep.subr.mxu0 0.0
    %844 = vmatpush1.msra.mxu0 0.0
    %845 = vmatprep.subr.mxu0 0.0
    %846 = vmatpush1.msra.mxu0 0.0
    %847 = vmatprep.subr.mxu0 0.0
    %848 = vmatpush1.msra.mxu0 0.0
    %849 = vmatprep.subr.mxu0 0.0
    %850 = vmatpush1.msra.mxu0 0.0
    %851 = vmatprep.subr.mxu0 0.0
    %852 = vmatpush1.msra.mxu0 0.0
    %853 = vmatprep.subr.mxu0 0.0
    %854 = vmatpush1.msra.mxu0 0.0
    %855 = vmatprep.subr.mxu0 0.0
    %856 = vmatpush1.msra.mxu0 0.0
    %857 = vmatprep.subr.mxu0 0.0
    %858 = vmatpush1.msra.mxu0 0.0
    %859 = vmatprep.subr.mxu0 0.0
    %860 = vmatpush1.msra.mxu0 0.0
    %861 = vmatprep.subr.mxu0 0.0
    %862 = vmatpush1.msra.mxu0 0.0
    %863 = vmatprep.subr.mxu0 0.0
    %864 = vmatpush1.msra.mxu0 0.0
    %865 = vmatprep.subr.mxu0 0.0
    %866 = vmatpush1.msra.mxu0 0.0
    %867 = vmatprep.subr.mxu0 0.0
    %868 = vmatpush1.msra.mxu0 0.0
    %869 = vmatprep.subr.mxu0 0.0
    %870 = vmatpush1.msra.mxu0 0.0
    %871 = vmatprep.subr.mxu0 0.0
    %872 = vmatpush1.msra.mxu0 0.0
    %873 = vmatprep.subr.mxu0 0.0
    %874 = vmatpush1.msra.mxu0 0.0
    %875 = vmatprep.subr.mxu0 0.0
    %876 = vmatpush1.msra.mxu0 0.0
    %877 = vmatprep.subr.mxu0 0.0
    %878 = vmatpush1.msra.mxu0 0.0
    %879 = vmatprep.subr.mxu0 0.0
    %880 = vmatpush1.msra.mxu0 0.0
    %881 = vmatprep.subr.mxu0 0.0
    %882 = vmatpush1.msra.mxu0 0.0
    %883 = vmatprep.subr.mxu0 0.0
    %884 = vmatpush1.msra.mxu0 0.0
    %885 = vmatprep.subr.mxu0 0.0
    %886 = vmatpush1.msra.mxu0 0.0
    %887 = vmatprep.mubr.f32.mxu0 0.0
    %888 = vmatmul.mubr.f32.gmra.mrb[0].mxu0 %v821
    %v889 = vpop.f32.mrb[0].mxu0
    %v890 = vadd.f32 0.0, %v889
    %v891 = vpop.f32.mrb[0].mxu0
    %892 = vdwg.mxu0
    %v893 = vadd.f32 %v387, %v890
    %v894 = vxor.u32 %v893, 2147483648
    %v895 = vmul.f32 %v894, 1.442695
    %v896 = vpow.pop %v895
    %v897 = vadd.f32 %v896, 1.0
    %v898 = vrcp.pop %v897
    %v899 = vmul.f32 1.0, %v898
    %v900 = vtanh.pop %v893
    %v902 = vrot.slane %v706, 4
    %v904 = vmul.f32 %v899, %v902
    %906 = vrot.lane.b32.xlu0 %v900, 64
    %v907 = vpop.permute.xlu0 %906
    %v909 = vmul.f32 %v899, %v907
    %911 = vrot.lane.b32.xlu0 %v909, 32
    %v912 = vpop.permute.xlu0 %911
    %v914 = vadd.f32 %v904, %v912
    %v915 = vtanh.pop %v914
    %917 = vrot.lane.b32.xlu0 %v915, 64
    %v918 = vpop.permute.xlu0 %917
    %v920 = vmul.f32 %v899, %v918
    %922 = vrot.lane.b32.xlu0 %v816, 32
    %v923 = vpop.permute.xlu0 %922
    %v924 = vsel %vm301, %v923, 0
    %926 = vmatprep.subr.mxu0 0.0
    %927 = vmatpush1.msra.mxu0 %v407
    %928 = vmatprep.subr.mxu0 0.0
    %929 = vmatpush1.msra.mxu0 %v408
    %930 = vmatprep.subr.mxu0 0.0
    %931 = vmatpush1.msra.mxu0 %v409
    %932 = vmatprep.subr.mxu0 0.0
    %933 = vmatpush1.msra.mxu0 %v410
    %934 = vmatprep.subr.mxu0 0.0
    %935 = vmatpush1.msra.mxu0 0.0
    %936 = vmatprep.subr.mxu0 0.0
    %937 = vmatpush1.msra.mxu0 0.0
    %938 = vmatprep.subr.mxu0 0.0
    %939 = vmatpush1.msra.mxu0 0.0
    %940 = vmatprep.subr.mxu0 0.0
    %941 = vmatpush1.msra.mxu0 0.0
    %942 = vmatprep.subr.mxu0 0.0
    %943 = vmatpush1.msra.mxu0 0.0
    %944 = vmatprep.subr.mxu0 0.0
    %945 = vmatpush1.msra.mxu0 0.0
    %946 = vmatprep.subr.mxu0 0.0
    %947 = vmatpush1.msra.mxu0 0.0
    %948 = vmatprep.subr.mxu0 0.0
    %949 = vmatpush1.msra.mxu0 0.0
    %950 = vmatprep.subr.mxu0 0.0
    %951 = vmatpush1.msra.mxu0 0.0
    %952 = vmatprep.subr.mxu0 0.0
    %953 = vmatpush1.msra.mxu0 0.0
    %954 = vmatprep.subr.mxu0 0.0
    %955 = vmatpush1.msra.mxu0 0.0
    %956 = vmatprep.subr.mxu0 0.0
    %957 = vmatpush1.msra.mxu0 0.0
    %958 = vmatprep.subr.mxu0 0.0
    %959 = vmatpush1.msra.mxu0 0.0
    %960 = vmatprep.subr.mxu0 0.0
    %961 = vmatpush1.msra.mxu0 0.0
    %962 = vmatprep.subr.mxu0 0.0
    %963 = vmatpush1.msra.mxu0 0.0
    %964 = vmatprep.subr.mxu0 0.0
    %965 = vmatpush1.msra.mxu0 0.0
    %966 = vmatprep.subr.mxu0 0.0
    %967 = vmatpush1.msra.mxu0 0.0
    %968 = vmatprep.subr.mxu0 0.0
    %969 = vmatpush1.msra.mxu0 0.0
    %970 = vmatprep.subr.mxu0 0.0
    %971 = vmatpush1.msra.mxu0 0.0
    %972 = vmatprep.subr.mxu0 0.0
    %973 = vmatpush1.msra.mxu0 0.0
    %974 = vmatprep.subr.mxu0 0.0
    %975 = vmatpush1.msra.mxu0 0.0
    %976 = vmatprep.subr.mxu0 0.0
    %977 = vmatpush1.msra.mxu0 0.0
    %978 = vmatprep.subr.mxu0 0.0
    %979 = vmatpush1.msra.mxu0 0.0
    %980 = vmatprep.subr.mxu0 0.0
    %981 = vmatpush1.msra.mxu0 0.0
    %982 = vmatprep.subr.mxu0 0.0
    %983 = vmatpush1.msra.mxu0 0.0
    %984 = vmatprep.subr.mxu0 0.0
    %985 = vmatpush1.msra.mxu0 0.0
    %986 = vmatprep.subr.mxu0 0.0
    %987 = vmatpush1.msra.mxu0 0.0
    %988 = vmatprep.subr.mxu0 0.0
    %989 = vmatpush1.msra.mxu0 0.0
    %990 = vmatprep.mubr.f32.mxu0 0.0
    %991 = vmatmul.mubr.f32.gmra.mrb[0].mxu0 %v924
    %v992 = vpop.f32.mrb[0].mxu0
    %v993 = vadd.f32 0.0, %v992
    %v994 = vpop.f32.mrb[0].mxu0
    %995 = vdwg.mxu0
    %v997 = vrot.slane %v993, 4
    %v999 = vadd.f32 %v395, %v997
    %v1000 = vxor.u32 %v999, 2147483648
    %v1001 = vmul.f32 %v1000, 1.442695
    %v1002 = vpow.pop %v1001
    %v1003 = vadd.f32 %v1002, 1.0
    %v1004 = vrcp.pop %v1003
    %v1005 = vmul.f32 1.0, %v1004
    %v1006 = vtanh.pop %v999
    %v1008 = vrot.slane %v810, 4
    %v1010 = vmul.f32 %v1005, %v1008
    %1012 = vrot.lane.b32.xlu0 %v1006, 64
    %v1013 = vpop.permute.xlu0 %1012
    %v1015 = vmul.f32 %v1005, %v1013
    %1017 = vrot.lane.b32.xlu0 %v1015, 32
    %v1018 = vpop.permute.xlu0 %1017
    %v1020 = vadd.f32 %v1010, %v1018
    %v1021 = vtanh.pop %v1020
    %1023 = vrot.lane.b32.xlu0 %v1021, 64
    %v1024 = vpop.permute.xlu0 %1023
    %v1026 = vmul.f32 %v1005, %v1024
    %1028 = vrot.lane.b32.xlu0 %v920, 32
    %v1029 = vpop.permute.xlu0 %1028
    %v1030 = vsel %vm301, %v1029, 0
    %1032 = vmatprep.subr.mxu0 0.0
    %1033 = vmatpush1.msra.mxu0 %v403
    %1034 = vmatprep.subr.mxu0 0.0
    %1035 = vmatpush1.msra.mxu0 %v404
    %1036 = vmatprep.subr.mxu0 0.0
    %1037 = vmatpush1.msra.mxu0 %v405
    %1038 = vmatprep.subr.mxu0 0.0
    %1039 = vmatpush1.msra.mxu0 %v406
    %1040 = vmatprep.subr.mxu0 0.0
    %1041 = vmatpush1.msra.mxu0 0.0
    %1042 = vmatprep.subr.mxu0 0.0
    %1043 = vmatpush1.msra.mxu0 0.0
    %1044 = vmatprep.subr.mxu0 0.0
    %1045 = vmatpush1.msra.mxu0 0.0
    %1046 = vmatprep.subr.mxu0 0.0
    %1047 = vmatpush1.msra.mxu0 0.0
    %1048 = vmatprep.subr.mxu0 0.0
    %1049 = vmatpush1.msra.mxu0 0.0
    %1050 = vmatprep.subr.mxu0 0.0
    %1051 = vmatpush1.msra.mxu0 0.0
    %1052 = vmatprep.subr.mxu0 0.0
    %1053 = vmatpush1.msra.mxu0 0.0
    %1054 = vmatprep.subr.mxu0 0.0
    %1055 = vmatpush1.msra.mxu0 0.0
    %1056 = vmatprep.subr.mxu0 0.0
    %1057 = vmatpush1.msra.mxu0 0.0
    %1058 = vmatprep.subr.mxu0 0.0
    %1059 = vmatpush1.msra.mxu0 0.0
    %1060 = vmatprep.subr.mxu0 0.0
    %1061 = vmatpush1.msra.mxu0 0.0
    %1062 = vmatprep.subr.mxu0 0.0
    %1063 = vmatpush1.msra.mxu0 0.0
    %1064 = vmatprep.subr.mxu0 0.0
    %1065 = vmatpush1.msra.mxu0 0.0
    %1066 = vmatprep.subr.mxu0 0.0
    %1067 = vmatpush1.msra.mxu0 0.0
    %1068 = vmatprep.subr.mxu0 0.0
    %1069 = vmatpush1.msra.mxu0 0.0
    %1070 = vmatprep.subr.mxu0 0.0
    %1071 = vmatpush1.msra.mxu0 0.0
    %1072 = vmatprep.subr.mxu0 0.0
    %1073 = vmatpush1.msra.mxu0 0.0
    %1074 = vmatprep.subr.mxu0 0.0
    %1075 = vmatpush1.msra.mxu0 0.0
    %1076 = vmatprep.subr.mxu0 0.0
    %1077 = vmatpush1.msra.mxu0 0.0
    %1078 = vmatprep.subr.mxu0 0.0
    %1079 = vmatpush1.msra.mxu0 0.0
    %1080 = vmatprep.subr.mxu0 0.0
    %1081 = vmatpush1.msra.mxu0 0.0
    %1082 = vmatprep.subr.mxu0 0.0
    %1083 = vmatpush1.msra.mxu0 0.0
    %1084 = vmatprep.subr.mxu0 0.0
    %1085 = vmatpush1.msra.mxu0 0.0
    %1086 = vmatprep.subr.mxu0 0.0
    %1087 = vmatpush1.msra.mxu0 0.0
    %1088 = vmatprep.subr.mxu0 0.0
    %1089 = vmatpush1.msra.mxu0 0.0
    %1090 = vmatprep.subr.mxu0 0.0
    %1091 = vmatpush1.msra.mxu0 0.0
    %1092 = vmatprep.subr.mxu0 0.0
    %1093 = vmatpush1.msra.mxu0 0.0
    %1094 = vmatprep.subr.mxu0 0.0
    %1095 = vmatpush1.msra.mxu0 0.0
    %1096 = vmatprep.mubr.f32.mxu0 0.0
    %1097 = vmatmul.mubr.f32.gmra.mrb[0].mxu0 %v1030
    %v1098 = vpop.f32.mrb[0].mxu0
    %v1099 = vadd.f32 0.0, %v1098
    %v1100 = vpop.f32.mrb[0].mxu0
    %1101 = vdwg.mxu0
    %v1103 = vrot.slane %v1099, 4
    %v1105 = vadd.f32 %v387, %v1103
    %v1106 = vxor.u32 %v1105, 2147483648
    %v1107 = vmul.f32 %v1106, 1.442695
    %v1108 = vpow.pop %v1107
    %v1109 = vadd.f32 %v1108, 1.0
    %v1110 = vrcp.pop %v1109
    %v1111 = vmul.f32 1.0, %v1110
    %v1112 = vtanh.pop %v1105
    %v1114 = vrot.slane %v914, 4
    %v1116 = vmul.f32 %v1111, %v1114
    %1118 = vrot.lane.b32.xlu0 %v1112, 64
    %v1119 = vpop.permute.xlu0 %1118
    %v1121 = vmul.f32 %v1111, %v1119
    %1123 = vrot.lane.b32.xlu0 %v1121, 32
    %v1124 = vpop.permute.xlu0 %1123
    %v1126 = vadd.f32 %v1116, %v1124
    %v1127 = vtanh.pop %v1126
    %1129 = vrot.lane.b32.xlu0 %v1127, 64
    %v1130 = vpop.permute.xlu0 %1129
    %v1132 = vmul.f32 %v1111, %v1130
    %v1134 = vrot.slane %v1026, 4
    %1135 = vrot.lane.b32.xlu0 %v1134, 32
    %v1136 = vpop.permute.xlu0 %1135
    %v1137 = vsel %vm301, %v1136, 0
    %1139 = vmatprep.subr.mxu0 0.0
    %1140 = vmatpush1.msra.mxu0 %v407
    %1141 = vmatprep.subr.mxu0 0.0
    %1142 = vmatpush1.msra.mxu0 %v408
    %1143 = vmatprep.subr.mxu0 0.0
    %1144 = vmatpush1.msra.mxu0 %v409
    %1145 = vmatprep.subr.mxu0 0.0
    %1146 = vmatpush1.msra.mxu0 %v410
    %1147 = vmatprep.subr.mxu0 0.0
    %1148 = vmatpush1.msra.mxu0 0.0
    %1149 = vmatprep.subr.mxu0 0.0
    %1150 = vmatpush1.msra.mxu0 0.0
    %1151 = vmatprep.subr.mxu0 0.0
    %1152 = vmatpush1.msra.mxu0 0.0
    %1153 = vmatprep.subr.mxu0 0.0
    %1154 = vmatpush1.msra.mxu0 0.0
    %1155 = vmatprep.subr.mxu0 0.0
    %1156 = vmatpush1.msra.mxu0 0.0
    %1157 = vmatprep.subr.mxu0 0.0
    %1158 = vmatpush1.msra.mxu0 0.0
    %1159 = vmatprep.subr.mxu0 0.0
    %1160 = vmatpush1.msra.mxu0 0.0
    %1161 = vmatprep.subr.mxu0 0.0
    %1162 = vmatpush1.msra.mxu0 0.0
    %1163 = vmatprep.subr.mxu0 0.0
    %1164 = vmatpush1.msra.mxu0 0.0
    %1165 = vmatprep.subr.mxu0 0.0
    %1166 = vmatpush1.msra.mxu0 0.0
    %1167 = vmatprep.subr.mxu0 0.0
    %1168 = vmatpush1.msra.mxu0 0.0
    %1169 = vmatprep.subr.mxu0 0.0
    %1170 = vmatpush1.msra.mxu0 0.0
    %1171 = vmatprep.subr.mxu0 0.0
    %1172 = vmatpush1.msra.mxu0 0.0
    %1173 = vmatprep.subr.mxu0 0.0
    %1174 = vmatpush1.msra.mxu0 0.0
    %1175 = vmatprep.subr.mxu0 0.0
    %1176 = vmatpush1.msra.mxu0 0.0
    %1177 = vmatprep.subr.mxu0 0.0
    %1178 = vmatpush1.msra.mxu0 0.0
    %1179 = vmatprep.subr.mxu0 0.0
    %1180 = vmatpush1.msra.mxu0 0.0
    %1181 = vmatprep.subr.mxu0 0.0
    %1182 = vmatpush1.msra.mxu0 0.0
    %1183 = vmatprep.subr.mxu0 0.0
    %1184 = vmatpush1.msra.mxu0 0.0
    %1185 = vmatprep.subr.mxu0 0.0
    %1186 = vmatpush1.msra.mxu0 0.0
    %1187 = vmatprep.subr.mxu0 0.0
    %1188 = vmatpush1.msra.mxu0 0.0
    %1189 = vmatprep.subr.mxu0 0.0
    %1190 = vmatpush1.msra.mxu0 0.0
    %1191 = vmatprep.subr.mxu0 0.0
    %1192 = vmatpush1.msra.mxu0 0.0
    %1193 = vmatprep.subr.mxu0 0.0
    %1194 = vmatpush1.msra.mxu0 0.0
    %1195 = vmatprep.subr.mxu0 0.0
    %1196 = vmatpush1.msra.mxu0 0.0
    %1197 = vmatprep.subr.mxu0 0.0
    %1198 = vmatpush1.msra.mxu0 0.0
    %1199 = vmatprep.subr.mxu0 0.0
    %1200 = vmatpush1.msra.mxu0 0.0
    %1201 = vmatprep.subr.mxu0 0.0
    %1202 = vmatpush1.msra.mxu0 0.0
    %1203 = vmatprep.mubr.f32.mxu0 0.0
    %1204 = vmatmul.mubr.f32.gmra.mrb[0].mxu0 %v1137
    %v1205 = vpop.f32.mrb[0].mxu0
    %v1206 = vadd.f32 0.0, %v1205
    %v1207 = vpop.f32.mrb[0].mxu0
    %1208 = vdwg.mxu0
    %v1209 = vadd.f32 %v395, %v1206
    %v1210 = vxor.u32 %v1209, 2147483648
    %v1211 = vmul.f32 %v1210, 1.442695
    %v1212 = vpow.pop %v1211
    %v1213 = vadd.f32 %v1212, 1.0
    %v1214 = vrcp.pop %v1213
    %v1215 = vmul.f32 1.0, %v1214
    %v1216 = vtanh.pop %v1209
    %v1218 = vrot.slane %v1020, 4
    %v1220 = vmul.f32 %v1215, %v1218
    %1222 = vrot.lane.b32.xlu0 %v1216, 64
    %v1223 = vpop.permute.xlu0 %1222
    %v1225 = vmul.f32 %v1215, %v1223
    %1227 = vrot.lane.b32.xlu0 %v1225, 32
    %v1228 = vpop.permute.xlu0 %1227
    %v1230 = vadd.f32 %v1220, %v1228
    %v1231 = vtanh.pop %v1230
    %1233 = vrot.lane.b32.xlu0 %v1231, 64
    %v1234 = vpop.permute.xlu0 %1233
    %v1236 = vmul.f32 %v1215, %v1234
    %v1238 = vrot.slane %v1132, 4
    %1239 = vrot.lane.b32.xlu0 %v1238, 32
    %v1240 = vpop.permute.xlu0 %1239
    %v1241 = vsel %vm301, %v1240, 0
    %1243 = vmatprep.subr.mxu0 0.0
    %1244 = vmatpush1.msra.mxu0 %v403
    %1245 = vmatprep.subr.mxu0 0.0
    %1246 = vmatpush1.msra.mxu0 %v404
    %1247 = vmatprep.subr.mxu0 0.0
    %1248 = vmatpush1.msra.mxu0 %v405
    %1249 = vmatprep.subr.mxu0 0.0
    %1250 = vmatpush1.msra.mxu0 %v406
    %1251 = vmatprep.subr.mxu0 0.0
    %1252 = vmatpush1.msra.mxu0 0.0
    %1253 = vmatprep.subr.mxu0 0.0
    %1254 = vmatpush1.msra.mxu0 0.0
    %1255 = vmatprep.subr.mxu0 0.0
    %1256 = vmatpush1.msra.mxu0 0.0
    %1257 = vmatprep.subr.mxu0 0.0
    %1258 = vmatpush1.msra.mxu0 0.0
    %1259 = vmatprep.subr.mxu0 0.0
    %1260 = vmatpush1.msra.mxu0 0.0
    %1261 = vmatprep.subr.mxu0 0.0
    %1262 = vmatpush1.msra.mxu0 0.0
    %1263 = vmatprep.subr.mxu0 0.0
    %1264 = vmatpush1.msra.mxu0 0.0
    %1265 = vmatprep.subr.mxu0 0.0
    %1266 = vmatpush1.msra.mxu0 0.0
    %1267 = vmatprep.subr.mxu0 0.0
    %1268 = vmatpush1.msra.mxu0 0.0
    %1269 = vmatprep.subr.mxu0 0.0
    %1270 = vmatpush1.msra.mxu0 0.0
    %1271 = vmatprep.subr.mxu0 0.0
    %1272 = vmatpush1.msra.mxu0 0.0
    %1273 = vmatprep.subr.mxu0 0.0
    %1274 = vmatpush1.msra.mxu0 0.0
    %1275 = vmatprep.subr.mxu0 0.0
    %1276 = vmatpush1.msra.mxu0 0.0
    %1277 = vmatprep.subr.mxu0 0.0
    %1278 = vmatpush1.msra.mxu0 0.0
    %1279 = vmatprep.subr.mxu0 0.0
    %1280 = vmatpush1.msra.mxu0 0.0
    %1281 = vmatprep.subr.mxu0 0.0
    %1282 = vmatpush1.msra.mxu0 0.0
    %1283 = vmatprep.subr.mxu0 0.0
    %1284 = vmatpush1.msra.mxu0 0.0
    %1285 = vmatprep.subr.mxu0 0.0
    %1286 = vmatpush1.msra.mxu0 0.0
    %1287 = vmatprep.subr.mxu0 0.0
    %1288 = vmatpush1.msra.mxu0 0.0
    %1289 = vmatprep.subr.mxu0 0.0
    %1290 = vmatpush1.msra.mxu0 0.0
    %1291 = vmatprep.subr.mxu0 0.0
    %1292 = vmatpush1.msra.mxu0 0.0
    %1293 = vmatprep.subr.mxu0 0.0
    %1294 = vmatpush1.msra.mxu0 0.0
    %1295 = vmatprep.subr.mxu0 0.0
    %1296 = vmatpush1.msra.mxu0 0.0
    %1297 = vmatprep.subr.mxu0 0.0
    %1298 = vmatpush1.msra.mxu0 0.0
    %1299 = vmatprep.subr.mxu0 0.0
    %1300 = vmatpush1.msra.mxu0 0.0
    %1301 = vmatprep.subr.mxu0 0.0
    %1302 = vmatpush1.msra.mxu0 0.0
    %1303 = vmatprep.subr.mxu0 0.0
    %1304 = vmatpush1.msra.mxu0 0.0
    %1305 = vmatprep.subr.mxu0 0.0
    %1306 = vmatpush1.msra.mxu0 0.0
    %1307 = vmatprep.mubr.f32.mxu0 0.0
    %1308 = vmatmul.mubr.f32.gmra.mrb[0].mxu0 %v1241
    %v1309 = vpop.f32.mrb[0].mxu0
    %v1310 = vadd.f32 0.0, %v1309
    %v1311 = vpop.f32.mrb[0].mxu0
    %1312 = vdwg.mxu0
    %v1313 = vadd.f32 %v393, %v1310
    %v1314 = vxor.u32 %v1313, 2147483648
    %v1315 = vmul.f32 %v1314, 1.442695
    %v1316 = vpow.pop %v1315
    %v1317 = vadd.f32 %v1316, 1.0
    %v1318 = vrcp.pop %v1317
    %v1319 = vmul.f32 1.0, %v1318
    %v1320 = vtanh.pop %v1313
    %v1322 = vrot.slane %v1126, 4
    %v1324 = vmul.f32 %v1319, %v1322
    %1326 = vrot.lane.b32.xlu0 %v1320, 64
    %v1327 = vpop.permute.xlu0 %1326
    %v1329 = vmul.f32 %v1319, %v1327
    %1331 = vrot.lane.b32.xlu0 %v1329, 32
    %v1332 = vpop.permute.xlu0 %1331
    %v1334 = vadd.f32 %v1324, %v1332
    %v1335 = vtanh.pop %v1334
    %1337 = vrot.lane.b32.xlu0 %v1335, 64
    %v1338 = vpop.permute.xlu0 %1337
    %v1340 = vmul.f32 %v1319, %v1338
    %1342 = vrot.lane.b32.xlu0 %v1236, 32
    %v1343 = vpop.permute.xlu0 %1342
    %v1344 = vsel %vm301, %v1343, 0
    %1346 = vmatprep.subr.mxu0 0.0
    %1347 = vmatpush1.msra.mxu0 %v407
    %1348 = vmatprep.subr.mxu0 0.0
    %1349 = vmatpush1.msra.mxu0 %v408
    %1350 = vmatprep.subr.mxu0 0.0
    %1351 = vmatpush1.msra.mxu0 %v409
    %1352 = vmatprep.subr.mxu0 0.0
    %1353 = vmatpush1.msra.mxu0 %v410
    %1354 = vmatprep.subr.mxu0 0.0
    %1355 = vmatpush1.msra.mxu0 0.0
    %1356 = vmatprep.subr.mxu0 0.0
    %1357 = vmatpush1.msra.mxu0 0.0
    %1358 = vmatprep.subr.mxu0 0.0
    %1359 = vmatpush1.msra.mxu0 0.0
    %1360 = vmatprep.subr.mxu0 0.0
    %1361 = vmatpush1.msra.mxu0 0.0
    %1362 = vmatprep.subr.mxu0 0.0
    %1363 = vmatpush1.msra.mxu0 0.0
    %1364 = vmatprep.subr.mxu0 0.0
    %1365 = vmatpush1.msra.mxu0 0.0
    %1366 = vmatprep.subr.mxu0 0.0
    %1367 = vmatpush1.msra.mxu0 0.0
    %1368 = vmatprep.subr.mxu0 0.0
    %1369 = vmatpush1.msra.mxu0 0.0
    %1370 = vmatprep.subr.mxu0 0.0
    %1371 = vmatpush1.msra.mxu0 0.0
    %1372 = vmatprep.subr.mxu0 0.0
    %1373 = vmatpush1.msra.mxu0 0.0
    %1374 = vmatprep.subr.mxu0 0.0
    %1375 = vmatpush1.msra.mxu0 0.0
    %1376 = vmatprep.subr.mxu0 0.0
    %1377 = vmatpush1.msra.mxu0 0.0
    %1378 = vmatprep.subr.mxu0 0.0
    %1379 = vmatpush1.msra.mxu0 0.0
    %1380 = vmatprep.subr.mxu0 0.0
    %1381 = vmatpush1.msra.mxu0 0.0
    %1382 = vmatprep.subr.mxu0 0.0
    %1383 = vmatpush1.msra.mxu0 0.0
    %1384 = vmatprep.subr.mxu0 0.0
    %1385 = vmatpush1.msra.mxu0 0.0
    %1386 = vmatprep.subr.mxu0 0.0
    %1387 = vmatpush1.msra.mxu0 0.0
    %1388 = vmatprep.subr.mxu0 0.0
    %1389 = vmatpush1.msra.mxu0 0.0
    %1390 = vmatprep.subr.mxu0 0.0
    %1391 = vmatpush1.msra.mxu0 0.0
    %1392 = vmatprep.subr.mxu0 0.0
    %1393 = vmatpush1.msra.mxu0 0.0
    %1394 = vmatprep.subr.mxu0 0.0
    %1395 = vmatpush1.msra.mxu0 0.0
    %1396 = vmatprep.subr.mxu0 0.0
    %1397 = vmatpush1.msra.mxu0 0.0
    %1398 = vmatprep.subr.mxu0 0.0
    %1399 = vmatpush1.msra.mxu0 0.0
    %1400 = vmatprep.subr.mxu0 0.0
    %1401 = vmatpush1.msra.mxu0 0.0
    %1402 = vmatprep.subr.mxu0 0.0
    %1403 = vmatpush1.msra.mxu0 0.0
    %1404 = vmatprep.subr.mxu0 0.0
    %1405 = vmatpush1.msra.mxu0 0.0
    %1406 = vmatprep.subr.mxu0 0.0
    %1407 = vmatpush1.msra.mxu0 0.0
    %1408 = vmatprep.subr.mxu0 0.0
    %1409 = vmatpush1.msra.mxu0 0.0
    %1410 = vmatprep.mubr.f32.mxu0 0.0
    %1411 = vmatmul.mubr.f32.gmra.mrb[0].mxu0 %v1344
    %v1412 = vpop.f32.mrb[0].mxu0
    %v1413 = vadd.f32 0.0, %v1412
    %v1414 = vpop.f32.mrb[0].mxu0
    %1415 = vdwg.mxu0
    %v1417 = vrot.slane %v1413, 4
    %v1419 = vadd.f32 %v389, %v1417
    %v1420 = vxor.u32 %v1419, 2147483648
    %v1421 = vmul.f32 %v1420, 1.442695
    %v1422 = vpow.pop %v1421
    %v1423 = vadd.f32 %v1422, 1.0
    %v1424 = vrcp.pop %v1423
    %v1425 = vmul.f32 1.0, %v1424
    %v1426 = vtanh.pop %v1419
    %v1428 = vrot.slane %v1230, 4
    %v1430 = vmul.f32 %v1425, %v1428
    %1432 = vrot.lane.b32.xlu0 %v1426, 64
    %v1433 = vpop.permute.xlu0 %1432
    %v1435 = vmul.f32 %v1425, %v1433
    %1437 = vrot.lane.b32.xlu0 %v1435, 32
    %v1438 = vpop.permute.xlu0 %1437
    %v1440 = vadd.f32 %v1430, %v1438
    %v1441 = vtanh.pop %v1440
    %1443 = vrot.lane.b32.xlu0 %v1441, 64
    %v1444 = vpop.permute.xlu0 %1443
    %v1446 = vmul.f32 %v1425, %v1444
    %1448 = vrot.lane.b32.xlu0 %v1340, 32
    %v1449 = vpop.permute.xlu0 %1448
    %v1450 = vsel %vm301, %v1449, 0
    %1452 = vmatprep.subr.mxu0 0.0
    %1453 = vmatpush1.msra.mxu0 %v403
    %1454 = vmatprep.subr.mxu0 0.0
    %1455 = vmatpush1.msra.mxu0 %v404
    %1456 = vmatprep.subr.mxu0 0.0
    %1457 = vmatpush1.msra.mxu0 %v405
    %1458 = vmatprep.subr.mxu0 0.0
    %1459 = vmatpush1.msra.mxu0 %v406
    %1460 = vmatprep.subr.mxu0 0.0
    %1461 = vmatpush1.msra.mxu0 0.0
    %1462 = vmatprep.subr.mxu0 0.0
    %1463 = vmatpush1.msra.mxu0 0.0
    %1464 = vmatprep.subr.mxu0 0.0
    %1465 = vmatpush1.msra.mxu0 0.0
    %1466 = vmatprep.subr.mxu0 0.0
    %1467 = vmatpush1.msra.mxu0 0.0
    %1468 = vmatprep.subr.mxu0 0.0
    %1469 = vmatpush1.msra.mxu0 0.0
    %1470 = vmatprep.subr.mxu0 0.0
    %1471 = vmatpush1.msra.mxu0 0.0
    %1472 = vmatprep.subr.mxu0 0.0
    %1473 = vmatpush1.msra.mxu0 0.0
    %1474 = vmatprep.subr.mxu0 0.0
    %1475 = vmatpush1.msra.mxu0 0.0
    %1476 = vmatprep.subr.mxu0 0.0
    %1477 = vmatpush1.msra.mxu0 0.0
    %1478 = vmatprep.subr.mxu0 0.0
    %1479 = vmatpush1.msra.mxu0 0.0
    %1480 = vmatprep.subr.mxu0 0.0
    %1481 = vmatpush1.msra.mxu0 0.0
    %1482 = vmatprep.subr.mxu0 0.0
    %1483 = vmatpush1.msra.mxu0 0.0
    %1484 = vmatprep.subr.mxu0 0.0
    %1485 = vmatpush1.msra.mxu0 0.0
    %1486 = vmatprep.subr.mxu0 0.0
    %1487 = vmatpush1.msra.mxu0 0.0
    %1488 = vmatprep.subr.mxu0 0.0
    %1489 = vmatpush1.msra.mxu0 0.0
    %1490 = vmatprep.subr.mxu0 0.0
    %1491 = vmatpush1.msra.mxu0 0.0
    %1492 = vmatprep.subr.mxu0 0.0
    %1493 = vmatpush1.msra.mxu0 0.0
    %1494 = vmatprep.subr.mxu0 0.0
    %1495 = vmatpush1.msra.mxu0 0.0
    %1496 = vmatprep.subr.mxu0 0.0
    %1497 = vmatpush1.msra.mxu0 0.0
    %1498 = vmatprep.subr.mxu0 0.0
    %1499 = vmatpush1.msra.mxu0 0.0
    %1500 = vmatprep.subr.mxu0 0.0
    %1501 = vmatpush1.msra.mxu0 0.0
    %1502 = vmatprep.subr.mxu0 0.0
    %1503 = vmatpush1.msra.mxu0 0.0
    %1504 = vmatprep.subr.mxu0 0.0
    %1505 = vmatpush1.msra.mxu0 0.0
    %1506 = vmatprep.subr.mxu0 0.0
    %1507 = vmatpush1.msra.mxu0 0.0
    %1508 = vmatprep.subr.mxu0 0.0
    %1509 = vmatpush1.msra.mxu0 0.0
    %1510 = vmatprep.subr.mxu0 0.0
    %1511 = vmatpush1.msra.mxu0 0.0
    %1512 = vmatprep.subr.mxu0 0.0
    %1513 = vmatpush1.msra.mxu0 0.0
    %1514 = vmatprep.subr.mxu0 0.0
    %1515 = vmatpush1.msra.mxu0 0.0
    %1516 = vmatprep.mubr.f32.mxu0 0.0
    %1517 = vmatmul.mubr.f32.gmra.mrb[0].mxu0 %v1450
    %v1518 = vpop.f32.mrb[0].mxu0
    %v1519 = vadd.f32 0.0, %v1518
    %v1520 = vpop.f32.mrb[0].mxu0
    %1521 = vdwg.mxu0
    %v1523 = vrot.slane %v1519, 4
    %v1525 = vadd.f32 %v393, %v1523
    %v1526 = vxor.u32 %v1525, 2147483648
    %v1527 = vmul.f32 %v1526, 1.442695
    %v1528 = vpow.pop %v1527
    %v1529 = vadd.f32 %v1528, 1.0
    %v1530 = vrcp.pop %v1529
    %v1531 = vmul.f32 1.0, %v1530
    %v1532 = vtanh.pop %v1525
    %v1534 = vrot.slane %v1334, 4
    %v1536 = vmul.f32 %v1531, %v1534
    %1538 = vrot.lane.b32.xlu0 %v1532, 64
    %v1539 = vpop.permute.xlu0 %1538
    %v1541 = vmul.f32 %v1531, %v1539
    %1543 = vrot.lane.b32.xlu0 %v1541, 32
    %v1544 = vpop.permute.xlu0 %1543
    %v1546 = vadd.f32 %v1536, %v1544
    %v1547 = vtanh.pop %v1546
    %1549 = vrot.lane.b32.xlu0 %v1547, 64
    %v1550 = vpop.permute.xlu0 %1549
    %v1552 = vmul.f32 %v1531, %v1550
    %v1554 = vrot.slane %v1446, 4
    %1555 = vrot.lane.b32.xlu0 %v1554, 32
    %v1556 = vpop.permute.xlu0 %1555
    %v1557 = vsel %vm301, %v1556, 0
    %1559 = vmatprep.subr.mxu0 0.0
    %1560 = vmatpush1.msra.mxu0 %v407
    %1561 = vmatprep.subr.mxu0 0.0
    %1562 = vmatpush1.msra.mxu0 %v408
    %1563 = vmatprep.subr.mxu0 0.0
    %1564 = vmatpush1.msra.mxu0 %v409
    %1565 = vmatprep.subr.mxu0 0.0
    %1566 = vmatpush1.msra.mxu0 %v410
    %1567 = vmatprep.subr.mxu0 0.0
    %1568 = vmatpush1.msra.mxu0 0.0
    %1569 = vmatprep.subr.mxu0 0.0
    %1570 = vmatpush1.msra.mxu0 0.0
    %1571 = vmatprep.subr.mxu0 0.0
    %1572 = vmatpush1.msra.mxu0 0.0
    %1573 = vmatprep.subr.mxu0 0.0
    %1574 = vmatpush1.msra.mxu0 0.0
    %1575 = vmatprep.subr.mxu0 0.0
    %1576 = vmatpush1.msra.mxu0 0.0
    %1577 = vmatprep.subr.mxu0 0.0
    %1578 = vmatpush1.msra.mxu0 0.0
    %1579 = vmatprep.subr.mxu0 0.0
    %1580 = vmatpush1.msra.mxu0 0.0
    %1581 = vmatprep.subr.mxu0 0.0
    %1582 = vmatpush1.msra.mxu0 0.0
    %1583 = vmatprep.subr.mxu0 0.0
    %1584 = vmatpush1.msra.mxu0 0.0
    %1585 = vmatprep.subr.mxu0 0.0
    %1586 = vmatpush1.msra.mxu0 0.0
    %1587 = vmatprep.subr.mxu0 0.0
    %1588 = vmatpush1.msra.mxu0 0.0
    %1589 = vmatprep.subr.mxu0 0.0
    %1590 = vmatpush1.msra.mxu0 0.0
    %1591 = vmatprep.subr.mxu0 0.0
    %1592 = vmatpush1.msra.mxu0 0.0
    %1593 = vmatprep.subr.mxu0 0.0
    %1594 = vmatpush1.msra.mxu0 0.0
    %1595 = vmatprep.subr.mxu0 0.0
    %1596 = vmatpush1.msra.mxu0 0.0
    %1597 = vmatprep.subr.mxu0 0.0
    %1598 = vmatpush1.msra.mxu0 0.0
    %1599 = vmatprep.subr.mxu0 0.0
    %1600 = vmatpush1.msra.mxu0 0.0
    %1601 = vmatprep.subr.mxu0 0.0
    %1602 = vmatpush1.msra.mxu0 0.0
    %1603 = vmatprep.subr.mxu0 0.0
    %1604 = vmatpush1.msra.mxu0 0.0
    %1605 = vmatprep.subr.mxu0 0.0
    %1606 = vmatpush1.msra.mxu0 0.0
    %1607 = vmatprep.subr.mxu0 0.0
    %1608 = vmatpush1.msra.mxu0 0.0
    %1609 = vmatprep.subr.mxu0 0.0
    %1610 = vmatpush1.msra.mxu0 0.0
    %1611 = vmatprep.subr.mxu0 0.0
    %1612 = vmatpush1.msra.mxu0 0.0
    %1613 = vmatprep.subr.mxu0 0.0
    %1614 = vmatpush1.msra.mxu0 0.0
    %1615 = vmatprep.subr.mxu0 0.0
    %1616 = vmatpush1.msra.mxu0 0.0
    %1617 = vmatprep.subr.mxu0 0.0
    %1618 = vmatpush1.msra.mxu0 0.0
    %1619 = vmatprep.subr.mxu0 0.0
    %1620 = vmatpush1.msra.mxu0 0.0
    %1621 = vmatprep.subr.mxu0 0.0
    %1622 = vmatpush1.msra.mxu0 0.0
    %1623 = vmatprep.mubr.f32.mxu0 0.0
    %1624 = vmatmul.mubr.f32.gmra.mrb[0].mxu0 %v1557
    %v1625 = vpop.f32.mrb[0].mxu0
    %v1626 = vadd.f32 0.0, %v1625
    %v1627 = vpop.f32.mrb[0].mxu0
    %1628 = vdwg.mxu0
    %v1629 = vadd.f32 %v389, %v1626
    %v1630 = vxor.u32 %v1629, 2147483648
    %v1631 = vmul.f32 %v1630, 1.442695
    %v1632 = vpow.pop %v1631
    %v1633 = vadd.f32 %v1632, 1.0
    %v1634 = vrcp.pop %v1633
    %v1635 = vmul.f32 1.0, %v1634
    %v1636 = vtanh.pop %v1629
    %v1638 = vrot.slane %v1440, 4
    %v1640 = vmul.f32 %v1635, %v1638
    %1642 = vrot.lane.b32.xlu0 %v1636, 64
    %v1643 = vpop.permute.xlu0 %1642
    %v1645 = vmul.f32 %v1635, %v1643
    %1647 = vrot.lane.b32.xlu0 %v1645, 32
    %v1648 = vpop.permute.xlu0 %1647
    %v1650 = vadd.f32 %v1640, %v1648
    %v1651 = vtanh.pop %v1650
    %1653 = vrot.lane.b32.xlu0 %v1651, 64
    %v1654 = vpop.permute.xlu0 %1653
    %v1656 = vmul.f32 %v1635, %v1654
    %v1658 = vrot.slane %v1552, 4
    %1659 = vrot.lane.b32.xlu0 %v1658, 32
    %v1660 = vpop.permute.xlu0 %1659
    %v1661 = vsel %vm301, %v1660, 0
    %1663 = vmatprep.subr.mxu0 0.0
    %1664 = vmatpush1.msra.mxu0 %v403
    %1665 = vmatprep.subr.mxu0 0.0
    %1666 = vmatpush1.msra.mxu0 %v404
    %1667 = vmatprep.subr.mxu0 0.0
    %1668 = vmatpush1.msra.mxu0 %v405
    %1669 = vmatprep.subr.mxu0 0.0
    %1670 = vmatpush1.msra.mxu0 %v406
    %1671 = vmatprep.subr.mxu0 0.0
    %1672 = vmatpush1.msra.mxu0 0.0
    %1673 = vmatprep.subr.mxu0 0.0
    %1674 = vmatpush1.msra.mxu0 0.0
    %1675 = vmatprep.subr.mxu0 0.0
    %1676 = vmatpush1.msra.mxu0 0.0
    %1677 = vmatprep.subr.mxu0 0.0
    %1678 = vmatpush1.msra.mxu0 0.0
    %1679 = vmatprep.subr.mxu0 0.0
    %1680 = vmatpush1.msra.mxu0 0.0
    %1681 = vmatprep.subr.mxu0 0.0
    %1682 = vmatpush1.msra.mxu0 0.0
    %1683 = vmatprep.subr.mxu0 0.0
    %1684 = vmatpush1.msra.mxu0 0.0
    %1685 = vmatprep.subr.mxu0 0.0
    %1686 = vmatpush1.msra.mxu0 0.0
    %1687 = vmatprep.subr.mxu0 0.0
    %1688 = vmatpush1.msra.mxu0 0.0
    %1689 = vmatprep.subr.mxu0 0.0
    %1690 = vmatpush1.msra.mxu0 0.0
    %1691 = vmatprep.subr.mxu0 0.0
    %1692 = vmatpush1.msra.mxu0 0.0
    %1693 = vmatprep.subr.mxu0 0.0
    %1694 = vmatpush1.msra.mxu0 0.0
    %1695 = vmatprep.subr.mxu0 0.0
    %1696 = vmatpush1.msra.mxu0 0.0
    %1697 = vmatprep.subr.mxu0 0.0
    %1698 = vmatpush1.msra.mxu0 0.0
    %1699 = vmatprep.subr.mxu0 0.0
    %1700 = vmatpush1.msra.mxu0 0.0
    %1701 = vmatprep.subr.mxu0 0.0
    %1702 = vmatpush1.msra.mxu0 0.0
    %1703 = vmatprep.subr.mxu0 0.0
    %1704 = vmatpush1.msra.mxu0 0.0
    %1705 = vmatprep.subr.mxu0 0.0
    %1706 = vmatpush1.msra.mxu0 0.0
    %1707 = vmatprep.subr.mxu0 0.0
    %1708 = vmatpush1.msra.mxu0 0.0
    %1709 = vmatprep.subr.mxu0 0.0
    %1710 = vmatpush1.msra.mxu0 0.0
    %1711 = vmatprep.subr.mxu0 0.0
    %1712 = vmatpush1.msra.mxu0 0.0
    %1713 = vmatprep.subr.mxu0 0.0
    %1714 = vmatpush1.msra.mxu0 0.0
    %1715 = vmatprep.subr.mxu0 0.0
    %1716 = vmatpush1.msra.mxu0 0.0
    %1717 = vmatprep.subr.mxu0 0.0
    %1718 = vmatpush1.msra.mxu0 0.0
    %1719 = vmatprep.subr.mxu0 0.0
    %1720 = vmatpush1.msra.mxu0 0.0
    %1721 = vmatprep.subr.mxu0 0.0
    %1722 = vmatpush1.msra.mxu0 0.0
    %1723 = vmatprep.subr.mxu0 0.0
    %1724 = vmatpush1.msra.mxu0 0.0
    %1725 = vmatprep.subr.mxu0 0.0
    %1726 = vmatpush1.msra.mxu0 0.0
    %1727 = vmatprep.mubr.f32.mxu0 0.0
    %1728 = vmatmul.mubr.f32.gmra.mrb[0].mxu0 %v1661
    %v1729 = vpop.f32.mrb[0].mxu0
    %v1730 = vadd.f32 0.0, %v1729
    %v1731 = vpop.f32.mrb[0].mxu0
    %1732 = vdwg.mxu0
    %v1733 = vadd.f32 %v399, %v1730
    %v1734 = vxor.u32 %v1733, 2147483648
    %v1735 = vmul.f32 %v1734, 1.442695
    %v1736 = vpow.pop %v1735
    %v1737 = vadd.f32 %v1736, 1.0
    %v1738 = vrcp.pop %v1737
    %v1739 = vmul.f32 1.0, %v1738
    %v1740 = vtanh.pop %v1733
    %v1742 = vrot.slane %v1546, 4
    %v1744 = vmul.f32 %v1739, %v1742
    %1746 = vrot.lane.b32.xlu0 %v1740, 64
    %v1747 = vpop.permute.xlu0 %1746
    %v1749 = vmul.f32 %v1739, %v1747
    %1751 = vrot.lane.b32.xlu0 %v1749, 32
    %v1752 = vpop.permute.xlu0 %1751
    %v1754 = vadd.f32 %v1744, %v1752
    %v1755 = vtanh.pop %v1754
    %1757 = vrot.lane.b32.xlu0 %v1755, 64
    %v1758 = vpop.permute.xlu0 %1757
    %v1760 = vmul.f32 %v1739, %v1758
    %1762 = vrot.lane.b32.xlu0 %v1656, 32
    %v1763 = vpop.permute.xlu0 %1762
    %v1764 = vsel %vm301, %v1763, 0
    %1766 = vmatprep.subr.mxu0 0.0
    %1767 = vmatpush1.msra.mxu0 %v407
    %1768 = vmatprep.subr.mxu0 0.0
    %1769 = vmatpush1.msra.mxu0 %v408
    %1770 = vmatprep.subr.mxu0 0.0
    %1771 = vmatpush1.msra.mxu0 %v409
    %1772 = vmatprep.subr.mxu0 0.0
    %1773 = vmatpush1.msra.mxu0 %v410
    %1774 = vmatprep.subr.mxu0 0.0
    %1775 = vmatpush1.msra.mxu0 0.0
    %1776 = vmatprep.subr.mxu0 0.0
    %1777 = vmatpush1.msra.mxu0 0.0
    %1778 = vmatprep.subr.mxu0 0.0
    %1779 = vmatpush1.msra.mxu0 0.0
    %1780 = vmatprep.subr.mxu0 0.0
    %1781 = vmatpush1.msra.mxu0 0.0
    %1782 = vmatprep.subr.mxu0 0.0
    %1783 = vmatpush1.msra.mxu0 0.0
    %1784 = vmatprep.subr.mxu0 0.0
    %1785 = vmatpush1.msra.mxu0 0.0
    %1786 = vmatprep.subr.mxu0 0.0
    %1787 = vmatpush1.msra.mxu0 0.0
    %1788 = vmatprep.subr.mxu0 0.0
    %1789 = vmatpush1.msra.mxu0 0.0
    %1790 = vmatprep.subr.mxu0 0.0
    %1791 = vmatpush1.msra.mxu0 0.0
    %1792 = vmatprep.subr.mxu0 0.0
    %1793 = vmatpush1.msra.mxu0 0.0
    %1794 = vmatprep.subr.mxu0 0.0
    %1795 = vmatpush1.msra.mxu0 0.0
    %1796 = vmatprep.subr.mxu0 0.0
    %1797 = vmatpush1.msra.mxu0 0.0
    %1798 = vmatprep.subr.mxu0 0.0
    %1799 = vmatpush1.msra.mxu0 0.0
    %1800 = vmatprep.subr.mxu0 0.0
    %1801 = vmatpush1.msra.mxu0 0.0
    %1802 = vmatprep.subr.mxu0 0.0
    %1803 = vmatpush1.msra.mxu0 0.0
    %1804 = vmatprep.subr.mxu0 0.0
    %1805 = vmatpush1.msra.mxu0 0.0
    %1806 = vmatprep.subr.mxu0 0.0
    %1807 = vmatpush1.msra.mxu0 0.0
    %1808 = vmatprep.subr.mxu0 0.0
    %1809 = vmatpush1.msra.mxu0 0.0
    %1810 = vmatprep.subr.mxu0 0.0
    %1811 = vmatpush1.msra.mxu0 0.0
    %1812 = vmatprep.subr.mxu0 0.0
    %1813 = vmatpush1.msra.mxu0 0.0
    %1814 = vmatprep.subr.mxu0 0.0
    %1815 = vmatpush1.msra.mxu0 0.0
    %1816 = vmatprep.subr.mxu0 0.0
    %1817 = vmatpush1.msra.mxu0 0.0
    %1818 = vmatprep.subr.mxu0 0.0
    %1819 = vmatpush1.msra.mxu0 0.0
    %1820 = vmatprep.subr.mxu0 0.0
    %1821 = vmatpush1.msra.mxu0 0.0
    %1822 = vmatprep.subr.mxu0 0.0
    %1823 = vmatpush1.msra.mxu0 0.0
    %1824 = vmatprep.subr.mxu0 0.0
    %1825 = vmatpush1.msra.mxu0 0.0
    %1826 = vmatprep.subr.mxu0 0.0
    %1827 = vmatpush1.msra.mxu0 0.0
    %1828 = vmatprep.subr.mxu0 0.0
    %1829 = vmatpush1.msra.mxu0 0.0
    %1830 = vmatprep.mubr.f32.mxu0 0.0
    %1831 = vmatmul.mubr.f32.gmra.mrb[0].mxu0 %v1764
    %v1832 = vpop.f32.mrb[0].mxu0
    %v1833 = vadd.f32 0.0, %v1832
    %v1834 = vpop.f32.mrb[0].mxu0
    %1835 = vdwg.mxu0
    %v1837 = vrot.slane %v1833, 4
    %v1839 = vadd.f32 %v383, %v1837
    %v1840 = vxor.u32 %v1839, 2147483648
    %v1841 = vmul.f32 %v1840, 1.442695
    %v1842 = vpow.pop %v1841
    %v1843 = vadd.f32 %v1842, 1.0
    %v1844 = vrcp.pop %v1843
    %v1845 = vmul.f32 1.0, %v1844
    %v1846 = vtanh.pop %v1839
    %v1848 = vrot.slane %v1650, 4
    %v1850 = vmul.f32 %v1845, %v1848
    %1852 = vrot.lane.b32.xlu0 %v1846, 64
    %v1853 = vpop.permute.xlu0 %1852
    %v1855 = vmul.f32 %v1845, %v1853
    %1857 = vrot.lane.b32.xlu0 %v1855, 32
    %v1858 = vpop.permute.xlu0 %1857
    %v1860 = vadd.f32 %v1850, %v1858
    %v1861 = vtanh.pop %v1860
    %1863 = vrot.lane.b32.xlu0 %v1861, 64
    %v1864 = vpop.permute.xlu0 %1863
    %v1866 = vmul.f32 %v1845, %v1864
    %1868 = vrot.lane.b32.xlu0 %v1760, 32
    %v1869 = vpop.permute.xlu0 %1868
    %v1870 = vsel %vm301, %v1869, 0
    %1872 = vmatprep.subr.mxu0 0.0
    %1873 = vmatpush1.msra.mxu0 %v403
    %1874 = vmatprep.subr.mxu0 0.0
    %1875 = vmatpush1.msra.mxu0 %v404
    %1876 = vmatprep.subr.mxu0 0.0
    %1877 = vmatpush1.msra.mxu0 %v405
    %1878 = vmatprep.subr.mxu0 0.0
    %1879 = vmatpush1.msra.mxu0 %v406
    %1880 = vmatprep.subr.mxu0 0.0
    %1881 = vmatpush1.msra.mxu0 0.0
    %1882 = vmatprep.subr.mxu0 0.0
    %1883 = vmatpush1.msra.mxu0 0.0
    %1884 = vmatprep.subr.mxu0 0.0
    %1885 = vmatpush1.msra.mxu0 0.0
    %1886 = vmatprep.subr.mxu0 0.0
    %1887 = vmatpush1.msra.mxu0 0.0
    %1888 = vmatprep.subr.mxu0 0.0
    %1889 = vmatpush1.msra.mxu0 0.0
    %1890 = vmatprep.subr.mxu0 0.0
    %1891 = vmatpush1.msra.mxu0 0.0
    %1892 = vmatprep.subr.mxu0 0.0
    %1893 = vmatpush1.msra.mxu0 0.0
    %1894 = vmatprep.subr.mxu0 0.0
    %1895 = vmatpush1.msra.mxu0 0.0
    %1896 = vmatprep.subr.mxu0 0.0
    %1897 = vmatpush1.msra.mxu0 0.0
    %1898 = vmatprep.subr.mxu0 0.0
    %1899 = vmatpush1.msra.mxu0 0.0
    %1900 = vmatprep.subr.mxu0 0.0
    %1901 = vmatpush1.msra.mxu0 0.0
    %1902 = vmatprep.subr.mxu0 0.0
    %1903 = vmatpush1.msra.mxu0 0.0
    %1904 = vmatprep.subr.mxu0 0.0
    %1905 = vmatpush1.msra.mxu0 0.0
    %1906 = vmatprep.subr.mxu0 0.0
    %1907 = vmatpush1.msra.mxu0 0.0
    %1908 = vmatprep.subr.mxu0 0.0
    %1909 = vmatpush1.msra.mxu0 0.0
    %1910 = vmatprep.subr.mxu0 0.0
    %1911 = vmatpush1.msra.mxu0 0.0
    %1912 = vmatprep.subr.mxu0 0.0
    %1913 = vmatpush1.msra.mxu0 0.0
    %1914 = vmatprep.subr.mxu0 0.0
    %1915 = vmatpush1.msra.mxu0 0.0
    %1916 = vmatprep.subr.mxu0 0.0
    %1917 = vmatpush1.msra.mxu0 0.0
    %1918 = vmatprep.subr.mxu0 0.0
    %1919 = vmatpush1.msra.mxu0 0.0
    %1920 = vmatprep.subr.mxu0 0.0
    %1921 = vmatpush1.msra.mxu0 0.0
    %1922 = vmatprep.subr.mxu0 0.0
    %1923 = vmatpush1.msra.mxu0 0.0
    %1924 = vmatprep.subr.mxu0 0.0
    %1925 = vmatpush1.msra.mxu0 0.0
    %1926 = vmatprep.subr.mxu0 0.0
    %1927 = vmatpush1.msra.mxu0 0.0
    %1928 = vmatprep.subr.mxu0 0.0
    %1929 = vmatpush1.msra.mxu0 0.0
    %1930 = vmatprep.subr.mxu0 0.0
    %1931 = vmatpush1.msra.mxu0 0.0
    %1932 = vmatprep.subr.mxu0 0.0
    %1933 = vmatpush1.msra.mxu0 0.0
    %1934 = vmatprep.subr.mxu0 0.0
    %1935 = vmatpush1.msra.mxu0 0.0
    %1936 = vmatprep.mubr.f32.mxu0 0.0
    %1937 = vmatmul.mubr.f32.gmra.mrb[0].mxu0 %v1870
    %v1938 = vpop.f32.mrb[0].mxu0
    %v1939 = vadd.f32 0.0, %v1938
    %v1940 = vpop.f32.mrb[0].mxu0
    %1941 = vdwg.mxu0
    %v1943 = vrot.slane %v1939, 4
    %v1945 = vadd.f32 %v399, %v1943
    %v1946 = vxor.u32 %v1945, 2147483648
    %v1947 = vmul.f32 %v1946, 1.442695
    %v1948 = vpow.pop %v1947
    %v1949 = vadd.f32 %v1948, 1.0
    %v1950 = vrcp.pop %v1949
    %v1951 = vmul.f32 1.0, %v1950
    %v1952 = vtanh.pop %v1945
    %v1954 = vrot.slane %v1754, 4
    %v1956 = vmul.f32 %v1951, %v1954
    %1958 = vrot.lane.b32.xlu0 %v1952, 64
    %v1959 = vpop.permute.xlu0 %1958
    %v1961 = vmul.f32 %v1951, %v1959
    %1963 = vrot.lane.b32.xlu0 %v1961, 32
    %v1964 = vpop.permute.xlu0 %1963
    %v1966 = vadd.f32 %v1956, %v1964
    %v1967 = vtanh.pop %v1966
    %1969 = vrot.lane.b32.xlu0 %v1967, 64
    %v1970 = vpop.permute.xlu0 %1969
    %v1972 = vmul.f32 %v1951, %v1970
    %v1974 = vrot.slane %v1866, 4
    %1975 = vrot.lane.b32.xlu0 %v1974, 32
    %v1976 = vpop.permute.xlu0 %1975
    %v1977 = vsel %vm301, %v1976, 0
    %1979 = vmatprep.subr.mxu0 0.0
    %1980 = vmatpush1.msra.mxu0 %v407
    %1981 = vmatprep.subr.mxu0 0.0
    %1982 = vmatpush1.msra.mxu0 %v408
    %1983 = vmatprep.subr.mxu0 0.0
    %1984 = vmatpush1.msra.mxu0 %v409
    %1985 = vmatprep.subr.mxu0 0.0
    %1986 = vmatpush1.msra.mxu0 %v410
    %1987 = vmatprep.subr.mxu0 0.0
    %1988 = vmatpush1.msra.mxu0 0.0
    %1989 = vmatprep.subr.mxu0 0.0
    %1990 = vmatpush1.msra.mxu0 0.0
    %1991 = vmatprep.subr.mxu0 0.0
    %1992 = vmatpush1.msra.mxu0 0.0
    %1993 = vmatprep.subr.mxu0 0.0
    %1994 = vmatpush1.msra.mxu0 0.0
    %1995 = vmatprep.subr.mxu0 0.0
    %1996 = vmatpush1.msra.mxu0 0.0
    %1997 = vmatprep.subr.mxu0 0.0
    %1998 = vmatpush1.msra.mxu0 0.0
    %1999 = vmatprep.subr.mxu0 0.0
    %2000 = vmatpush1.msra.mxu0 0.0
    %2001 = vmatprep.subr.mxu0 0.0
    %2002 = vmatpush1.msra.mxu0 0.0
    %2003 = vmatprep.subr.mxu0 0.0
    %2004 = vmatpush1.msra.mxu0 0.0
    %2005 = vmatprep.subr.mxu0 0.0
    %2006 = vmatpush1.msra.mxu0 0.0
    %2007 = vmatprep.subr.mxu0 0.0
    %2008 = vmatpush1.msra.mxu0 0.0
    %2009 = vmatprep.subr.mxu0 0.0
    %2010 = vmatpush1.msra.mxu0 0.0
    %2011 = vmatprep.subr.mxu0 0.0
    %2012 = vmatpush1.msra.mxu0 0.0
    %2013 = vmatprep.subr.mxu0 0.0
    %2014 = vmatpush1.msra.mxu0 0.0
    %2015 = vmatprep.subr.mxu0 0.0
    %2016 = vmatpush1.msra.mxu0 0.0
    %2017 = vmatprep.subr.mxu0 0.0
    %2018 = vmatpush1.msra.mxu0 0.0
    %2019 = vmatprep.subr.mxu0 0.0
    %2020 = vmatpush1.msra.mxu0 0.0
    %2021 = vmatprep.subr.mxu0 0.0
    %2022 = vmatpush1.msra.mxu0 0.0
    %2023 = vmatprep.subr.mxu0 0.0
    %2024 = vmatpush1.msra.mxu0 0.0
    %2025 = vmatprep.subr.mxu0 0.0
    %2026 = vmatpush1.msra.mxu0 0.0
    %2027 = vmatprep.subr.mxu0 0.0
    %2028 = vmatpush1.msra.mxu0 0.0
    %2029 = vmatprep.subr.mxu0 0.0
    %2030 = vmatpush1.msra.mxu0 0.0
    %2031 = vmatprep.subr.mxu0 0.0
    %2032 = vmatpush1.msra.mxu0 0.0
    %2033 = vmatprep.subr.mxu0 0.0
    %2034 = vmatpush1.msra.mxu0 0.0
    %2035 = vmatprep.subr.mxu0 0.0
    %2036 = vmatpush1.msra.mxu0 0.0
    %2037 = vmatprep.subr.mxu0 0.0
    %2038 = vmatpush1.msra.mxu0 0.0
    %2039 = vmatprep.subr.mxu0 0.0
    %2040 = vmatpush1.msra.mxu0 0.0
    %2041 = vmatprep.subr.mxu0 0.0
    %2042 = vmatpush1.msra.mxu0 0.0
    %2043 = vmatprep.mubr.f32.mxu0 0.0
    %2044 = vmatmul.mubr.f32.gmra.mrb[0].mxu0 %v1977
    %v2045 = vpop.f32.mrb[0].mxu0
    %v2046 = vadd.f32 0.0, %v2045
    %v2047 = vpop.f32.mrb[0].mxu0
    %2048 = vdwg.mxu0
    %v2049 = vadd.f32 %v383, %v2046
    %v2050 = vxor.u32 %v2049, 2147483648
    %v2051 = vmul.f32 %v2050, 1.442695
    %v2052 = vpow.pop %v2051
    %v2053 = vadd.f32 %v2052, 1.0
    %v2054 = vrcp.pop %v2053
    %v2055 = vmul.f32 1.0, %v2054
    %v2056 = vtanh.pop %v2049
    %v2058 = vrot.slane %v1860, 4
    %v2060 = vmul.f32 %v2055, %v2058
    %2062 = vrot.lane.b32.xlu0 %v2056, 64
    %v2063 = vpop.permute.xlu0 %2062
    %v2065 = vmul.f32 %v2055, %v2063
    %2067 = vrot.lane.b32.xlu0 %v2065, 32
    %v2068 = vpop.permute.xlu0 %2067
    %v2070 = vadd.f32 %v2060, %v2068
    %v2071 = vtanh.pop %v2070
    %2073 = vrot.lane.b32.xlu0 %v2071, 64
    %v2074 = vpop.permute.xlu0 %2073
    %v2076 = vmul.f32 %v2055, %v2074
    %2079 = vrot.lane.b32.xlu0 %v2076, 64
    %v2080 = vpop.permute.xlu0 %2079
    %v2082 = vsel %vm301, %v609, %v2080
    %2083 = vrot.lane.b32.xlu0 %v712, 32
    %v2084 = vpop.permute.xlu0 %2083
    %2086 = vrot.lane.b32.xlu0 %v1866, 64
    %v2087 = vpop.permute.xlu0 %2086
    %v2089 = vsel %vm301, %v2084, %v2087
    %2091 = vrot.lane.b32.xlu0 %v1656, 64
    %v2092 = vpop.permute.xlu0 %2091
    %v2094 = vsel %vm301, %v1029, %v2092
    %2095 = vrot.lane.b32.xlu0 %v1132, 32
    %v2096 = vpop.permute.xlu0 %2095
    %2098 = vrot.lane.b32.xlu0 %v1446, 64
    %v2099 = vpop.permute.xlu0 %2098
    %v2101 = vsel %vm301, %v2096, %v2099
    %2103 = vrot.lane.b32.xlu0 %v1236, 64
    %v2104 = vpop.permute.xlu0 %2103
    %v2106 = vsel %vm301, %v1449, %v2104
    %2107 = vrot.lane.b32.xlu0 %v1552, 32
    %v2108 = vpop.permute.xlu0 %2107
    %2110 = vrot.lane.b32.xlu0 %v1026, 64
    %v2111 = vpop.permute.xlu0 %2110
    %v2113 = vsel %vm301, %v2108, %v2111
    %2115 = vrot.lane.b32.xlu0 %v816, 64
    %v2116 = vpop.permute.xlu0 %2115
    %v2118 = vsel %vm301, %v1869, %v2116
    %2120 = vrot.lane.b32.xlu0 %v1972, 32
    %v2121 = vpop.permute.xlu0 %2120
    %2123 = vrot.lane.b32.xlu0 %v606, 64
    %v2124 = vpop.permute.xlu0 %2123
    %v2126 = vsel %vm301, %v2121, %v2124
    %v2128 = vrot.slane %v2089, 3
    %v2131 = vrot.slane %v2094, 6
    %v2134 = vrot.slane %v2101, 1
    %v2137 = vrot.slane %v2106, 4
    %v2140 = vrot.slane %v2113, 7
    %v2143 = vrot.slane %v2118, 2
    %v2146 = vrot.slane %v2126, 5
    %vm2148 = vcmask 1040384
    %v2149 = vsel %vm2148, %v2082, %v2128
    %v2150 = vsel %vm192, %v2149, %v2131
    %vm2151 = vcmask 1042432
    %v2152 = vsel %vm2151, %v2150, %v2134
    %vm2153 = vcmask 1043456
    %v2154 = vsel %vm2153, %v2152, %v2137
    %vm2155 = vcmask 1044480
    %v2156 = vsel %vm2155, %v2154, %v2140
    %vm2157 = vcmask 1045504
    %v2158 = vsel %vm2157, %v2156, %v2143
    %vm2159 = vcmask 1046528
    %v2160 = vsel %vm2159, %v2158, %v2146
    %v2162 = vrot.slane %v2082, 1
    %v2164 = vrot.slane %v2089, 4
    %v2166 = vrot.slane %v2094, 7
    %v2168 = vrot.slane %v2101, 2
    %v2170 = vrot.slane %v2106, 5
    %v2172 = vrot.slane %v2118, 3
    %v2174 = vrot.slane %v2126, 6
    %v2176 = vsel %vm2148, %v2162, %v2164
    %v2177 = vsel %vm192, %v2176, %v2166
    %v2178 = vsel %vm2151, %v2177, %v2168
    %v2179 = vsel %vm2153, %v2178, %v2170
    %v2180 = vsel %vm2155, %v2179, %v2113
    %v2181 = vsel %vm2157, %v2180, %v2172
    %v2182 = vsel %vm2159, %v2181, %v2174
    %v2183 = vrot.slane %v2082, 2
    %v2185 = vrot.slane %v2089, 5
    %v2187 = vrot.slane %v2101, 3
    %v2189 = vrot.slane %v2106, 6
    %v2191 = vrot.slane %v2113, 1
    %v2193 = vrot.slane %v2118, 4
    %v2195 = vrot.slane %v2126, 7
    %v2197 = vsel %vm2148, %v2183, %v2185
    %v2198 = vsel %vm192, %v2197, %v2094
    %v2199 = vsel %vm2151, %v2198, %v2187
    %v2200 = vsel %vm2153, %v2199, %v2189
    %v2201 = vsel %vm2155, %v2200, %v2191
    %v2202 = vsel %vm2157, %v2201, %v2193
    %v2203 = vsel %vm2159, %v2202, %v2195
    %v2204 = vrot.slane %v2082, 3
    %v2206 = vrot.slane %v2089, 6
    %v2208 = vrot.slane %v2094, 1
    %v2210 = vrot.slane %v2101, 4
    %v2212 = vrot.slane %v2106, 7
    %v2214 = vrot.slane %v2113, 2
    %v2216 = vrot.slane %v2118, 5
    %v2218 = vsel %vm2148, %v2204, %v2206
    %v2219 = vsel %vm192, %v2218, %v2208
    %v2220 = vsel %vm2151, %v2219, %v2210
    %v2221 = vsel %vm2153, %v2220, %v2212
    %v2222 = vsel %vm2155, %v2221, %v2214
    %v2223 = vsel %vm2157, %v2222, %v2216
    %v2224 = vsel %vm2159, %v2223, %v2126
    %v2225 = vlaneseq
    %v2226 = vshrl.u32 %v2225, 7
    %v2227 = vsub.s32 2, %v2226
    %v2228 = vrot.slane %v141, %v2227
    %vm2229 = vcmask 523264
    %v2231 = vsel %vm2229, %v2160, 0
    %v2234 = vsel %vm2229, %v2203, 0
    %2236 = vmatprep.subr.mxu0 0.0
    %2237 = vmatpush1.xpose.msra.mxu0 %v2234
    %2238 = vmatprep.subr.mxu0 0.0
    %2239 = vmatpush1.xpose.msra.mxu0 0.0
    %2240 = vmatprep.subr.mxu0 0.0
    %2241 = vmatpush1.xpose.msra.mxu0 0.0
    %2242 = vmatprep.subr.mxu0 0.0
    %2243 = vmatpush1.xpose.msra.mxu0 0.0
    %2244 = vmatprep.subr.mxu0 0.0
    %2245 = vmatpush1.xpose.msra.mxu0 0.0
    %2246 = vmatprep.subr.mxu0 0.0
    %2247 = vmatpush1.xpose.msra.mxu0 0.0
    %2248 = vmatprep.subr.mxu0 0.0
    %2249 = vmatpush1.xpose.msra.mxu0 0.0
    %2250 = vmatprep.subr.mxu0 0.0
    %2251 = vmatpush1.xpose.msra.mxu0 0.0
    %2252 = vmatprep.subr.mxu0 0.0
    %2253 = vmatpush1.xpose.msra.mxu0 0.0
    %2254 = vmatprep.subr.mxu0 0.0
    %2255 = vmatpush1.xpose.msra.mxu0 0.0
    %2256 = vmatprep.subr.mxu0 0.0
    %2257 = vmatpush1.xpose.msra.mxu0 0.0
    %2258 = vmatprep.subr.mxu0 0.0
    %2259 = vmatpush1.xpose.msra.mxu0 0.0
    %2260 = vmatprep.subr.mxu0 0.0
    %2261 = vmatpush1.xpose.msra.mxu0 0.0
    %2262 = vmatprep.subr.mxu0 0.0
    %2263 = vmatpush1.xpose.msra.mxu0 0.0
    %2264 = vmatprep.subr.mxu0 0.0
    %2265 = vmatpush1.xpose.msra.mxu0 0.0
    %2266 = vmatprep.subr.mxu0 0.0
    %2267 = vmatpush1.xpose.msra.mxu0 0.0
    %2268 = vmatprep.subr.mxu0 0.0
    %2269 = vmatpush1.xpose.msra.mxu0 0.0
    %2270 = vmatprep.subr.mxu0 0.0
    %2271 = vmatpush1.xpose.msra.mxu0 0.0
    %2272 = vmatprep.subr.mxu0 0.0
    %2273 = vmatpush1.xpose.msra.mxu0 0.0
    %2274 = vmatprep.subr.mxu0 0.0
    %2275 = vmatpush1.xpose.msra.mxu0 0.0
    %2276 = vmatprep.subr.mxu0 0.0
    %2277 = vmatpush1.xpose.msra.mxu0 0.0
    %2278 = vmatprep.subr.mxu0 0.0
    %2279 = vmatpush1.xpose.msra.mxu0 0.0
    %2280 = vmatprep.subr.mxu0 0.0
    %2281 = vmatpush1.xpose.msra.mxu0 0.0
    %2282 = vmatprep.subr.mxu0 0.0
    %2283 = vmatpush1.xpose.msra.mxu0 0.0
    %2284 = vmatprep.subr.mxu0 0.0
    %2285 = vmatpush1.xpose.msra.mxu0 0.0
    %2286 = vmatprep.subr.mxu0 0.0
    %2287 = vmatpush1.xpose.msra.mxu0 0.0
    %2288 = vmatprep.subr.mxu0 0.0
    %2289 = vmatpush1.xpose.msra.mxu0 0.0
    %2290 = vmatprep.subr.mxu0 0.0
    %2291 = vmatpush1.xpose.msra.mxu0 0.0
    %2292 = vmatprep.subr.mxu0 0.0
    %2293 = vmatpush1.xpose.msra.mxu0 0.0
    %2294 = vmatprep.subr.mxu0 0.0
    %2295 = vmatpush1.xpose.msra.mxu0 0.0
    %2296 = vmatprep.subr.mxu0 0.0
    %2297 = vmatpush1.xpose.msra.mxu0 0.0
    %2298 = vmatprep.subr.mxu0 0.0
    %2299 = vmatpush1.xpose.msra.mxu0 0.0
    %2300 = vmatprep.mubr.f32.mxu0 0.0
    %2301 = vmatmul.mubr.f32.gmra.mrb[0].mxu0 %v2231
    %v2302 = vpop.f32.mrb[0].mxu0
    %v2303 = vadd.f32 %v2228, %v2302
    %v2304 = vpop.f32.mrb[0].mxu0
    %2305 = vdwg.mxu0
    %vm2306 = vcmask 64512
    %v2307 = vsel %vm2306, %v2303, -inf
    %2308 = vmax.xlane.f32.xlu0 %v2307
    %v2309 = vpop.xlane.xlu0 %2308
    %v2310 = vsub.f32 %v2303, %v2309
    %v2311 = vmul.f32 %v2310, 1.442695
    %v2312 = vpow.pop %v2311
    %v2313 = vsel %vm2306, %v2312, 0.0
    %2314 = vadd.xlane.f32.xlu0 %v2313
    %v2315 = vpop.xlane.xlu0 %2314
    %v2316 = vrcp.pop %v2315
    %v2317 = vmul.f32 %v2312, %v2316
    %v2319 = vsel %vm2306, %v2317, 0
    %2321 = vmatprep.subr.mxu0 0.0
    %2322 = vmatpush1.msra.mxu0 %v2203
    %2323 = vmatprep.subr.mxu0 0.0
    %2324 = vmatpush1.msra.mxu0 0.0
    %2325 = vmatprep.subr.mxu0 0.0
    %2326 = vmatpush1.msra.mxu0 0.0
    %2327 = vmatprep.subr.mxu0 0.0
    %2328 = vmatpush1.msra.mxu0 0.0
    %2329 = vmatprep.subr.mxu0 0.0
    %2330 = vmatpush1.msra.mxu0 0.0
    %2331 = vmatprep.subr.mxu0 0.0
    %2332 = vmatpush1.msra.mxu0 0.0
    %2333 = vmatprep.subr.mxu0 0.0
    %2334 = vmatpush1.msra.mxu0 0.0
    %2335 = vmatprep.subr.mxu0 0.0
    %2336 = vmatpush1.msra.mxu0 0.0
    %2337 = vmatprep.subr.mxu0 0.0
    %2338 = vmatpush1.msra.mxu0 0.0
    %2339 = vmatprep.subr.mxu0 0.0
    %2340 = vmatpush1.msra.mxu0 0.0
    %2341 = vmatprep.subr.mxu0 0.0
    %2342 = vmatpush1.msra.mxu0 0.0
    %2343 = vmatprep.subr.mxu0 0.0
    %2344 = vmatpush1.msra.mxu0 0.0
    %2345 = vmatprep.subr.mxu0 0.0
    %2346 = vmatpush1.msra.mxu0 0.0
    %2347 = vmatprep.subr.mxu0 0.0
    %2348 = vmatpush1.msra.mxu0 0.0
    %2349 = vmatprep.subr.mxu0 0.0
    %2350 = vmatpush1.msra.mxu0 0.0
    %2351 = vmatprep.subr.mxu0 0.0
    %2352 = vmatpush1.msra.mxu0 0.0
    %2353 = vmatprep.subr.mxu0 0.0
    %2354 = vmatpush1.msra.mxu0 0.0
    %2355 = vmatprep.subr.mxu0 0.0
    %2356 = vmatpush1.msra.mxu0 0.0
    %2357 = vmatprep.subr.mxu0 0.0
    %2358 = vmatpush1.msra.mxu0 0.0
    %2359 = vmatprep.subr.mxu0 0.0
    %2360 = vmatpush1.msra.mxu0 0.0
    %2361 = vmatprep.subr.mxu0 0.0
    %2362 = vmatpush1.msra.mxu0 0.0
    %2363 = vmatprep.subr.mxu0 0.0
    %2364 = vmatpush1.msra.mxu0 0.0
    %2365 = vmatprep.subr.mxu0 0.0
    %2366 = vmatpush1.msra.mxu0 0.0
    %2367 = vmatprep.subr.mxu0 0.0
    %2368 = vmatpush1.msra.mxu0 0.0
    %2369 = vmatprep.subr.mxu0 0.0
    %2370 = vmatpush1.msra.mxu0 0.0
    %2371 = vmatprep.subr.mxu0 0.0
    %2372 = vmatpush1.msra.mxu0 0.0
    %2373 = vmatprep.subr.mxu0 0.0
    %2374 = vmatpush1.msra.mxu0 0.0
    %2375 = vmatprep.subr.mxu0 0.0
    %2376 = vmatpush1.msra.mxu0 0.0
    %2377 = vmatprep.subr.mxu0 0.0
    %2378 = vmatpush1.msra.mxu0 0.0
    %2379 = vmatprep.subr.mxu0 0.0
    %2380 = vmatpush1.msra.mxu0 0.0
    %2381 = vmatprep.subr.mxu0 0.0
    %2382 = vmatpush1.msra.mxu0 0.0
    %2383 = vmatprep.subr.mxu0 0.0
    %2384 = vmatpush1.msra.mxu0 0.0
    %2385 = vmatprep.mubr.f32.mxu0 0.0
    %2386 = vmatmul.mubr.f32.gmra.mrb[0].mxu0 %v2319
    %v2387 = vpop.f32.mrb[0].mxu0
    %v2388 = vadd.f32 0.0, %v2387
    %v2389 = vpop.f32.mrb[0].mxu0
    %2390 = vdwg.mxu0
    %v2391 = vlaneseq
    %v2392 = vshrl.u32 %v2391, 7
    %v2393 = vsub.s32 0, %v2392
    %v2394 = vrot.slane %v141, %v2393
    %2395 = vmatprep.subr.mxu0 0.0
    %2396 = vmatpush1.xpose.msra.mxu0 %v2231
    %2397 = vmatprep.subr.mxu0 0.0
    %2398 = vmatpush1.xpose.msra.mxu0 0.0
    %2399 = vmatprep.subr.mxu0 0.0
    %2400 = vmatpush1.xpose.msra.mxu0 0.0
    %2401 = vmatprep.subr.mxu0 0.0
    %2402 = vmatpush1.xpose.msra.mxu0 0.0
    %2403 = vmatprep.subr.mxu0 0.0
    %2404 = vmatpush1.xpose.msra.mxu0 0.0
    %2405 = vmatprep.subr.mxu0 0.0
    %2406 = vmatpush1.xpose.msra.mxu0 0.0
    %2407 = vmatprep.subr.mxu0 0.0
    %2408 = vmatpush1.xpose.msra.mxu0 0.0
    %2409 = vmatprep.subr.mxu0 0.0
    %2410 = vmatpush1.xpose.msra.mxu0 0.0
    %2411 = vmatprep.subr.mxu0 0.0
    %2412 = vmatpush1.xpose.msra.mxu0 0.0
    %2413 = vmatprep.subr.mxu0 0.0
    %2414 = vmatpush1.xpose.msra.mxu0 0.0
    %2415 = vmatprep.subr.mxu0 0.0
    %2416 = vmatpush1.xpose.msra.mxu0 0.0
    %2417 = vmatprep.subr.mxu0 0.0
    %2418 = vmatpush1.xpose.msra.mxu0 0.0
    %2419 = vmatprep.subr.mxu0 0.0
    %2420 = vmatpush1.xpose.msra.mxu0 0.0
    %2421 = vmatprep.subr.mxu0 0.0
    %2422 = vmatpush1.xpose.msra.mxu0 0.0
    %2423 = vmatprep.subr.mxu0 0.0
    %2424 = vmatpush1.xpose.msra.mxu0 0.0
    %2425 = vmatprep.subr.mxu0 0.0
    %2426 = vmatpush1.xpose.msra.mxu0 0.0
    %2427 = vmatprep.subr.mxu0 0.0
    %2428 = vmatpush1.xpose.msra.mxu0 0.0
    %2429 = vmatprep.subr.mxu0 0.0
    %2430 = vmatpush1.xpose.msra.mxu0 0.0
    %2431 = vmatprep.subr.mxu0 0.0
    %2432 = vmatpush1.xpose.msra.mxu0 0.0
    %2433 = vmatprep.subr.mxu0 0.0
    %2434 = vmatpush1.xpose.msra.mxu0 0.0
    %2435 = vmatprep.subr.mxu0 0.0
    %2436 = vmatpush1.xpose.msra.mxu0 0.0
    %2437 = vmatprep.subr.mxu0 0.0
    %2438 = vmatpush1.xpose.msra.mxu0 0.0
    %2439 = vmatprep.subr.mxu0 0.0
    %2440 = vmatpush1.xpose.msra.mxu0 0.0
    %2441 = vmatprep.subr.mxu0 0.0
    %2442 = vmatpush1.xpose.msra.mxu0 0.0
    %2443 = vmatprep.subr.mxu0 0.0
    %2444 = vmatpush1.xpose.msra.mxu0 0.0
    %2445 = vmatprep.subr.mxu0 0.0
    %2446 = vmatpush1.xpose.msra.mxu0 0.0
    %2447 = vmatprep.subr.mxu0 0.0
    %2448 = vmatpush1.xpose.msra.mxu0 0.0
    %2449 = vmatprep.subr.mxu0 0.0
    %2450 = vmatpush1.xpose.msra.mxu0 0.0
    %2451 = vmatprep.subr.mxu0 0.0
    %2452 = vmatpush1.xpose.msra.mxu0 0.0
    %2453 = vmatprep.subr.mxu0 0.0
    %2454 = vmatpush1.xpose.msra.mxu0 0.0
    %2455 = vmatprep.subr.mxu0 0.0
    %2456 = vmatpush1.xpose.msra.mxu0 0.0
    %2457 = vmatprep.subr.mxu0 0.0
    %2458 = vmatpush1.xpose.msra.mxu0 0.0
    %2459 = vmatprep.mubr.f32.mxu0 0.0
    %2460 = vmatmul.mubr.f32.gmra.mrb[0].mxu0 %v2234
    %v2461 = vpop.f32.mrb[0].mxu0
    %v2462 = vadd.f32 %v2394, %v2461
    %v2463 = vpop.f32.mrb[0].mxu0
    %2464 = vdwg.mxu0
    %v2465 = vsel %vm2306, %v2462, -inf
    %2466 = vmax.xlane.f32.xlu0 %v2465
    %v2467 = vpop.xlane.xlu0 %2466
    %v2468 = vsub.f32 %v2462, %v2467
    %v2469 = vmul.f32 %v2468, 1.442695
    %v2470 = vpow.pop %v2469
    %v2471 = vsel %vm2306, %v2470, 0.0
    %2472 = vadd.xlane.f32.xlu0 %v2471
    %v2473 = vpop.xlane.xlu0 %2472
    %v2474 = vrcp.pop %v2473
    %v2475 = vmul.f32 %v2470, %v2474
    %v2477 = vsel %vm2306, %v2475, 0
    %2479 = vmatprep.subr.mxu0 0.0
    %2480 = vmatpush1.msra.mxu0 %v2160
    %2481 = vmatprep.subr.mxu0 0.0
    %2482 = vmatpush1.msra.mxu0 0.0
    %2483 = vmatprep.subr.mxu0 0.0
    %2484 = vmatpush1.msra.mxu0 0.0
    %2485 = vmatprep.subr.mxu0 0.0
    %2486 = vmatpush1.msra.mxu0 0.0
    %2487 = vmatprep.subr.mxu0 0.0
    %2488 = vmatpush1.msra.mxu0 0.0
    %2489 = vmatprep.subr.mxu0 0.0
    %2490 = vmatpush1.msra.mxu0 0.0
    %2491 = vmatprep.subr.mxu0 0.0
    %2492 = vmatpush1.msra.mxu0 0.0
    %2493 = vmatprep.subr.mxu0 0.0
    %2494 = vmatpush1.msra.mxu0 0.0
    %2495 = vmatprep.subr.mxu0 0.0
    %2496 = vmatpush1.msra.mxu0 0.0
    %2497 = vmatprep.subr.mxu0 0.0
    %2498 = vmatpush1.msra.mxu0 0.0
    %2499 = vmatprep.subr.mxu0 0.0
    %2500 = vmatpush1.msra.mxu0 0.0
    %2501 = vmatprep.subr.mxu0 0.0
    %2502 = vmatpush1.msra.mxu0 0.0
    %2503 = vmatprep.subr.mxu0 0.0
    %2504 = vmatpush1.msra.mxu0 0.0
    %2505 = vmatprep.subr.mxu0 0.0
    %2506 = vmatpush1.msra.mxu0 0.0
    %2507 = vmatprep.subr.mxu0 0.0
    %2508 = vmatpush1.msra.mxu0 0.0
    %2509 = vmatprep.subr.mxu0 0.0
    %2510 = vmatpush1.msra.mxu0 0.0
    %2511 = vmatprep.subr.mxu0 0.0
    %2512 = vmatpush1.msra.mxu0 0.0
    %2513 = vmatprep.subr.mxu0 0.0
    %2514 = vmatpush1.msra.mxu0 0.0
    %2515 = vmatprep.subr.mxu0 0.0
    %2516 = vmatpush1.msra.mxu0 0.0
    %2517 = vmatprep.subr.mxu0 0.0
    %2518 = vmatpush1.msra.mxu0 0.0
    %2519 = vmatprep.subr.mxu0 0.0
    %2520 = vmatpush1.msra.mxu0 0.0
    %2521 = vmatprep.subr.mxu0 0.0
    %2522 = vmatpush1.msra.mxu0 0.0
    %2523 = vmatprep.subr.mxu0 0.0
    %2524 = vmatpush1.msra.mxu0 0.0
    %2525 = vmatprep.subr.mxu0 0.0
    %2526 = vmatpush1.msra.mxu0 0.0
    %2527 = vmatprep.subr.mxu0 0.0
    %2528 = vmatpush1.msra.mxu0 0.0
    %2529 = vmatprep.subr.mxu0 0.0
    %2530 = vmatpush1.msra.mxu0 0.0
    %2531 = vmatprep.subr.mxu0 0.0
    %2532 = vmatpush1.msra.mxu0 0.0
    %2533 = vmatprep.subr.mxu0 0.0
    %2534 = vmatpush1.msra.mxu0 0.0
    %2535 = vmatprep.subr.mxu0 0.0
    %2536 = vmatpush1.msra.mxu0 0.0
    %2537 = vmatprep.subr.mxu0 0.0
    %2538 = vmatpush1.msra.mxu0 0.0
    %2539 = vmatprep.subr.mxu0 0.0
    %2540 = vmatpush1.msra.mxu0 0.0
    %2541 = vmatprep.subr.mxu0 0.0
    %2542 = vmatpush1.msra.mxu0 0.0
    %2543 = vmatprep.mubr.f32.mxu0 0.0
    %2544 = vmatmul.mubr.f32.gmra.mrb[0].mxu0 %v2477
    %v2545 = vpop.f32.mrb[0].mxu0
    %v2546 = vadd.f32 0.0, %v2545
    %v2547 = vpop.f32.mrb[0].mxu0
    %2548 = vdwg.mxu0
    %v2549 = vsub.f32 %v2160, %v2388
    %v2550 = vmul.f32 %v2160, %v2388
    %2552 = vrot.lane.b32.xlu0 %v2388, 64
    %v2553 = vpop.permute.xlu0 %2552
    %2556 = vrot.lane.b32.xlu0 %v2550, 64
    %v2557 = vpop.permute.xlu0 %2556
    %v2559 = vsel %vm2229, %v2160, %v2553
    %v2560 = vsel %vm2229, %v2549, %v2557
    %v2561 = vsub.f32 %v2203, %v2546
    %v2562 = vmul.f32 %v2203, %v2546
    %2564 = vrot.lane.b32.xlu0 %v2546, 64
    %v2565 = vpop.permute.xlu0 %2564
    %2568 = vrot.lane.b32.xlu0 %v2562, 64
    %v2569 = vpop.permute.xlu0 %2568
    %v2571 = vsel %vm2229, %v2203, %v2565
    %v2572 = vsel %vm2229, %v2561, %v2569
    %v2573 = vlaneseq
    %v2574 = vshrl.u32 %v2573, 7
    %v2575 = vsub.s32 3, %v2574
    %v2576 = vrot.slane %v141, %v2575
    %v2578 = vsel %vm2229, %v2182, 0
    %v2581 = vsel %vm2229, %v2224, 0
    %2583 = vmatprep.subr.mxu0 0.0
    %2584 = vmatpush1.xpose.msra.mxu0 %v2581
    %2585 = vmatprep.subr.mxu0 0.0
    %2586 = vmatpush1.xpose.msra.mxu0 0.0
    %2587 = vmatprep.subr.mxu0 0.0
    %2588 = vmatpush1.xpose.msra.mxu0 0.0
    %2589 = vmatprep.subr.mxu0 0.0
    %2590 = vmatpush1.xpose.msra.mxu0 0.0
    %2591 = vmatprep.subr.mxu0 0.0
    %2592 = vmatpush1.xpose.msra.mxu0 0.0
    %2593 = vmatprep.subr.mxu0 0.0
    %2594 = vmatpush1.xpose.msra.mxu0 0.0
    %2595 = vmatprep.subr.mxu0 0.0
    %2596 = vmatpush1.xpose.msra.mxu0 0.0
    %2597 = vmatprep.subr.mxu0 0.0
    %2598 = vmatpush1.xpose.msra.mxu0 0.0
    %2599 = vmatprep.subr.mxu0 0.0
    %2600 = vmatpush1.xpose.msra.mxu0 0.0
    %2601 = vmatprep.subr.mxu0 0.0
    %2602 = vmatpush1.xpose.msra.mxu0 0.0
    %2603 = vmatprep.subr.mxu0 0.0
    %2604 = vmatpush1.xpose.msra.mxu0 0.0
    %2605 = vmatprep.subr.mxu0 0.0
    %2606 = vmatpush1.xpose.msra.mxu0 0.0
    %2607 = vmatprep.subr.mxu0 0.0
    %2608 = vmatpush1.xpose.msra.mxu0 0.0
    %2609 = vmatprep.subr.mxu0 0.0
    %2610 = vmatpush1.xpose.msra.mxu0 0.0
    %2611 = vmatprep.subr.mxu0 0.0
    %2612 = vmatpush1.xpose.msra.mxu0 0.0
    %2613 = vmatprep.subr.mxu0 0.0
    %2614 = vmatpush1.xpose.msra.mxu0 0.0
    %2615 = vmatprep.subr.mxu0 0.0
    %2616 = vmatpush1.xpose.msra.mxu0 0.0
    %2617 = vmatprep.subr.mxu0 0.0
    %2618 = vmatpush1.xpose.msra.mxu0 0.0
    %2619 = vmatprep.subr.mxu0 0.0
    %2620 = vmatpush1.xpose.msra.mxu0 0.0
    %2621 = vmatprep.subr.mxu0 0.0
    %2622 = vmatpush1.xpose.msra.mxu0 0.0
    %2623 = vmatprep.subr.mxu0 0.0
    %2624 = vmatpush1.xpose.msra.mxu0 0.0
    %2625 = vmatprep.subr.mxu0 0.0
    %2626 = vmatpush1.xpose.msra.mxu0 0.0
    %2627 = vmatprep.subr.mxu0 0.0
    %2628 = vmatpush1.xpose.msra.mxu0 0.0
    %2629 = vmatprep.subr.mxu0 0.0
    %2630 = vmatpush1.xpose.msra.mxu0 0.0
    %2631 = vmatprep.subr.mxu0 0.0
    %2632 = vmatpush1.xpose.msra.mxu0 0.0
    %2633 = vmatprep.subr.mxu0 0.0
    %2634 = vmatpush1.xpose.msra.mxu0 0.0
    %2635 = vmatprep.subr.mxu0 0.0
    %2636 = vmatpush1.xpose.msra.mxu0 0.0
    %2637 = vmatprep.subr.mxu0 0.0
    %2638 = vmatpush1.xpose.msra.mxu0 0.0
    %2639 = vmatprep.subr.mxu0 0.0
    %2640 = vmatpush1.xpose.msra.mxu0 0.0
    %2641 = vmatprep.subr.mxu0 0.0
    %2642 = vmatpush1.xpose.msra.mxu0 0.0
    %2643 = vmatprep.subr.mxu0 0.0
    %2644 = vmatpush1.xpose.msra.mxu0 0.0
    %2645 = vmatprep.subr.mxu0 0.0
    %2646 = vmatpush1.xpose.msra.mxu0 0.0
    %2647 = vmatprep.mubr.f32.mxu0 0.0
    %2648 = vmatmul.mubr.f32.gmra.mrb[0].mxu0 %v2578
    %v2649 = vpop.f32.mrb[0].mxu0
    %v2650 = vadd.f32 %v2576, %v2649
    %v2651 = vpop.f32.mrb[0].mxu0
    %2652 = vdwg.mxu0
    %v2653 = vsel %vm2306, %v2650, -inf
    %2654 = vmax.xlane.f32.xlu0 %v2653
    %v2655 = vpop.xlane.xlu0 %2654
    %v2656 = vsub.f32 %v2650, %v2655
    %v2657 = vmul.f32 %v2656, 1.442695
    %v2658 = vpow.pop %v2657
    %v2659 = vsel %vm2306, %v2658, 0.0
    %2660 = vadd.xlane.f32.xlu0 %v2659
    %v2661 = vpop.xlane.xlu0 %2660
    %v2662 = vrcp.pop %v2661
    %v2663 = vmul.f32 %v2658, %v2662
    %v2665 = vsel %vm2306, %v2663, 0
    %2667 = vmatprep.subr.mxu0 0.0
    %2668 = vmatpush1.msra.mxu0 %v2224
    %2669 = vmatprep.subr.mxu0 0.0
    %2670 = vmatpush1.msra.mxu0 0.0
    %2671 = vmatprep.subr.mxu0 0.0
    %2672 = vmatpush1.msra.mxu0 0.0
    %2673 = vmatprep.subr.mxu0 0.0
    %2674 = vmatpush1.msra.mxu0 0.0
    %2675 = vmatprep.subr.mxu0 0.0
    %2676 = vmatpush1.msra.mxu0 0.0
    %2677 = vmatprep.subr.mxu0 0.0
    %2678 = vmatpush1.msra.mxu0 0.0
    %2679 = vmatprep.subr.mxu0 0.0
    %2680 = vmatpush1.msra.mxu0 0.0
    %2681 = vmatprep.subr.mxu0 0.0
    %2682 = vmatpush1.msra.mxu0 0.0
    %2683 = vmatprep.subr.mxu0 0.0
    %2684 = vmatpush1.msra.mxu0 0.0
    %2685 = vmatprep.subr.mxu0 0.0
    %2686 = vmatpush1.msra.mxu0 0.0
    %2687 = vmatprep.subr.mxu0 0.0
    %2688 = vmatpush1.msra.mxu0 0.0
    %2689 = vmatprep.subr.mxu0 0.0
    %2690 = vmatpush1.msra.mxu0 0.0
    %2691 = vmatprep.subr.mxu0 0.0
    %2692 = vmatpush1.msra.mxu0 0.0
    %2693 = vmatprep.subr.mxu0 0.0
    %2694 = vmatpush1.msra.mxu0 0.0
    %2695 = vmatprep.subr.mxu0 0.0
    %2696 = vmatpush1.msra.mxu0 0.0
    %2697 = vmatprep.subr.mxu0 0.0
    %2698 = vmatpush1.msra.mxu0 0.0
    %2699 = vmatprep.subr.mxu0 0.0
    %2700 = vmatpush1.msra.mxu0 0.0
    %2701 = vmatprep.subr.mxu0 0.0
    %2702 = vmatpush1.msra.mxu0 0.0
    %2703 = vmatprep.subr.mxu0 0.0
    %2704 = vmatpush1.msra.mxu0 0.0
    %2705 = vmatprep.subr.mxu0 0.0
    %2706 = vmatpush1.msra.mxu0 0.0
    %2707 = vmatprep.subr.mxu0 0.0
    %2708 = vmatpush1.msra.mxu0 0.0
    %2709 = vmatprep.subr.mxu0 0.0
    %2710 = vmatpush1.msra.mxu0 0.0
    %2711 = vmatprep.subr.mxu0 0.0
    %2712 = vmatpush1.msra.mxu0 0.0
    %2713 = vmatprep.subr.mxu0 0.0
    %2714 = vmatpush1.msra.mxu0 0.0
    %2715 = vmatprep.subr.mxu0 0.0
    %2716 = vmatpush1.msra.mxu0 0.0
    %2717 = vmatprep.subr.mxu0 0.0
    %2718 = vmatpush1.msra.mxu0 0.0
    %2719 = vmatprep.subr.mxu0 0.0
    %2720 = vmatpush1.msra.mxu0 0.0
    %2721 = vmatprep.subr.mxu0 0.0
    %2722 = vmatpush1.msra.mxu0 0.0
    %2723 = vmatprep.subr.mxu0 0.0
    %2724 = vmatpush1.msra.mxu0 0.0
    %2725 = vmatprep.subr.mxu0 0.0
    %2726 = vmatpush1.msra.mxu0 0.0
    %2727 = vmatprep.subr.mxu0 0.0
    %2728 = vmatpush1.msra.mxu0 0.0
    %2729 = vmatprep.subr.mxu0 0.0
    %2730 = vmatpush1.msra.mxu0 0.0
    %2731 = vmatprep.mubr.f32.mxu0 0.0
    %2732 = vmatmul.mubr.f32.gmra.mrb[0].mxu0 %v2665
    %v2733 = vpop.f32.mrb[0].mxu0
    %v2734 = vadd.f32 0.0, %v2733
    %v2735 = vpop.f32.mrb[0].mxu0
    %2736 = vdwg.mxu0
    %v2737 = vlaneseq
    %v2738 = vshrl.u32 %v2737, 7
    %v2739 = vsub.s32 1, %v2738
    %v2740 = vrot.slane %v141, %v2739
    %2741 = vmatprep.subr.mxu0 0.0
    %2742 = vmatpush1.xpose.msra.mxu0 %v2578
    %2743 = vmatprep.subr.mxu0 0.0
    %2744 = vmatpush1.xpose.msra.mxu0 0.0
    %2745 = vmatprep.subr.mxu0 0.0
    %2746 = vmatpush1.xpose.msra.mxu0 0.0
    %2747 = vmatprep.subr.mxu0 0.0
    %2748 = vmatpush1.xpose.msra.mxu0 0.0
    %2749 = vmatprep.subr.mxu0 0.0
    %2750 = vmatpush1.xpose.msra.mxu0 0.0
    %2751 = vmatprep.subr.mxu0 0.0
    %2752 = vmatpush1.xpose.msra.mxu0 0.0
    %2753 = vmatprep.subr.mxu0 0.0
    %2754 = vmatpush1.xpose.msra.mxu0 0.0
    %2755 = vmatprep.subr.mxu0 0.0
    %2756 = vmatpush1.xpose.msra.mxu0 0.0
    %2757 = vmatprep.subr.mxu0 0.0
    %2758 = vmatpush1.xpose.msra.mxu0 0.0
    %2759 = vmatprep.subr.mxu0 0.0
    %2760 = vmatpush1.xpose.msra.mxu0 0.0
    %2761 = vmatprep.subr.mxu0 0.0
    %2762 = vmatpush1.xpose.msra.mxu0 0.0
    %2763 = vmatprep.subr.mxu0 0.0
    %2764 = vmatpush1.xpose.msra.mxu0 0.0
    %2765 = vmatprep.subr.mxu0 0.0
    %2766 = vmatpush1.xpose.msra.mxu0 0.0
    %2767 = vmatprep.subr.mxu0 0.0
    %2768 = vmatpush1.xpose.msra.mxu0 0.0
    %2769 = vmatprep.subr.mxu0 0.0
    %2770 = vmatpush1.xpose.msra.mxu0 0.0
    %2771 = vmatprep.subr.mxu0 0.0
    %2772 = vmatpush1.xpose.msra.mxu0 0.0
    %2773 = vmatprep.subr.mxu0 0.0
    %2774 = vmatpush1.xpose.msra.mxu0 0.0
    %2775 = vmatprep.subr.mxu0 0.0
    %2776 = vmatpush1.xpose.msra.mxu0 0.0
    %2777 = vmatprep.subr.mxu0 0.0
    %2778 = vmatpush1.xpose.msra.mxu0 0.0
    %2779 = vmatprep.subr.mxu0 0.0
    %2780 = vmatpush1.xpose.msra.mxu0 0.0
    %2781 = vmatprep.subr.mxu0 0.0
    %2782 = vmatpush1.xpose.msra.mxu0 0.0
    %2783 = vmatprep.subr.mxu0 0.0
    %2784 = vmatpush1.xpose.msra.mxu0 0.0
    %2785 = vmatprep.subr.mxu0 0.0
    %2786 = vmatpush1.xpose.msra.mxu0 0.0
    %2787 = vmatprep.subr.mxu0 0.0
    %2788 = vmatpush1.xpose.msra.mxu0 0.0
    %2789 = vmatprep.subr.mxu0 0.0
    %2790 = vmatpush1.xpose.msra.mxu0 0.0
    %2791 = vmatprep.subr.mxu0 0.0
    %2792 = vmatpush1.xpose.msra.mxu0 0.0
    %2793 = vmatprep.subr.mxu0 0.0
    %2794 = vmatpush1.xpose.msra.mxu0 0.0
    %2795 = vmatprep.subr.mxu0 0.0
    %2796 = vmatpush1.xpose.msra.mxu0 0.0
    %2797 = vmatprep.subr.mxu0 0.0
    %2798 = vmatpush1.xpose.msra.mxu0 0.0
    %2799 = vmatprep.subr.mxu0 0.0
    %2800 = vmatpush1.xpose.msra.mxu0 0.0
    %2801 = vmatprep.subr.mxu0 0.0
    %2802 = vmatpush1.xpose.msra.mxu0 0.0
    %2803 = vmatprep.subr.mxu0 0.0
    %2804 = vmatpush1.xpose.msra.mxu0 0.0
    %2805 = vmatprep.mubr.f32.mxu0 0.0
    %2806 = vmatmul.mubr.f32.gmra.mrb[0].mxu0 %v2581
    %v2807 = vpop.f32.mrb[0].mxu0
    %v2808 = vadd.f32 %v2740, %v2807
    %v2809 = vpop.f32.mrb[0].mxu0
    %2810 = vdwg.mxu0
    %v2811 = vsel %vm2306, %v2808, -inf
    %2812 = vmax.xlane.f32.xlu0 %v2811
    %v2813 = vpop.xlane.xlu0 %2812
    %v2814 = vsub.f32 %v2808, %v2813
    %v2815 = vmul.f32 %v2814, 1.442695
    %v2816 = vpow.pop %v2815
    %v2817 = vsel %vm2306, %v2816, 0.0
    %2818 = vadd.xlane.f32.xlu0 %v2817
    %v2819 = vpop.xlane.xlu0 %2818
    %v2820 = vrcp.pop %v2819
    %v2821 = vmul.f32 %v2816, %v2820
    %v2823 = vsel %vm2306, %v2821, 0
    %2825 = vmatprep.subr.mxu0 0.0
    %2826 = vmatpush1.msra.mxu0 %v2182
    %2827 = vmatprep.subr.mxu0 0.0
    %2828 = vmatpush1.msra.mxu0 0.0
    %2829 = vmatprep.subr.mxu0 0.0
    %2830 = vmatpush1.msra.mxu0 0.0
    %2831 = vmatprep.subr.mxu0 0.0
    %2832 = vmatpush1.msra.mxu0 0.0
    %2833 = vmatprep.subr.mxu0 0.0
    %2834 = vmatpush1.msra.mxu0 0.0
    %2835 = vmatprep.subr.mxu0 0.0
    %2836 = vmatpush1.msra.mxu0 0.0
    %2837 = vmatprep.subr.mxu0 0.0
    %2838 = vmatpush1.msra.mxu0 0.0
    %2839 = vmatprep.subr.mxu0 0.0
    %2840 = vmatpush1.msra.mxu0 0.0
    %2841 = vmatprep.subr.mxu0 0.0
    %2842 = vmatpush1.msra.mxu0 0.0
    %2843 = vmatprep.subr.mxu0 0.0
    %2844 = vmatpush1.msra.mxu0 0.0
    %2845 = vmatprep.subr.mxu0 0.0
    %2846 = vmatpush1.msra.mxu0 0.0
    %2847 = vmatprep.subr.mxu0 0.0
    %2848 = vmatpush1.msra.mxu0 0.0
    %2849 = vmatprep.subr.mxu0 0.0
    %2850 = vmatpush1.msra.mxu0 0.0
    %2851 = vmatprep.subr.mxu0 0.0
    %2852 = vmatpush1.msra.mxu0 0.0
    %2853 = vmatprep.subr.mxu0 0.0
    %2854 = vmatpush1.msra.mxu0 0.0
    %2855 = vmatprep.subr.mxu0 0.0
    %2856 = vmatpush1.msra.mxu0 0.0
    %2857 = vmatprep.subr.mxu0 0.0
    %2858 = vmatpush1.msra.mxu0 0.0
    %2859 = vmatprep.subr.mxu0 0.0
    %2860 = vmatpush1.msra.mxu0 0.0
    %2861 = vmatprep.subr.mxu0 0.0
    %2862 = vmatpush1.msra.mxu0 0.0
    %2863 = vmatprep.subr.mxu0 0.0
    %2864 = vmatpush1.msra.mxu0 0.0
    %2865 = vmatprep.subr.mxu0 0.0
    %2866 = vmatpush1.msra.mxu0 0.0
    %2867 = vmatprep.subr.mxu0 0.0
    %2868 = vmatpush1.msra.mxu0 0.0
    %2869 = vmatprep.subr.mxu0 0.0
    %2870 = vmatpush1.msra.mxu0 0.0
    %2871 = vmatprep.subr.mxu0 0.0
    %2872 = vmatpush1.msra.mxu0 0.0
    %2873 = vmatprep.subr.mxu0 0.0
    %2874 = vmatpush1.msra.mxu0 0.0
    %2875 = vmatprep.subr.mxu0 0.0
    %2876 = vmatpush1.msra.mxu0 0.0
    %2877 = vmatprep.subr.mxu0 0.0
    %2878 = vmatpush1.msra.mxu0 0.0
    %2879 = vmatprep.subr.mxu0 0.0
    %2880 = vmatpush1.msra.mxu0 0.0
    %2881 = vmatprep.subr.mxu0 0.0
    %2882 = vmatpush1.msra.mxu0 0.0
    %2883 = vmatprep.subr.mxu0 0.0
    %2884 = vmatpush1.msra.mxu0 0.0
    %2885 = vmatprep.subr.mxu0 0.0
    %2886 = vmatpush1.msra.mxu0 0.0
    %2887 = vmatprep.subr.mxu0 0.0
    %2888 = vmatpush1.msra.mxu0 0.0
    %2889 = vmatprep.mubr.f32.mxu0 0.0
    %2890 = vmatmul.mubr.f32.gmra.mrb[0].mxu0 %v2823
    %v2891 = vpop.f32.mrb[0].mxu0
    %v2892 = vadd.f32 0.0, %v2891
    %v2893 = vpop.f32.mrb[0].mxu0
    %2894 = vdwg.mxu0
    %v2895 = vsub.f32 %v2182, %v2734
    %v2896 = vmul.f32 %v2182, %v2734
    %2898 = vrot.lane.b32.xlu0 %v2734, 64
    %v2899 = vpop.permute.xlu0 %2898
    %2902 = vrot.lane.b32.xlu0 %v2896, 64
    %v2903 = vpop.permute.xlu0 %2902
    %v2905 = vsel %vm2229, %v2182, %v2899
    %v2906 = vsel %vm2229, %v2895, %v2903
    %v2907 = vsub.f32 %v2224, %v2892
    %v2908 = vmul.f32 %v2224, %v2892
    %2910 = vrot.lane.b32.xlu0 %v2892, 64
    %v2911 = vpop.permute.xlu0 %2910
    %2914 = vrot.lane.b32.xlu0 %v2908, 64
    %v2915 = vpop.permute.xlu0 %2914
    %v2917 = vsel %vm2229, %v2224, %v2911
    %v2918 = vsel %vm2229, %v2907, %v2915
    %v2919 = vld [vmem:[%s7] sm:$0xff]
    %v2920 = vld [vmem:[%s7 + $0x8] sm:$0xff]
    %v2921 = vld [vmem:[%s7 + $0x10] sm:$0xff]
    %v2922 = vld [vmem:[%s7 + $0x18] sm:$0xff]
    %v2923 = vld [vmem:[%s7 + $0x20] sm:$0xff]
    %v2924 = vld [vmem:[%s7 + $0x28] sm:$0xff]
    %v2925 = vld [vmem:[%s7 + $0x30] sm:$0xff]
    %v2926 = vld [vmem:[%s7 + $0x38] sm:$0xff]
    %v2927 = vld [vmem:[%s7 + $0x40] sm:$0xff]
    %v2928 = vld [vmem:[%s7 + $0x48] sm:$0xff]
    %v2929 = vld [vmem:[%s7 + $0x50] sm:$0xff]
    %v2930 = vld [vmem:[%s7 + $0x58] sm:$0xff]
    %v2931 = vld [vmem:[%s7 + $0x60] sm:$0xff]
    %v2932 = vld [vmem:[%s7 + $0x68] sm:$0xff]
    %v2933 = vld [vmem:[%s7 + $0x70] sm:$0xff]
    %v2934 = vld [vmem:[%s7 + $0x78] sm:$0xff]
    %v2935 = vld [vmem:[%s7 + $0x80] sm:$0xff]
    %v2936 = vld [vmem:[%s7 + $0x88] sm:$0xff]
    %v2937 = vld [vmem:[%s7 + $0x90] sm:$0xff]
    %v2938 = vld [vmem:[%s7 + $0x98] sm:$0xff]
    %v2939 = vld [vmem:[%s7 + $0xa0] sm:$0xff]
    %v2940 = vld [vmem:[%s7 + $0xa8] sm:$0xff]
    %v2941 = vld [vmem:[%s7 + $0xb0] sm:$0xff]
    %v2942 = vld [vmem:[%s7 + $0xb8] sm:$0xff]
    %v2943 = vld [vmem:[%s7 + $0xc0] sm:$0xff]
    %v2944 = vld [vmem:[%s7 + $0xc8] sm:$0xff]
    %v2945 = vld [vmem:[%s7 + $0xd0] sm:$0xff]
    %v2946 = vld [vmem:[%s7 + $0xd8] sm:$0xff]
    %v2947 = vld [vmem:[%s7 + $0xe0] sm:$0xff]
    %v2948 = vld [vmem:[%s7 + $0xe8] sm:$0xff]
    %v2949 = vld [vmem:[%s7 + $0xf0] sm:$0xff]
    %v2950 = vld [vmem:[%s7 + $0xf8] sm:$0xff]
    %v2951 = vld [vmem:[%s7 + $0x100] sm:$0xff]
    %v2952 = vld [vmem:[%s7 + $0x108] sm:$0xff]
    %v2953 = vld [vmem:[%s7 + $0x110] sm:$0xff]
    %v2954 = vld [vmem:[%s7 + $0x118] sm:$0xff]
    %v2955 = vld [vmem:[%s7 + $0x120] sm:$0xff]
    %v2956 = vld [vmem:[%s7 + $0x128] sm:$0xff]
    %v2957 = vld [vmem:[%s7 + $0x130] sm:$0xff]
    %v2958 = vld [vmem:[%s7 + $0x138] sm:$0xff]
    %v2959 = vld [vmem:[%s7 + $0x140] sm:$0xff]
    %v2960 = vld [vmem:[%s7 + $0x148] sm:$0xff]
    %v2961 = vld [vmem:[%s7 + $0x150] sm:$0xff]
    %v2962 = vld [vmem:[%s7 + $0x158] sm:$0xff]
    %v2963 = vld [vmem:[%s7 + $0x160] sm:$0xff]
    %v2964 = vld [vmem:[%s7 + $0x168] sm:$0xff]
    %v2965 = vld [vmem:[%s7 + $0x170] sm:$0xff]
    %v2966 = vld [vmem:[%s7 + $0x178] sm:$0xff]
    %v2967 = vld [vmem:[%s7 + $0x180] sm:$0xff]
    %v2968 = vld [vmem:[%s7 + $0x188] sm:$0xff]
    %v2969 = vld [vmem:[%s7 + $0x190] sm:$0xff]
    %v2970 = vld [vmem:[%s7 + $0x198] sm:$0xff]
    %v2971 = vld [vmem:[%s7 + $0x1a0] sm:$0xff]
    %v2972 = vld [vmem:[%s7 + $0x1a8] sm:$0xff]
    %v2973 = vld [vmem:[%s7 + $0x1b0] sm:$0xff]
    %v2974 = vld [vmem:[%s7 + $0x1b8] sm:$0xff]
    %v2975 = vld [vmem:[%s7 + $0x1c0] sm:$0xff]
    %v2976 = vld [vmem:[%s7 + $0x1c8] sm:$0xff]
    %v2977 = vld [vmem:[%s7 + $0x1d0] sm:$0xff]
    %v2978 = vld [vmem:[%s7 + $0x1d8] sm:$0xff]
    %v2979 = vld [vmem:[%s7 + $0x1e0] sm:$0xff]
    %v2980 = vld [vmem:[%s7 + $0x1e8] sm:$0xff]
    %v2981 = vld [vmem:[%s7 + $0x1f0] sm:$0xff]
    %v2982 = vld [vmem:[%s7 + $0x1f8] sm:$0xff]
    %v2983 = vld [vmem:[%s10] sm:$0x3]
    %v2985 = vlaneseq
    %v2986 = vshrl.u32 %v2985, 7
    %v2987 = vsub.s32 0, %v2986
    %v2988 = vrot.slane %v2983, %v2987
    %v2989 = vlaneseq
    %v2990 = vshrl.u32 %v2989, 7
    %v2991 = vsub.s32 1, %v2990
    %v2992 = vrot.slane %v2983, %v2991
    %2995 = vmatprep.subr.mxu0 %v2920
    %2996 = vmatpush1.msra.mxu0 %v2919
    %2997 = vmatprep.subr.mxu0 %v2922
    %2998 = vmatpush1.msra.mxu0 %v2921
    %2999 = vmatprep.subr.mxu0 %v2924
    %3000 = vmatpush1.msra.mxu0 %v2923
    %3001 = vmatprep.subr.mxu0 %v2926
    %3002 = vmatpush1.msra.mxu0 %v2925
    %3003 = vmatprep.subr.mxu0 %v2928
    %3004 = vmatpush1.msra.mxu0 %v2927
    %3005 = vmatprep.subr.mxu0 %v2930
    %3006 = vmatpush1.msra.mxu0 %v2929
    %3007 = vmatprep.subr.mxu0 %v2932
    %3008 = vmatpush1.msra.mxu0 %v2931
    %3009 = vmatprep.subr.mxu0 %v2934
    %3010 = vmatpush1.msra.mxu0 %v2933
    %3011 = vmatprep.subr.mxu0 %v2936
    %3012 = vmatpush1.msra.mxu0 %v2935
    %3013 = vmatprep.subr.mxu0 %v2938
    %3014 = vmatpush1.msra.mxu0 %v2937
    %3015 = vmatprep.subr.mxu0 %v2940
    %3016 = vmatpush1.msra.mxu0 %v2939
    %3017 = vmatprep.subr.mxu0 %v2942
    %3018 = vmatpush1.msra.mxu0 %v2941
    %3019 = vmatprep.subr.mxu0 %v2944
    %3020 = vmatpush1.msra.mxu0 %v2943
    %3021 = vmatprep.subr.mxu0 %v2946
    %3022 = vmatpush1.msra.mxu0 %v2945
    %3023 = vmatprep.subr.mxu0 %v2948
    %3024 = vmatpush1.msra.mxu0 %v2947
    %3025 = vmatprep.subr.mxu0 %v2950
    %3026 = vmatpush1.msra.mxu0 %v2949
    %3027 = vmatprep.subr.mxu0 %v2952
    %3028 = vmatpush1.msra.mxu0 %v2951
    %3029 = vmatprep.subr.mxu0 %v2954
    %3030 = vmatpush1.msra.mxu0 %v2953
    %3031 = vmatprep.subr.mxu0 %v2956
    %3032 = vmatpush1.msra.mxu0 %v2955
    %3033 = vmatprep.subr.mxu0 %v2958
    %3034 = vmatpush1.msra.mxu0 %v2957
    %3035 = vmatprep.subr.mxu0 %v2960
    %3036 = vmatpush1.msra.mxu0 %v2959
    %3037 = vmatprep.subr.mxu0 %v2962
    %3038 = vmatpush1.msra.mxu0 %v2961
    %3039 = vmatprep.subr.mxu0 %v2964
    %3040 = vmatpush1.msra.mxu0 %v2963
    %3041 = vmatprep.subr.mxu0 %v2966
    %3042 = vmatpush1.msra.mxu0 %v2965
    %3043 = vmatprep.subr.mxu0 %v2968
    %3044 = vmatpush1.msra.mxu0 %v2967
    %3045 = vmatprep.subr.mxu0 %v2970
    %3046 = vmatpush1.msra.mxu0 %v2969
    %3047 = vmatprep.subr.mxu0 %v2972
    %3048 = vmatpush1.msra.mxu0 %v2971
    %3049 = vmatprep.subr.mxu0 %v2974
    %3050 = vmatpush1.msra.mxu0 %v2973
    %3051 = vmatprep.subr.mxu0 %v2976
    %3052 = vmatpush1.msra.mxu0 %v2975
    %3053 = vmatprep.subr.mxu0 %v2978
    %3054 = vmatpush1.msra.mxu0 %v2977
    %3055 = vmatprep.subr.mxu0 %v2980
    %3056 = vmatpush1.msra.mxu0 %v2979
    %3057 = vmatprep.subr.mxu0 %v2982
    %3058 = vmatpush1.msra.mxu0 %v2981
    %3059 = vmatprep.mubr.f32.mxu0 %v2560
    %3060 = vmatmul.mubr.f32.gmra.mrb[0].mxu0 %v2559
    %v3061 = vpop.f32.mrb[0].mxu0
    %v3062 = vadd.f32 %v2988, %v3061
    %v3063 = vpop.f32.mrb[0].mxu0
    %v3064 = vadd.f32 %v2992, %v3063
    %3065 = vmatprep.mubr.f32.mxu0 %v2906
    %3066 = vmatmul.mubr.f32.gmra.mrb[0].mxu0 %v2905
    %v3067 = vpop.f32.mrb[0].mxu0
    %v3068 = vadd.f32 %v2988, %v3067
    %v3069 = vpop.f32.mrb[0].mxu0
    %v3070 = vadd.f32 %v2992, %v3069
    %3071 = vmatprep.mubr.f32.mxu0 %v2572
    %3072 = vmatmul.mubr.f32.gmra.mrb[0].mxu0 %v2571
    %v3073 = vpop.f32.mrb[0].mxu0
    %v3074 = vadd.f32 %v2988, %v3073
    %v3075 = vpop.f32.mrb[0].mxu0
    %v3076 = vadd.f32 %v2992, %v3075
    %3077 = vmatprep.mubr.f32.mxu0 %v2918
    %3078 = vmatmul.mubr.f32.gmra.mrb[0].mxu0 %v2917
    %v3079 = vpop.f32.mrb[0].mxu0
    %v3080 = vadd.f32 %v2988, %v3079
    %v3081 = vpop.f32.mrb[0].mxu0
    %v3082 = vadd.f32 %v2992, %v3081
    %3083 = vdwg.mxu0
    %v3086 = vrot.slane %v3068, 7
    %v3087 = vrot.slane %v3070, 7
    %v3092 = vrot.slane %v3074, 6
    %v3093 = vrot.slane %v3076, 6
    %v3098 = vrot.slane %v3080, 5
    %v3099 = vrot.slane %v3082, 5
    %v3102 = vsel %vm2148, %v3062, %v3086
    %v3103 = vsel %vm2148, %v3064, %v3087
    %v3104 = vsel %vm192, %v3102, %v3092
    %v3105 = vsel %vm192, %v3103, %v3093
    %v3106 = vsel %vm2151, %v3104, %v3098
    %v3107 = vsel %vm2151, %v3105, %v3099
    %v3110 = vrot.slane %v3062, 1
    %v3111 = vrot.slane %v3064, 1
    %v3114 = vrot.slane %v3074, 7
    %v3115 = vrot.slane %v3076, 7
    %v3118 = vrot.slane %v3080, 6
    %v3119 = vrot.slane %v3082, 6
    %v3122 = vsel %vm2148, %v3110, %v3068
    %v3123 = vsel %vm2148, %v3111, %v3070
    %v3124 = vsel %vm192, %v3122, %v3114
    %v3125 = vsel %vm192, %v3123, %v3115
    %v3126 = vsel %vm2151, %v3124, %v3118
    %v3127 = vsel %vm2151, %v3125, %v3119
    %v3128 = vrot.slane %v3062, 2
    %v3129 = vrot.slane %v3064, 2
    %v3132 = vrot.slane %v3068, 1
    %v3133 = vrot.slane %v3070, 1
    %v3136 = vrot.slane %v3080, 7
    %v3137 = vrot.slane %v3082, 7
    %v3140 = vsel %vm2148, %v3128, %v3132
    %v3141 = vsel %vm2148, %v3129, %v3133
    %v3142 = vsel %vm192, %v3140, %v3074
    %v3143 = vsel %vm192, %v3141, %v3076
    %v3144 = vsel %vm2151, %v3142, %v3136
    %v3145 = vsel %vm2151, %v3143, %v3137
    %v3146 = vrot.slane %v3062, 3
    %v3147 = vrot.slane %v3064, 3
    %v3150 = vrot.slane %v3068, 2
    %v3151 = vrot.slane %v3070, 2
    %v3154 = vrot.slane %v3074, 1
    %v3155 = vrot.slane %v3076, 1
    %v3158 = vsel %vm2148, %v3146, %v3150
    %v3159 = vsel %vm2148, %v3147, %v3151
    %v3160 = vsel %vm192, %v3158, %v3154
    %v3161 = vsel %vm192, %v3159, %v3155
    %v3162 = vsel %vm2151, %v3160, %v3080
    %v3163 = vsel %vm2151, %v3161, %v3082
    %v3164 = vrot.slane %v3062, 4
    %v3165 = vrot.slane %v3064, 4
    %v3168 = vrot.slane %v3068, 3
    %v3169 = vrot.slane %v3070, 3
    %v3172 = vrot.slane %v3074, 2
    %v3173 = vrot.slane %v3076, 2
    %v3176 = vrot.slane %v3080, 1
    %v3177 = vrot.slane %v3082, 1
    %v3180 = vsel %vm2148, %v3164, %v3168
    %v3181 = vsel %vm2148, %v3165, %v3169
    %v3182 = vsel %vm192, %v3180, %v3172
    %v3183 = vsel %vm192, %v3181, %v3173
    %v3184 = vsel %vm2151, %v3182, %v3176
    %v3185 = vsel %vm2151, %v3183, %v3177
    %v3186 = vrot.slane %v3062, 5
    %v3187 = vrot.slane %v3064, 5
    %v3190 = vrot.slane %v3068, 4
    %v3191 = vrot.slane %v3070, 4
    %v3194 = vrot.slane %v3074, 3
    %v3195 = vrot.slane %v3076, 3
    %v3198 = vrot.slane %v3080, 2
    %v3199 = vrot.slane %v3082, 2
    %v3202 = vsel %vm2148, %v3186, %v3190
    %v3203 = vsel %vm2148, %v3187, %v3191
    %v3204 = vsel %vm192, %v3202, %v3194
    %v3205 = vsel %vm192, %v3203, %v3195
    %v3206 = vsel %vm2151, %v3204, %v3198
    %v3207 = vsel %vm2151, %v3205, %v3199
    %v3208 = vrot.slane %v3062, 6
    %v3209 = vrot.slane %v3064, 6
    %v3212 = vrot.slane %v3068, 5
    %v3213 = vrot.slane %v3070, 5
    %v3216 = vrot.slane %v3074, 4
    %v3217 = vrot.slane %v3076, 4
    %v3220 = vrot.slane %v3080, 3
    %v3221 = vrot.slane %v3082, 3
    %v3224 = vsel %vm2148, %v3208, %v3212
    %v3225 = vsel %vm2148, %v3209, %v3213
    %v3226 = vsel %vm192, %v3224, %v3216
    %v3227 = vsel %vm192, %v3225, %v3217
    %v3228 = vsel %vm2151, %v3226, %v3220
    %v3229 = vsel %vm2151, %v3227, %v3221
    %v3230 = vrot.slane %v3062, 7
    %v3231 = vrot.slane %v3064, 7
    %v3234 = vrot.slane %v3068, 6
    %v3235 = vrot.slane %v3070, 6
    %v3238 = vrot.slane %v3074, 5
    %v3239 = vrot.slane %v3076, 5
    %v3242 = vrot.slane %v3080, 4
    %v3243 = vrot.slane %v3082, 4
    %v3246 = vsel %vm2148, %v3230, %v3234
    %v3247 = vsel %vm2148, %v3231, %v3235
    %v3248 = vsel %vm192, %v3246, %v3238
    %v3249 = vsel %vm192, %v3247, %v3239
    %v3250 = vsel %vm2151, %v3248, %v3242
    %v3251 = vsel %vm2151, %v3249, %v3243
    %v3252 = vld [vmem:[#allocation5] sm:$0xff]
    %v3253 = vld [vmem:[#allocation5 + $0x8] sm:$0xff]
    %v3254 = vld [vmem:[#allocation5 + $0x10] sm:$0xff]
    %v3255 = vld [vmem:[#allocation5 + $0x18] sm:$0xff]
    %v3256 = vld [vmem:[#allocation7] sm:$0xff]
    %v3257 = vld [vmem:[#allocation7 + $0x8] sm:$0xff]
    %v3258 = vld [vmem:[#allocation7 + $0x10] sm:$0xff]
    %v3259 = vld [vmem:[#allocation7 + $0x18] sm:$0xff]
    %3260 = vmatprep.subr.mxu0 0.0
    %3261 = vmatpush1.msra.mxu0 %v3252
    %3262 = vmatprep.subr.mxu0 0.0
    %3263 = vmatpush1.msra.mxu0 %v3253
    %3264 = vmatprep.subr.mxu0 0.0
    %3265 = vmatpush1.msra.mxu0 %v3254
    %3266 = vmatprep.subr.mxu0 0.0
    %3267 = vmatpush1.msra.mxu0 %v3255
    %3268 = vmatprep.subr.mxu0 0.0
    %3269 = vmatpush1.msra.mxu0 0.0
    %3270 = vmatprep.subr.mxu0 0.0
    %3271 = vmatpush1.msra.mxu0 0.0
    %3272 = vmatprep.subr.mxu0 0.0
    %3273 = vmatpush1.msra.mxu0 0.0
    %3274 = vmatprep.subr.mxu0 0.0
    %3275 = vmatpush1.msra.mxu0 0.0
    %3276 = vmatprep.subr.mxu0 0.0
    %3277 = vmatpush1.msra.mxu0 0.0
    %3278 = vmatprep.subr.mxu0 0.0
    %3279 = vmatpush1.msra.mxu0 0.0
    %3280 = vmatprep.subr.mxu0 0.0
    %3281 = vmatpush1.msra.mxu0 0.0
    %3282 = vmatprep.subr.mxu0 0.0
    %3283 = vmatpush1.msra.mxu0 0.0
    %3284 = vmatprep.subr.mxu0 0.0
    %3285 = vmatpush1.msra.mxu0 0.0
    %3286 = vmatprep.subr.mxu0 0.0
    %3287 = vmatpush1.msra.mxu0 0.0
    %3288 = vmatprep.subr.mxu0 0.0
    %3289 = vmatpush1.msra.mxu0 0.0
    %3290 = vmatprep.subr.mxu0 0.0
    %3291 = vmatpush1.msra.mxu0 0.0
    %3292 = vmatprep.subr.mxu0 0.0
    %3293 = vmatpush1.msra.mxu0 0.0
    %3294 = vmatprep.subr.mxu0 0.0
    %3295 = vmatpush1.msra.mxu0 0.0
    %3296 = vmatprep.subr.mxu0 0.0
    %3297 = vmatpush1.msra.mxu0 0.0
    %3298 = vmatprep.subr.mxu0 0.0
    %3299 = vmatpush1.msra.mxu0 0.0
    %3300 = vmatprep.subr.mxu0 0.0
    %3301 = vmatpush1.msra.mxu0 0.0
    %3302 = vmatprep.subr.mxu0 0.0
    %3303 = vmatpush1.msra.mxu0 0.0
    %3304 = vmatprep.subr.mxu0 0.0
    %3305 = vmatpush1.msra.mxu0 0.0
    %3306 = vmatprep.subr.mxu0 0.0
    %3307 = vmatpush1.msra.mxu0 0.0
    %3308 = vmatprep.subr.mxu0 0.0
    %3309 = vmatpush1.msra.mxu0 0.0
    %3310 = vmatprep.subr.mxu0 0.0
    %3311 = vmatpush1.msra.mxu0 0.0
    %3312 = vmatprep.subr.mxu0 0.0
    %3313 = vmatpush1.msra.mxu0 0.0
    %3314 = vmatprep.subr.mxu0 0.0
    %3315 = vmatpush1.msra.mxu0 0.0
    %3316 = vmatprep.subr.mxu0 0.0
    %3317 = vmatpush1.msra.mxu0 0.0
    %3318 = vmatprep.subr.mxu0 0.0
    %3319 = vmatpush1.msra.mxu0 0.0
    %3320 = vmatprep.subr.mxu0 0.0
    %3321 = vmatpush1.msra.mxu0 0.0
    %3322 = vmatprep.subr.mxu0 0.0
    %3323 = vmatpush1.msra.mxu0 0.0
    %3324 = vmatprep.mubr.f32.mxu0 0.0
    %3325 = vmatmul.mubr.f32.gmra.mrb[0].mxu0 %v412
    %v3326 = vpop.f32.mrb[0].mxu0
    %v3327 = vadd.f32 0.0, %v3326
    %v3328 = vpop.f32.mrb[0].mxu0
    %3329 = vdwg.mxu0
    %v3330 = vadd.f32 %v3106, %v3327
    %v3331 = vxor.u32 %v3330, 2147483648
    %v3332 = vmul.f32 %v3331, 1.442695
    %v3333 = vpow.pop %v3332
    %v3334 = vadd.f32 %v3333, 1.0
    %v3335 = vrcp.pop %v3334
    %v3336 = vmul.f32 1.0, %v3335
    %v3337 = vtanh.pop %v3330
    %v3338 = vmul.f32 %v3336, 0.0
    %3340 = vrot.lane.b32.xlu0 %v3337, 64
    %v3341 = vpop.permute.xlu0 %3340
    %v3343 = vmul.f32 %v3336, %v3341
    %3345 = vrot.lane.b32.xlu0 %v3343, 32
    %v3346 = vpop.permute.xlu0 %3345
    %v3348 = vadd.f32 %v3338, %v3346
    %v3349 = vtanh.pop %v3348
    %3351 = vrot.lane.b32.xlu0 %v3349, 64
    %v3352 = vpop.permute.xlu0 %3351
    %v3354 = vmul.f32 %v3336, %v3352
    %3355 = vmatprep.subr.mxu0 0.0
    %3356 = vmatpush1.msra.mxu0 %v3256
    %3357 = vmatprep.subr.mxu0 0.0
    %3358 = vmatpush1.msra.mxu0 %v3257
    %3359 = vmatprep.subr.mxu0 0.0
    %3360 = vmatpush1.msra.mxu0 %v3258
    %3361 = vmatprep.subr.mxu0 0.0
    %3362 = vmatpush1.msra.mxu0 %v3259
    %3363 = vmatprep.subr.mxu0 0.0
    %3364 = vmatpush1.msra.mxu0 0.0
    %3365 = vmatprep.subr.mxu0 0.0
    %3366 = vmatpush1.msra.mxu0 0.0
    %3367 = vmatprep.subr.mxu0 0.0
    %3368 = vmatpush1.msra.mxu0 0.0
    %3369 = vmatprep.subr.mxu0 0.0
    %3370 = vmatpush1.msra.mxu0 0.0
    %3371 = vmatprep.subr.mxu0 0.0
    %3372 = vmatpush1.msra.mxu0 0.0
    %3373 = vmatprep.subr.mxu0 0.0
    %3374 = vmatpush1.msra.mxu0 0.0
    %3375 = vmatprep.subr.mxu0 0.0
    %3376 = vmatpush1.msra.mxu0 0.0
    %3377 = vmatprep.subr.mxu0 0.0
    %3378 = vmatpush1.msra.mxu0 0.0
    %3379 = vmatprep.subr.mxu0 0.0
    %3380 = vmatpush1.msra.mxu0 0.0
    %3381 = vmatprep.subr.mxu0 0.0
    %3382 = vmatpush1.msra.mxu0 0.0
    %3383 = vmatprep.subr.mxu0 0.0
    %3384 = vmatpush1.msra.mxu0 0.0
    %3385 = vmatprep.subr.mxu0 0.0
    %3386 = vmatpush1.msra.mxu0 0.0
    %3387 = vmatprep.subr.mxu0 0.0
    %3388 = vmatpush1.msra.mxu0 0.0
    %3389 = vmatprep.subr.mxu0 0.0
    %3390 = vmatpush1.msra.mxu0 0.0
    %3391 = vmatprep.subr.mxu0 0.0
    %3392 = vmatpush1.msra.mxu0 0.0
    %3393 = vmatprep.subr.mxu0 0.0
    %3394 = vmatpush1.msra.mxu0 0.0
    %3395 = vmatprep.subr.mxu0 0.0
    %3396 = vmatpush1.msra.mxu0 0.0
    %3397 = vmatprep.subr.mxu0 0.0
    %3398 = vmatpush1.msra.mxu0 0.0
    %3399 = vmatprep.subr.mxu0 0.0
    %3400 = vmatpush1.msra.mxu0 0.0
    %3401 = vmatprep.subr.mxu0 0.0
    %3402 = vmatpush1.msra.mxu0 0.0
    %3403 = vmatprep.subr.mxu0 0.0
    %3404 = vmatpush1.msra.mxu0 0.0
    %3405 = vmatprep.subr.mxu0 0.0
    %3406 = vmatpush1.msra.mxu0 0.0
    %3407 = vmatprep.subr.mxu0 0.0
    %3408 = vmatpush1.msra.mxu0 0.0
    %3409 = vmatprep.subr.mxu0 0.0
    %3410 = vmatpush1.msra.mxu0 0.0
    %3411 = vmatprep.subr.mxu0 0.0
    %3412 = vmatpush1.msra.mxu0 0.0
    %3413 = vmatprep.subr.mxu0 0.0
    %3414 = vmatpush1.msra.mxu0 0.0
    %3415 = vmatprep.subr.mxu0 0.0
    %3416 = vmatpush1.msra.mxu0 0.0
    %3417 = vmatprep.subr.mxu0 0.0
    %3418 = vmatpush1.msra.mxu0 0.0
    %3419 = vmatprep.mubr.f32.mxu0 0.0
    %3420 = vmatmul.mubr.f32.gmra.mrb[0].mxu0 %v412
    %v3421 = vpop.f32.mrb[0].mxu0
    %v3422 = vadd.f32 0.0, %v3421
    %v3423 = vpop.f32.mrb[0].mxu0
    %3424 = vdwg.mxu0
    %v3425 = vadd.f32 %v3251, %v3422
    %v3426 = vxor.u32 %v3425, 2147483648
    %v3427 = vmul.f32 %v3426, 1.442695
    %v3428 = vpow.pop %v3427
    %v3429 = vadd.f32 %v3428, 1.0
    %v3430 = vrcp.pop %v3429
    %v3431 = vmul.f32 1.0, %v3430
    %v3432 = vtanh.pop %v3425
    %v3433 = vmul.f32 %v3431, 0.0
    %3435 = vrot.lane.b32.xlu0 %v3432, 64
    %v3436 = vpop.permute.xlu0 %3435
    %v3438 = vmul.f32 %v3431, %v3436
    %3440 = vrot.lane.b32.xlu0 %v3438, 32
    %v3441 = vpop.permute.xlu0 %3440
    %v3443 = vadd.f32 %v3433, %v3441
    %v3444 = vtanh.pop %v3443
    %3446 = vrot.lane.b32.xlu0 %v3444, 64
    %v3447 = vpop.permute.xlu0 %3446
    %v3449 = vmul.f32 %v3431, %v3447
    %3451 = vrot.lane.b32.xlu0 %v3354, 32
    %v3452 = vpop.permute.xlu0 %3451
    %v3453 = vsel %vm301, %v3452, 0
    %3455 = vmatprep.subr.mxu0 0.0
    %3456 = vmatpush1.msra.mxu0 %v3252
    %3457 = vmatprep.subr.mxu0 0.0
    %3458 = vmatpush1.msra.mxu0 %v3253
    %3459 = vmatprep.subr.mxu0 0.0
    %3460 = vmatpush1.msra.mxu0 %v3254
    %3461 = vmatprep.subr.mxu0 0.0
    %3462 = vmatpush1.msra.mxu0 %v3255
    %3463 = vmatprep.subr.mxu0 0.0
    %3464 = vmatpush1.msra.mxu0 0.0
    %3465 = vmatprep.subr.mxu0 0.0
    %3466 = vmatpush1.msra.mxu0 0.0
    %3467 = vmatprep.subr.mxu0 0.0
    %3468 = vmatpush1.msra.mxu0 0.0
    %3469 = vmatprep.subr.mxu0 0.0
    %3470 = vmatpush1.msra.mxu0 0.0
    %3471 = vmatprep.subr.mxu0 0.0
    %3472 = vmatpush1.msra.mxu0 0.0
    %3473 = vmatprep.subr.mxu0 0.0
    %3474 = vmatpush1.msra.mxu0 0.0
    %3475 = vmatprep.subr.mxu0 0.0
    %3476 = vmatpush1.msra.mxu0 0.0
    %3477 = vmatprep.subr.mxu0 0.0
    %3478 = vmatpush1.msra.mxu0 0.0
    %3479 = vmatprep.subr.mxu0 0.0
    %3480 = vmatpush1.msra.mxu0 0.0
    %3481 = vmatprep.subr.mxu0 0.0
    %3482 = vmatpush1.msra.mxu0 0.0
    %3483 = vmatprep.subr.mxu0 0.0
    %3484 = vmatpush1.msra.mxu0 0.0
    %3485 = vmatprep.subr.mxu0 0.0
    %3486 = vmatpush1.msra.mxu0 0.0
    %3487 = vmatprep.subr.mxu0 0.0
    %3488 = vmatpush1.msra.mxu0 0.0
    %3489 = vmatprep.subr.mxu0 0.0
    %3490 = vmatpush1.msra.mxu0 0.0
    %3491 = vmatprep.subr.mxu0 0.0
    %3492 = vmatpush1.msra.mxu0 0.0
    %3493 = vmatprep.subr.mxu0 0.0
    %3494 = vmatpush1.msra.mxu0 0.0
    %3495 = vmatprep.subr.mxu0 0.0
    %3496 = vmatpush1.msra.mxu0 0.0
    %3497 = vmatprep.subr.mxu0 0.0
    %3498 = vmatpush1.msra.mxu0 0.0
    %3499 = vmatprep.subr.mxu0 0.0
    %3500 = vmatpush1.msra.mxu0 0.0
    %3501 = vmatprep.subr.mxu0 0.0
    %3502 = vmatpush1.msra.mxu0 0.0
    %3503 = vmatprep.subr.mxu0 0.0
    %3504 = vmatpush1.msra.mxu0 0.0
    %3505 = vmatprep.subr.mxu0 0.0
    %3506 = vmatpush1.msra.mxu0 0.0
    %3507 = vmatprep.subr.mxu0 0.0
    %3508 = vmatpush1.msra.mxu0 0.0
    %3509 = vmatprep.subr.mxu0 0.0
    %3510 = vmatpush1.msra.mxu0 0.0
    %3511 = vmatprep.subr.mxu0 0.0
    %3512 = vmatpush1.msra.mxu0 0.0
    %3513 = vmatprep.subr.mxu0 0.0
    %3514 = vmatpush1.msra.mxu0 0.0
    %3515 = vmatprep.subr.mxu0 0.0
    %3516 = vmatpush1.msra.mxu0 0.0
    %3517 = vmatprep.subr.mxu0 0.0
    %3518 = vmatpush1.msra.mxu0 0.0
    %3519 = vmatprep.mubr.f32.mxu0 0.0
    %3520 = vmatmul.mubr.f32.gmra.mrb[0].mxu0 %v3453
    %v3521 = vpop.f32.mrb[0].mxu0
    %v3522 = vadd.f32 0.0, %v3521
    %v3523 = vpop.f32.mrb[0].mxu0
    %3524 = vdwg.mxu0
    %v3525 = vadd.f32 %v3126, %v3522
    %v3526 = vxor.u32 %v3525, 2147483648
    %v3527 = vmul.f32 %v3526, 1.442695
    %v3528 = vpow.pop %v3527
    %v3529 = vadd.f32 %v3528, 1.0
    %v3530 = vrcp.pop %v3529
    %v3531 = vmul.f32 1.0, %v3530
    %v3532 = vtanh.pop %v3525
    %v3533 = vmul.f32 %v3531, %v3348
    %3535 = vrot.lane.b32.xlu0 %v3532, 64
    %v3536 = vpop.permute.xlu0 %3535
    %v3538 = vmul.f32 %v3531, %v3536
    %3540 = vrot.lane.b32.xlu0 %v3538, 32
    %v3541 = vpop.permute.xlu0 %3540
    %v3543 = vadd.f32 %v3533, %v3541
    %v3544 = vtanh.pop %v3543
    %3546 = vrot.lane.b32.xlu0 %v3544, 64
    %v3547 = vpop.permute.xlu0 %3546
    %v3549 = vmul.f32 %v3531, %v3547
    %3551 = vrot.lane.b32.xlu0 %v3449, 32
    %v3552 = vpop.permute.xlu0 %3551
    %v3553 = vsel %vm301, %v3552, 0
    %3555 = vmatprep.subr.mxu0 0.0
    %3556 = vmatpush1.msra.mxu0 %v3256
    %3557 = vmatprep.subr.mxu0 0.0
    %3558 = vmatpush1.msra.mxu0 %v3257
    %3559 = vmatprep.subr.mxu0 0.0
    %3560 = vmatpush1.msra.mxu0 %v3258
    %3561 = vmatprep.subr.mxu0 0.0
    %3562 = vmatpush1.msra.mxu0 %v3259
    %3563 = vmatprep.subr.mxu0 0.0
    %3564 = vmatpush1.msra.mxu0 0.0
    %3565 = vmatprep.subr.mxu0 0.0
    %3566 = vmatpush1.msra.mxu0 0.0
    %3567 = vmatprep.subr.mxu0 0.0
    %3568 = vmatpush1.msra.mxu0 0.0
    %3569 = vmatprep.subr.mxu0 0.0
    %3570 = vmatpush1.msra.mxu0 0.0
    %3571 = vmatprep.subr.mxu0 0.0
    %3572 = vmatpush1.msra.mxu0 0.0
    %3573 = vmatprep.subr.mxu0 0.0
    %3574 = vmatpush1.msra.mxu0 0.0
    %3575 = vmatprep.subr.mxu0 0.0
    %3576 = vmatpush1.msra.mxu0 0.0
    %3577 = vmatprep.subr.mxu0 0.0
    %3578 = vmatpush1.msra.mxu0 0.0
    %3579 = vmatprep.subr.mxu0 0.0
    %3580 = vmatpush1.msra.mxu0 0.0
    %3581 = vmatprep.subr.mxu0 0.0
    %3582 = vmatpush1.msra.mxu0 0.0
    %3583 = vmatprep.subr.mxu0 0.0
    %3584 = vmatpush1.msra.mxu0 0.0
    %3585 = vmatprep.subr.mxu0 0.0
    %3586 = vmatpush1.msra.mxu0 0.0
    %3587 = vmatprep.subr.mxu0 0.0
    %3588 = vmatpush1.msra.mxu0 0.0
    %3589 = vmatprep.subr.mxu0 0.0
    %3590 = vmatpush1.msra.mxu0 0.0
    %3591 = vmatprep.subr.mxu0 0.0
    %3592 = vmatpush1.msra.mxu0 0.0
    %3593 = vmatprep.subr.mxu0 0.0
    %3594 = vmatpush1.msra.mxu0 0.0
    %3595 = vmatprep.subr.mxu0 0.0
    %3596 = vmatpush1.msra.mxu0 0.0
    %3597 = vmatprep.subr.mxu0 0.0
    %3598 = vmatpush1.msra.mxu0 0.0
    %3599 = vmatprep.subr.mxu0 0.0
    %3600 = vmatpush1.msra.mxu0 0.0
    %3601 = vmatprep.subr.mxu0 0.0
    %3602 = vmatpush1.msra.mxu0 0.0
    %3603 = vmatprep.subr.mxu0 0.0
    %3604 = vmatpush1.msra.mxu0 0.0
    %3605 = vmatprep.subr.mxu0 0.0
    %3606 = vmatpush1.msra.mxu0 0.0
    %3607 = vmatprep.subr.mxu0 0.0
    %3608 = vmatpush1.msra.mxu0 0.0
    %3609 = vmatprep.subr.mxu0 0.0
    %3610 = vmatpush1.msra.mxu0 0.0
    %3611 = vmatprep.subr.mxu0 0.0
    %3612 = vmatpush1.msra.mxu0 0.0
    %3613 = vmatprep.subr.mxu0 0.0
    %3614 = vmatpush1.msra.mxu0 0.0
    %3615 = vmatprep.subr.mxu0 0.0
    %3616 = vmatpush1.msra.mxu0 0.0
    %3617 = vmatprep.subr.mxu0 0.0
    %3618 = vmatpush1.msra.mxu0 0.0
    %3619 = vmatprep.mubr.f32.mxu0 0.0
    %3620 = vmatmul.mubr.f32.gmra.mrb[0].mxu0 %v3553
    %v3621 = vpop.f32.mrb[0].mxu0
    %v3622 = vadd.f32 0.0, %v3621
    %v3623 = vpop.f32.mrb[0].mxu0
    %3624 = vdwg.mxu0
    %v3625 = vadd.f32 %v3229, %v3622
    %v3626 = vxor.u32 %v3625, 2147483648
    %v3627 = vmul.f32 %v3626, 1.442695
    %v3628 = vpow.pop %v3627
    %v3629 = vadd.f32 %v3628, 1.0
    %v3630 = vrcp.pop %v3629
    %v3631 = vmul.f32 1.0, %v3630
    %v3632 = vtanh.pop %v3625
    %v3633 = vmul.f32 %v3631, %v3443
    %3635 = vrot.lane.b32.xlu0 %v3632, 64
    %v3636 = vpop.permute.xlu0 %3635
    %v3638 = vmul.f32 %v3631, %v3636
    %3640 = vrot.lane.b32.xlu0 %v3638, 32
    %v3641 = vpop.permute.xlu0 %3640
    %v3643 = vadd.f32 %v3633, %v3641
    %v3644 = vtanh.pop %v3643
    %3646 = vrot.lane.b32.xlu0 %v3644, 64
    %v3647 = vpop.permute.xlu0 %3646
    %v3649 = vmul.f32 %v3631, %v3647
    %3651 = vrot.lane.b32.xlu0 %v3549, 32
    %v3652 = vpop.permute.xlu0 %3651
    %v3653 = vsel %vm301, %v3652, 0
    %3655 = vmatprep.subr.mxu0 0.0
    %3656 = vmatpush1.msra.mxu0 %v3252
    %3657 = vmatprep.subr.mxu0 0.0
    %3658 = vmatpush1.msra.mxu0 %v3253
    %3659 = vmatprep.subr.mxu0 0.0
    %3660 = vmatpush1.msra.mxu0 %v3254
    %3661 = vmatprep.subr.mxu0 0.0
    %3662 = vmatpush1.msra.mxu0 %v3255
    %3663 = vmatprep.subr.mxu0 0.0
    %3664 = vmatpush1.msra.mxu0 0.0
    %3665 = vmatprep.subr.mxu0 0.0
    %3666 = vmatpush1.msra.mxu0 0.0
    %3667 = vmatprep.subr.mxu0 0.0
    %3668 = vmatpush1.msra.mxu0 0.0
    %3669 = vmatprep.subr.mxu0 0.0
    %3670 = vmatpush1.msra.mxu0 0.0
    %3671 = vmatprep.subr.mxu0 0.0
    %3672 = vmatpush1.msra.mxu0 0.0
    %3673 = vmatprep.subr.mxu0 0.0
    %3674 = vmatpush1.msra.mxu0 0.0
    %3675 = vmatprep.subr.mxu0 0.0
    %3676 = vmatpush1.msra.mxu0 0.0
    %3677 = vmatprep.subr.mxu0 0.0
    %3678 = vmatpush1.msra.mxu0 0.0
    %3679 = vmatprep.subr.mxu0 0.0
    %3680 = vmatpush1.msra.mxu0 0.0
    %3681 = vmatprep.subr.mxu0 0.0
    %3682 = vmatpush1.msra.mxu0 0.0
    %3683 = vmatprep.subr.mxu0 0.0
    %3684 = vmatpush1.msra.mxu0 0.0
    %3685 = vmatprep.subr.mxu0 0.0
    %3686 = vmatpush1.msra.mxu0 0.0
    %3687 = vmatprep.subr.mxu0 0.0
    %3688 = vmatpush1.msra.mxu0 0.0
    %3689 = vmatprep.subr.mxu0 0.0
    %3690 = vmatpush1.msra.mxu0 0.0
    %3691 = vmatprep.subr.mxu0 0.0
    %3692 = vmatpush1.msra.mxu0 0.0
    %3693 = vmatprep.subr.mxu0 0.0
    %3694 = vmatpush1.msra.mxu0 0.0
    %3695 = vmatprep.subr.mxu0 0.0
    %3696 = vmatpush1.msra.mxu0 0.0
    %3697 = vmatprep.subr.mxu0 0.0
    %3698 = vmatpush1.msra.mxu0 0.0
    %3699 = vmatprep.subr.mxu0 0.0
    %3700 = vmatpush1.msra.mxu0 0.0
    %3701 = vmatprep.subr.mxu0 0.0
    %3702 = vmatpush1.msra.mxu0 0.0
    %3703 = vmatprep.subr.mxu0 0.0
    %3704 = vmatpush1.msra.mxu0 0.0
    %3705 = vmatprep.subr.mxu0 0.0
    %3706 = vmatpush1.msra.mxu0 0.0
    %3707 = vmatprep.subr.mxu0 0.0
    %3708 = vmatpush1.msra.mxu0 0.0
    %3709 = vmatprep.subr.mxu0 0.0
    %3710 = vmatpush1.msra.mxu0 0.0
    %3711 = vmatprep.subr.mxu0 0.0
    %3712 = vmatpush1.msra.mxu0 0.0
    %3713 = vmatprep.subr.mxu0 0.0
    %3714 = vmatpush1.msra.mxu0 0.0
    %3715 = vmatprep.subr.mxu0 0.0
    %3716 = vmatpush1.msra.mxu0 0.0
    %3717 = vmatprep.subr.mxu0 0.0
    %3718 = vmatpush1.msra.mxu0 0.0
    %3719 = vmatprep.mubr.f32.mxu0 0.0
    %3720 = vmatmul.mubr.f32.gmra.mrb[0].mxu0 %v3653
    %v3721 = vpop.f32.mrb[0].mxu0
    %v3722 = vadd.f32 0.0, %v3721
    %v3723 = vpop.f32.mrb[0].mxu0
    %3724 = vdwg.mxu0
    %v3725 = vadd.f32 %v3144, %v3722
    %v3726 = vxor.u32 %v3725, 2147483648
    %v3727 = vmul.f32 %v3726, 1.442695
    %v3728 = vpow.pop %v3727
    %v3729 = vadd.f32 %v3728, 1.0
    %v3730 = vrcp.pop %v3729
    %v3731 = vmul.f32 1.0, %v3730
    %v3732 = vtanh.pop %v3725
    %v3733 = vmul.f32 %v3731, %v3543
    %3735 = vrot.lane.b32.xlu0 %v3732, 64
    %v3736 = vpop.permute.xlu0 %3735
    %v3738 = vmul.f32 %v3731, %v3736
    %3740 = vrot.lane.b32.xlu0 %v3738, 32
    %v3741 = vpop.permute.xlu0 %3740
    %v3743 = vadd.f32 %v3733, %v3741
    %v3744 = vtanh.pop %v3743
    %3746 = vrot.lane.b32.xlu0 %v3744, 64
    %v3747 = vpop.permute.xlu0 %3746
    %v3749 = vmul.f32 %v3731, %v3747
    %3751 = vrot.lane.b32.xlu0 %v3649, 32
    %v3752 = vpop.permute.xlu0 %3751
    %v3753 = vsel %vm301, %v3752, 0
    %3755 = vmatprep.subr.mxu0 0.0
    %3756 = vmatpush1.msra.mxu0 %v3256
    %3757 = vmatprep.subr.mxu0 0.0
    %3758 = vmatpush1.msra.mxu0 %v3257
    %3759 = vmatprep.subr.mxu0 0.0
    %3760 = vmatpush1.msra.mxu0 %v3258
    %3761 = vmatprep.subr.mxu0 0.0
    %3762 = vmatpush1.msra.mxu0 %v3259
    %3763 = vmatprep.subr.mxu0 0.0
    %3764 = vmatpush1.msra.mxu0 0.0
    %3765 = vmatprep.subr.mxu0 0.0
    %3766 = vmatpush1.msra.mxu0 0.0
    %3767 = vmatprep.subr.mxu0 0.0
    %3768 = vmatpush1.msra.mxu0 0.0
    %3769 = vmatprep.subr.mxu0 0.0
    %3770 = vmatpush1.msra.mxu0 0.0
    %3771 = vmatprep.subr.mxu0 0.0
    %3772 = vmatpush1.msra.mxu0 0.0
    %3773 = vmatprep.subr.mxu0 0.0
    %3774 = vmatpush1.msra.mxu0 0.0
    %3775 = vmatprep.subr.mxu0 0.0
    %3776 = vmatpush1.msra.mxu0 0.0
    %3777 = vmatprep.subr.mxu0 0.0
    %3778 = vmatpush1.msra.mxu0 0.0
    %3779 = vmatprep.subr.mxu0 0.0
    %3780 = vmatpush1.msra.mxu0 0.0
    %3781 = vmatprep.subr.mxu0 0.0
    %3782 = vmatpush1.msra.mxu0 0.0
    %3783 = vmatprep.subr.mxu0 0.0
    %3784 = vmatpush1.msra.mxu0 0.0
    %3785 = vmatprep.subr.mxu0 0.0
    %3786 = vmatpush1.msra.mxu0 0.0
    %3787 = vmatprep.subr.mxu0 0.0
    %3788 = vmatpush1.msra.mxu0 0.0
    %3789 = vmatprep.subr.mxu0 0.0
    %3790 = vmatpush1.msra.mxu0 0.0
    %3791 = vmatprep.subr.mxu0 0.0
    %3792 = vmatpush1.msra.mxu0 0.0
    %3793 = vmatprep.subr.mxu0 0.0
    %3794 = vmatpush1.msra.mxu0 0.0
    %3795 = vmatprep.subr.mxu0 0.0
    %3796 = vmatpush1.msra.mxu0 0.0
    %3797 = vmatprep.subr.mxu0 0.0
    %3798 = vmatpush1.msra.mxu0 0.0
    %3799 = vmatprep.subr.mxu0 0.0
    %3800 = vmatpush1.msra.mxu0 0.0
    %3801 = vmatprep.subr.mxu0 0.0
    %3802 = vmatpush1.msra.mxu0 0.0
    %3803 = vmatprep.subr.mxu0 0.0
    %3804 = vmatpush1.msra.mxu0 0.0
    %3805 = vmatprep.subr.mxu0 0.0
    %3806 = vmatpush1.msra.mxu0 0.0
    %3807 = vmatprep.subr.mxu0 0.0
    %3808 = vmatpush1.msra.mxu0 0.0
    %3809 = vmatprep.subr.mxu0 0.0
    %3810 = vmatpush1.msra.mxu0 0.0
    %3811 = vmatprep.subr.mxu0 0.0
    %3812 = vmatpush1.msra.mxu0 0.0
    %3813 = vmatprep.subr.mxu0 0.0
    %3814 = vmatpush1.msra.mxu0 0.0
    %3815 = vmatprep.subr.mxu0 0.0
    %3816 = vmatpush1.msra.mxu0 0.0
    %3817 = vmatprep.subr.mxu0 0.0
    %3818 = vmatpush1.msra.mxu0 0.0
    %3819 = vmatprep.mubr.f32.mxu0 0.0
    %3820 = vmatmul.mubr.f32.gmra.mrb[0].mxu0 %v3753
    %v3821 = vpop.f32.mrb[0].mxu0
    %v3822 = vadd.f32 0.0, %v3821
    %v3823 = vpop.f32.mrb[0].mxu0
    %3824 = vdwg.mxu0
    %v3825 = vadd.f32 %v3207, %v3822
    %v3826 = vxor.u32 %v3825, 2147483648
    %v3827 = vmul.f32 %v3826, 1.442695
    %v3828 = vpow.pop %v3827
    %v3829 = vadd.f32 %v3828, 1.0
    %v3830 = vrcp.pop %v3829
    %v3831 = vmul.f32 1.0, %v3830
    %v3832 = vtanh.pop %v3825
    %v3833 = vmul.f32 %v3831, %v3643
    %3835 = vrot.lane.b32.xlu0 %v3832, 64
    %v3836 = vpop.permute.xlu0 %3835
    %v3838 = vmul.f32 %v3831, %v3836
    %3840 = vrot.lane.b32.xlu0 %v3838, 32
    %v3841 = vpop.permute.xlu0 %3840
    %v3843 = vadd.f32 %v3833, %v3841
    %v3844 = vtanh.pop %v3843
    %3846 = vrot.lane.b32.xlu0 %v3844, 64
    %v3847 = vpop.permute.xlu0 %3846
    %v3849 = vmul.f32 %v3831, %v3847
    %3851 = vrot.lane.b32.xlu0 %v3749, 32
    %v3852 = vpop.permute.xlu0 %3851
    %v3853 = vsel %vm301, %v3852, 0
    %3855 = vmatprep.subr.mxu0 0.0
    %3856 = vmatpush1.msra.mxu0 %v3252
    %3857 = vmatprep.subr.mxu0 0.0
    %3858 = vmatpush1.msra.mxu0 %v3253
    %3859 = vmatprep.subr.mxu0 0.0
    %3860 = vmatpush1.msra.mxu0 %v3254
    %3861 = vmatprep.subr.mxu0 0.0
    %3862 = vmatpush1.msra.mxu0 %v3255
    %3863 = vmatprep.subr.mxu0 0.0
    %3864 = vmatpush1.msra.mxu0 0.0
    %3865 = vmatprep.subr.mxu0 0.0
    %3866 = vmatpush1.msra.mxu0 0.0
    %3867 = vmatprep.subr.mxu0 0.0
    %3868 = vmatpush1.msra.mxu0 0.0
    %3869 = vmatprep.subr.mxu0 0.0
    %3870 = vmatpush1.msra.mxu0 0.0
    %3871 = vmatprep.subr.mxu0 0.0
    %3872 = vmatpush1.msra.mxu0 0.0
    %3873 = vmatprep.subr.mxu0 0.0
    %3874 = vmatpush1.msra.mxu0 0.0
    %3875 = vmatprep.subr.mxu0 0.0
    %3876 = vmatpush1.msra.mxu0 0.0
    %3877 = vmatprep.subr.mxu0 0.0
    %3878 = vmatpush1.msra.mxu0 0.0
    %3879 = vmatprep.subr.mxu0 0.0
    %3880 = vmatpush1.msra.mxu0 0.0
    %3881 = vmatprep.subr.mxu0 0.0
    %3882 = vmatpush1.msra.mxu0 0.0
    %3883 = vmatprep.subr.mxu0 0.0
    %3884 = vmatpush1.msra.mxu0 0.0
    %3885 = vmatprep.subr.mxu0 0.0
    %3886 = vmatpush1.msra.mxu0 0.0
    %3887 = vmatprep.subr.mxu0 0.0
    %3888 = vmatpush1.msra.mxu0 0.0
    %3889 = vmatprep.subr.mxu0 0.0
    %3890 = vmatpush1.msra.mxu0 0.0
    %3891 = vmatprep.subr.mxu0 0.0
    %3892 = vmatpush1.msra.mxu0 0.0
    %3893 = vmatprep.subr.mxu0 0.0
    %3894 = vmatpush1.msra.mxu0 0.0
    %3895 = vmatprep.subr.mxu0 0.0
    %3896 = vmatpush1.msra.mxu0 0.0
    %3897 = vmatprep.subr.mxu0 0.0
    %3898 = vmatpush1.msra.mxu0 0.0
    %3899 = vmatprep.subr.mxu0 0.0
    %3900 = vmatpush1.msra.mxu0 0.0
    %3901 = vmatprep.subr.mxu0 0.0
    %3902 = vmatpush1.msra.mxu0 0.0
    %3903 = vmatprep.subr.mxu0 0.0
    %3904 = vmatpush1.msra.mxu0 0.0
    %3905 = vmatprep.subr.mxu0 0.0
    %3906 = vmatpush1.msra.mxu0 0.0
    %3907 = vmatprep.subr.mxu0 0.0
    %3908 = vmatpush1.msra.mxu0 0.0
    %3909 = vmatprep.subr.mxu0 0.0
    %3910 = vmatpush1.msra.mxu0 0.0
    %3911 = vmatprep.subr.mxu0 0.0
    %3912 = vmatpush1.msra.mxu0 0.0
    %3913 = vmatprep.subr.mxu0 0.0
    %3914 = vmatpush1.msra.mxu0 0.0
    %3915 = vmatprep.subr.mxu0 0.0
    %3916 = vmatpush1.msra.mxu0 0.0
    %3917 = vmatprep.subr.mxu0 0.0
    %3918 = vmatpush1.msra.mxu0 0.0
    %3919 = vmatprep.mubr.f32.mxu0 0.0
    %3920 = vmatmul.mubr.f32.gmra.mrb[0].mxu0 %v3853
    %v3921 = vpop.f32.mrb[0].mxu0
    %v3922 = vadd.f32 0.0, %v3921
    %v3923 = vpop.f32.mrb[0].mxu0
    %3924 = vdwg.mxu0
    %v3925 = vadd.f32 %v3162, %v3922
    %v3926 = vxor.u32 %v3925, 2147483648
    %v3927 = vmul.f32 %v3926, 1.442695
    %v3928 = vpow.pop %v3927
    %v3929 = vadd.f32 %v3928, 1.0
    %v3930 = vrcp.pop %v3929
    %v3931 = vmul.f32 1.0, %v3930
    %v3932 = vtanh.pop %v3925
    %v3933 = vmul.f32 %v3931, %v3743
    %3935 = vrot.lane.b32.xlu0 %v3932, 64
    %v3936 = vpop.permute.xlu0 %3935
    %v3938 = vmul.f32 %v3931, %v3936
    %3940 = vrot.lane.b32.xlu0 %v3938, 32
    %v3941 = vpop.permute.xlu0 %3940
    %v3943 = vadd.f32 %v3933, %v3941
    %v3944 = vtanh.pop %v3943
    %3946 = vrot.lane.b32.xlu0 %v3944, 64
    %v3947 = vpop.permute.xlu0 %3946
    %v3949 = vmul.f32 %v3931, %v3947
    %3951 = vrot.lane.b32.xlu0 %v3849, 32
    %v3952 = vpop.permute.xlu0 %3951
    %v3953 = vsel %vm301, %v3952, 0
    %3955 = vmatprep.subr.mxu0 0.0
    %3956 = vmatpush1.msra.mxu0 %v3256
    %3957 = vmatprep.subr.mxu0 0.0
    %3958 = vmatpush1.msra.mxu0 %v3257
    %3959 = vmatprep.subr.mxu0 0.0
    %3960 = vmatpush1.msra.mxu0 %v3258
    %3961 = vmatprep.subr.mxu0 0.0
    %3962 = vmatpush1.msra.mxu0 %v3259
    %3963 = vmatprep.subr.mxu0 0.0
    %3964 = vmatpush1.msra.mxu0 0.0
    %3965 = vmatprep.subr.mxu0 0.0
    %3966 = vmatpush1.msra.mxu0 0.0
    %3967 = vmatprep.subr.mxu0 0.0
    %3968 = vmatpush1.msra.mxu0 0.0
    %3969 = vmatprep.subr.mxu0 0.0
    %3970 = vmatpush1.msra.mxu0 0.0
    %3971 = vmatprep.subr.mxu0 0.0
    %3972 = vmatpush1.msra.mxu0 0.0
    %3973 = vmatprep.subr.mxu0 0.0
    %3974 = vmatpush1.msra.mxu0 0.0
    %3975 = vmatprep.subr.mxu0 0.0
    %3976 = vmatpush1.msra.mxu0 0.0
    %3977 = vmatprep.subr.mxu0 0.0
    %3978 = vmatpush1.msra.mxu0 0.0
    %3979 = vmatprep.subr.mxu0 0.0
    %3980 = vmatpush1.msra.mxu0 0.0
    %3981 = vmatprep.subr.mxu0 0.0
    %3982 = vmatpush1.msra.mxu0 0.0
    %3983 = vmatprep.subr.mxu0 0.0
    %3984 = vmatpush1.msra.mxu0 0.0
    %3985 = vmatprep.subr.mxu0 0.0
    %3986 = vmatpush1.msra.mxu0 0.0
    %3987 = vmatprep.subr.mxu0 0.0
    %3988 = vmatpush1.msra.mxu0 0.0
    %3989 = vmatprep.subr.mxu0 0.0
    %3990 = vmatpush1.msra.mxu0 0.0
    %3991 = vmatprep.subr.mxu0 0.0
    %3992 = vmatpush1.msra.mxu0 0.0
    %3993 = vmatprep.subr.mxu0 0.0
    %3994 = vmatpush1.msra.mxu0 0.0
    %3995 = vmatprep.subr.mxu0 0.0
    %3996 = vmatpush1.msra.mxu0 0.0
    %3997 = vmatprep.subr.mxu0 0.0
    %3998 = vmatpush1.msra.mxu0 0.0
    %3999 = vmatprep.subr.mxu0 0.0
    %4000 = vmatpush1.msra.mxu0 0.0
    %4001 = vmatprep.subr.mxu0 0.0
    %4002 = vmatpush1.msra.mxu0 0.0
    %4003 = vmatprep.subr.mxu0 0.0
    %4004 = vmatpush1.msra.mxu0 0.0
    %4005 = vmatprep.subr.mxu0 0.0
    %4006 = vmatpush1.msra.mxu0 0.0
    %4007 = vmatprep.subr.mxu0 0.0
    %4008 = vmatpush1.msra.mxu0 0.0
    %4009 = vmatprep.subr.mxu0 0.0
    %4010 = vmatpush1.msra.mxu0 0.0
    %4011 = vmatprep.subr.mxu0 0.0
    %4012 = vmatpush1.msra.mxu0 0.0
    %4013 = vmatprep.subr.mxu0 0.0
    %4014 = vmatpush1.msra.mxu0 0.0
    %4015 = vmatprep.subr.mxu0 0.0
    %4016 = vmatpush1.msra.mxu0 0.0
    %4017 = vmatprep.subr.mxu0 0.0
    %4018 = vmatpush1.msra.mxu0 0.0
    %4019 = vmatprep.mubr.f32.mxu0 0.0
    %4020 = vmatmul.mubr.f32.gmra.mrb[0].mxu0 %v3953
    %v4021 = vpop.f32.mrb[0].mxu0
    %v4022 = vadd.f32 0.0, %v4021
    %v4023 = vpop.f32.mrb[0].mxu0
    %4024 = vdwg.mxu0
    %v4025 = vadd.f32 %v3185, %v4022
    %v4026 = vxor.u32 %v4025, 2147483648
    %v4027 = vmul.f32 %v4026, 1.442695
    %v4028 = vpow.pop %v4027
    %v4029 = vadd.f32 %v4028, 1.0
    %v4030 = vrcp.pop %v4029
    %v4031 = vmul.f32 1.0, %v4030
    %v4032 = vtanh.pop %v4025
    %v4033 = vmul.f32 %v4031, %v3843
    %4035 = vrot.lane.b32.xlu0 %v4032, 64
    %v4036 = vpop.permute.xlu0 %4035
    %v4038 = vmul.f32 %v4031, %v4036
    %4040 = vrot.lane.b32.xlu0 %v4038, 32
    %v4041 = vpop.permute.xlu0 %4040
    %v4043 = vadd.f32 %v4033, %v4041
    %v4044 = vtanh.pop %v4043
    %4046 = vrot.lane.b32.xlu0 %v4044, 64
    %v4047 = vpop.permute.xlu0 %4046
    %v4049 = vmul.f32 %v4031, %v4047
    %4051 = vrot.lane.b32.xlu0 %v3949, 32
    %v4052 = vpop.permute.xlu0 %4051
    %v4053 = vsel %vm301, %v4052, 0
    %4055 = vmatprep.subr.mxu0 0.0
    %4056 = vmatpush1.msra.mxu0 %v3252
    %4057 = vmatprep.subr.mxu0 0.0
    %4058 = vmatpush1.msra.mxu0 %v3253
    %4059 = vmatprep.subr.mxu0 0.0
    %4060 = vmatpush1.msra.mxu0 %v3254
    %4061 = vmatprep.subr.mxu0 0.0
    %4062 = vmatpush1.msra.mxu0 %v3255
    %4063 = vmatprep.subr.mxu0 0.0
    %4064 = vmatpush1.msra.mxu0 0.0
    %4065 = vmatprep.subr.mxu0 0.0
    %4066 = vmatpush1.msra.mxu0 0.0
    %4067 = vmatprep.subr.mxu0 0.0
    %4068 = vmatpush1.msra.mxu0 0.0
    %4069 = vmatprep.subr.mxu0 0.0
    %4070 = vmatpush1.msra.mxu0 0.0
    %4071 = vmatprep.subr.mxu0 0.0
    %4072 = vmatpush1.msra.mxu0 0.0
    %4073 = vmatprep.subr.mxu0 0.0
    %4074 = vmatpush1.msra.mxu0 0.0
    %4075 = vmatprep.subr.mxu0 0.0
    %4076 = vmatpush1.msra.mxu0 0.0
    %4077 = vmatprep.subr.mxu0 0.0
    %4078 = vmatpush1.msra.mxu0 0.0
    %4079 = vmatprep.subr.mxu0 0.0
    %4080 = vmatpush1.msra.mxu0 0.0
    %4081 = vmatprep.subr.mxu0 0.0
    %4082 = vmatpush1.msra.mxu0 0.0
    %4083 = vmatprep.subr.mxu0 0.0
    %4084 = vmatpush1.msra.mxu0 0.0
    %4085 = vmatprep.subr.mxu0 0.0
    %4086 = vmatpush1.msra.mxu0 0.0
    %4087 = vmatprep.subr.mxu0 0.0
    %4088 = vmatpush1.msra.mxu0 0.0
    %4089 = vmatprep.subr.mxu0 0.0
    %4090 = vmatpush1.msra.mxu0 0.0
    %4091 = vmatprep.subr.mxu0 0.0
    %4092 = vmatpush1.msra.mxu0 0.0
    %4093 = vmatprep.subr.mxu0 0.0
    %4094 = vmatpush1.msra.mxu0 0.0
    %4095 = vmatprep.subr.mxu0 0.0
    %4096 = vmatpush1.msra.mxu0 0.0
    %4097 = vmatprep.subr.mxu0 0.0
    %4098 = vmatpush1.msra.mxu0 0.0
    %4099 = vmatprep.subr.mxu0 0.0
    %4100 = vmatpush1.msra.mxu0 0.0
    %4101 = vmatprep.subr.mxu0 0.0
    %4102 = vmatpush1.msra.mxu0 0.0
    %4103 = vmatprep.subr.mxu0 0.0
    %4104 = vmatpush1.msra.mxu0 0.0
    %4105 = vmatprep.subr.mxu0 0.0
    %4106 = vmatpush1.msra.mxu0 0.0
    %4107 = vmatprep.subr.mxu0 0.0
    %4108 = vmatpush1.msra.mxu0 0.0
    %4109 = vmatprep.subr.mxu0 0.0
    %4110 = vmatpush1.msra.mxu0 0.0
    %4111 = vmatprep.subr.mxu0 0.0
    %4112 = vmatpush1.msra.mxu0 0.0
    %4113 = vmatprep.subr.mxu0 0.0
    %4114 = vmatpush1.msra.mxu0 0.0
    %4115 = vmatprep.subr.mxu0 0.0
    %4116 = vmatpush1.msra.mxu0 0.0
    %4117 = vmatprep.subr.mxu0 0.0
    %4118 = vmatpush1.msra.mxu0 0.0
    %4119 = vmatprep.mubr.f32.mxu0 0.0
    %4120 = vmatmul.mubr.f32.gmra.mrb[0].mxu0 %v4053
    %v4121 = vpop.f32.mrb[0].mxu0
    %v4122 = vadd.f32 0.0, %v4121
    %v4123 = vpop.f32.mrb[0].mxu0
    %4124 = vdwg.mxu0
    %v4125 = vadd.f32 %v3184, %v4122
    %v4126 = vxor.u32 %v4125, 2147483648
    %v4127 = vmul.f32 %v4126, 1.442695
    %v4128 = vpow.pop %v4127
    %v4129 = vadd.f32 %v4128, 1.0
    %v4130 = vrcp.pop %v4129
    %v4131 = vmul.f32 1.0, %v4130
    %v4132 = vtanh.pop %v4125
    %v4133 = vmul.f32 %v4131, %v3943
    %4135 = vrot.lane.b32.xlu0 %v4132, 64
    %v4136 = vpop.permute.xlu0 %4135
    %v4138 = vmul.f32 %v4131, %v4136
    %4140 = vrot.lane.b32.xlu0 %v4138, 32
    %v4141 = vpop.permute.xlu0 %4140
    %v4143 = vadd.f32 %v4133, %v4141
    %v4144 = vtanh.pop %v4143
    %4146 = vrot.lane.b32.xlu0 %v4144, 64
    %v4147 = vpop.permute.xlu0 %4146
    %v4149 = vmul.f32 %v4131, %v4147
    %4151 = vrot.lane.b32.xlu0 %v4049, 32
    %v4152 = vpop.permute.xlu0 %4151
    %v4153 = vsel %vm301, %v4152, 0
    %4155 = vmatprep.subr.mxu0 0.0
    %4156 = vmatpush1.msra.mxu0 %v3256
    %4157 = vmatprep.subr.mxu0 0.0
    %4158 = vmatpush1.msra.mxu0 %v3257
    %4159 = vmatprep.subr.mxu0 0.0
    %4160 = vmatpush1.msra.mxu0 %v3258
    %4161 = vmatprep.subr.mxu0 0.0
    %4162 = vmatpush1.msra.mxu0 %v3259
    %4163 = vmatprep.subr.mxu0 0.0
    %4164 = vmatpush1.msra.mxu0 0.0
    %4165 = vmatprep.subr.mxu0 0.0
    %4166 = vmatpush1.msra.mxu0 0.0
    %4167 = vmatprep.subr.mxu0 0.0
    %4168 = vmatpush1.msra.mxu0 0.0
    %4169 = vmatprep.subr.mxu0 0.0
    %4170 = vmatpush1.msra.mxu0 0.0
    %4171 = vmatprep.subr.mxu0 0.0
    %4172 = vmatpush1.msra.mxu0 0.0
    %4173 = vmatprep.subr.mxu0 0.0
    %4174 = vmatpush1.msra.mxu0 0.0
    %4175 = vmatprep.subr.mxu0 0.0
    %4176 = vmatpush1.msra.mxu0 0.0
    %4177 = vmatprep.subr.mxu0 0.0
    %4178 = vmatpush1.msra.mxu0 0.0
    %4179 = vmatprep.subr.mxu0 0.0
    %4180 = vmatpush1.msra.mxu0 0.0
    %4181 = vmatprep.subr.mxu0 0.0
    %4182 = vmatpush1.msra.mxu0 0.0
    %4183 = vmatprep.subr.mxu0 0.0
    %4184 = vmatpush1.msra.mxu0 0.0
    %4185 = vmatprep.subr.mxu0 0.0
    %4186 = vmatpush1.msra.mxu0 0.0
    %4187 = vmatprep.subr.mxu0 0.0
    %4188 = vmatpush1.msra.mxu0 0.0
    %4189 = vmatprep.subr.mxu0 0.0
    %4190 = vmatpush1.msra.mxu0 0.0
    %4191 = vmatprep.subr.mxu0 0.0
    %4192 = vmatpush1.msra.mxu0 0.0
    %4193 = vmatprep.subr.mxu0 0.0
    %4194 = vmatpush1.msra.mxu0 0.0
    %4195 = vmatprep.subr.mxu0 0.0
    %4196 = vmatpush1.msra.mxu0 0.0
    %4197 = vmatprep.subr.mxu0 0.0
    %4198 = vmatpush1.msra.mxu0 0.0
    %4199 = vmatprep.subr.mxu0 0.0
    %4200 = vmatpush1.msra.mxu0 0.0
    %4201 = vmatprep.subr.mxu0 0.0
    %4202 = vmatpush1.msra.mxu0 0.0
    %4203 = vmatprep.subr.mxu0 0.0
    %4204 = vmatpush1.msra.mxu0 0.0
    %4205 = vmatprep.subr.mxu0 0.0
    %4206 = vmatpush1.msra.mxu0 0.0
    %4207 = vmatprep.subr.mxu0 0.0
    %4208 = vmatpush1.msra.mxu0 0.0
    %4209 = vmatprep.subr.mxu0 0.0
    %4210 = vmatpush1.msra.mxu0 0.0
    %4211 = vmatprep.subr.mxu0 0.0
    %4212 = vmatpush1.msra.mxu0 0.0
    %4213 = vmatprep.subr.mxu0 0.0
    %4214 = vmatpush1.msra.mxu0 0.0
    %4215 = vmatprep.subr.mxu0 0.0
    %4216 = vmatpush1.msra.mxu0 0.0
    %4217 = vmatprep.subr.mxu0 0.0
    %4218 = vmatpush1.msra.mxu0 0.0
    %4219 = vmatprep.mubr.f32.mxu0 0.0
    %4220 = vmatmul.mubr.f32.gmra.mrb[0].mxu0 %v4153
    %v4221 = vpop.f32.mrb[0].mxu0
    %v4222 = vadd.f32 0.0, %v4221
    %v4223 = vpop.f32.mrb[0].mxu0
    %4224 = vdwg.mxu0
    %v4225 = vadd.f32 %v3163, %v4222
    %v4226 = vxor.u32 %v4225, 2147483648
    %v4227 = vmul.f32 %v4226, 1.442695
    %v4228 = vpow.pop %v4227
    %v4229 = vadd.f32 %v4228, 1.0
    %v4230 = vrcp.pop %v4229
    %v4231 = vmul.f32 1.0, %v4230
    %v4232 = vtanh.pop %v4225
    %v4233 = vmul.f32 %v4231, %v4043
    %4235 = vrot.lane.b32.xlu0 %v4232, 64
    %v4236 = vpop.permute.xlu0 %4235
    %v4238 = vmul.f32 %v4231, %v4236
    %4240 = vrot.lane.b32.xlu0 %v4238, 32
    %v4241 = vpop.permute.xlu0 %4240
    %v4243 = vadd.f32 %v4233, %v4241
    %v4244 = vtanh.pop %v4243
    %4246 = vrot.lane.b32.xlu0 %v4244, 64
    %v4247 = vpop.permute.xlu0 %4246
    %v4249 = vmul.f32 %v4231, %v4247
    %4251 = vrot.lane.b32.xlu0 %v4149, 32
    %v4252 = vpop.permute.xlu0 %4251
    %v4253 = vsel %vm301, %v4252, 0
    %4255 = vmatprep.subr.mxu0 0.0
    %4256 = vmatpush1.msra.mxu0 %v3252
    %4257 = vmatprep.subr.mxu0 0.0
    %4258 = vmatpush1.msra.mxu0 %v3253
    %4259 = vmatprep.subr.mxu0 0.0
    %4260 = vmatpush1.msra.mxu0 %v3254
    %4261 = vmatprep.subr.mxu0 0.0
    %4262 = vmatpush1.msra.mxu0 %v3255
    %4263 = vmatprep.subr.mxu0 0.0
    %4264 = vmatpush1.msra.mxu0 0.0
    %4265 = vmatprep.subr.mxu0 0.0
    %4266 = vmatpush1.msra.mxu0 0.0
    %4267 = vmatprep.subr.mxu0 0.0
    %4268 = vmatpush1.msra.mxu0 0.0
    %4269 = vmatprep.subr.mxu0 0.0
    %4270 = vmatpush1.msra.mxu0 0.0
    %4271 = vmatprep.subr.mxu0 0.0
    %4272 = vmatpush1.msra.mxu0 0.0
    %4273 = vmatprep.subr.mxu0 0.0
    %4274 = vmatpush1.msra.mxu0 0.0
    %4275 = vmatprep.subr.mxu0 0.0
    %4276 = vmatpush1.msra.mxu0 0.0
    %4277 = vmatprep.subr.mxu0 0.0
    %4278 = vmatpush1.msra.mxu0 0.0
    %4279 = vmatprep.subr.mxu0 0.0
    %4280 = vmatpush1.msra.mxu0 0.0
    %4281 = vmatprep.subr.mxu0 0.0
    %4282 = vmatpush1.msra.mxu0 0.0
    %4283 = vmatprep.subr.mxu0 0.0
    %4284 = vmatpush1.msra.mxu0 0.0
    %4285 = vmatprep.subr.mxu0 0.0
    %4286 = vmatpush1.msra.mxu0 0.0
    %4287 = vmatprep.subr.mxu0 0.0
    %4288 = vmatpush1.msra.mxu0 0.0
    %4289 = vmatprep.subr.mxu0 0.0
    %4290 = vmatpush1.msra.mxu0 0.0
    %4291 = vmatprep.subr.mxu0 0.0
    %4292 = vmatpush1.msra.mxu0 0.0
    %4293 = vmatprep.subr.mxu0 0.0
    %4294 = vmatpush1.msra.mxu0 0.0
    %4295 = vmatprep.subr.mxu0 0.0
    %4296 = vmatpush1.msra.mxu0 0.0
    %4297 = vmatprep.subr.mxu0 0.0
    %4298 = vmatpush1.msra.mxu0 0.0
    %4299 = vmatprep.subr.mxu0 0.0
    %4300 = vmatpush1.msra.mxu0 0.0
    %4301 = vmatprep.subr.mxu0 0.0
    %4302 = vmatpush1.msra.mxu0 0.0
    %4303 = vmatprep.subr.mxu0 0.0
    %4304 = vmatpush1.msra.mxu0 0.0
    %4305 = vmatprep.subr.mxu0 0.0
    %4306 = vmatpush1.msra.mxu0 0.0
    %4307 = vmatprep.subr.mxu0 0.0
    %4308 = vmatpush1.msra.mxu0 0.0
    %4309 = vmatprep.subr.mxu0 0.0
    %4310 = vmatpush1.msra.mxu0 0.0
    %4311 = vmatprep.subr.mxu0 0.0
    %4312 = vmatpush1.msra.mxu0 0.0
    %4313 = vmatprep.subr.mxu0 0.0
    %4314 = vmatpush1.msra.mxu0 0.0
    %4315 = vmatprep.subr.mxu0 0.0
    %4316 = vmatpush1.msra.mxu0 0.0
    %4317 = vmatprep.subr.mxu0 0.0
    %4318 = vmatpush1.msra.mxu0 0.0
    %4319 = vmatprep.mubr.f32.mxu0 0.0
    %4320 = vmatmul.mubr.f32.gmra.mrb[0].mxu0 %v4253
    %v4321 = vpop.f32.mrb[0].mxu0
    %v4322 = vadd.f32 0.0, %v4321
    %v4323 = vpop.f32.mrb[0].mxu0
    %4324 = vdwg.mxu0
    %v4325 = vadd.f32 %v3206, %v4322
    %v4326 = vxor.u32 %v4325, 2147483648
    %v4327 = vmul.f32 %v4326, 1.442695
    %v4328 = vpow.pop %v4327
    %v4329 = vadd.f32 %v4328, 1.0
    %v4330 = vrcp.pop %v4329
    %v4331 = vmul.f32 1.0, %v4330
    %v4332 = vtanh.pop %v4325
    %v4333 = vmul.f32 %v4331, %v4143
    %4335 = vrot.lane.b32.xlu0 %v4332, 64
    %v4336 = vpop.permute.xlu0 %4335
    %v4338 = vmul.f32 %v4331, %v4336
    %4340 = vrot.lane.b32.xlu0 %v4338, 32
    %v4341 = vpop.permute.xlu0 %4340
    %v4343 = vadd.f32 %v4333, %v4341
    %v4344 = vtanh.pop %v4343
    %4346 = vrot.lane.b32.xlu0 %v4344, 64
    %v4347 = vpop.permute.xlu0 %4346
    %v4349 = vmul.f32 %v4331, %v4347
    %4351 = vrot.lane.b32.xlu0 %v4249, 32
    %v4352 = vpop.permute.xlu0 %4351
    %v4353 = vsel %vm301, %v4352, 0
    %4355 = vmatprep.subr.mxu0 0.0
    %4356 = vmatpush1.msra.mxu0 %v3256
    %4357 = vmatprep.subr.mxu0 0.0
    %4358 = vmatpush1.msra.mxu0 %v3257
    %4359 = vmatprep.subr.mxu0 0.0
    %4360 = vmatpush1.msra.mxu0 %v3258
    %4361 = vmatprep.subr.mxu0 0.0
    %4362 = vmatpush1.msra.mxu0 %v3259
    %4363 = vmatprep.subr.mxu0 0.0
    %4364 = vmatpush1.msra.mxu0 0.0
    %4365 = vmatprep.subr.mxu0 0.0
    %4366 = vmatpush1.msra.mxu0 0.0
    %4367 = vmatprep.subr.mxu0 0.0
    %4368 = vmatpush1.msra.mxu0 0.0
    %4369 = vmatprep.subr.mxu0 0.0
    %4370 = vmatpush1.msra.mxu0 0.0
    %4371 = vmatprep.subr.mxu0 0.0
    %4372 = vmatpush1.msra.mxu0 0.0
    %4373 = vmatprep.subr.mxu0 0.0
    %4374 = vmatpush1.msra.mxu0 0.0
    %4375 = vmatprep.subr.mxu0 0.0
    %4376 = vmatpush1.msra.mxu0 0.0
    %4377 = vmatprep.subr.mxu0 0.0
    %4378 = vmatpush1.msra.mxu0 0.0
    %4379 = vmatprep.subr.mxu0 0.0
    %4380 = vmatpush1.msra.mxu0 0.0
    %4381 = vmatprep.subr.mxu0 0.0
    %4382 = vmatpush1.msra.mxu0 0.0
    %4383 = vmatprep.subr.mxu0 0.0
    %4384 = vmatpush1.msra.mxu0 0.0
    %4385 = vmatprep.subr.mxu0 0.0
    %4386 = vmatpush1.msra.mxu0 0.0
    %4387 = vmatprep.subr.mxu0 0.0
    %4388 = vmatpush1.msra.mxu0 0.0
    %4389 = vmatprep.subr.mxu0 0.0
    %4390 = vmatpush1.msra.mxu0 0.0
    %4391 = vmatprep.subr.mxu0 0.0
    %4392 = vmatpush1.msra.mxu0 0.0
    %4393 = vmatprep.subr.mxu0 0.0
    %4394 = vmatpush1.msra.mxu0 0.0
    %4395 = vmatprep.subr.mxu0 0.0
    %4396 = vmatpush1.msra.mxu0 0.0
    %4397 = vmatprep.subr.mxu0 0.0
    %4398 = vmatpush1.msra.mxu0 0.0
    %4399 = vmatprep.subr.mxu0 0.0
    %4400 = vmatpush1.msra.mxu0 0.0
    %4401 = vmatprep.subr.mxu0 0.0
    %4402 = vmatpush1.msra.mxu0 0.0
    %4403 = vmatprep.subr.mxu0 0.0
    %4404 = vmatpush1.msra.mxu0 0.0
    %4405 = vmatprep.subr.mxu0 0.0
    %4406 = vmatpush1.msra.mxu0 0.0
    %4407 = vmatprep.subr.mxu0 0.0
    %4408 = vmatpush1.msra.mxu0 0.0
    %4409 = vmatprep.subr.mxu0 0.0
    %4410 = vmatpush1.msra.mxu0 0.0
    %4411 = vmatprep.subr.mxu0 0.0
    %4412 = vmatpush1.msra.mxu0 0.0
    %4413 = vmatprep.subr.mxu0 0.0
    %4414 = vmatpush1.msra.mxu0 0.0
    %4415 = vmatprep.subr.mxu0 0.0
    %4416 = vmatpush1.msra.mxu0 0.0
    %4417 = vmatprep.subr.mxu0 0.0
    %4418 = vmatpush1.msra.mxu0 0.0
    %4419 = vmatprep.mubr.f32.mxu0 0.0
    %4420 = vmatmul.mubr.f32.gmra.mrb[0].mxu0 %v4353
    %v4421 = vpop.f32.mrb[0].mxu0
    %v4422 = vadd.f32 0.0, %v4421
    %v4423 = vpop.f32.mrb[0].mxu0
    %4424 = vdwg.mxu0
    %v4425 = vadd.f32 %v3145, %v4422
    %v4426 = vxor.u32 %v4425, 2147483648
    %v4427 = vmul.f32 %v4426, 1.442695
    %v4428 = vpow.pop %v4427
    %v4429 = vadd.f32 %v4428, 1.0
    %v4430 = vrcp.pop %v4429
    %v4431 = vmul.f32 1.0, %v4430
    %v4432 = vtanh.pop %v4425
    %v4433 = vmul.f32 %v4431, %v4243
    %4435 = vrot.lane.b32.xlu0 %v4432, 64
    %v4436 = vpop.permute.xlu0 %4435
    %v4438 = vmul.f32 %v4431, %v4436
    %4440 = vrot.lane.b32.xlu0 %v4438, 32
    %v4441 = vpop.permute.xlu0 %4440
    %v4443 = vadd.f32 %v4433, %v4441
    %v4444 = vtanh.pop %v4443
    %4446 = vrot.lane.b32.xlu0 %v4444, 64
    %v4447 = vpop.permute.xlu0 %4446
    %v4449 = vmul.f32 %v4431, %v4447
    %4451 = vrot.lane.b32.xlu0 %v4349, 32
    %v4452 = vpop.permute.xlu0 %4451
    %v4453 = vsel %vm301, %v4452, 0
    %4455 = vmatprep.subr.mxu0 0.0
    %4456 = vmatpush1.msra.mxu0 %v3252
    %4457 = vmatprep.subr.mxu0 0.0
    %4458 = vmatpush1.msra.mxu0 %v3253
    %4459 = vmatprep.subr.mxu0 0.0
    %4460 = vmatpush1.msra.mxu0 %v3254
    %4461 = vmatprep.subr.mxu0 0.0
    %4462 = vmatpush1.msra.mxu0 %v3255
    %4463 = vmatprep.subr.mxu0 0.0
    %4464 = vmatpush1.msra.mxu0 0.0
    %4465 = vmatprep.subr.mxu0 0.0
    %4466 = vmatpush1.msra.mxu0 0.0
    %4467 = vmatprep.subr.mxu0 0.0
    %4468 = vmatpush1.msra.mxu0 0.0
    %4469 = vmatprep.subr.mxu0 0.0
    %4470 = vmatpush1.msra.mxu0 0.0
    %4471 = vmatprep.subr.mxu0 0.0
    %4472 = vmatpush1.msra.mxu0 0.0
    %4473 = vmatprep.subr.mxu0 0.0
    %4474 = vmatpush1.msra.mxu0 0.0
    %4475 = vmatprep.subr.mxu0 0.0
    %4476 = vmatpush1.msra.mxu0 0.0
    %4477 = vmatprep.subr.mxu0 0.0
    %4478 = vmatpush1.msra.mxu0 0.0
    %4479 = vmatprep.subr.mxu0 0.0
    %4480 = vmatpush1.msra.mxu0 0.0
    %4481 = vmatprep.subr.mxu0 0.0
    %4482 = vmatpush1.msra.mxu0 0.0
    %4483 = vmatprep.subr.mxu0 0.0
    %4484 = vmatpush1.msra.mxu0 0.0
    %4485 = vmatprep.subr.mxu0 0.0
    %4486 = vmatpush1.msra.mxu0 0.0
    %4487 = vmatprep.subr.mxu0 0.0
    %4488 = vmatpush1.msra.mxu0 0.0
    %4489 = vmatprep.subr.mxu0 0.0
    %4490 = vmatpush1.msra.mxu0 0.0
    %4491 = vmatprep.subr.mxu0 0.0
    %4492 = vmatpush1.msra.mxu0 0.0
    %4493 = vmatprep.subr.mxu0 0.0
    %4494 = vmatpush1.msra.mxu0 0.0
    %4495 = vmatprep.subr.mxu0 0.0
    %4496 = vmatpush1.msra.mxu0 0.0
    %4497 = vmatprep.subr.mxu0 0.0
    %4498 = vmatpush1.msra.mxu0 0.0
    %4499 = vmatprep.subr.mxu0 0.0
    %4500 = vmatpush1.msra.mxu0 0.0
    %4501 = vmatprep.subr.mxu0 0.0
    %4502 = vmatpush1.msra.mxu0 0.0
    %4503 = vmatprep.subr.mxu0 0.0
    %4504 = vmatpush1.msra.mxu0 0.0
    %4505 = vmatprep.subr.mxu0 0.0
    %4506 = vmatpush1.msra.mxu0 0.0
    %4507 = vmatprep.subr.mxu0 0.0
    %4508 = vmatpush1.msra.mxu0 0.0
    %4509 = vmatprep.subr.mxu0 0.0
    %4510 = vmatpush1.msra.mxu0 0.0
    %4511 = vmatprep.subr.mxu0 0.0
    %4512 = vmatpush1.msra.mxu0 0.0
    %4513 = vmatprep.subr.mxu0 0.0
    %4514 = vmatpush1.msra.mxu0 0.0
    %4515 = vmatprep.subr.mxu0 0.0
    %4516 = vmatpush1.msra.mxu0 0.0
    %4517 = vmatprep.subr.mxu0 0.0
    %4518 = vmatpush1.msra.mxu0 0.0
    %4519 = vmatprep.mubr.f32.mxu0 0.0
    %4520 = vmatmul.mubr.f32.gmra.mrb[0].mxu0 %v4453
    %v4521 = vpop.f32.mrb[0].mxu0
    %v4522 = vadd.f32 0.0, %v4521
    %v4523 = vpop.f32.mrb[0].mxu0
    %4524 = vdwg.mxu0
    %v4525 = vadd.f32 %v3228, %v4522
    %v4526 = vxor.u32 %v4525, 2147483648
    %v4527 = vmul.f32 %v4526, 1.442695
    %v4528 = vpow.pop %v4527
    %v4529 = vadd.f32 %v4528, 1.0
    %v4530 = vrcp.pop %v4529
    %v4531 = vmul.f32 1.0, %v4530
    %v4532 = vtanh.pop %v4525
    %v4533 = vmul.f32 %v4531, %v4343
    %4535 = vrot.lane.b32.xlu0 %v4532, 64
    %v4536 = vpop.permute.xlu0 %4535
    %v4538 = vmul.f32 %v4531, %v4536
    %4540 = vrot.lane.b32.xlu0 %v4538, 32
    %v4541 = vpop.permute.xlu0 %4540
    %v4543 = vadd.f32 %v4533, %v4541
    %v4544 = vtanh.pop %v4543
    %4546 = vrot.lane.b32.xlu0 %v4544, 64
    %v4547 = vpop.permute.xlu0 %4546
    %v4549 = vmul.f32 %v4531, %v4547
    %4551 = vrot.lane.b32.xlu0 %v4449, 32
    %v4552 = vpop.permute.xlu0 %4551
    %v4553 = vsel %vm301, %v4552, 0
    %4555 = vmatprep.subr.mxu0 0.0
    %4556 = vmatpush1.msra.mxu0 %v3256
    %4557 = vmatprep.subr.mxu0 0.0
    %4558 = vmatpush1.msra.mxu0 %v3257
    %4559 = vmatprep.subr.mxu0 0.0
    %4560 = vmatpush1.msra.mxu0 %v3258
    %4561 = vmatprep.subr.mxu0 0.0
    %4562 = vmatpush1.msra.mxu0 %v3259
    %4563 = vmatprep.subr.mxu0 0.0
    %4564 = vmatpush1.msra.mxu0 0.0
    %4565 = vmatprep.subr.mxu0 0.0
    %4566 = vmatpush1.msra.mxu0 0.0
    %4567 = vmatprep.subr.mxu0 0.0
    %4568 = vmatpush1.msra.mxu0 0.0
    %4569 = vmatprep.subr.mxu0 0.0
    %4570 = vmatpush1.msra.mxu0 0.0
    %4571 = vmatprep.subr.mxu0 0.0
    %4572 = vmatpush1.msra.mxu0 0.0
    %4573 = vmatprep.subr.mxu0 0.0
    %4574 = vmatpush1.msra.mxu0 0.0
    %4575 = vmatprep.subr.mxu0 0.0
    %4576 = vmatpush1.msra.mxu0 0.0
    %4577 = vmatprep.subr.mxu0 0.0
    %4578 = vmatpush1.msra.mxu0 0.0
    %4579 = vmatprep.subr.mxu0 0.0
    %4580 = vmatpush1.msra.mxu0 0.0
    %4581 = vmatprep.subr.mxu0 0.0
    %4582 = vmatpush1.msra.mxu0 0.0
    %4583 = vmatprep.subr.mxu0 0.0
    %4584 = vmatpush1.msra.mxu0 0.0
    %4585 = vmatprep.subr.mxu0 0.0
    %4586 = vmatpush1.msra.mxu0 0.0
    %4587 = vmatprep.subr.mxu0 0.0
    %4588 = vmatpush1.msra.mxu0 0.0
    %4589 = vmatprep.subr.mxu0 0.0
    %4590 = vmatpush1.msra.mxu0 0.0
    %4591 = vmatprep.subr.mxu0 0.0
    %4592 = vmatpush1.msra.mxu0 0.0
    %4593 = vmatprep.subr.mxu0 0.0
    %4594 = vmatpush1.msra.mxu0 0.0
    %4595 = vmatprep.subr.mxu0 0.0
    %4596 = vmatpush1.msra.mxu0 0.0
    %4597 = vmatprep.subr.mxu0 0.0
    %4598 = vmatpush1.msra.mxu0 0.0
    %4599 = vmatprep.subr.mxu0 0.0
    %4600 = vmatpush1.msra.mxu0 0.0
    %4601 = vmatprep.subr.mxu0 0.0
    %4602 = vmatpush1.msra.mxu0 0.0
    %4603 = vmatprep.subr.mxu0 0.0
    %4604 = vmatpush1.msra.mxu0 0.0
    %4605 = vmatprep.subr.mxu0 0.0
    %4606 = vmatpush1.msra.mxu0 0.0
    %4607 = vmatprep.subr.mxu0 0.0
    %4608 = vmatpush1.msra.mxu0 0.0
    %4609 = vmatprep.subr.mxu0 0.0
    %4610 = vmatpush1.msra.mxu0 0.0
    %4611 = vmatprep.subr.mxu0 0.0
    %4612 = vmatpush1.msra.mxu0 0.0
    %4613 = vmatprep.subr.mxu0 0.0
    %4614 = vmatpush1.msra.mxu0 0.0
    %4615 = vmatprep.subr.mxu0 0.0
    %4616 = vmatpush1.msra.mxu0 0.0
    %4617 = vmatprep.subr.mxu0 0.0
    %4618 = vmatpush1.msra.mxu0 0.0
    %4619 = vmatprep.mubr.f32.mxu0 0.0
    %4620 = vmatmul.mubr.f32.gmra.mrb[0].mxu0 %v4553
    %v4621 = vpop.f32.mrb[0].mxu0
    %v4622 = vadd.f32 0.0, %v4621
    %v4623 = vpop.f32.mrb[0].mxu0
    %4624 = vdwg.mxu0
    %v4625 = vadd.f32 %v3127, %v4622
    %v4626 = vxor.u32 %v4625, 2147483648
    %v4627 = vmul.f32 %v4626, 1.442695
    %v4628 = vpow.pop %v4627
    %v4629 = vadd.f32 %v4628, 1.0
    %v4630 = vrcp.pop %v4629
    %v4631 = vmul.f32 1.0, %v4630
    %v4632 = vtanh.pop %v4625
    %v4633 = vmul.f32 %v4631, %v4443
    %4635 = vrot.lane.b32.xlu0 %v4632, 64
    %v4636 = vpop.permute.xlu0 %4635
    %v4638 = vmul.f32 %v4631, %v4636
    %4640 = vrot.lane.b32.xlu0 %v4638, 32
    %v4641 = vpop.permute.xlu0 %4640
    %v4643 = vadd.f32 %v4633, %v4641
    %v4644 = vtanh.pop %v4643
    %4646 = vrot.lane.b32.xlu0 %v4644, 64
    %v4647 = vpop.permute.xlu0 %4646
    %v4649 = vmul.f32 %v4631, %v4647
    %4651 = vrot.lane.b32.xlu0 %v4549, 32
    %v4652 = vpop.permute.xlu0 %4651
    %v4653 = vsel %vm301, %v4652, 0
    %4655 = vmatprep.subr.mxu0 0.0
    %4656 = vmatpush1.msra.mxu0 %v3252
    %4657 = vmatprep.subr.mxu0 0.0
    %4658 = vmatpush1.msra.mxu0 %v3253
    %4659 = vmatprep.subr.mxu0 0.0
    %4660 = vmatpush1.msra.mxu0 %v3254
    %4661 = vmatprep.subr.mxu0 0.0
    %4662 = vmatpush1.msra.mxu0 %v3255
    %4663 = vmatprep.subr.mxu0 0.0
    %4664 = vmatpush1.msra.mxu0 0.0
    %4665 = vmatprep.subr.mxu0 0.0
    %4666 = vmatpush1.msra.mxu0 0.0
    %4667 = vmatprep.subr.mxu0 0.0
    %4668 = vmatpush1.msra.mxu0 0.0
    %4669 = vmatprep.subr.mxu0 0.0
    %4670 = vmatpush1.msra.mxu0 0.0
    %4671 = vmatprep.subr.mxu0 0.0
    %4672 = vmatpush1.msra.mxu0 0.0
    %4673 = vmatprep.subr.mxu0 0.0
    %4674 = vmatpush1.msra.mxu0 0.0
    %4675 = vmatprep.subr.mxu0 0.0
    %4676 = vmatpush1.msra.mxu0 0.0
    %4677 = vmatprep.subr.mxu0 0.0
    %4678 = vmatpush1.msra.mxu0 0.0
    %4679 = vmatprep.subr.mxu0 0.0
    %4680 = vmatpush1.msra.mxu0 0.0
    %4681 = vmatprep.subr.mxu0 0.0
    %4682 = vmatpush1.msra.mxu0 0.0
    %4683 = vmatprep.subr.mxu0 0.0
    %4684 = vmatpush1.msra.mxu0 0.0
    %4685 = vmatprep.subr.mxu0 0.0
    %4686 = vmatpush1.msra.mxu0 0.0
    %4687 = vmatprep.subr.mxu0 0.0
    %4688 = vmatpush1.msra.mxu0 0.0
    %4689 = vmatprep.subr.mxu0 0.0
    %4690 = vmatpush1.msra.mxu0 0.0
    %4691 = vmatprep.subr.mxu0 0.0
    %4692 = vmatpush1.msra.mxu0 0.0
    %4693 = vmatprep.subr.mxu0 0.0
    %4694 = vmatpush1.msra.mxu0 0.0
    %4695 = vmatprep.subr.mxu0 0.0
    %4696 = vmatpush1.msra.mxu0 0.0
    %4697 = vmatprep.subr.mxu0 0.0
    %4698 = vmatpush1.msra.mxu0 0.0
    %4699 = vmatprep.subr.mxu0 0.0
    %4700 = vmatpush1.msra.mxu0 0.0
    %4701 = vmatprep.subr.mxu0 0.0
    %4702 = vmatpush1.msra.mxu0 0.0
    %4703 = vmatprep.subr.mxu0 0.0
    %4704 = vmatpush1.msra.mxu0 0.0
    %4705 = vmatprep.subr.mxu0 0.0
    %4706 = vmatpush1.msra.mxu0 0.0
    %4707 = vmatprep.subr.mxu0 0.0
    %4708 = vmatpush1.msra.mxu0 0.0
    %4709 = vmatprep.subr.mxu0 0.0
    %4710 = vmatpush1.msra.mxu0 0.0
    %4711 = vmatprep.subr.mxu0 0.0
    %4712 = vmatpush1.msra.mxu0 0.0
    %4713 = vmatprep.subr.mxu0 0.0
    %4714 = vmatpush1.msra.mxu0 0.0
    %4715 = vmatprep.subr.mxu0 0.0
    %4716 = vmatpush1.msra.mxu0 0.0
    %4717 = vmatprep.subr.mxu0 0.0
    %4718 = vmatpush1.msra.mxu0 0.0
    %4719 = vmatprep.mubr.f32.mxu0 0.0
    %4720 = vmatmul.mubr.f32.gmra.mrb[0].mxu0 %v4653
    %v4721 = vpop.f32.mrb[0].mxu0
    %v4722 = vadd.f32 0.0, %v4721
    %v4723 = vpop.f32.mrb[0].mxu0
    %4724 = vdwg.mxu0
    %v4725 = vadd.f32 %v3250, %v4722
    %v4726 = vxor.u32 %v4725, 2147483648
    %v4727 = vmul.f32 %v4726, 1.442695
    %v4728 = vpow.pop %v4727
    %v4729 = vadd.f32 %v4728, 1.0
    %v4730 = vrcp.pop %v4729
    %v4731 = vmul.f32 1.0, %v4730
    %v4732 = vtanh.pop %v4725
    %v4733 = vmul.f32 %v4731, %v4543
    %4735 = vrot.lane.b32.xlu0 %v4732, 64
    %v4736 = vpop.permute.xlu0 %4735
    %v4738 = vmul.f32 %v4731, %v4736
    %4740 = vrot.lane.b32.xlu0 %v4738, 32
    %v4741 = vpop.permute.xlu0 %4740
    %v4743 = vadd.f32 %v4733, %v4741
    %v4744 = vtanh.pop %v4743
    %4746 = vrot.lane.b32.xlu0 %v4744, 64
    %v4747 = vpop.permute.xlu0 %4746
    %v4749 = vmul.f32 %v4731, %v4747
    %4751 = vrot.lane.b32.xlu0 %v4649, 32
    %v4752 = vpop.permute.xlu0 %4751
    %v4753 = vsel %vm301, %v4752, 0
    %4755 = vmatprep.subr.mxu0 0.0
    %4756 = vmatpush1.msra.mxu0 %v3256
    %4757 = vmatprep.subr.mxu0 0.0
    %4758 = vmatpush1.msra.mxu0 %v3257
    %4759 = vmatprep.subr.mxu0 0.0
    %4760 = vmatpush1.msra.mxu0 %v3258
    %4761 = vmatprep.subr.mxu0 0.0
    %4762 = vmatpush1.msra.mxu0 %v3259
    %4763 = vmatprep.subr.mxu0 0.0
    %4764 = vmatpush1.msra.mxu0 0.0
    %4765 = vmatprep.subr.mxu0 0.0
    %4766 = vmatpush1.msra.mxu0 0.0
    %4767 = vmatprep.subr.mxu0 0.0
    %4768 = vmatpush1.msra.mxu0 0.0
    %4769 = vmatprep.subr.mxu0 0.0
    %4770 = vmatpush1.msra.mxu0 0.0
    %4771 = vmatprep.subr.mxu0 0.0
    %4772 = vmatpush1.msra.mxu0 0.0
    %4773 = vmatprep.subr.mxu0 0.0
    %4774 = vmatpush1.msra.mxu0 0.0
    %4775 = vmatprep.subr.mxu0 0.0
    %4776 = vmatpush1.msra.mxu0 0.0
    %4777 = vmatprep.subr.mxu0 0.0
    %4778 = vmatpush1.msra.mxu0 0.0
    %4779 = vmatprep.subr.mxu0 0.0
    %4780 = vmatpush1.msra.mxu0 0.0
    %4781 = vmatprep.subr.mxu0 0.0
    %4782 = vmatpush1.msra.mxu0 0.0
    %4783 = vmatprep.subr.mxu0 0.0
    %4784 = vmatpush1.msra.mxu0 0.0
    %4785 = vmatprep.subr.mxu0 0.0
    %4786 = vmatpush1.msra.mxu0 0.0
    %4787 = vmatprep.subr.mxu0 0.0
    %4788 = vmatpush1.msra.mxu0 0.0
    %4789 = vmatprep.subr.mxu0 0.0
    %4790 = vmatpush1.msra.mxu0 0.0
    %4791 = vmatprep.subr.mxu0 0.0
    %4792 = vmatpush1.msra.mxu0 0.0
    %4793 = vmatprep.subr.mxu0 0.0
    %4794 = vmatpush1.msra.mxu0 0.0
    %4795 = vmatprep.subr.mxu0 0.0
    %4796 = vmatpush1.msra.mxu0 0.0
    %4797 = vmatprep.subr.mxu0 0.0
    %4798 = vmatpush1.msra.mxu0 0.0
    %4799 = vmatprep.subr.mxu0 0.0
    %4800 = vmatpush1.msra.mxu0 0.0
    %4801 = vmatprep.subr.mxu0 0.0
    %4802 = vmatpush1.msra.mxu0 0.0
    %4803 = vmatprep.subr.mxu0 0.0
    %4804 = vmatpush1.msra.mxu0 0.0
    %4805 = vmatprep.subr.mxu0 0.0
    %4806 = vmatpush1.msra.mxu0 0.0
    %4807 = vmatprep.subr.mxu0 0.0
    %4808 = vmatpush1.msra.mxu0 0.0
    %4809 = vmatprep.subr.mxu0 0.0
    %4810 = vmatpush1.msra.mxu0 0.0
    %4811 = vmatprep.subr.mxu0 0.0
    %4812 = vmatpush1.msra.mxu0 0.0
    %4813 = vmatprep.subr.mxu0 0.0
    %4814 = vmatpush1.msra.mxu0 0.0
    %4815 = vmatprep.subr.mxu0 0.0
    %4816 = vmatpush1.msra.mxu0 0.0
    %4817 = vmatprep.subr.mxu0 0.0
    %4818 = vmatpush1.msra.mxu0 0.0
    %4819 = vmatprep.mubr.f32.mxu0 0.0
    %4820 = vmatmul.mubr.f32.gmra.mrb[0].mxu0 %v4753
    %v4821 = vpop.f32.mrb[0].mxu0
    %v4822 = vadd.f32 0.0, %v4821
    %v4823 = vpop.f32.mrb[0].mxu0
    %4824 = vdwg.mxu0
    %v4825 = vadd.f32 %v3107, %v4822
    %v4826 = vxor.u32 %v4825, 2147483648
    %v4827 = vmul.f32 %v4826, 1.442695
    %v4828 = vpow.pop %v4827
    %v4829 = vadd.f32 %v4828, 1.0
    %v4830 = vrcp.pop %v4829
    %v4831 = vmul.f32 1.0, %v4830
    %v4832 = vtanh.pop %v4825
    %v4833 = vmul.f32 %v4831, %v4643
    %4835 = vrot.lane.b32.xlu0 %v4832, 64
    %v4836 = vpop.permute.xlu0 %4835
    %v4838 = vmul.f32 %v4831, %v4836
    %4840 = vrot.lane.b32.xlu0 %v4838, 32
    %v4841 = vpop.permute.xlu0 %4840
    %v4843 = vadd.f32 %v4833, %v4841
    %v4844 = vtanh.pop %v4843
    %4846 = vrot.lane.b32.xlu0 %v4844, 64
    %v4847 = vpop.permute.xlu0 %4846
    %v4849 = vmul.f32 %v4831, %v4847
    %4852 = vrot.lane.b32.xlu0 %v4849, 64
    %v4853 = vpop.permute.xlu0 %4852
    %v4855 = vsel %vm301, %v3452, %v4853
    %4857 = vrot.lane.b32.xlu0 %v4649, 64
    %v4858 = vpop.permute.xlu0 %4857
    %v4860 = vsel %vm301, %v3652, %v4858
    %4862 = vrot.lane.b32.xlu0 %v4449, 64
    %v4863 = vpop.permute.xlu0 %4862
    %v4865 = vsel %vm301, %v3852, %v4863
    %4867 = vrot.lane.b32.xlu0 %v4249, 64
    %v4868 = vpop.permute.xlu0 %4867
    %v4870 = vsel %vm301, %v4052, %v4868
    %4872 = vrot.lane.b32.xlu0 %v4049, 64
    %v4873 = vpop.permute.xlu0 %4872
    %v4875 = vsel %vm301, %v4252, %v4873
    %4877 = vrot.lane.b32.xlu0 %v3849, 64
    %v4878 = vpop.permute.xlu0 %4877
    %v4880 = vsel %vm301, %v4452, %v4878
    %4882 = vrot.lane.b32.xlu0 %v3649, 64
    %v4883 = vpop.permute.xlu0 %4882
    %v4885 = vsel %vm301, %v4652, %v4883
    %4887 = vrot.lane.b32.xlu0 %v4749, 32
    %v4888 = vpop.permute.xlu0 %4887
    %4890 = vrot.lane.b32.xlu0 %v3449, 64
    %v4891 = vpop.permute.xlu0 %4890
    %v4893 = vsel %vm301, %v4888, %v4891
    %v4894 = vadd.f32 %v4855, %v4860
    %v4895 = vmax.f32 %v4855, %v4860
    %v4896 = vadd.f32 %v4894, %v4865
    %v4897 = vmax.f32 %v4895, %v4865
    %v4898 = vadd.f32 %v4896, %v4870
    %v4899 = vmax.f32 %v4897, %v4870
    %v4900 = vadd.f32 %v4898, %v4875
    %v4901 = vmax.f32 %v4899, %v4875
    %v4902 = vadd.f32 %v4900, %v4880
    %v4903 = vmax.f32 %v4901, %v4880
    %v4904 = vadd.f32 %v4902, %v4885
    %v4905 = vmax.f32 %v4903, %v4885
    %v4906 = vadd.f32 %v4904, %v4893
    %v4907 = vmax.f32 %v4905, %v4893
    %v4908 = vmul.f32 %v4906, 0.125
    %4910 = vrot.lane.b32.xlu0 %v4907, 64
    %v4911 = vpop.permute.xlu0 %4910
    %v4914 = vrot.slane %v4908, 2
    %v4916 = vrot.slane %v4907, 2
    %4917 = vrot.lane.b32.xlu0 %v4916, 64
    %v4918 = vpop.permute.xlu0 %4917
    %v4920 = vsel %vm2229, %v4908, %v4911
    %v4921 = vsel %vm2229, %v4914, %v4918
    %v4922 = vld [vmem:[%s11] sm:$0x3]
    %v4924 = vlaneseq
    %v4925 = vshrl.u32 %v4924, 7
    %v4926 = vsub.s32 0, %v4925
    %v4927 = vrot.slane %v4922, %v4926
    %v4928 = vlaneseq
    %v4929 = vshrl.u32 %v4928, 7
    %v4930 = vsub.s32 1, %v4929
    %v4931 = vrot.slane %v4922, %v4930
    %v4934 = vmul.f32 %v4920, %v4927
    %v4935 = vmul.f32 %v4921, %v4931
    %v4936 = vld [vmem:[%s12] sm:$0x3]
    %v4938 = vlaneseq
    %v4939 = vshrl.u32 %v4938, 7
    %v4940 = vsub.s32 0, %v4939
    %v4941 = vrot.slane %v4936, %v4940
    %v4942 = vlaneseq
    %v4943 = vshrl.u32 %v4942, 7
    %v4944 = vsub.s32 1, %v4943
    %v4945 = vrot.slane %v4936, %v4944
    %v4948 = vadd.f32 %v4934, %v4941
    %v4949 = vadd.f32 %v4935, %v4945
    %v4950 = vld [vmem:[%s13] sm:$0xff]
    %v4951 = vld [vmem:[%s13 + $0x8] sm:$0xff]
    %v4952 = vld [vmem:[%s13 + $0x10] sm:$0xff]
    %v4953 = vld [vmem:[%s13 + $0x18] sm:$0xff]
    %v4954 = vld [vmem:[%s13 + $0x20] sm:$0xff]
    %v4955 = vld [vmem:[%s13 + $0x28] sm:$0xff]
    %v4956 = vld [vmem:[%s13 + $0x30] sm:$0xff]
    %v4957 = vld [vmem:[%s13 + $0x38] sm:$0xff]
    %v4958 = vld [vmem:[%s13 + $0x40] sm:$0xff]
    %v4959 = vld [vmem:[%s13 + $0x48] sm:$0xff]
    %v4960 = vld [vmem:[%s13 + $0x50] sm:$0xff]
    %v4961 = vld [vmem:[%s13 + $0x58] sm:$0xff]
    %v4962 = vld [vmem:[%s13 + $0x60] sm:$0xff]
    %v4963 = vld [vmem:[%s13 + $0x68] sm:$0xff]
    %v4964 = vld [vmem:[%s13 + $0x70] sm:$0xff]
    %v4965 = vld [vmem:[%s13 + $0x78] sm:$0xff]
    %v4966 = vld [vmem:[%s13 + $0x80] sm:$0xff]
    %v4967 = vld [vmem:[%s13 + $0x88] sm:$0xff]
    %v4968 = vld [vmem:[%s13 + $0x90] sm:$0xff]
    %v4969 = vld [vmem:[%s13 + $0x98] sm:$0xff]
    %v4970 = vld [vmem:[%s13 + $0xa0] sm:$0xff]
    %v4971 = vld [vmem:[%s13 + $0xa8] sm:$0xff]
    %v4972 = vld [vmem:[%s13 + $0xb0] sm:$0xff]
    %v4973 = vld [vmem:[%s13 + $0xb8] sm:$0xff]
    %v4974 = vld [vmem:[%s13 + $0xc0] sm:$0xff]
    %v4975 = vld [vmem:[%s13 + $0xc8] sm:$0xff]
    %v4976 = vld [vmem:[%s13 + $0xd0] sm:$0xff]
    %v4977 = vld [vmem:[%s13 + $0xd8] sm:$0xff]
    %v4978 = vld [vmem:[%s13 + $0xe0] sm:$0xff]
    %v4979 = vld [vmem:[%s13 + $0xe8] sm:$0xff]
    %v4980 = vld [vmem:[%s13 + $0xf0] sm:$0xff]
    %v4981 = vld [vmem:[%s13 + $0xf8] sm:$0xff]
    %v4982 = vld [vmem:[%s14] sm:$0x1]
    %v4984 = vlaneseq
    %v4985 = vshrl.u32 %v4984, 7
    %v4986 = vsub.s32 0, %v4985
    %v4987 = vrot.slane %v4982, %v4986
    %4989 = vmatprep.subr.mxu0 0.0
    %4990 = vmatpush1.msra.mxu0 %v4950
    %4991 = vmatprep.subr.mxu0 0.0
    %4992 = vmatpush1.msra.mxu0 %v4951
    %4993 = vmatprep.subr.mxu0 0.0
    %4994 = vmatpush1.msra.mxu0 %v4952
    %4995 = vmatprep.subr.mxu0 0.0
    %4996 = vmatpush1.msra.mxu0 %v4953
    %4997 = vmatprep.subr.mxu0 0.0
    %4998 = vmatpush1.msra.mxu0 %v4954
    %4999 = vmatprep.subr.mxu0 0.0
    %5000 = vmatpush1.msra.mxu0 %v4955
    %5001 = vmatprep.subr.mxu0 0.0
    %5002 = vmatpush1.msra.mxu0 %v4956
    %5003 = vmatprep.subr.mxu0 0.0
    %5004 = vmatpush1.msra.mxu0 %v4957
    %5005 = vmatprep.subr.mxu0 0.0
    %5006 = vmatpush1.msra.mxu0 %v4958
    %5007 = vmatprep.subr.mxu0 0.0
    %5008 = vmatpush1.msra.mxu0 %v4959
    %5009 = vmatprep.subr.mxu0 0.0
    %5010 = vmatpush1.msra.mxu0 %v4960
    %5011 = vmatprep.subr.mxu0 0.0
    %5012 = vmatpush1.msra.mxu0 %v4961
    %5013 = vmatprep.subr.mxu0 0.0
    %5014 = vmatpush1.msra.mxu0 %v4962
    %5015 = vmatprep.subr.mxu0 0.0
    %5016 = vmatpush1.msra.mxu0 %v4963
    %5017 = vmatprep.subr.mxu0 0.0
    %5018 = vmatpush1.msra.mxu0 %v4964
    %5019 = vmatprep.subr.mxu0 0.0
    %5020 = vmatpush1.msra.mxu0 %v4965
    %5021 = vmatprep.subr.mxu0 0.0
    %5022 = vmatpush1.msra.mxu0 %v4966
    %5023 = vmatprep.subr.mxu0 0.0
    %5024 = vmatpush1.msra.mxu0 %v4967
    %5025 = vmatprep.subr.mxu0 0.0
    %5026 = vmatpush1.msra.mxu0 %v4968
    %5027 = vmatprep.subr.mxu0 0.0
    %5028 = vmatpush1.msra.mxu0 %v4969
    %5029 = vmatprep.subr.mxu0 0.0
    %5030 = vmatpush1.msra.mxu0 %v4970
    %5031 = vmatprep.subr.mxu0 0.0
    %5032 = vmatpush1.msra.mxu0 %v4971
    %5033 = vmatprep.subr.mxu0 0.0
    %5034 = vmatpush1.msra.mxu0 %v4972
    %5035 = vmatprep.subr.mxu0 0.0
    %5036 = vmatpush1.msra.mxu0 %v4973
    %5037 = vmatprep.subr.mxu0 0.0
    %5038 = vmatpush1.msra.mxu0 %v4974
    %5039 = vmatprep.subr.mxu0 0.0
    %5040 = vmatpush1.msra.mxu0 %v4975
    %5041 = vmatprep.subr.mxu0 0.0
    %5042 = vmatpush1.msra.mxu0 %v4976
    %5043 = vmatprep.subr.mxu0 0.0
    %5044 = vmatpush1.msra.mxu0 %v4977
    %5045 = vmatprep.subr.mxu0 0.0
    %5046 = vmatpush1.msra.mxu0 %v4978
    %5047 = vmatprep.subr.mxu0 0.0
    %5048 = vmatpush1.msra.mxu0 %v4979
    %5049 = vmatprep.subr.mxu0 0.0
    %5050 = vmatpush1.msra.mxu0 %v4980
    %5051 = vmatprep.subr.mxu0 0.0
    %5052 = vmatpush1.msra.mxu0 %v4981
    %5053 = vmatprep.mubr.f32.mxu0 %v4949
    %5054 = vmatmul.mubr.f32.gmra.mrb[0].mxu0 %v4948
    %v5055 = vpop.f32.mrb[0].mxu0
    %v5056 = vadd.f32 %v4987, %v5055
    %v5057 = vpop.f32.mrb[0].mxu0
    %5058 = vdwg.mxu0
    %vm5059 = vcmp.gt.f32.partialorder %v5056, 0.0
    %v5060 = vmin.f32 %v5056, 0.0
    %v5061 = vmul.f32 %v5060, 1.442695
    %v5062 = vpow.pop %v5061
    %v5063 = vsub.f32 %v5062, 1.0
    %v5064 = vsel %vm5059, %v5056, %v5063
    %v5065 = vld [vmem:[%s15] sm:$0x1]
    %v5067 = vlaneseq
    %v5068 = vshrl.u32 %v5067, 7
    %v5069 = vsub.s32 0, %v5068
    %v5070 = vrot.slane %v5065, %v5069
    %v5072 = vmul.f32 %v5064, %v5070
    %v5073 = vld [vmem:[%s16] sm:$0x1]
    %v5075 = vlaneseq
    %v5076 = vshrl.u32 %v5075, 7
    %v5077 = vsub.s32 0, %v5076
    %v5078 = vrot.slane %v5073, %v5077
    %v5080 = vadd.f32 %v5072, %v5078
    %v5081 = vld [vmem:[%s17] sm:$0xff]
    %v5082 = vld [vmem:[%s17 + $0x8] sm:$0xff]
    %v5083 = vld [vmem:[%s17 + $0x10] sm:$0xff]
    %v5084 = vld [vmem:[%s17 + $0x18] sm:$0xff]
    %v5085 = vld [vmem:[%s17 + $0x20] sm:$0xff]
    %v5086 = vld [vmem:[%s17 + $0x28] sm:$0xff]
    %v5087 = vld [vmem:[%s17 + $0x30] sm:$0xff]
    %v5088 = vld [vmem:[%s17 + $0x38] sm:$0xff]
    %v5089 = vld [vmem:[%s18] sm:$0x1]
    %v5091 = vlaneseq
    %v5092 = vshrl.u32 %v5091, 7
    %v5093 = vsub.s32 0, %v5092
    %v5094 = vrot.slane %v5089, %v5093
    %v5097 = vsel %vm2229, %v5080, 0
    %5099 = vmatprep.subr.mxu0 0.0
    %5100 = vmatpush1.msra.mxu0 %v5081
    %5101 = vmatprep.subr.mxu0 0.0
    %5102 = vmatpush1.msra.mxu0 %v5082
    %5103 = vmatprep.subr.mxu0 0.0
    %5104 = vmatpush1.msra.mxu0 %v5083
    %5105 = vmatprep.subr.mxu0 0.0
    %5106 = vmatpush1.msra.mxu0 %v5084
    %5107 = vmatprep.subr.mxu0 0.0
    %5108 = vmatpush1.msra.mxu0 %v5085
    %5109 = vmatprep.subr.mxu0 0.0
    %5110 = vmatpush1.msra.mxu0 %v5086
    %5111 = vmatprep.subr.mxu0 0.0
    %5112 = vmatpush1.msra.mxu0 %v5087
    %5113 = vmatprep.subr.mxu0 0.0
    %5114 = vmatpush1.msra.mxu0 %v5088
    %5115 = vmatprep.subr.mxu0 0.0
    %5116 = vmatpush1.msra.mxu0 0.0
    %5117 = vmatprep.subr.mxu0 0.0
    %5118 = vmatpush1.msra.mxu0 0.0
    %5119 = vmatprep.subr.mxu0 0.0
    %5120 = vmatpush1.msra.mxu0 0.0
    %5121 = vmatprep.subr.mxu0 0.0
    %5122 = vmatpush1.msra.mxu0 0.0
    %5123 = vmatprep.subr.mxu0 0.0
    %5124 = vmatpush1.msra.mxu0 0.0
    %5125 = vmatprep.subr.mxu0 0.0
    %5126 = vmatpush1.msra.mxu0 0.0
    %5127 = vmatprep.subr.mxu0 0.0
    %5128 = vmatpush1.msra.mxu0 0.0
    %5129 = vmatprep.subr.mxu0 0.0
    %5130 = vmatpush1.msra.mxu0 0.0
    %5131 = vmatprep.subr.mxu0 0.0
    %5132 = vmatpush1.msra.mxu0 0.0
    %5133 = vmatprep.subr.mxu0 0.0
    %5134 = vmatpush1.msra.mxu0 0.0
    %5135 = vmatprep.subr.mxu0 0.0
    %5136 = vmatpush1.msra.mxu0 0.0
    %5137 = vmatprep.subr.mxu0 0.0
    %5138 = vmatpush1.msra.mxu0 0.0
    %5139 = vmatprep.subr.mxu0 0.0
    %5140 = vmatpush1.msra.mxu0 0.0
    %5141 = vmatprep.subr.mxu0 0.0
    %5142 = vmatpush1.msra.mxu0 0.0
    %5143 = vmatprep.subr.mxu0 0.0
    %5144 = vmatpush1.msra.mxu0 0.0
    %5145 = vmatprep.subr.mxu0 0.0
    %5146 = vmatpush1.msra.mxu0 0.0
    %5147 = vmatprep.subr.mxu0 0.0
    %5148 = vmatpush1.msra.mxu0 0.0
    %5149 = vmatprep.subr.mxu0 0.0
    %5150 = vmatpush1.msra.mxu0 0.0
    %5151 = vmatprep.subr.mxu0 0.0
    %5152 = vmatpush1.msra.mxu0 0.0
    %5153 = vmatprep.subr.mxu0 0.0
    %5154 = vmatpush1.msra.mxu0 0.0
    %5155 = vmatprep.subr.mxu0 0.0
    %5156 = vmatpush1.msra.mxu0 0.0
    %5157 = vmatprep.subr.mxu0 0.0
    %5158 = vmatpush1.msra.mxu0 0.0
    %5159 = vmatprep.subr.mxu0 0.0
    %5160 = vmatpush1.msra.mxu0 0.0
    %5161 = vmatprep.subr.mxu0 0.0
    %5162 = vmatpush1.msra.mxu0 0.0
    %5163 = vmatprep.mubr.f32.mxu0 0.0
    %5164 = vmatmul.mubr.f32.gmra.mrb[0].mxu0 %v5097
    %v5165 = vpop.f32.mrb[0].mxu0
    %v5166 = vadd.f32 %v5094, %v5165
    %v5167 = vpop.f32.mrb[0].mxu0
    %5168 = vdwg.mxu0
    %vm5169 = vcmp.gt.f32.partialorder %v5166, 0.0
    %v5170 = vmin.f32 %v5166, 0.0
    %v5171 = vmul.f32 %v5170, 1.442695
    %v5172 = vpow.pop %v5171
    %v5173 = vsub.f32 %v5172, 1.0
    %v5174 = vsel %vm5169, %v5166, %v5173
    %v5175 = vld [vmem:[%s19] sm:$0x1]
    %v5177 = vlaneseq
    %v5178 = vshrl.u32 %v5177, 7
    %v5179 = vsub.s32 0, %v5178
    %v5180 = vrot.slane %v5175, %v5179
    %v5182 = vmul.f32 %v5174, %v5180
    %v5183 = vld [vmem:[#allocation8] sm:$0x1]
    %v5185 = vlaneseq
    %v5186 = vshrl.u32 %v5185, 7
    %v5187 = vsub.s32 0, %v5186
    %v5188 = vrot.slane %v5183, %v5187
    %v5190 = vadd.f32 %v5182, %v5188
    %v5191 = vld [vmem:[%s21] sm:$0xff]
    %v5192 = vld [vmem:[%s21 + $0x8] sm:$0xff]
    %v5193 = vld [vmem:[%s21 + $0x10] sm:$0xff]
    %v5194 = vld [vmem:[%s21 + $0x18] sm:$0xff]
    %v5195 = vld [vmem:[%s21 + $0x20] sm:$0xff]
    %v5196 = vld [vmem:[%s21 + $0x28] sm:$0xff]
    %v5197 = vld [vmem:[%s21 + $0x30] sm:$0xff]
    %v5198 = vld [vmem:[%s21 + $0x38] sm:$0xff]
    %v5199 = vld [vmem:[#allocation10] sm:$0x1]
    %v5201 = vlaneseq
    %v5202 = vshrl.u32 %v5201, 7
    %v5203 = vsub.s32 0, %v5202
    %v5204 = vrot.slane %v5199, %v5203
    %v5207 = vsel %vm2229, %v5190, 0
    %5209 = vmatprep.subr.mxu0 0.0
    %5210 = vmatpush1.msra.mxu0 %v5191
    %5211 = vmatprep.subr.mxu0 0.0
    %5212 = vmatpush1.msra.mxu0 %v5192
    %5213 = vmatprep.subr.mxu0 0.0
    %5214 = vmatpush1.msra.mxu0 %v5193
    %5215 = vmatprep.subr.mxu0 0.0
    %5216 = vmatpush1.msra.mxu0 %v5194
    %5217 = vmatprep.subr.mxu0 0.0
    %5218 = vmatpush1.msra.mxu0 %v5195
    %5219 = vmatprep.subr.mxu0 0.0
    %5220 = vmatpush1.msra.mxu0 %v5196
    %5221 = vmatprep.subr.mxu0 0.0
    %5222 = vmatpush1.msra.mxu0 %v5197
    %5223 = vmatprep.subr.mxu0 0.0
    %5224 = vmatpush1.msra.mxu0 %v5198
    %5225 = vmatprep.subr.mxu0 0.0
    %5226 = vmatpush1.msra.mxu0 0.0
    %5227 = vmatprep.subr.mxu0 0.0
    %5228 = vmatpush1.msra.mxu0 0.0
    %5229 = vmatprep.subr.mxu0 0.0
    %5230 = vmatpush1.msra.mxu0 0.0
    %5231 = vmatprep.subr.mxu0 0.0
    %5232 = vmatpush1.msra.mxu0 0.0
    %5233 = vmatprep.subr.mxu0 0.0
    %5234 = vmatpush1.msra.mxu0 0.0
    %5235 = vmatprep.subr.mxu0 0.0
    %5236 = vmatpush1.msra.mxu0 0.0
    %5237 = vmatprep.subr.mxu0 0.0
    %5238 = vmatpush1.msra.mxu0 0.0
    %5239 = vmatprep.subr.mxu0 0.0
    %5240 = vmatpush1.msra.mxu0 0.0
    %5241 = vmatprep.subr.mxu0 0.0
    %5242 = vmatpush1.msra.mxu0 0.0
    %5243 = vmatprep.subr.mxu0 0.0
    %5244 = vmatpush1.msra.mxu0 0.0
    %5245 = vmatprep.subr.mxu0 0.0
    %5246 = vmatpush1.msra.mxu0 0.0
    %5247 = vmatprep.subr.mxu0 0.0
    %5248 = vmatpush1.msra.mxu0 0.0
    %5249 = vmatprep.subr.mxu0 0.0
    %5250 = vmatpush1.msra.mxu0 0.0
    %5251 = vmatprep.subr.mxu0 0.0
    %5252 = vmatpush1.msra.mxu0 0.0
    %5253 = vmatprep.subr.mxu0 0.0
    %5254 = vmatpush1.msra.mxu0 0.0
    %5255 = vmatprep.subr.mxu0 0.0
    %5256 = vmatpush1.msra.mxu0 0.0
    %5257 = vmatprep.subr.mxu0 0.0
    %5258 = vmatpush1.msra.mxu0 0.0
    %5259 = vmatprep.subr.mxu0 0.0
    %5260 = vmatpush1.msra.mxu0 0.0
    %5261 = vmatprep.subr.mxu0 0.0
    %5262 = vmatpush1.msra.mxu0 0.0
    %5263 = vmatprep.subr.mxu0 0.0
    %5264 = vmatpush1.msra.mxu0 0.0
    %5265 = vmatprep.subr.mxu0 0.0
    %5266 = vmatpush1.msra.mxu0 0.0
    %5267 = vmatprep.subr.mxu0 0.0
    %5268 = vmatpush1.msra.mxu0 0.0
    %5269 = vmatprep.subr.mxu0 0.0
    %5270 = vmatpush1.msra.mxu0 0.0
    %5271 = vmatprep.subr.mxu0 0.0
    %5272 = vmatpush1.msra.mxu0 0.0
    %5273 = vmatprep.mubr.f32.mxu0 0.0
    %5274 = vmatmul.mubr.f32.gmra.mrb[0].mxu0 %v5207
    %v5275 = vpop.f32.mrb[0].mxu0
    %v5276 = vadd.f32 %v5204, %v5275
    %v5277 = vpop.f32.mrb[0].mxu0
    %5278 = vdwg.mxu0
    %vm5279 = vcmask 9216
    %5280 = vst.msk [vmem:[#allocation11] sm:$0x3] %vm5279, %v5276
    // Predicated region
    $region114: #{esim_forward.1} parent=1 // pred_check
      _
    $region115: #{esim_forward.1} parent=1 // pred_check_branch
      %5282 = sbr.rel (0) target = $region117
    $region116: #{esim_forward.1} parent=1 // pred_region
      %s5284 = ssub.s32 32, 32
      %5285 = vsyncadd [#allocation4], %s5284
      %s5287 = sshll.u32 [#allocation11], 4
      %s5288 = int_to_ptr.vmem [resolvable:$true] %s5287
      %5290 = dma.vmem_to_hbm [thread:$0]  %s5288, 32, %s23, [#allocation4]
    $region117: #{esim_forward.1} parent=1 // pred_fallthru
      _
    // Predicated region
    $region118: #{esim_forward.1} parent=1 // pred_check
      _
    $region119: #{esim_forward.1} parent=1 // pred_check_branch
      %5292 = sbr.rel (0) target = $region121
    $region120: #{esim_forward.1} parent=1 // pred_region
      %5293 = dma.done [#allocation4], 32
    $region121: #{esim_forward.1} parent=1 // pred_fallthru
      _
    %5294 = vsyncpa [#allocation3], 1
    %5295 = vsyncpa [#allocation6], 1
    %5296 = vsyncpa [#allocation9], 1
    %5297 = vsyncpa [#allocation4], 1

</llo_original>
